<compile_context>
chip_gen: v5e
topology: v5e:2x2
jax: 0.10.0
libtpu: 0.0.40
codegen_flags: <defaults>
</compile_context>

<pallas_src>
import math
from functools import partial

import jax
import jax.numpy as jnp
from jax.experimental import pallas as pl
from jax.experimental.pallas import tpu as pltpu


# ----------------------------- kernels -------------------------------------


def _conv1x1_stats_kernel(x_ref, w_ref, h_ref, sum_ref, ssq_ref):
    """h = x @ w (bf16 in, f32 acc); accumulate sum / sum-of-squares of h."""
    @pl.when(pl.program_id(0) == 0)
    def _():
        sum_ref[...] = jnp.zeros_like(sum_ref)
        ssq_ref[...] = jnp.zeros_like(ssq_ref)

    h = jnp.dot(x_ref[...], w_ref[...], preferred_element_type=jnp.float32)
    sum_ref[...] += jnp.sum(h, axis=0, keepdims=True)
    ssq_ref[...] += jnp.sum(h * h, axis=0, keepdims=True)
    h_ref[...] = h.astype(h_ref.dtype)


def _bn_conv1x1_stats_kernel(x_ref, scale_ref, shift_ref, w_ref,
                             h_ref, sum_ref, ssq_ref):
    """h = relu(bn(x)) @ w; accumulate sum / sum-of-squares of h."""
    @pl.when(pl.program_id(0) == 0)
    def _():
        sum_ref[...] = jnp.zeros_like(sum_ref)
        ssq_ref[...] = jnp.zeros_like(ssq_ref)

    a = jnp.maximum(x_ref[...].astype(jnp.float32) * scale_ref[...]
                    + shift_ref[...], 0.0)
    h = jnp.dot(a.astype(w_ref.dtype), w_ref[...],
                preferred_element_type=jnp.float32)
    sum_ref[...] += jnp.sum(h, axis=0, keepdims=True)
    ssq_ref[...] += jnp.sum(h * h, axis=0, keepdims=True)
    h_ref[...] = h.astype(h_ref.dtype)


def _grouped3x3_kernel(h1_ref, scale_ref, shift_ref, w2_ref,
                       h2_ref, sum_ref, ssq_ref,
                       pad_ref, x9_ref, *, H, W, Ws, D):
    """Per image: bn1+relu, grouped 3x3 conv as one stacked (9*D, D) matmul."""
    n = pl.program_id(0)

    @pl.when(n == 0)
    def _():
        sum_ref[...] = jnp.zeros_like(sum_ref)
        ssq_ref[...] = jnp.zeros_like(ssq_ref)
        # Zero the halo scratch ONCE. Only interior rows are rewritten below,
        # so the halo rows / gap columns stay zero for every image.
        pad_ref[...] = jnp.zeros_like(pad_ref)

    # bn1 affine (from globally-accumulated stats) + relu, back to bf16.
    a1 = jnp.maximum(h1_ref[...].astype(jnp.float32) * scale_ref[...]
                     + shift_ref[...], 0.0).astype(pad_ref.dtype)     # (H*W, D)

    # Stage into the zero-padded spatial halo: image row h lives at scratch
    # rows (1+h)*Ws + 1 .. +W, surrounded by zeros -> no per-tap masks needed.
    for h in range(H):
        r0 = (1 + h) * Ws + 1
        pad_ref[r0:r0 + W, :] = a1[h * W:(h + 1) * W, :]

    # Concatenate the 9 spatial shifts along channels into one (H*W, 9*D)
    # slab -> a single K = 9*D MXU matmul instead of nine K = D matmuls.
    taps = [(dy, dx) for dy in (-1, 0, 1) for dx in (-1, 0, 1)]
    for t, (dy, dx) in enumerate(taps):
        base = (1 + dy) * Ws + 1 + dx
        for h in range(H):
            src = base + h * Ws
            x9_ref[h * W:(h + 1) * W, t * D:(t + 1) * D] = \
                pad_ref[src:src + W, :]

    h2 = jnp.dot(x9_ref[...], w2_ref[...],
                 preferred_element_type=jnp.float32)                  # (H*W, D)
    sum_ref[...] += jnp.sum(h2, axis=0, keepdims=True)
    ssq_ref[...] += jnp.sum(h2 * h2, axis=0, keepdims=True)
    h2_ref[...] = h2.astype(h2_ref.dtype)


def _bn_residual_relu_kernel(h3_ref, scale_ref, shift_ref, res_ref, o_ref):
    o_ref[...] = jnp.maximum(
        h3_ref[...] * scale_ref[...] + shift_ref[...] + res_ref[...], 0.0)


# ----------------------------- wrapper --------------------------------------


def _bn_affine(s, ss, count, gamma, beta, eps):
    """Fold one-pass batch stats + BN params into per-channel scale/shift."""
    mean = s / count
    var = jnp.maximum(ss / count - mean * mean, 0.0)
    scale = gamma.reshape(1, -1).astype(jnp.float32) * jax.lax.rsqrt(var + eps)
    shift = beta.reshape(1, -1).astype(jnp.float32) - mean * scale
    return scale, shift


@partial(jax.jit, static_argnames=("cardinality", "eps", "row_tile"))
def resnext_bottleneck_forward(x_nchw, params, *, cardinality, eps=1e-5,
                               row_tile=256):
    w1, g1, b1 = params["w1"], params["g1"], params["b1"]
    w2, g2, b2 = params["w2"], params["g2"], params["b2"]
    w3, g3, b3 = params["w3"], params["g3"], params["b3"]

    N, Cin, H, W = x_nchw.shape
    D = w1.shape[0]
    Cout = w3.shape[0]
    assert Cout == Cin, "downsample is None -> residual channels must match"

    R = N * H * W
    HW = H * W
    TR = min(row_tile, R)
    assert R % TR == 0 and TR % 8 == 0, "row tile must divide R and align to 8"
    assert HW % 8 == 0
    Ws = -(-(W + 2) // 8) * 8          # halo row stride, multiple of 8

    # TODO(synk): the NCHW<->NHWC transposes are an extra HBM round trip; in a
    # full network you would keep activations channels-last end-to-end.
    # TODO(synk): Cout=64 (<128 lanes) in the demo config means lane-sparse
    # stores; production ResNeXt widths (>=128) fill the lanes.
    x_f32 = jnp.transpose(x_nchw, (0, 2, 3, 1)).reshape(R, Cin).astype(jnp.float32)
    x_bf16 = x_f32.astype(jnp.bfloat16)

    # 1x1 conv weights (O, I, 1, 1) -> (I, O) matmul layout, bf16 for the MXU.
    w1_mat = jnp.transpose(w1[:, :, 0, 0]).astype(jnp.bfloat16)      # (Cin, D)
    w3_mat = jnp.transpose(w3[:, :, 0, 0]).astype(jnp.bfloat16)      # (D, Cout)

    # Grouped 3x3 weights (D, D//card, 3, 3) -> stacked (9*D, D) taps.
    # TODO(synk): for large group size (>=128) a per-group batched matmul
    # avoids the 1/cardinality density waste of this block-diagonal encoding.
    gsz = D // cardinality
    w2r = w2.reshape(cardinality, gsz, gsz, 3, 3)
    taps = []
    for ky in range(3):
        for kx in range(3):
            taps.append(jax.scipy.linalg.block_diag(
                *[w2r[g, :, :, ky, kx].T for g in range(cardinality)]))
    w2_stk = jnp.concatenate(taps, axis=0).astype(jnp.bfloat16)      # (9D, D)

    cp_arb = pltpu.CompilerParams(dimension_semantics=("arbitrary",),
                                  vmem_limit_bytes=32 * 1024 * 1024)
    cp_par = pltpu.CompilerParams(dimension_semantics=("parallel",),
                                  vmem_limit_bytes=32 * 1024 * 1024)
    stat = lambda c: jax.ShapeDtypeStruct((1, c), jnp.float32)
    stat_spec = lambda c: pl.BlockSpec((1, c), lambda i: (0, 0))

    # ---- K1: conv1 (1x1) + stats -------------------------------------------
    h1, s1, ss1 = pl.pallas_call(
        _conv1x1_stats_kernel,
        grid=(R // TR,),
        in_specs=[pl.BlockSpec((TR, Cin), lambda i: (i, 0)),
                  pl.BlockSpec((Cin, D), lambda i: (0, 0))],
        out_specs=(pl.BlockSpec((TR, D), lambda i: (i, 0)),
                   stat_spec(D), stat_spec(D)),
        out_shape=(jax.ShapeDtypeStruct((R, D), jnp.bfloat16), stat(D), stat(D)),
        compiler_params=cp_arb,
        cost_estimate=pl.CostEstimate(
            flops=2 * R * Cin * D, transcendentals=0,
            bytes_accessed=2 * R * (Cin + D) + 2 * Cin * D + 8 * D),
    )(x_bf16, w1_mat)
    scale1, shift1 = _bn_affine(s1, ss1, R, g1, b1, eps)

    # ---- K2: bn1 + relu + grouped 3x3 conv + stats (per image) -------------
    h2, s2, ss2 = pl.pallas_call(
        partial(_grouped3x3_kernel, H=H, W=W, Ws=Ws, D=D),
        grid=(N,),
        in_specs=[pl.BlockSpec((HW, D), lambda n: (n, 0)),
                  pl.BlockSpec((1, D), lambda n: (0, 0)),
                  pl.BlockSpec((1, D), lambda n: (0, 0)),
                  pl.BlockSpec((9 * D, D), lambda n: (0, 0))],
        out_specs=(pl.BlockSpec((HW, D), lambda n: (n, 0)),
                   stat_spec(D), stat_spec(D)),
        out_shape=(jax.ShapeDtypeStruct((R, D), jnp.bfloat16), stat(D), stat(D)),
        scratch_shapes=[pltpu.VMEM(((H + 2) * Ws, D), jnp.bfloat16),
                        pltpu.VMEM((HW, 9 * D), jnp.bfloat16)],
        compiler_params=cp_arb,
        cost_estimate=pl.CostEstimate(
            flops=2 * R * 9 * D * D, transcendentals=0,
            bytes_accessed=4 * R * D + 2 * 9 * D * D + 8 * D),
    )(h1, scale1, shift1, w2_stk)
    scale2, shift2 = _bn_affine(s2, ss2, R, g2, b2, eps)

    # ---- K3: bn2 + relu + conv3 (1x1) + stats --------------------------------
    h3, s3, ss3 = pl.pallas_call(
        _bn_conv1x1_stats_kernel,
        grid=(R // TR,),
        in_specs=[pl.BlockSpec((TR, D), lambda i: (i, 0)),
                  pl.BlockSpec((1, D), lambda i: (0, 0)),
                  pl.BlockSpec((1, D), lambda i: (0, 0)),
                  pl.BlockSpec((D, Cout), lambda i: (0, 0))],
        out_specs=(pl.BlockSpec((TR, Cout), lambda i: (i, 0)),
                   stat_spec(Cout), stat_spec(Cout)),
        out_shape=(jax.ShapeDtypeStruct((R, Cout), jnp.float32),
                   stat(Cout), stat(Cout)),
        compiler_params=cp_arb,
        cost_estimate=pl.CostEstimate(
            flops=2 * R * D * Cout, transcendentals=0,
            bytes_accessed=2 * R * D + 4 * R * Cout + 2 * D * Cout),
    )(h2, scale2, shift2, w3_mat)
    scale3, shift3 = _bn_affine(s3, ss3, R, g3, b3, eps)

    # ---- K4: bn3 + residual + relu ------------------------------------------
    out_flat = pl.pallas_call(
        _bn_residual_relu_kernel,
        grid=(R // TR,),
        in_specs=[pl.BlockSpec((TR, Cout), lambda i: (i, 0)),
                  pl.BlockSpec((1, Cout), lambda i: (0, 0)),
                  pl.BlockSpec((1, Cout), lambda i: (0, 0)),
                  pl.BlockSpec((TR, Cout), lambda i: (i, 0))],
        out_specs=pl.BlockSpec((TR, Cout), lambda i: (i, 0)),
        out_shape=jax.ShapeDtypeStruct((R, Cout), jnp.float32),
        compiler_params=cp_par,
        cost_estimate=pl.CostEstimate(
            flops=3 * R * Cout, transcendentals=0,
            bytes_accessed=12 * R * Cout),
    )(h3, scale3, shift3, x_f32)

    return jnp.transpose(out_flat.reshape(N, H, W, Cout), (0, 3, 1, 2))


# ----------------------------- reference & test ------------------------------


def _ref_forward(x, params, cardinality, eps=1e-5):
    """Pure-JAX f32 reference (NCHW, training-mode BN) for verification."""
    def conv(h, w, groups, pad):
        return jax.lax.conv_general_dilated(
            h, w, window_strides=(1, 1), padding=[(pad, pad), (pad, pad)],
            feature_group_count=groups,
            dimension_numbers=("NCHW", "OIHW", "NCHW"))

    def bn(h, g, b):
        mu = jnp.mean(h, axis=(0, 2, 3), keepdims=True)
        var = jnp.mean((h - mu) ** 2, axis=(0, 2, 3), keepdims=True)
        return ((h - mu) * jax.lax.rsqrt(var + eps) * g.reshape(1, -1, 1, 1)
                + b.reshape(1, -1, 1, 1))

    out = jax.nn.relu(bn(conv(x, params["w1"], 1, 0), params["g1"], params["b1"]))
    out = jax.nn.relu(bn(conv(out, params["w2"], cardinality, 1),
                         params["g2"], params["b2"]))
    out = bn(conv(out, params["w3"], 1, 0), params["g3"], params["b3"])
    return jax.nn.relu(out + x)


if __name__ == "__main__":
    # Module config (stride=1, downsample=None -> inplanes == planes*expansion)
    inplanes, planes, base_width, cardinality = 64, 16, 4, 32
    D = int(math.floor(planes * (base_width / 64.0)) * cardinality)   # 32
    Cout = planes * 4                                                  # 64
    N, H, W = 2, 16, 16

    key = jax.random.PRNGKey(0)
    k = jax.random.split(key, 10)
    x = jax.random.normal(k[0], (N, inplanes, H, W), jnp.float32)
    params = dict(
        w1=0.1 * jax.random.normal(k[1], (D, inplanes, 1, 1), jnp.float32),
        g1=1.0 + 0.1 * jax.random.normal(k[4], (D,), jnp.float32),
        b1=0.1 * jax.random.normal(k[5], (D,), jnp.float32),
        w2=0.1 * jax.random.normal(k[2], (D, D // cardinality, 3, 3), jnp.float32),
        g2=1.0 + 0.1 * jax.random.normal(k[6], (D,), jnp.float32),
        b2=0.1 * jax.random.normal(k[7], (D,), jnp.float32),
        w3=0.1 * jax.random.normal(k[3], (Cout, D, 1, 1), jnp.float32),
        g3=1.0 + 0.1 * jax.random.normal(k[8], (Cout,), jnp.float32),
        b3=0.1 * jax.random.normal(k[9], (Cout,), jnp.float32),
    )

    out = resnext_bottleneck_forward(x, params, cardinality=cardinality)
    out = jax.block_until_ready(out)

    ref = _ref_forward(x, params, cardinality)
    assert out.shape == (N, Cout, H, W)
    # bf16 matmul operands -> widened tolerance vs the f32 reference.
    assert jnp.allclose(out, ref, atol=6e-2, rtol=6e-2), \
        float(jnp.max(jnp.abs(out - ref)))
    print("KERNEL_OK")
</pallas_src>

<mosaic_0001>
module attributes {stable_mosaic.version = 11 : i64} {
  func.func @_conv1x1_stats_kernel(%arg0: i32, %arg1: memref<256x64xbf16, #tpu.memory_space<vmem>>, %arg2: memref<64x32xbf16, #tpu.memory_space<vmem>>, %arg3: memref<256x32xbf16, #tpu.memory_space<vmem>>, %arg4: memref<1x32xf32, #tpu.memory_space<vmem>>, %arg5: memref<1x32xf32, #tpu.memory_space<vmem>>) attributes {dimension_semantics = [#tpu.dimension_semantics<arbitrary>], iteration_bounds = array<i64: 2>, scalar_prefetch = 0 : i64, scratch_operands = 0 : i64, tpu.core_type = #tpu.core_type<tc>, window_params = [{transform_indices = @transform_0, window_bounds = array<i64: 256, 64>}, {pipeline_mode = #tpu.pipeline_mode<synchronous>, transform_indices = @transform_1, window_bounds = array<i64: 64, 32>}, {transform_indices = @transform_2, window_bounds = array<i64: 256, 32>}, {pipeline_mode = #tpu.pipeline_mode<synchronous>, transform_indices = @transform_3, window_bounds = array<i64: 1, 32>}, {pipeline_mode = #tpu.pipeline_mode<synchronous>, transform_indices = @transform_4, window_bounds = array<i64: 1, 32>}]} {
    %c0_i32 = arith.constant 0 : i32
    %0 = arith.cmpi eq, %arg0, %c0_i32 : i32
    %1 = arith.extui %0 : i1 to i32
    %c0_i32_0 = arith.constant 0 : i32
    %2 = arith.cmpi ne, %1, %c0_i32_0 : i32
    scf.if %2 {
      %cst_16 = arith.constant 0.000000e+00 : f32
      %19 = vector.broadcast %cst_16 : f32 to vector<1x32xf32>
      %c0_17 = arith.constant 0 : index
      %c0_18 = arith.constant 0 : index
      %20 = vector.load %arg4[%c0_17, %c0_18] : memref<1x32xf32, #tpu.memory_space<vmem>>, vector<1x32xf32>
      tpu.vector_store %arg4[%c0_17, %c0_18], %19 {strides = array<i32>} : memref<1x32xf32, #tpu.memory_space<vmem>>, vector<1x32xf32>,
      %cst_19 = arith.constant 0.000000e+00 : f32
      %21 = vector.broadcast %cst_19 : f32 to vector<1x32xf32>
      %c0_20 = arith.constant 0 : index
      %c0_21 = arith.constant 0 : index
      %22 = vector.load %arg5[%c0_20, %c0_21] : memref<1x32xf32, #tpu.memory_space<vmem>>, vector<1x32xf32>
      tpu.vector_store %arg5[%c0_20, %c0_21], %21 {strides = array<i32>} : memref<1x32xf32, #tpu.memory_space<vmem>>, vector<1x32xf32>,
    } else {
    }
    %c0 = arith.constant 0 : index
    %c0_1 = arith.constant 0 : index
    %3 = vector.load %arg1[%c0, %c0_1] : memref<256x64xbf16, #tpu.memory_space<vmem>>, vector<256x64xbf16>
    %c0_2 = arith.constant 0 : index
    %c0_3 = arith.constant 0 : index
    %4 = vector.load %arg2[%c0_2, %c0_3] : memref<64x32xbf16, #tpu.memory_space<vmem>>, vector<64x32xbf16>
    %cst = arith.constant dense<0.000000e+00> : vector<256x32xf32>
    %5 = tpu.matmul %3, %4, %cst {dimension_numbers = #tpu.dot_dimension_numbers<[1], [0], [0], [1], [0, 0, 1, 1], [], []>} : vector<256x64xbf16>, vector<64x32xbf16>, vector<256x32xf32> -> vector<256x32xf32>
    %c0_4 = arith.constant 0 : index
    %c0_5 = arith.constant 0 : index
    %6 = vector.load %arg4[%c0_4, %c0_5] : memref<1x32xf32, #tpu.memory_space<vmem>>, vector<1x32xf32>
    %cst_6 = arith.constant dense<0.000000e+00> : vector<32xf32>
    %7 = vector.multi_reduction <add>, %5, %cst_6 [0] : vector<256x32xf32> to vector<32xf32>
    %8 = vector.shape_cast %7 : vector<32xf32> to vector<1x32xf32>
    %9 = arith.addf %6, %8 : vector<1x32xf32>
    %c0_7 = arith.constant 0 : index
    %c0_8 = arith.constant 0 : index
    %10 = vector.load %arg4[%c0_7, %c0_8] : memref<1x32xf32, #tpu.memory_space<vmem>>, vector<1x32xf32>
    tpu.vector_store %arg4[%c0_7, %c0_8], %9 {strides = array<i32>} : memref<1x32xf32, #tpu.memory_space<vmem>>, vector<1x32xf32>,
    %c0_9 = arith.constant 0 : index
    %c0_10 = arith.constant 0 : index
    %11 = vector.load %arg5[%c0_9, %c0_10] : memref<1x32xf32, #tpu.memory_space<vmem>>, vector<1x32xf32>
    %12 = arith.mulf %5, %5 : vector<256x32xf32>
    %cst_11 = arith.constant dense<0.000000e+00> : vector<32xf32>
    %13 = vector.multi_reduction <add>, %12, %cst_11 [0] : vector<256x32xf32> to vector<32xf32>
    %14 = vector.shape_cast %13 : vector<32xf32> to vector<1x32xf32>
    %15 = arith.addf %11, %14 : vector<1x32xf32>
    %c0_12 = arith.constant 0 : index
    %c0_13 = arith.constant 0 : index
    %16 = vector.load %arg5[%c0_12, %c0_13] : memref<1x32xf32, #tpu.memory_space<vmem>>, vector<1x32xf32>
    tpu.vector_store %arg5[%c0_12, %c0_13], %15 {strides = array<i32>} : memref<1x32xf32, #tpu.memory_space<vmem>>, vector<1x32xf32>,
    %17 = arith.truncf %5 : vector<256x32xf32> to vector<256x32xbf16>
    %c0_14 = arith.constant 0 : index
    %c0_15 = arith.constant 0 : index
    %18 = vector.load %arg3[%c0_14, %c0_15] : memref<256x32xbf16, #tpu.memory_space<vmem>>, vector<256x32xbf16>
    tpu.vector_store %arg3[%c0_14, %c0_15], %17 {strides = array<i32>} : memref<256x32xbf16, #tpu.memory_space<vmem>>, vector<256x32xbf16>,
    return
  }
  func.func @transform_0(%arg0: i32) -> (i32, i32) {
    %c0_i32 = arith.constant 0 : i32
    %c0_i32_0 = arith.constant 0 : i32
    return %arg0, %c0_i32 : i32, i32
  }
  func.func @transform_1(%arg0: i32) -> (i32, i32) {
    %c0_i32 = arith.constant 0 : i32
    %c0_i32_0 = arith.constant 0 : i32
    %c0_i32_1 = arith.constant 0 : i32
    return %c0_i32, %c0_i32_0 : i32, i32
  }
  func.func @transform_2(%arg0: i32) -> (i32, i32) {
    %c0_i32 = arith.constant 0 : i32
    %c0_i32_0 = arith.constant 0 : i32
    return %arg0, %c0_i32 : i32, i32
  }
  func.func @transform_3(%arg0: i32) -> (i32, i32) {
    %c0_i32 = arith.constant 0 : i32
    %c0_i32_0 = arith.constant 0 : i32
    %c0_i32_1 = arith.constant 0 : i32
    return %c0_i32, %c0_i32_0 : i32, i32
  }
  func.func @transform_4(%arg0: i32) -> (i32, i32) {
    %c0_i32 = arith.constant 0 : i32
    %c0_i32_0 = arith.constant 0 : i32
    %c0_i32_1 = arith.constant 0 : i32
    return %c0_i32, %c0_i32_0 : i32, i32
  }
}

module attributes {stable_mosaic.version = 11 : i64} {
  func.func @_bn_conv1x1_stats_kernel(%arg0: i32, %arg1: memref<256x32xbf16, #tpu.memory_space<vmem>>, %arg2: memref<1x32xf32, #tpu.memory_space<vmem>>, %arg3: memref<1x32xf32, #tpu.memory_space<vmem>>, %arg4: memref<32x64xbf16, #tpu.memory_space<vmem>>, %arg5: memref<256x64xf32, #tpu.memory_space<vmem>>, %arg6: memref<1x64xf32, #tpu.memory_space<vmem>>, %arg7: memref<1x64xf32, #tpu.memory_space<vmem>>) attributes {dimension_semantics = [#tpu.dimension_semantics<arbitrary>], iteration_bounds = array<i64: 2>, scalar_prefetch = 0 : i64, scratch_operands = 0 : i64, tpu.core_type = #tpu.core_type<tc>, window_params = [{transform_indices = @transform_0, window_bounds = array<i64: 256, 32>}, {pipeline_mode = #tpu.pipeline_mode<synchronous>, transform_indices = @transform_1, window_bounds = array<i64: 1, 32>}, {pipeline_mode = #tpu.pipeline_mode<synchronous>, transform_indices = @transform_2, window_bounds = array<i64: 1, 32>}, {pipeline_mode = #tpu.pipeline_mode<synchronous>, transform_indices = @transform_3, window_bounds = array<i64: 32, 64>}, {transform_indices = @transform_4, window_bounds = array<i64: 256, 64>}, {pipeline_mode = #tpu.pipeline_mode<synchronous>, transform_indices = @transform_5, window_bounds = array<i64: 1, 64>}, {pipeline_mode = #tpu.pipeline_mode<synchronous>, transform_indices = @transform_6, window_bounds = array<i64: 1, 64>}]} {
    %c0_i32 = arith.constant 0 : i32
    %0 = arith.cmpi eq, %arg0, %c0_i32 : i32
    %1 = arith.extui %0 : i1 to i32
    %c0_i32_0 = arith.constant 0 : i32
    %2 = arith.cmpi ne, %1, %c0_i32_0 : i32
    scf.if %2 {
      %cst_21 = arith.constant 0.000000e+00 : f32
      %28 = vector.broadcast %cst_21 : f32 to vector<1x64xf32>
      %c0_22 = arith.constant 0 : index
      %c0_23 = arith.constant 0 : index
      %29 = vector.load %arg6[%c0_22, %c0_23] : memref<1x64xf32, #tpu.memory_space<vmem>>, vector<1x64xf32>
      tpu.vector_store %arg6[%c0_22, %c0_23], %28 {strides = array<i32>} : memref<1x64xf32, #tpu.memory_space<vmem>>, vector<1x64xf32>,
      %cst_24 = arith.constant 0.000000e+00 : f32
      %30 = vector.broadcast %cst_24 : f32 to vector<1x64xf32>
      %c0_25 = arith.constant 0 : index
      %c0_26 = arith.constant 0 : index
      %31 = vector.load %arg7[%c0_25, %c0_26] : memref<1x64xf32, #tpu.memory_space<vmem>>, vector<1x64xf32>
      tpu.vector_store %arg7[%c0_25, %c0_26], %30 {strides = array<i32>} : memref<1x64xf32, #tpu.memory_space<vmem>>, vector<1x64xf32>,
    } else {
    }
    %c0 = arith.constant 0 : index
    %c0_1 = arith.constant 0 : index
    %3 = vector.load %arg1[%c0, %c0_1] : memref<256x32xbf16, #tpu.memory_space<vmem>>, vector<256x32xbf16>
    %4 = arith.extf %3 : vector<256x32xbf16> to vector<256x32xf32>
    %c0_2 = arith.constant 0 : index
    %c0_3 = arith.constant 0 : index
    %5 = vector.load %arg2[%c0_2, %c0_3] : memref<1x32xf32, #tpu.memory_space<vmem>>, vector<1x32xf32>
    %6 = vector.broadcast %5 : vector<1x32xf32> to vector<256x32xf32>
    %7 = arith.mulf %4, %6 : vector<256x32xf32>
    %c0_4 = arith.constant 0 : index
    %c0_5 = arith.constant 0 : index
    %8 = vector.load %arg3[%c0_4, %c0_5] : memref<1x32xf32, #tpu.memory_space<vmem>>, vector<1x32xf32>
    %9 = vector.broadcast %8 : vector<1x32xf32> to vector<256x32xf32>
    %10 = arith.addf %7, %9 : vector<256x32xf32>
    %cst = arith.constant 0.000000e+00 : f32
    %11 = vector.broadcast %cst : f32 to vector<256x32xf32>
    %12 = arith.maximumf %10, %11 : vector<256x32xf32>
    %13 = arith.truncf %12 : vector<256x32xf32> to vector<256x32xbf16>
    %c0_6 = arith.constant 0 : index
    %c0_7 = arith.constant 0 : index
    %14 = vector.load %arg4[%c0_6, %c0_7] : memref<32x64xbf16, #tpu.memory_space<vmem>>, vector<32x64xbf16>
    %cst_8 = arith.constant dense<0.000000e+00> : vector<256x64xf32>
    %15 = tpu.matmul %13, %14, %cst_8 {dimension_numbers = #tpu.dot_dimension_numbers<[1], [0], [0], [1], [0, 0, 1, 1], [], []>} : vector<256x32xbf16>, vector<32x64xbf16>, vector<256x64xf32> -> vector<256x64xf32>
    %c0_9 = arith.constant 0 : index
    %c0_10 = arith.constant 0 : index
    %16 = vector.load %arg6[%c0_9, %c0_10] : memref<1x64xf32, #tpu.memory_space<vmem>>, vector<1x64xf32>
    %cst_11 = arith.constant dense<0.000000e+00> : vector<64xf32>
    %17 = vector.multi_reduction <add>, %15, %cst_11 [0] : vector<256x64xf32> to vector<64xf32>
    %18 = vector.shape_cast %17 : vector<64xf32> to vector<1x64xf32>
    %19 = arith.addf %16, %18 : vector<1x64xf32>
    %c0_12 = arith.constant 0 : index
    %c0_13 = arith.constant 0 : index
    %20 = vector.load %arg6[%c0_12, %c0_13] : memref<1x64xf32, #tpu.memory_space<vmem>>, vector<1x64xf32>
    tpu.vector_store %arg6[%c0_12, %c0_13], %19 {strides = array<i32>} : memref<1x64xf32, #tpu.memory_space<vmem>>, vector<1x64xf32>,
    %c0_14 = arith.constant 0 : index
    %c0_15 = arith.constant 0 : index
    %21 = vector.load %arg7[%c0_14, %c0_15] : memref<1x64xf32, #tpu.memory_space<vmem>>, vector<1x64xf32>
    %22 = arith.mulf %15, %15 : vector<256x64xf32>
    %cst_16 = arith.constant dense<0.000000e+00> : vector<64xf32>
    %23 = vector.multi_reduction <add>, %22, %cst_16 [0] : vector<256x64xf32> to vector<64xf32>
    %24 = vector.shape_cast %23 : vector<64xf32> to vector<1x64xf32>
    %25 = arith.addf %21, %24 : vector<1x64xf32>
    %c0_17 = arith.constant 0 : index
    %c0_18 = arith.constant 0 : index
    %26 = vector.load %arg7[%c0_17, %c0_18] : memref<1x64xf32, #tpu.memory_space<vmem>>, vector<1x64xf32>
    tpu.vector_store %arg7[%c0_17, %c0_18], %25 {strides = array<i32>} : memref<1x64xf32, #tpu.memory_space<vmem>>, vector<1x64xf32>,
    %c0_19 = arith.constant 0 : index
    %c0_20 = arith.constant 0 : index
    %27 = vector.load %arg5[%c0_19, %c0_20] : memref<256x64xf32, #tpu.memory_space<vmem>>, vector<256x64xf32>
    tpu.vector_store %arg5[%c0_19, %c0_20], %15 {strides = array<i32>} : memref<256x64xf32, #tpu.memory_space<vmem>>, vector<256x64xf32>,
    return
  }
  func.func @transform_0(%arg0: i32) -> (i32, i32) {
    %c0_i32 = arith.constant 0 : i32
    %c0_i32_0 = arith.constant 0 : i32
    return %arg0, %c0_i32 : i32, i32
  }
  func.func @transform_1(%arg0: i32) -> (i32, i32) {
    %c0_i32 = arith.constant 0 : i32
    %c0_i32_0 = arith.constant 0 : i32
    %c0_i32_1 = arith.constant 0 : i32
    return %c0_i32, %c0_i32_0 : i32, i32
  }
  func.func @transform_2(%arg0: i32) -> (i32, i32) {
    %c0_i32 = arith.constant 0 : i32
    %c0_i32_0 = arith.constant 0 : i32
    %c0_i32_1 = arith.constant 0 : i32
    return %c0_i32, %c0_i32_0 : i32, i32
  }
  func.func @transform_3(%arg0: i32) -> (i32, i32) {
    %c0_i32 = arith.constant 0 : i32
    %c0_i32_0 = arith.constant 0 : i32
    %c0_i32_1 = arith.constant 0 : i32
    return %c0_i32, %c0_i32_0 : i32, i32
  }
  func.func @transform_4(%arg0: i32) -> (i32, i32) {
    %c0_i32 = arith.constant 0 : i32
    %c0_i32_0 = arith.constant 0 : i32
    return %arg0, %c0_i32 : i32, i32
  }
  func.func @transform_5(%arg0: i32) -> (i32, i32) {
    %c0_i32 = arith.constant 0 : i32
    %c0_i32_0 = arith.constant 0 : i32
    %c0_i32_1 = arith.constant 0 : i32
    return %c0_i32, %c0_i32_0 : i32, i32
  }
  func.func @transform_6(%arg0: i32) -> (i32, i32) {
    %c0_i32 = arith.constant 0 : i32
    %c0_i32_0 = arith.constant 0 : i32
    %c0_i32_1 = arith.constant 0 : i32
    return %c0_i32, %c0_i32_0 : i32, i32
  }
}

module attributes {stable_mosaic.version = 11 : i64} {
  func.func @_grouped3x3_kernel(%arg0: i32, %arg1: memref<256x32xbf16, #tpu.memory_space<vmem>>, %arg2: memref<1x32xf32, #tpu.memory_space<vmem>>, %arg3: memref<1x32xf32, #tpu.memory_space<vmem>>, %arg4: memref<288x32xbf16, #tpu.memory_space<vmem>>, %arg5: memref<256x32xbf16, #tpu.memory_space<vmem>>, %arg6: memref<1x32xf32, #tpu.memory_space<vmem>>, %arg7: memref<1x32xf32, #tpu.memory_space<vmem>>, %arg8: memref<432x32xbf16, #tpu.memory_space<vmem>>, %arg9: memref<256x288xbf16, #tpu.memory_space<vmem>>) attributes {dimension_semantics = [#tpu.dimension_semantics<arbitrary>], iteration_bounds = array<i64: 2>, scalar_prefetch = 0 : i64, scratch_operands = 2 : i64, tpu.core_type = #tpu.core_type<tc>, window_params = [{transform_indices = @transform_0, window_bounds = array<i64: 256, 32>}, {pipeline_mode = #tpu.pipeline_mode<synchronous>, transform_indices = @transform_1, window_bounds = array<i64: 1, 32>}, {pipeline_mode = #tpu.pipeline_mode<synchronous>, transform_indices = @transform_2, window_bounds = array<i64: 1, 32>}, {pipeline_mode = #tpu.pipeline_mode<synchronous>, transform_indices = @transform_3, window_bounds = array<i64: 288, 32>}, {transform_indices = @transform_4, window_bounds = array<i64: 256, 32>}, {pipeline_mode = #tpu.pipeline_mode<synchronous>, transform_indices = @transform_5, window_bounds = array<i64: 1, 32>}, {pipeline_mode = #tpu.pipeline_mode<synchronous>, transform_indices = @transform_6, window_bounds = array<i64: 1, 32>}]} {
    %c0_i32 = arith.constant 0 : i32
    %0 = arith.cmpi eq, %arg0, %c0_i32 : i32
    %1 = arith.extui %0 : i1 to i32
    %c0_i32_0 = arith.constant 0 : i32
    %2 = arith.cmpi ne, %1, %c0_i32_0 : i32
    scf.if %2 {
      %cst_567 = arith.constant 0.000000e+00 : f32
      %350 = vector.broadcast %cst_567 : f32 to vector<1x32xf32>
      %c0_568 = arith.constant 0 : index
      %c0_569 = arith.constant 0 : index
      %351 = vector.load %arg6[%c0_568, %c0_569] : memref<1x32xf32, #tpu.memory_space<vmem>>, vector<1x32xf32>
      tpu.vector_store %arg6[%c0_568, %c0_569], %350 {strides = array<i32>} : memref<1x32xf32, #tpu.memory_space<vmem>>, vector<1x32xf32>,
      %cst_570 = arith.constant 0.000000e+00 : f32
      %352 = vector.broadcast %cst_570 : f32 to vector<1x32xf32>
      %c0_571 = arith.constant 0 : index
      %c0_572 = arith.constant 0 : index
      %353 = vector.load %arg7[%c0_571, %c0_572] : memref<1x32xf32, #tpu.memory_space<vmem>>, vector<1x32xf32>
      tpu.vector_store %arg7[%c0_571, %c0_572], %352 {strides = array<i32>} : memref<1x32xf32, #tpu.memory_space<vmem>>, vector<1x32xf32>,
      %cst_573 = arith.constant 0.000000e+00 : bf16
      %354 = vector.broadcast %cst_573 : bf16 to vector<432x32xbf16>
      %c0_574 = arith.constant 0 : index
      %c0_575 = arith.constant 0 : index
      %355 = vector.load %arg8[%c0_574, %c0_575] : memref<432x32xbf16, #tpu.memory_space<vmem>>, vector<432x32xbf16>
      tpu.vector_store %arg8[%c0_574, %c0_575], %354 {strides = array<i32>} : memref<432x32xbf16, #tpu.memory_space<vmem>>, vector<432x32xbf16>,
    } else {
    }
    %c0 = arith.constant 0 : index
    %c0_1 = arith.constant 0 : index
    %3 = vector.load %arg1[%c0, %c0_1] : memref<256x32xbf16, #tpu.memory_space<vmem>>, vector<256x32xbf16>
    %4 = arith.extf %3 : vector<256x32xbf16> to vector<256x32xf32>
    %c0_2 = arith.constant 0 : index
    %c0_3 = arith.constant 0 : index
    %5 = vector.load %arg2[%c0_2, %c0_3] : memref<1x32xf32, #tpu.memory_space<vmem>>, vector<1x32xf32>
    %6 = vector.broadcast %5 : vector<1x32xf32> to vector<256x32xf32>
    %7 = arith.mulf %4, %6 : vector<256x32xf32>
    %c0_4 = arith.constant 0 : index
    %c0_5 = arith.constant 0 : index
    %8 = vector.load %arg3[%c0_4, %c0_5] : memref<1x32xf32, #tpu.memory_space<vmem>>, vector<1x32xf32>
    %9 = vector.broadcast %8 : vector<1x32xf32> to vector<256x32xf32>
    %10 = arith.addf %7, %9 : vector<256x32xf32>
    %cst = arith.constant 0.000000e+00 : f32
    %11 = vector.broadcast %cst : f32 to vector<256x32xf32>
    %12 = arith.maximumf %10, %11 : vector<256x32xf32>
    %13 = arith.truncf %12 : vector<256x32xf32> to vector<256x32xbf16>
    %14 = vector.extract_strided_slice %13 {offsets = [0, 0], sizes = [16, 32], strides = [1, 1]} : vector<256x32xbf16> to vector<16x32xbf16>
    %c25 = arith.constant 25 : index
    %c0_6 = arith.constant 0 : index
    %15 = vector.load %arg8[%c25, %c0_6] : memref<432x32xbf16, #tpu.memory_space<vmem>>, vector<16x32xbf16>
    tpu.vector_store %arg8[%c25, %c0_6], %14 {strides = array<i32>} : memref<432x32xbf16, #tpu.memory_space<vmem>>, vector<16x32xbf16>,
    %16 = vector.extract_strided_slice %13 {offsets = [16, 0], sizes = [16, 32], strides = [1, 1]} : vector<256x32xbf16> to vector<16x32xbf16>
    %c49 = arith.constant 49 : index
    %c0_7 = arith.constant 0 : index
    %17 = vector.load %arg8[%c49, %c0_7] : memref<432x32xbf16, #tpu.memory_space<vmem>>, vector<16x32xbf16>
    tpu.vector_store %arg8[%c49, %c0_7], %16 {strides = array<i32>} : memref<432x32xbf16, #tpu.memory_space<vmem>>, vector<16x32xbf16>,
    %18 = vector.extract_strided_slice %13 {offsets = [32, 0], sizes = [16, 32], strides = [1, 1]} : vector<256x32xbf16> to vector<16x32xbf16>
    %c73 = arith.constant 73 : index
    %c0_8 = arith.constant 0 : index
    %19 = vector.load %arg8[%c73, %c0_8] : memref<432x32xbf16, #tpu.memory_space<vmem>>, vector<16x32xbf16>
    tpu.vector_store %arg8[%c73, %c0_8], %18 {strides = array<i32>} : memref<432x32xbf16, #tpu.memory_space<vmem>>, vector<16x32xbf16>,
    %20 = vector.extract_strided_slice %13 {offsets = [48, 0], sizes = [16, 32], strides = [1, 1]} : vector<256x32xbf16> to vector<16x32xbf16>
    %c97 = arith.constant 97 : index
    %c0_9 = arith.constant 0 : index
    %21 = vector.load %arg8[%c97, %c0_9] : memref<432x32xbf16, #tpu.memory_space<vmem>>, vector<16x32xbf16>
    tpu.vector_store %arg8[%c97, %c0_9], %20 {strides = array<i32>} : memref<432x32xbf16, #tpu.memory_space<vmem>>, vector<16x32xbf16>,
    %22 = vector.extract_strided_slice %13 {offsets = [64, 0], sizes = [16, 32], strides = [1, 1]} : vector<256x32xbf16> to vector<16x32xbf16>
    %c121 = arith.constant 121 : index
    %c0_10 = arith.constant 0 : index
    %23 = vector.load %arg8[%c121, %c0_10] : memref<432x32xbf16, #tpu.memory_space<vmem>>, vector<16x32xbf16>
    tpu.vector_store %arg8[%c121, %c0_10], %22 {strides = array<i32>} : memref<432x32xbf16, #tpu.memory_space<vmem>>, vector<16x32xbf16>,
    %24 = vector.extract_strided_slice %13 {offsets = [80, 0], sizes = [16, 32], strides = [1, 1]} : vector<256x32xbf16> to vector<16x32xbf16>
    %c145 = arith.constant 145 : index
    %c0_11 = arith.constant 0 : index
    %25 = vector.load %arg8[%c145, %c0_11] : memref<432x32xbf16, #tpu.memory_space<vmem>>, vector<16x32xbf16>
    tpu.vector_store %arg8[%c145, %c0_11], %24 {strides = array<i32>} : memref<432x32xbf16, #tpu.memory_space<vmem>>, vector<16x32xbf16>,
    %26 = vector.extract_strided_slice %13 {offsets = [96, 0], sizes = [16, 32], strides = [1, 1]} : vector<256x32xbf16> to vector<16x32xbf16>
    %c169 = arith.constant 169 : index
    %c0_12 = arith.constant 0 : index
    %27 = vector.load %arg8[%c169, %c0_12] : memref<432x32xbf16, #tpu.memory_space<vmem>>, vector<16x32xbf16>
    tpu.vector_store %arg8[%c169, %c0_12], %26 {strides = array<i32>} : memref<432x32xbf16, #tpu.memory_space<vmem>>, vector<16x32xbf16>,
    %28 = vector.extract_strided_slice %13 {offsets = [112, 0], sizes = [16, 32], strides = [1, 1]} : vector<256x32xbf16> to vector<16x32xbf16>
    %c193 = arith.constant 193 : index
    %c0_13 = arith.constant 0 : index
    %29 = vector.load %arg8[%c193, %c0_13] : memref<432x32xbf16, #tpu.memory_space<vmem>>, vector<16x32xbf16>
    tpu.vector_store %arg8[%c193, %c0_13], %28 {strides = array<i32>} : memref<432x32xbf16, #tpu.memory_space<vmem>>, vector<16x32xbf16>,
    %30 = vector.extract_strided_slice %13 {offsets = [128, 0], sizes = [16, 32], strides = [1, 1]} : vector<256x32xbf16> to vector<16x32xbf16>
    %c217 = arith.constant 217 : index
    %c0_14 = arith.constant 0 : index
    %31 = vector.load %arg8[%c217, %c0_14] : memref<432x32xbf16, #tpu.memory_space<vmem>>, vector<16x32xbf16>
    tpu.vector_store %arg8[%c217, %c0_14], %30 {strides = array<i32>} : memref<432x32xbf16, #tpu.memory_space<vmem>>, vector<16x32xbf16>,
    %32 = vector.extract_strided_slice %13 {offsets = [144, 0], sizes = [16, 32], strides = [1, 1]} : vector<256x32xbf16> to vector<16x32xbf16>
    %c241 = arith.constant 241 : index
    %c0_15 = arith.constant 0 : index
    %33 = vector.load %arg8[%c241, %c0_15] : memref<432x32xbf16, #tpu.memory_space<vmem>>, vector<16x32xbf16>
    tpu.vector_store %arg8[%c241, %c0_15], %32 {strides = array<i32>} : memref<432x32xbf16, #tpu.memory_space<vmem>>, vector<16x32xbf16>,
    %34 = vector.extract_strided_slice %13 {offsets = [160, 0], sizes = [16, 32], strides = [1, 1]} : vector<256x32xbf16> to vector<16x32xbf16>
    %c265 = arith.constant 265 : index
    %c0_16 = arith.constant 0 : index
    %35 = vector.load %arg8[%c265, %c0_16] : memref<432x32xbf16, #tpu.memory_space<vmem>>, vector<16x32xbf16>
    tpu.vector_store %arg8[%c265, %c0_16], %34 {strides = array<i32>} : memref<432x32xbf16, #tpu.memory_space<vmem>>, vector<16x32xbf16>,
    %36 = vector.extract_strided_slice %13 {offsets = [176, 0], sizes = [16, 32], strides = [1, 1]} : vector<256x32xbf16> to vector<16x32xbf16>
    %c289 = arith.constant 289 : index
    %c0_17 = arith.constant 0 : index
    %37 = vector.load %arg8[%c289, %c0_17] : memref<432x32xbf16, #tpu.memory_space<vmem>>, vector<16x32xbf16>
    tpu.vector_store %arg8[%c289, %c0_17], %36 {strides = array<i32>} : memref<432x32xbf16, #tpu.memory_space<vmem>>, vector<16x32xbf16>,
    %38 = vector.extract_strided_slice %13 {offsets = [192, 0], sizes = [16, 32], strides = [1, 1]} : vector<256x32xbf16> to vector<16x32xbf16>
    %c313 = arith.constant 313 : index
    %c0_18 = arith.constant 0 : index
    %39 = vector.load %arg8[%c313, %c0_18] : memref<432x32xbf16, #tpu.memory_space<vmem>>, vector<16x32xbf16>
    tpu.vector_store %arg8[%c313, %c0_18], %38 {strides = array<i32>} : memref<432x32xbf16, #tpu.memory_space<vmem>>, vector<16x32xbf16>,
    %40 = vector.extract_strided_slice %13 {offsets = [208, 0], sizes = [16, 32], strides = [1, 1]} : vector<256x32xbf16> to vector<16x32xbf16>
    %c337 = arith.constant 337 : index
    %c0_19 = arith.constant 0 : index
    %41 = vector.load %arg8[%c337, %c0_19] : memref<432x32xbf16, #tpu.memory_space<vmem>>, vector<16x32xbf16>
    tpu.vector_store %arg8[%c337, %c0_19], %40 {strides = array<i32>} : memref<432x32xbf16, #tpu.memory_space<vmem>>, vector<16x32xbf16>,
    %42 = vector.extract_strided_slice %13 {offsets = [224, 0], sizes = [16, 32], strides = [1, 1]} : vector<256x32xbf16> to vector<16x32xbf16>
    %c361 = arith.constant 361 : index
    %c0_20 = arith.constant 0 : index
    %43 = vector.load %arg8[%c361, %c0_20] : memref<432x32xbf16, #tpu.memory_space<vmem>>, vector<16x32xbf16>
    tpu.vector_store %arg8[%c361, %c0_20], %42 {strides = array<i32>} : memref<432x32xbf16, #tpu.memory_space<vmem>>, vector<16x32xbf16>,
    %44 = vector.extract_strided_slice %13 {offsets = [240, 0], sizes = [16, 32], strides = [1, 1]} : vector<256x32xbf16> to vector<16x32xbf16>
    %c385 = arith.constant 385 : index
    %c0_21 = arith.constant 0 : index
    %45 = vector.load %arg8[%c385, %c0_21] : memref<432x32xbf16, #tpu.memory_space<vmem>>, vector<16x32xbf16>
    tpu.vector_store %arg8[%c385, %c0_21], %44 {strides = array<i32>} : memref<432x32xbf16, #tpu.memory_space<vmem>>, vector<16x32xbf16>,
    %c0_22 = arith.constant 0 : index
    %c0_23 = arith.constant 0 : index
    %46 = vector.load %arg8[%c0_22, %c0_23] : memref<432x32xbf16, #tpu.memory_space<vmem>>, vector<16x32xbf16>
    %c0_24 = arith.constant 0 : index
    %c0_25 = arith.constant 0 : index
    %47 = vector.load %arg9[%c0_24, %c0_25] : memref<256x288xbf16, #tpu.memory_space<vmem>>, vector<16x32xbf16>
    tpu.vector_store %arg9[%c0_24, %c0_25], %46 {strides = array<i32>} : memref<256x288xbf16, #tpu.memory_space<vmem>>, vector<16x32xbf16>,
    %c24 = arith.constant 24 : index
    %c0_26 = arith.constant 0 : index
    %48 = vector.load %arg8[%c24, %c0_26] : memref<432x32xbf16, #tpu.memory_space<vmem>>, vector<16x32xbf16>
    %c16 = arith.constant 16 : index
    %c0_27 = arith.constant 0 : index
    %49 = vector.load %arg9[%c16, %c0_27] : memref<256x288xbf16, #tpu.memory_space<vmem>>, vector<16x32xbf16>
    tpu.vector_store %arg9[%c16, %c0_27], %48 {strides = array<i32>} : memref<256x288xbf16, #tpu.memory_space<vmem>>, vector<16x32xbf16>,
    %c48 = arith.constant 48 : index
    %c0_28 = arith.constant 0 : index
    %50 = vector.load %arg8[%c48, %c0_28] : memref<432x32xbf16, #tpu.memory_space<vmem>>, vector<16x32xbf16>
    %c32 = arith.constant 32 : index
    %c0_29 = arith.constant 0 : index
    %51 = vector.load %arg9[%c32, %c0_29] : memref<256x288xbf16, #tpu.memory_space<vmem>>, vector<16x32xbf16>
    tpu.vector_store %arg9[%c32, %c0_29], %50 {strides = array<i32>} : memref<256x288xbf16, #tpu.memory_space<vmem>>, vector<16x32xbf16>,
    %c72 = arith.constant 72 : index
    %c0_30 = arith.constant 0 : index
    %52 = vector.load %arg8[%c72, %c0_30] : memref<432x32xbf16, #tpu.memory_space<vmem>>, vector<16x32xbf16>
    %c48_31 = arith.constant 48 : index
    %c0_32 = arith.constant 0 : index
    %53 = vector.load %arg9[%c48_31, %c0_32] : memref<256x288xbf16, #tpu.memory_space<vmem>>, vector<16x32xbf16>
    tpu.vector_store %arg9[%c48_31, %c0_32], %52 {strides = array<i32>} : memref<256x288xbf16, #tpu.memory_space<vmem>>, vector<16x32xbf16>,
    %c96 = arith.constant 96 : index
    %c0_33 = arith.constant 0 : index
    %54 = vector.load %arg8[%c96, %c0_33] : memref<432x32xbf16, #tpu.memory_space<vmem>>, vector<16x32xbf16>
    %c64 = arith.constant 64 : index
    %c0_34 = arith.constant 0 : index
    %55 = vector.load %arg9[%c64, %c0_34] : memref<256x288xbf16, #tpu.memory_space<vmem>>, vector<16x32xbf16>
    tpu.vector_store %arg9[%c64, %c0_34], %54 {strides = array<i32>} : memref<256x288xbf16, #tpu.memory_space<vmem>>, vector<16x32xbf16>,
    %c120 = arith.constant 120 : index
    %c0_35 = arith.constant 0 : index
    %56 = vector.load %arg8[%c120, %c0_35] : memref<432x32xbf16, #tpu.memory_space<vmem>>, vector<16x32xbf16>
    %c80 = arith.constant 80 : index
    %c0_36 = arith.constant 0 : index
    %57 = vector.load %arg9[%c80, %c0_36] : memref<256x288xbf16, #tpu.memory_space<vmem>>, vector<16x32xbf16>
    tpu.vector_store %arg9[%c80, %c0_36], %56 {strides = array<i32>} : memref<256x288xbf16, #tpu.memory_space<vmem>>, vector<16x32xbf16>,
    %c144 = arith.constant 144 : index
    %c0_37 = arith.constant 0 : index
    %58 = vector.load %arg8[%c144, %c0_37] : memref<432x32xbf16, #tpu.memory_space<vmem>>, vector<16x32xbf16>
    %c96_38 = arith.constant 96 : index
    %c0_39 = arith.constant 0 : index
    %59 = vector.load %arg9[%c96_38, %c0_39] : memref<256x288xbf16, #tpu.memory_space<vmem>>, vector<16x32xbf16>
    tpu.vector_store %arg9[%c96_38, %c0_39], %58 {strides = array<i32>} : memref<256x288xbf16, #tpu.memory_space<vmem>>, vector<16x32xbf16>,
    %c168 = arith.constant 168 : index
    %c0_40 = arith.constant 0 : index
    %60 = vector.load %arg8[%c168, %c0_40] : memref<432x32xbf16, #tpu.memory_space<vmem>>, vector<16x32xbf16>
    %c112 = arith.constant 112 : index
    %c0_41 = arith.constant 0 : index
    %61 = vector.load %arg9[%c112, %c0_41] : memref<256x288xbf16, #tpu.memory_space<vmem>>, vector<16x32xbf16>
    tpu.vector_store %arg9[%c112, %c0_41], %60 {strides = array<i32>} : memref<256x288xbf16, #tpu.memory_space<vmem>>, vector<16x32xbf16>,
    %c192 = arith.constant 192 : index
    %c0_42 = arith.constant 0 : index
    %62 = vector.load %arg8[%c192, %c0_42] : memref<432x32xbf16, #tpu.memory_space<vmem>>, vector<16x32xbf16>
    %c128 = arith.constant 128 : index
    %c0_43 = arith.constant 0 : index
    %63 = vector.load %arg9[%c128, %c0_43] : memref<256x288xbf16, #tpu.memory_space<vmem>>, vector<16x32xbf16>
    tpu.vector_store %arg9[%c128, %c0_43], %62 {strides = array<i32>} : memref<256x288xbf16, #tpu.memory_space<vmem>>, vector<16x32xbf16>,
    %c216 = arith.constant 216 : index
    %c0_44 = arith.constant 0 : index
    %64 = vector.load %arg8[%c216, %c0_44] : memref<432x32xbf16, #tpu.memory_space<vmem>>, vector<16x32xbf16>
    %c144_45 = arith.constant 144 : index
    %c0_46 = arith.constant 0 : index
    %65 = vector.load %arg9[%c144_45, %c0_46] : memref<256x288xbf16, #tpu.memory_space<vmem>>, vector<16x32xbf16>
    tpu.vector_store %arg9[%c144_45, %c0_46], %64 {strides = array<i32>} : memref<256x288xbf16, #tpu.memory_space<vmem>>, vector<16x32xbf16>,
    %c240 = arith.constant 240 : index
    %c0_47 = arith.constant 0 : index
    %66 = vector.load %arg8[%c240, %c0_47] : memref<432x32xbf16, #tpu.memory_space<vmem>>, vector<16x32xbf16>
    %c160 = arith.constant 160 : index
    %c0_48 = arith.constant 0 : index
    %67 = vector.load %arg9[%c160, %c0_48] : memref<256x288xbf16, #tpu.memory_space<vmem>>, vector<16x32xbf16>
    tpu.vector_store %arg9[%c160, %c0_48], %66 {strides = array<i32>} : memref<256x288xbf16, #tpu.memory_space<vmem>>, vector<16x32xbf16>,
    %c264 = arith.constant 264 : index
    %c0_49 = arith.constant 0 : index
    %68 = vector.load %arg8[%c264, %c0_49] : memref<432x32xbf16, #tpu.memory_space<vmem>>, vector<16x32xbf16>
    %c176 = arith.constant 176 : index
    %c0_50 = arith.constant 0 : index
    %69 = vector.load %arg9[%c176, %c0_50] : memref<256x288xbf16, #tpu.memory_space<vmem>>, vector<16x32xbf16>
    tpu.vector_store %arg9[%c176, %c0_50], %68 {strides = array<i32>} : memref<256x288xbf16, #tpu.memory_space<vmem>>, vector<16x32xbf16>,
    %c288 = arith.constant 288 : index
    %c0_51 = arith.constant 0 : index
    %70 = vector.load %arg8[%c288, %c0_51] : memref<432x32xbf16, #tpu.memory_space<vmem>>, vector<16x32xbf16>
    %c192_52 = arith.constant 192 : index
    %c0_53 = arith.constant 0 : index
    %71 = vector.load %arg9[%c192_52, %c0_53] : memref<256x288xbf16, #tpu.memory_space<vmem>>, vector<16x32xbf16>
    tpu.vector_store %arg9[%c192_52, %c0_53], %70 {strides = array<i32>} : memref<256x288xbf16, #tpu.memory_space<vmem>>, vector<16x32xbf16>,
    %c312 = arith.constant 312 : index
    %c0_54 = arith.constant 0 : index
    %72 = vector.load %arg8[%c312, %c0_54] : memref<432x32xbf16, #tpu.memory_space<vmem>>, vector<16x32xbf16>
    %c208 = arith.constant 208 : index
    %c0_55 = arith.constant 0 : index
    %73 = vector.load %arg9[%c208, %c0_55] : memref<256x288xbf16, #tpu.memory_space<vmem>>, vector<16x32xbf16>
    tpu.vector_store %arg9[%c208, %c0_55], %72 {strides = array<i32>} : memref<256x288xbf16, #tpu.memory_space<vmem>>, vector<16x32xbf16>,
    %c336 = arith.constant 336 : index
    %c0_56 = arith.constant 0 : index
    %74 = vector.load %arg8[%c336, %c0_56] : memref<432x32xbf16, #tpu.memory_space<vmem>>, vector<16x32xbf16>
    %c224 = arith.constant 224 : index
    %c0_57 = arith.constant 0 : index
    %75 = vector.load %arg9[%c224, %c0_57] : memref<256x288xbf16, #tpu.memory_space<vmem>>, vector<16x32xbf16>
    tpu.vector_store %arg9[%c224, %c0_57], %74 {strides = array<i32>} : memref<256x288xbf16, #tpu.memory_space<vmem>>, vector<16x32xbf16>,
    %c360 = arith.constant 360 : index
    %c0_58 = arith.constant 0 : index
    %76 = vector.load %arg8[%c360, %c0_58] : memref<432x32xbf16, #tpu.memory_space<vmem>>, vector<16x32xbf16>
    %c240_59 = arith.constant 240 : index
    %c0_60 = arith.constant 0 : index
    %77 = vector.load %arg9[%c240_59, %c0_60] : memref<256x288xbf16, #tpu.memory_space<vmem>>, vector<16x32xbf16>
    tpu.vector_store %arg9[%c240_59, %c0_60], %76 {strides = array<i32>} : memref<256x288xbf16, #tpu.memory_space<vmem>>, vector<16x32xbf16>,
    %c1 = arith.constant 1 : index
    %c0_61 = arith.constant 0 : index
    %78 = vector.load %arg8[%c1, %c0_61] : memref<432x32xbf16, #tpu.memory_space<vmem>>, vector<16x32xbf16>
    %c0_62 = arith.constant 0 : index
    %c32_63 = arith.constant 32 : index
    %79 = vector.load %arg9[%c0_62, %c32_63] : memref<256x288xbf16, #tpu.memory_space<vmem>>, vector<16x32xbf16>
    tpu.vector_store %arg9[%c0_62, %c32_63], %78 {strides = array<i32>} : memref<256x288xbf16, #tpu.memory_space<vmem>>, vector<16x32xbf16>,
    %c25_64 = arith.constant 25 : index
    %c0_65 = arith.constant 0 : index
    %80 = vector.load %arg8[%c25_64, %c0_65] : memref<432x32xbf16, #tpu.memory_space<vmem>>, vector<16x32xbf16>
    %c16_66 = arith.constant 16 : index
    %c32_67 = arith.constant 32 : index
    %81 = vector.load %arg9[%c16_66, %c32_67] : memref<256x288xbf16, #tpu.memory_space<vmem>>, vector<16x32xbf16>
    tpu.vector_store %arg9[%c16_66, %c32_67], %80 {strides = array<i32>} : memref<256x288xbf16, #tpu.memory_space<vmem>>, vector<16x32xbf16>,
    %c49_68 = arith.constant 49 : index
    %c0_69 = arith.constant 0 : index
    %82 = vector.load %arg8[%c49_68, %c0_69] : memref<432x32xbf16, #tpu.memory_space<vmem>>, vector<16x32xbf16>
    %c32_70 = arith.constant 32 : index
    %c32_71 = arith.constant 32 : index
    %83 = vector.load %arg9[%c32_70, %c32_71] : memref<256x288xbf16, #tpu.memory_space<vmem>>, vector<16x32xbf16>
    tpu.vector_store %arg9[%c32_70, %c32_71], %82 {strides = array<i32>} : memref<256x288xbf16, #tpu.memory_space<vmem>>, vector<16x32xbf16>,
    %c73_72 = arith.constant 73 : index
    %c0_73 = arith.constant 0 : index
    %84 = vector.load %arg8[%c73_72, %c0_73] : memref<432x32xbf16, #tpu.memory_space<vmem>>, vector<16x32xbf16>
    %c48_74 = arith.constant 48 : index
    %c32_75 = arith.constant 32 : index
    %85 = vector.load %arg9[%c48_74, %c32_75] : memref<256x288xbf16, #tpu.memory_space<vmem>>, vector<16x32xbf16>
    tpu.vector_store %arg9[%c48_74, %c32_75], %84 {strides = array<i32>} : memref<256x288xbf16, #tpu.memory_space<vmem>>, vector<16x32xbf16>,
    %c97_76 = arith.constant 97 : index
    %c0_77 = arith.constant 0 : index
    %86 = vector.load %arg8[%c97_76, %c0_77] : memref<432x32xbf16, #tpu.memory_space<vmem>>, vector<16x32xbf16>
    %c64_78 = arith.constant 64 : index
    %c32_79 = arith.constant 32 : index
    %87 = vector.load %arg9[%c64_78, %c32_79] : memref<256x288xbf16, #tpu.memory_space<vmem>>, vector<16x32xbf16>
    tpu.vector_store %arg9[%c64_78, %c32_79], %86 {strides = array<i32>} : memref<256x288xbf16, #tpu.memory_space<vmem>>, vector<16x32xbf16>,
    %c121_80 = arith.constant 121 : index
    %c0_81 = arith.constant 0 : index
    %88 = vector.load %arg8[%c121_80, %c0_81] : memref<432x32xbf16, #tpu.memory_space<vmem>>, vector<16x32xbf16>
    %c80_82 = arith.constant 80 : index
    %c32_83 = arith.constant 32 : index
    %89 = vector.load %arg9[%c80_82, %c32_83] : memref<256x288xbf16, #tpu.memory_space<vmem>>, vector<16x32xbf16>
    tpu.vector_store %arg9[%c80_82, %c32_83], %88 {strides = array<i32>} : memref<256x288xbf16, #tpu.memory_space<vmem>>, vector<16x32xbf16>,
    %c145_84 = arith.constant 145 : index
    %c0_85 = arith.constant 0 : index
    %90 = vector.load %arg8[%c145_84, %c0_85] : memref<432x32xbf16, #tpu.memory_space<vmem>>, vector<16x32xbf16>
    %c96_86 = arith.constant 96 : index
    %c32_87 = arith.constant 32 : index
    %91 = vector.load %arg9[%c96_86, %c32_87] : memref<256x288xbf16, #tpu.memory_space<vmem>>, vector<16x32xbf16>
    tpu.vector_store %arg9[%c96_86, %c32_87], %90 {strides = array<i32>} : memref<256x288xbf16, #tpu.memory_space<vmem>>, vector<16x32xbf16>,
    %c169_88 = arith.constant 169 : index
    %c0_89 = arith.constant 0 : index
    %92 = vector.load %arg8[%c169_88, %c0_89] : memref<432x32xbf16, #tpu.memory_space<vmem>>, vector<16x32xbf16>
    %c112_90 = arith.constant 112 : index
    %c32_91 = arith.constant 32 : index
    %93 = vector.load %arg9[%c112_90, %c32_91] : memref<256x288xbf16, #tpu.memory_space<vmem>>, vector<16x32xbf16>
    tpu.vector_store %arg9[%c112_90, %c32_91], %92 {strides = array<i32>} : memref<256x288xbf16, #tpu.memory_space<vmem>>, vector<16x32xbf16>,
    %c193_92 = arith.constant 193 : index
    %c0_93 = arith.constant 0 : index
    %94 = vector.load %arg8[%c193_92, %c0_93] : memref<432x32xbf16, #tpu.memory_space<vmem>>, vector<16x32xbf16>
    %c128_94 = arith.constant 128 : index
    %c32_95 = arith.constant 32 : index
    %95 = vector.load %arg9[%c128_94, %c32_95] : memref<256x288xbf16, #tpu.memory_space<vmem>>, vector<16x32xbf16>
    tpu.vector_store %arg9[%c128_94, %c32_95], %94 {strides = array<i32>} : memref<256x288xbf16, #tpu.memory_space<vmem>>, vector<16x32xbf16>,
    %c217_96 = arith.constant 217 : index
    %c0_97 = arith.constant 0 : index
    %96 = vector.load %arg8[%c217_96, %c0_97] : memref<432x32xbf16, #tpu.memory_space<vmem>>, vector<16x32xbf16>
    %c144_98 = arith.constant 144 : index
    %c32_99 = arith.constant 32 : index
    %97 = vector.load %arg9[%c144_98, %c32_99] : memref<256x288xbf16, #tpu.memory_space<vmem>>, vector<16x32xbf16>
    tpu.vector_store %arg9[%c144_98, %c32_99], %96 {strides = array<i32>} : memref<256x288xbf16, #tpu.memory_space<vmem>>, vector<16x32xbf16>,
    %c241_100 = arith.constant 241 : index
    %c0_101 = arith.constant 0 : index
    %98 = vector.load %arg8[%c241_100, %c0_101] : memref<432x32xbf16, #tpu.memory_space<vmem>>, vector<16x32xbf16>
    %c160_102 = arith.constant 160 : index
    %c32_103 = arith.constant 32 : index
    %99 = vector.load %arg9[%c160_102, %c32_103] : memref<256x288xbf16, #tpu.memory_space<vmem>>, vector<16x32xbf16>
    tpu.vector_store %arg9[%c160_102, %c32_103], %98 {strides = array<i32>} : memref<256x288xbf16, #tpu.memory_space<vmem>>, vector<16x32xbf16>,
    %c265_104 = arith.constant 265 : index
    %c0_105 = arith.constant 0 : index
    %100 = vector.load %arg8[%c265_104, %c0_105] : memref<432x32xbf16, #tpu.memory_space<vmem>>, vector<16x32xbf16>
    %c176_106 = arith.constant 176 : index
    %c32_107 = arith.constant 32 : index
    %101 = vector.load %arg9[%c176_106, %c32_107] : memref<256x288xbf16, #tpu.memory_space<vmem>>, vector<16x32xbf16>
    tpu.vector_store %arg9[%c176_106, %c32_107], %100 {strides = array<i32>} : memref<256x288xbf16, #tpu.memory_space<vmem>>, vector<16x32xbf16>,
    %c289_108 = arith.constant 289 : index
    %c0_109 = arith.constant 0 : index
    %102 = vector.load %arg8[%c289_108, %c0_109] : memref<432x32xbf16, #tpu.memory_space<vmem>>, vector<16x32xbf16>
    %c192_110 = arith.constant 192 : index
    %c32_111 = arith.constant 32 : index
    %103 = vector.load %arg9[%c192_110, %c32_111] : memref<256x288xbf16, #tpu.memory_space<vmem>>, vector<16x32xbf16>
    tpu.vector_store %arg9[%c192_110, %c32_111], %102 {strides = array<i32>} : memref<256x288xbf16, #tpu.memory_space<vmem>>, vector<16x32xbf16>,
    %c313_112 = arith.constant 313 : index
    %c0_113 = arith.constant 0 : index
    %104 = vector.load %arg8[%c313_112, %c0_113] : memref<432x32xbf16, #tpu.memory_space<vmem>>, vector<16x32xbf16>
    %c208_114 = arith.constant 208 : index
    %c32_115 = arith.constant 32 : index
    %105 = vector.load %arg9[%c208_114, %c32_115] : memref<256x288xbf16, #tpu.memory_space<vmem>>, vector<16x32xbf16>
    tpu.vector_store %arg9[%c208_114, %c32_115], %104 {strides = array<i32>} : memref<256x288xbf16, #tpu.memory_space<vmem>>, vector<16x32xbf16>,
    %c337_116 = arith.constant 337 : index
    %c0_117 = arith.constant 0 : index
    %106 = vector.load %arg8[%c337_116, %c0_117] : memref<432x32xbf16, #tpu.memory_space<vmem>>, vector<16x32xbf16>
    %c224_118 = arith.constant 224 : index
    %c32_119 = arith.constant 32 : index
    %107 = vector.load %arg9[%c224_118, %c32_119] : memref<256x288xbf16, #tpu.memory_space<vmem>>, vector<16x32xbf16>
    tpu.vector_store %arg9[%c224_118, %c32_119], %106 {strides = array<i32>} : memref<256x288xbf16, #tpu.memory_space<vmem>>, vector<16x32xbf16>,
    %c361_120 = arith.constant 361 : index
    %c0_121 = arith.constant 0 : index
    %108 = vector.load %arg8[%c361_120, %c0_121] : memref<432x32xbf16, #tpu.memory_space<vmem>>, vector<16x32xbf16>
    %c240_122 = arith.constant 240 : index
    %c32_123 = arith.constant 32 : index
    %109 = vector.load %arg9[%c240_122, %c32_123] : memref<256x288xbf16, #tpu.memory_space<vmem>>, vector<16x32xbf16>
    tpu.vector_store %arg9[%c240_122, %c32_123], %108 {strides = array<i32>} : memref<256x288xbf16, #tpu.memory_space<vmem>>, vector<16x32xbf16>,
    %c2 = arith.constant 2 : index
    %c0_124 = arith.constant 0 : index
    %110 = vector.load %arg8[%c2, %c0_124] : memref<432x32xbf16, #tpu.memory_space<vmem>>, vector<16x32xbf16>
    %c0_125 = arith.constant 0 : index
    %c64_126 = arith.constant 64 : index
    %111 = vector.load %arg9[%c0_125, %c64_126] : memref<256x288xbf16, #tpu.memory_space<vmem>>, vector<16x32xbf16>
    tpu.vector_store %arg9[%c0_125, %c64_126], %110 {strides = array<i32>} : memref<256x288xbf16, #tpu.memory_space<vmem>>, vector<16x32xbf16>,
    %c26 = arith.constant 26 : index
    %c0_127 = arith.constant 0 : index
    %112 = vector.load %arg8[%c26, %c0_127] : memref<432x32xbf16, #tpu.memory_space<vmem>>, vector<16x32xbf16>
    %c16_128 = arith.constant 16 : index
    %c64_129 = arith.constant 64 : index
    %113 = vector.load %arg9[%c16_128, %c64_129] : memref<256x288xbf16, #tpu.memory_space<vmem>>, vector<16x32xbf16>
    tpu.vector_store %arg9[%c16_128, %c64_129], %112 {strides = array<i32>} : memref<256x288xbf16, #tpu.memory_space<vmem>>, vector<16x32xbf16>,
    %c50 = arith.constant 50 : index
    %c0_130 = arith.constant 0 : index
    %114 = vector.load %arg8[%c50, %c0_130] : memref<432x32xbf16, #tpu.memory_space<vmem>>, vector<16x32xbf16>
    %c32_131 = arith.constant 32 : index
    %c64_132 = arith.constant 64 : index
    %115 = vector.load %arg9[%c32_131, %c64_132] : memref<256x288xbf16, #tpu.memory_space<vmem>>, vector<16x32xbf16>
    tpu.vector_store %arg9[%c32_131, %c64_132], %114 {strides = array<i32>} : memref<256x288xbf16, #tpu.memory_space<vmem>>, vector<16x32xbf16>,
    %c74 = arith.constant 74 : index
    %c0_133 = arith.constant 0 : index
    %116 = vector.load %arg8[%c74, %c0_133] : memref<432x32xbf16, #tpu.memory_space<vmem>>, vector<16x32xbf16>
    %c48_134 = arith.constant 48 : index
    %c64_135 = arith.constant 64 : index
    %117 = vector.load %arg9[%c48_134, %c64_135] : memref<256x288xbf16, #tpu.memory_space<vmem>>, vector<16x32xbf16>
    tpu.vector_store %arg9[%c48_134, %c64_135], %116 {strides = array<i32>} : memref<256x288xbf16, #tpu.memory_space<vmem>>, vector<16x32xbf16>,
    %c98 = arith.constant 98 : index
    %c0_136 = arith.constant 0 : index
    %118 = vector.load %arg8[%c98, %c0_136] : memref<432x32xbf16, #tpu.memory_space<vmem>>, vector<16x32xbf16>
    %c64_137 = arith.constant 64 : index
    %c64_138 = arith.constant 64 : index
    %119 = vector.load %arg9[%c64_137, %c64_138] : memref<256x288xbf16, #tpu.memory_space<vmem>>, vector<16x32xbf16>
    tpu.vector_store %arg9[%c64_137, %c64_138], %118 {strides = array<i32>} : memref<256x288xbf16, #tpu.memory_space<vmem>>, vector<16x32xbf16>,
    %c122 = arith.constant 122 : index
    %c0_139 = arith.constant 0 : index
    %120 = vector.load %arg8[%c122, %c0_139] : memref<432x32xbf16, #tpu.memory_space<vmem>>, vector<16x32xbf16>
    %c80_140 = arith.constant 80 : index
    %c64_141 = arith.constant 64 : index
    %121 = vector.load %arg9[%c80_140, %c64_141] : memref<256x288xbf16, #tpu.memory_space<vmem>>, vector<16x32xbf16>
    tpu.vector_store %arg9[%c80_140, %c64_141], %120 {strides = array<i32>} : memref<256x288xbf16, #tpu.memory_space<vmem>>, vector<16x32xbf16>,
    %c146 = arith.constant 146 : index
    %c0_142 = arith.constant 0 : index
    %122 = vector.load %arg8[%c146, %c0_142] : memref<432x32xbf16, #tpu.memory_space<vmem>>, vector<16x32xbf16>
    %c96_143 = arith.constant 96 : index
    %c64_144 = arith.constant 64 : index
    %123 = vector.load %arg9[%c96_143, %c64_144] : memref<256x288xbf16, #tpu.memory_space<vmem>>, vector<16x32xbf16>
    tpu.vector_store %arg9[%c96_143, %c64_144], %122 {strides = array<i32>} : memref<256x288xbf16, #tpu.memory_space<vmem>>, vector<16x32xbf16>,
    %c170 = arith.constant 170 : index
    %c0_145 = arith.constant 0 : index
    %124 = vector.load %arg8[%c170, %c0_145] : memref<432x32xbf16, #tpu.memory_space<vmem>>, vector<16x32xbf16>
    %c112_146 = arith.constant 112 : index
    %c64_147 = arith.constant 64 : index
    %125 = vector.load %arg9[%c112_146, %c64_147] : memref<256x288xbf16, #tpu.memory_space<vmem>>, vector<16x32xbf16>
    tpu.vector_store %arg9[%c112_146, %c64_147], %124 {strides = array<i32>} : memref<256x288xbf16, #tpu.memory_space<vmem>>, vector<16x32xbf16>,
    %c194 = arith.constant 194 : index
    %c0_148 = arith.constant 0 : index
    %126 = vector.load %arg8[%c194, %c0_148] : memref<432x32xbf16, #tpu.memory_space<vmem>>, vector<16x32xbf16>
    %c128_149 = arith.constant 128 : index
    %c64_150 = arith.constant 64 : index
    %127 = vector.load %arg9[%c128_149, %c64_150] : memref<256x288xbf16, #tpu.memory_space<vmem>>, vector<16x32xbf16>
    tpu.vector_store %arg9[%c128_149, %c64_150], %126 {strides = array<i32>} : memref<256x288xbf16, #tpu.memory_space<vmem>>, vector<16x32xbf16>,
    %c218 = arith.constant 218 : index
    %c0_151 = arith.constant 0 : index
    %128 = vector.load %arg8[%c218, %c0_151] : memref<432x32xbf16, #tpu.memory_space<vmem>>, vector<16x32xbf16>
    %c144_152 = arith.constant 144 : index
    %c64_153 = arith.constant 64 : index
    %129 = vector.load %arg9[%c144_152, %c64_153] : memref<256x288xbf16, #tpu.memory_space<vmem>>, vector<16x32xbf16>
    tpu.vector_store %arg9[%c144_152, %c64_153], %128 {strides = array<i32>} : memref<256x288xbf16, #tpu.memory_space<vmem>>, vector<16x32xbf16>,
    %c242 = arith.constant 242 : index
    %c0_154 = arith.constant 0 : index
    %130 = vector.load %arg8[%c242, %c0_154] : memref<432x32xbf16, #tpu.memory_space<vmem>>, vector<16x32xbf16>
    %c160_155 = arith.constant 160 : index
    %c64_156 = arith.constant 64 : index
    %131 = vector.load %arg9[%c160_155, %c64_156] : memref<256x288xbf16, #tpu.memory_space<vmem>>, vector<16x32xbf16>
    tpu.vector_store %arg9[%c160_155, %c64_156], %130 {strides = array<i32>} : memref<256x288xbf16, #tpu.memory_space<vmem>>, vector<16x32xbf16>,
    %c266 = arith.constant 266 : index
    %c0_157 = arith.constant 0 : index
    %132 = vector.load %arg8[%c266, %c0_157] : memref<432x32xbf16, #tpu.memory_space<vmem>>, vector<16x32xbf16>
    %c176_158 = arith.constant 176 : index
    %c64_159 = arith.constant 64 : index
    %133 = vector.load %arg9[%c176_158, %c64_159] : memref<256x288xbf16, #tpu.memory_space<vmem>>, vector<16x32xbf16>
    tpu.vector_store %arg9[%c176_158, %c64_159], %132 {strides = array<i32>} : memref<256x288xbf16, #tpu.memory_space<vmem>>, vector<16x32xbf16>,
    %c290 = arith.constant 290 : index
    %c0_160 = arith.constant 0 : index
    %134 = vector.load %arg8[%c290, %c0_160] : memref<432x32xbf16, #tpu.memory_space<vmem>>, vector<16x32xbf16>
    %c192_161 = arith.constant 192 : index
    %c64_162 = arith.constant 64 : index
    %135 = vector.load %arg9[%c192_161, %c64_162] : memref<256x288xbf16, #tpu.memory_space<vmem>>, vector<16x32xbf16>
    tpu.vector_store %arg9[%c192_161, %c64_162], %134 {strides = array<i32>} : memref<256x288xbf16, #tpu.memory_space<vmem>>, vector<16x32xbf16>,
    %c314 = arith.constant 314 : index
    %c0_163 = arith.constant 0 : index
    %136 = vector.load %arg8[%c314, %c0_163] : memref<432x32xbf16, #tpu.memory_space<vmem>>, vector<16x32xbf16>
    %c208_164 = arith.constant 208 : index
    %c64_165 = arith.constant 64 : index
    %137 = vector.load %arg9[%c208_164, %c64_165] : memref<256x288xbf16, #tpu.memory_space<vmem>>, vector<16x32xbf16>
    tpu.vector_store %arg9[%c208_164, %c64_165], %136 {strides = array<i32>} : memref<256x288xbf16, #tpu.memory_space<vmem>>, vector<16x32xbf16>,
    %c338 = arith.constant 338 : index
    %c0_166 = arith.constant 0 : index
    %138 = vector.load %arg8[%c338, %c0_166] : memref<432x32xbf16, #tpu.memory_space<vmem>>, vector<16x32xbf16>
    %c224_167 = arith.constant 224 : index
    %c64_168 = arith.constant 64 : index
    %139 = vector.load %arg9[%c224_167, %c64_168] : memref<256x288xbf16, #tpu.memory_space<vmem>>, vector<16x32xbf16>
    tpu.vector_store %arg9[%c224_167, %c64_168], %138 {strides = array<i32>} : memref<256x288xbf16, #tpu.memory_space<vmem>>, vector<16x32xbf16>,
    %c362 = arith.constant 362 : index
    %c0_169 = arith.constant 0 : index
    %140 = vector.load %arg8[%c362, %c0_169] : memref<432x32xbf16, #tpu.memory_space<vmem>>, vector<16x32xbf16>
    %c240_170 = arith.constant 240 : index
    %c64_171 = arith.constant 64 : index
    %141 = vector.load %arg9[%c240_170, %c64_171] : memref<256x288xbf16, #tpu.memory_space<vmem>>, vector<16x32xbf16>
    tpu.vector_store %arg9[%c240_170, %c64_171], %140 {strides = array<i32>} : memref<256x288xbf16, #tpu.memory_space<vmem>>, vector<16x32xbf16>,
    %c24_172 = arith.constant 24 : index
    %c0_173 = arith.constant 0 : index
    %142 = vector.load %arg8[%c24_172, %c0_173] : memref<432x32xbf16, #tpu.memory_space<vmem>>, vector<16x32xbf16>
    %c0_174 = arith.constant 0 : index
    %c96_175 = arith.constant 96 : index
    %143 = vector.load %arg9[%c0_174, %c96_175] : memref<256x288xbf16, #tpu.memory_space<vmem>>, vector<16x32xbf16>
    tpu.vector_store %arg9[%c0_174, %c96_175], %142 {strides = array<i32>} : memref<256x288xbf16, #tpu.memory_space<vmem>>, vector<16x32xbf16>,
    %c48_176 = arith.constant 48 : index
    %c0_177 = arith.constant 0 : index
    %144 = vector.load %arg8[%c48_176, %c0_177] : memref<432x32xbf16, #tpu.memory_space<vmem>>, vector<16x32xbf16>
    %c16_178 = arith.constant 16 : index
    %c96_179 = arith.constant 96 : index
    %145 = vector.load %arg9[%c16_178, %c96_179] : memref<256x288xbf16, #tpu.memory_space<vmem>>, vector<16x32xbf16>
    tpu.vector_store %arg9[%c16_178, %c96_179], %144 {strides = array<i32>} : memref<256x288xbf16, #tpu.memory_space<vmem>>, vector<16x32xbf16>,
    %c72_180 = arith.constant 72 : index
    %c0_181 = arith.constant 0 : index
    %146 = vector.load %arg8[%c72_180, %c0_181] : memref<432x32xbf16, #tpu.memory_space<vmem>>, vector<16x32xbf16>
    %c32_182 = arith.constant 32 : index
    %c96_183 = arith.constant 96 : index
    %147 = vector.load %arg9[%c32_182, %c96_183] : memref<256x288xbf16, #tpu.memory_space<vmem>>, vector<16x32xbf16>
    tpu.vector_store %arg9[%c32_182, %c96_183], %146 {strides = array<i32>} : memref<256x288xbf16, #tpu.memory_space<vmem>>, vector<16x32xbf16>,
    %c96_184 = arith.constant 96 : index
    %c0_185 = arith.constant 0 : index
    %148 = vector.load %arg8[%c96_184, %c0_185] : memref<432x32xbf16, #tpu.memory_space<vmem>>, vector<16x32xbf16>
    %c48_186 = arith.constant 48 : index
    %c96_187 = arith.constant 96 : index
    %149 = vector.load %arg9[%c48_186, %c96_187] : memref<256x288xbf16, #tpu.memory_space<vmem>>, vector<16x32xbf16>
    tpu.vector_store %arg9[%c48_186, %c96_187], %148 {strides = array<i32>} : memref<256x288xbf16, #tpu.memory_space<vmem>>, vector<16x32xbf16>,
    %c120_188 = arith.constant 120 : index
    %c0_189 = arith.constant 0 : index
    %150 = vector.load %arg8[%c120_188, %c0_189] : memref<432x32xbf16, #tpu.memory_space<vmem>>, vector<16x32xbf16>
    %c64_190 = arith.constant 64 : index
    %c96_191 = arith.constant 96 : index
    %151 = vector.load %arg9[%c64_190, %c96_191] : memref<256x288xbf16, #tpu.memory_space<vmem>>, vector<16x32xbf16>
    tpu.vector_store %arg9[%c64_190, %c96_191], %150 {strides = array<i32>} : memref<256x288xbf16, #tpu.memory_space<vmem>>, vector<16x32xbf16>,
    %c144_192 = arith.constant 144 : index
    %c0_193 = arith.constant 0 : index
    %152 = vector.load %arg8[%c144_192, %c0_193] : memref<432x32xbf16, #tpu.memory_space<vmem>>, vector<16x32xbf16>
    %c80_194 = arith.constant 80 : index
    %c96_195 = arith.constant 96 : index
    %153 = vector.load %arg9[%c80_194, %c96_195] : memref<256x288xbf16, #tpu.memory_space<vmem>>, vector<16x32xbf16>
    tpu.vector_store %arg9[%c80_194, %c96_195], %152 {strides = array<i32>} : memref<256x288xbf16, #tpu.memory_space<vmem>>, vector<16x32xbf16>,
    %c168_196 = arith.constant 168 : index
    %c0_197 = arith.constant 0 : index
    %154 = vector.load %arg8[%c168_196, %c0_197] : memref<432x32xbf16, #tpu.memory_space<vmem>>, vector<16x32xbf16>
    %c96_198 = arith.constant 96 : index
    %c96_199 = arith.constant 96 : index
    %155 = vector.load %arg9[%c96_198, %c96_199] : memref<256x288xbf16, #tpu.memory_space<vmem>>, vector<16x32xbf16>
    tpu.vector_store %arg9[%c96_198, %c96_199], %154 {strides = array<i32>} : memref<256x288xbf16, #tpu.memory_space<vmem>>, vector<16x32xbf16>,
    %c192_200 = arith.constant 192 : index
    %c0_201 = arith.constant 0 : index
    %156 = vector.load %arg8[%c192_200, %c0_201] : memref<432x32xbf16, #tpu.memory_space<vmem>>, vector<16x32xbf16>
    %c112_202 = arith.constant 112 : index
    %c96_203 = arith.constant 96 : index
    %157 = vector.load %arg9[%c112_202, %c96_203] : memref<256x288xbf16, #tpu.memory_space<vmem>>, vector<16x32xbf16>
    tpu.vector_store %arg9[%c112_202, %c96_203], %156 {strides = array<i32>} : memref<256x288xbf16, #tpu.memory_space<vmem>>, vector<16x32xbf16>,
    %c216_204 = arith.constant 216 : index
    %c0_205 = arith.constant 0 : index
    %158 = vector.load %arg8[%c216_204, %c0_205] : memref<432x32xbf16, #tpu.memory_space<vmem>>, vector<16x32xbf16>
    %c128_206 = arith.constant 128 : index
    %c96_207 = arith.constant 96 : index
    %159 = vector.load %arg9[%c128_206, %c96_207] : memref<256x288xbf16, #tpu.memory_space<vmem>>, vector<16x32xbf16>
    tpu.vector_store %arg9[%c128_206, %c96_207], %158 {strides = array<i32>} : memref<256x288xbf16, #tpu.memory_space<vmem>>, vector<16x32xbf16>,
    %c240_208 = arith.constant 240 : index
    %c0_209 = arith.constant 0 : index
    %160 = vector.load %arg8[%c240_208, %c0_209] : memref<432x32xbf16, #tpu.memory_space<vmem>>, vector<16x32xbf16>
    %c144_210 = arith.constant 144 : index
    %c96_211 = arith.constant 96 : index
    %161 = vector.load %arg9[%c144_210, %c96_211] : memref<256x288xbf16, #tpu.memory_space<vmem>>, vector<16x32xbf16>
    tpu.vector_store %arg9[%c144_210, %c96_211], %160 {strides = array<i32>} : memref<256x288xbf16, #tpu.memory_space<vmem>>, vector<16x32xbf16>,
    %c264_212 = arith.constant 264 : index
    %c0_213 = arith.constant 0 : index
    %162 = vector.load %arg8[%c264_212, %c0_213] : memref<432x32xbf16, #tpu.memory_space<vmem>>, vector<16x32xbf16>
    %c160_214 = arith.constant 160 : index
    %c96_215 = arith.constant 96 : index
    %163 = vector.load %arg9[%c160_214, %c96_215] : memref<256x288xbf16, #tpu.memory_space<vmem>>, vector<16x32xbf16>
    tpu.vector_store %arg9[%c160_214, %c96_215], %162 {strides = array<i32>} : memref<256x288xbf16, #tpu.memory_space<vmem>>, vector<16x32xbf16>,
    %c288_216 = arith.constant 288 : index
    %c0_217 = arith.constant 0 : index
    %164 = vector.load %arg8[%c288_216, %c0_217] : memref<432x32xbf16, #tpu.memory_space<vmem>>, vector<16x32xbf16>
    %c176_218 = arith.constant 176 : index
    %c96_219 = arith.constant 96 : index
    %165 = vector.load %arg9[%c176_218, %c96_219] : memref<256x288xbf16, #tpu.memory_space<vmem>>, vector<16x32xbf16>
    tpu.vector_store %arg9[%c176_218, %c96_219], %164 {strides = array<i32>} : memref<256x288xbf16, #tpu.memory_space<vmem>>, vector<16x32xbf16>,
    %c312_220 = arith.constant 312 : index
    %c0_221 = arith.constant 0 : index
    %166 = vector.load %arg8[%c312_220, %c0_221] : memref<432x32xbf16, #tpu.memory_space<vmem>>, vector<16x32xbf16>
    %c192_222 = arith.constant 192 : index
    %c96_223 = arith.constant 96 : index
    %167 = vector.load %arg9[%c192_222, %c96_223] : memref<256x288xbf16, #tpu.memory_space<vmem>>, vector<16x32xbf16>
    tpu.vector_store %arg9[%c192_222, %c96_223], %166 {strides = array<i32>} : memref<256x288xbf16, #tpu.memory_space<vmem>>, vector<16x32xbf16>,
    %c336_224 = arith.constant 336 : index
    %c0_225 = arith.constant 0 : index
    %168 = vector.load %arg8[%c336_224, %c0_225] : memref<432x32xbf16, #tpu.memory_space<vmem>>, vector<16x32xbf16>
    %c208_226 = arith.constant 208 : index
    %c96_227 = arith.constant 96 : index
    %169 = vector.load %arg9[%c208_226, %c96_227] : memref<256x288xbf16, #tpu.memory_space<vmem>>, vector<16x32xbf16>
    tpu.vector_store %arg9[%c208_226, %c96_227], %168 {strides = array<i32>} : memref<256x288xbf16, #tpu.memory_space<vmem>>, vector<16x32xbf16>,
    %c360_228 = arith.constant 360 : index
    %c0_229 = arith.constant 0 : index
    %170 = vector.load %arg8[%c360_228, %c0_229] : memref<432x32xbf16, #tpu.memory_space<vmem>>, vector<16x32xbf16>
    %c224_230 = arith.constant 224 : index
    %c96_231 = arith.constant 96 : index
    %171 = vector.load %arg9[%c224_230, %c96_231] : memref<256x288xbf16, #tpu.memory_space<vmem>>, vector<16x32xbf16>
    tpu.vector_store %arg9[%c224_230, %c96_231], %170 {strides = array<i32>} : memref<256x288xbf16, #tpu.memory_space<vmem>>, vector<16x32xbf16>,
    %c384 = arith.constant 384 : index
    %c0_232 = arith.constant 0 : index
    %172 = vector.load %arg8[%c384, %c0_232] : memref<432x32xbf16, #tpu.memory_space<vmem>>, vector<16x32xbf16>
    %c240_233 = arith.constant 240 : index
    %c96_234 = arith.constant 96 : index
    %173 = vector.load %arg9[%c240_233, %c96_234] : memref<256x288xbf16, #tpu.memory_space<vmem>>, vector<16x32xbf16>
    tpu.vector_store %arg9[%c240_233, %c96_234], %172 {strides = array<i32>} : memref<256x288xbf16, #tpu.memory_space<vmem>>, vector<16x32xbf16>,
    %c25_235 = arith.constant 25 : index
    %c0_236 = arith.constant 0 : index
    %174 = vector.load %arg8[%c25_235, %c0_236] : memref<432x32xbf16, #tpu.memory_space<vmem>>, vector<16x32xbf16>
    %c0_237 = arith.constant 0 : index
    %c128_238 = arith.constant 128 : index
    %175 = vector.load %arg9[%c0_237, %c128_238] : memref<256x288xbf16, #tpu.memory_space<vmem>>, vector<16x32xbf16>
    tpu.vector_store %arg9[%c0_237, %c128_238], %174 {strides = array<i32>} : memref<256x288xbf16, #tpu.memory_space<vmem>>, vector<16x32xbf16>,
    %c49_239 = arith.constant 49 : index
    %c0_240 = arith.constant 0 : index
    %176 = vector.load %arg8[%c49_239, %c0_240] : memref<432x32xbf16, #tpu.memory_space<vmem>>, vector<16x32xbf16>
    %c16_241 = arith.constant 16 : index
    %c128_242 = arith.constant 128 : index
    %177 = vector.load %arg9[%c16_241, %c128_242] : memref<256x288xbf16, #tpu.memory_space<vmem>>, vector<16x32xbf16>
    tpu.vector_store %arg9[%c16_241, %c128_242], %176 {strides = array<i32>} : memref<256x288xbf16, #tpu.memory_space<vmem>>, vector<16x32xbf16>,
    %c73_243 = arith.constant 73 : index
    %c0_244 = arith.constant 0 : index
    %178 = vector.load %arg8[%c73_243, %c0_244] : memref<432x32xbf16, #tpu.memory_space<vmem>>, vector<16x32xbf16>
    %c32_245 = arith.constant 32 : index
    %c128_246 = arith.constant 128 : index
    %179 = vector.load %arg9[%c32_245, %c128_246] : memref<256x288xbf16, #tpu.memory_space<vmem>>, vector<16x32xbf16>
    tpu.vector_store %arg9[%c32_245, %c128_246], %178 {strides = array<i32>} : memref<256x288xbf16, #tpu.memory_space<vmem>>, vector<16x32xbf16>,
    %c97_247 = arith.constant 97 : index
    %c0_248 = arith.constant 0 : index
    %180 = vector.load %arg8[%c97_247, %c0_248] : memref<432x32xbf16, #tpu.memory_space<vmem>>, vector<16x32xbf16>
    %c48_249 = arith.constant 48 : index
    %c128_250 = arith.constant 128 : index
    %181 = vector.load %arg9[%c48_249, %c128_250] : memref<256x288xbf16, #tpu.memory_space<vmem>>, vector<16x32xbf16>
    tpu.vector_store %arg9[%c48_249, %c128_250], %180 {strides = array<i32>} : memref<256x288xbf16, #tpu.memory_space<vmem>>, vector<16x32xbf16>,
    %c121_251 = arith.constant 121 : index
    %c0_252 = arith.constant 0 : index
    %182 = vector.load %arg8[%c121_251, %c0_252] : memref<432x32xbf16, #tpu.memory_space<vmem>>, vector<16x32xbf16>
    %c64_253 = arith.constant 64 : index
    %c128_254 = arith.constant 128 : index
    %183 = vector.load %arg9[%c64_253, %c128_254] : memref<256x288xbf16, #tpu.memory_space<vmem>>, vector<16x32xbf16>
    tpu.vector_store %arg9[%c64_253, %c128_254], %182 {strides = array<i32>} : memref<256x288xbf16, #tpu.memory_space<vmem>>, vector<16x32xbf16>,
    %c145_255 = arith.constant 145 : index
    %c0_256 = arith.constant 0 : index
    %184 = vector.load %arg8[%c145_255, %c0_256] : memref<432x32xbf16, #tpu.memory_space<vmem>>, vector<16x32xbf16>
    %c80_257 = arith.constant 80 : index
    %c128_258 = arith.constant 128 : index
    %185 = vector.load %arg9[%c80_257, %c128_258] : memref<256x288xbf16, #tpu.memory_space<vmem>>, vector<16x32xbf16>
    tpu.vector_store %arg9[%c80_257, %c128_258], %184 {strides = array<i32>} : memref<256x288xbf16, #tpu.memory_space<vmem>>, vector<16x32xbf16>,
    %c169_259 = arith.constant 169 : index
    %c0_260 = arith.constant 0 : index
    %186 = vector.load %arg8[%c169_259, %c0_260] : memref<432x32xbf16, #tpu.memory_space<vmem>>, vector<16x32xbf16>
    %c96_261 = arith.constant 96 : index
    %c128_262 = arith.constant 128 : index
    %187 = vector.load %arg9[%c96_261, %c128_262] : memref<256x288xbf16, #tpu.memory_space<vmem>>, vector<16x32xbf16>
    tpu.vector_store %arg9[%c96_261, %c128_262], %186 {strides = array<i32>} : memref<256x288xbf16, #tpu.memory_space<vmem>>, vector<16x32xbf16>,
    %c193_263 = arith.constant 193 : index
    %c0_264 = arith.constant 0 : index
    %188 = vector.load %arg8[%c193_263, %c0_264] : memref<432x32xbf16, #tpu.memory_space<vmem>>, vector<16x32xbf16>
    %c112_265 = arith.constant 112 : index
    %c128_266 = arith.constant 128 : index
    %189 = vector.load %arg9[%c112_265, %c128_266] : memref<256x288xbf16, #tpu.memory_space<vmem>>, vector<16x32xbf16>
    tpu.vector_store %arg9[%c112_265, %c128_266], %188 {strides = array<i32>} : memref<256x288xbf16, #tpu.memory_space<vmem>>, vector<16x32xbf16>,
    %c217_267 = arith.constant 217 : index
    %c0_268 = arith.constant 0 : index
    %190 = vector.load %arg8[%c217_267, %c0_268] : memref<432x32xbf16, #tpu.memory_space<vmem>>, vector<16x32xbf16>
    %c128_269 = arith.constant 128 : index
    %c128_270 = arith.constant 128 : index
    %191 = vector.load %arg9[%c128_269, %c128_270] : memref<256x288xbf16, #tpu.memory_space<vmem>>, vector<16x32xbf16>
    tpu.vector_store %arg9[%c128_269, %c128_270], %190 {strides = array<i32>} : memref<256x288xbf16, #tpu.memory_space<vmem>>, vector<16x32xbf16>,
    %c241_271 = arith.constant 241 : index
    %c0_272 = arith.constant 0 : index
    %192 = vector.load %arg8[%c241_271, %c0_272] : memref<432x32xbf16, #tpu.memory_space<vmem>>, vector<16x32xbf16>
    %c144_273 = arith.constant 144 : index
    %c128_274 = arith.constant 128 : index
    %193 = vector.load %arg9[%c144_273, %c128_274] : memref<256x288xbf16, #tpu.memory_space<vmem>>, vector<16x32xbf16>
    tpu.vector_store %arg9[%c144_273, %c128_274], %192 {strides = array<i32>} : memref<256x288xbf16, #tpu.memory_space<vmem>>, vector<16x32xbf16>,
    %c265_275 = arith.constant 265 : index
    %c0_276 = arith.constant 0 : index
    %194 = vector.load %arg8[%c265_275, %c0_276] : memref<432x32xbf16, #tpu.memory_space<vmem>>, vector<16x32xbf16>
    %c160_277 = arith.constant 160 : index
    %c128_278 = arith.constant 128 : index
    %195 = vector.load %arg9[%c160_277, %c128_278] : memref<256x288xbf16, #tpu.memory_space<vmem>>, vector<16x32xbf16>
    tpu.vector_store %arg9[%c160_277, %c128_278], %194 {strides = array<i32>} : memref<256x288xbf16, #tpu.memory_space<vmem>>, vector<16x32xbf16>,
    %c289_279 = arith.constant 289 : index
    %c0_280 = arith.constant 0 : index
    %196 = vector.load %arg8[%c289_279, %c0_280] : memref<432x32xbf16, #tpu.memory_space<vmem>>, vector<16x32xbf16>
    %c176_281 = arith.constant 176 : index
    %c128_282 = arith.constant 128 : index
    %197 = vector.load %arg9[%c176_281, %c128_282] : memref<256x288xbf16, #tpu.memory_space<vmem>>, vector<16x32xbf16>
    tpu.vector_store %arg9[%c176_281, %c128_282], %196 {strides = array<i32>} : memref<256x288xbf16, #tpu.memory_space<vmem>>, vector<16x32xbf16>,
    %c313_283 = arith.constant 313 : index
    %c0_284 = arith.constant 0 : index
    %198 = vector.load %arg8[%c313_283, %c0_284] : memref<432x32xbf16, #tpu.memory_space<vmem>>, vector<16x32xbf16>
    %c192_285 = arith.constant 192 : index
    %c128_286 = arith.constant 128 : index
    %199 = vector.load %arg9[%c192_285, %c128_286] : memref<256x288xbf16, #tpu.memory_space<vmem>>, vector<16x32xbf16>
    tpu.vector_store %arg9[%c192_285, %c128_286], %198 {strides = array<i32>} : memref<256x288xbf16, #tpu.memory_space<vmem>>, vector<16x32xbf16>,
    %c337_287 = arith.constant 337 : index
    %c0_288 = arith.constant 0 : index
    %200 = vector.load %arg8[%c337_287, %c0_288] : memref<432x32xbf16, #tpu.memory_space<vmem>>, vector<16x32xbf16>
    %c208_289 = arith.constant 208 : index
    %c128_290 = arith.constant 128 : index
    %201 = vector.load %arg9[%c208_289, %c128_290] : memref<256x288xbf16, #tpu.memory_space<vmem>>, vector<16x32xbf16>
    tpu.vector_store %arg9[%c208_289, %c128_290], %200 {strides = array<i32>} : memref<256x288xbf16, #tpu.memory_space<vmem>>, vector<16x32xbf16>,
    %c361_291 = arith.constant 361 : index
    %c0_292 = arith.constant 0 : index
    %202 = vector.load %arg8[%c361_291, %c0_292] : memref<432x32xbf16, #tpu.memory_space<vmem>>, vector<16x32xbf16>
    %c224_293 = arith.constant 224 : index
    %c128_294 = arith.constant 128 : index
    %203 = vector.load %arg9[%c224_293, %c128_294] : memref<256x288xbf16, #tpu.memory_space<vmem>>, vector<16x32xbf16>
    tpu.vector_store %arg9[%c224_293, %c128_294], %202 {strides = array<i32>} : memref<256x288xbf16, #tpu.memory_space<vmem>>, vector<16x32xbf16>,
    %c385_295 = arith.constant 385 : index
    %c0_296 = arith.constant 0 : index
    %204 = vector.load %arg8[%c385_295, %c0_296] : memref<432x32xbf16, #tpu.memory_space<vmem>>, vector<16x32xbf16>
    %c240_297 = arith.constant 240 : index
    %c128_298 = arith.constant 128 : index
    %205 = vector.load %arg9[%c240_297, %c128_298] : memref<256x288xbf16, #tpu.memory_space<vmem>>, vector<16x32xbf16>
    tpu.vector_store %arg9[%c240_297, %c128_298], %204 {strides = array<i32>} : memref<256x288xbf16, #tpu.memory_space<vmem>>, vector<16x32xbf16>,
    %c26_299 = arith.constant 26 : index
    %c0_300 = arith.constant 0 : index
    %206 = vector.load %arg8[%c26_299, %c0_300] : memref<432x32xbf16, #tpu.memory_space<vmem>>, vector<16x32xbf16>
    %c0_301 = arith.constant 0 : index
    %c160_302 = arith.constant 160 : index
    %207 = vector.load %arg9[%c0_301, %c160_302] : memref<256x288xbf16, #tpu.memory_space<vmem>>, vector<16x32xbf16>
    tpu.vector_store %arg9[%c0_301, %c160_302], %206 {strides = array<i32>} : memref<256x288xbf16, #tpu.memory_space<vmem>>, vector<16x32xbf16>,
    %c50_303 = arith.constant 50 : index
    %c0_304 = arith.constant 0 : index
    %208 = vector.load %arg8[%c50_303, %c0_304] : memref<432x32xbf16, #tpu.memory_space<vmem>>, vector<16x32xbf16>
    %c16_305 = arith.constant 16 : index
    %c160_306 = arith.constant 160 : index
    %209 = vector.load %arg9[%c16_305, %c160_306] : memref<256x288xbf16, #tpu.memory_space<vmem>>, vector<16x32xbf16>
    tpu.vector_store %arg9[%c16_305, %c160_306], %208 {strides = array<i32>} : memref<256x288xbf16, #tpu.memory_space<vmem>>, vector<16x32xbf16>,
    %c74_307 = arith.constant 74 : index
    %c0_308 = arith.constant 0 : index
    %210 = vector.load %arg8[%c74_307, %c0_308] : memref<432x32xbf16, #tpu.memory_space<vmem>>, vector<16x32xbf16>
    %c32_309 = arith.constant 32 : index
    %c160_310 = arith.constant 160 : index
    %211 = vector.load %arg9[%c32_309, %c160_310] : memref<256x288xbf16, #tpu.memory_space<vmem>>, vector<16x32xbf16>
    tpu.vector_store %arg9[%c32_309, %c160_310], %210 {strides = array<i32>} : memref<256x288xbf16, #tpu.memory_space<vmem>>, vector<16x32xbf16>,
    %c98_311 = arith.constant 98 : index
    %c0_312 = arith.constant 0 : index
    %212 = vector.load %arg8[%c98_311, %c0_312] : memref<432x32xbf16, #tpu.memory_space<vmem>>, vector<16x32xbf16>
    %c48_313 = arith.constant 48 : index
    %c160_314 = arith.constant 160 : index
    %213 = vector.load %arg9[%c48_313, %c160_314] : memref<256x288xbf16, #tpu.memory_space<vmem>>, vector<16x32xbf16>
    tpu.vector_store %arg9[%c48_313, %c160_314], %212 {strides = array<i32>} : memref<256x288xbf16, #tpu.memory_space<vmem>>, vector<16x32xbf16>,
    %c122_315 = arith.constant 122 : index
    %c0_316 = arith.constant 0 : index
    %214 = vector.load %arg8[%c122_315, %c0_316] : memref<432x32xbf16, #tpu.memory_space<vmem>>, vector<16x32xbf16>
    %c64_317 = arith.constant 64 : index
    %c160_318 = arith.constant 160 : index
    %215 = vector.load %arg9[%c64_317, %c160_318] : memref<256x288xbf16, #tpu.memory_space<vmem>>, vector<16x32xbf16>
    tpu.vector_store %arg9[%c64_317, %c160_318], %214 {strides = array<i32>} : memref<256x288xbf16, #tpu.memory_space<vmem>>, vector<16x32xbf16>,
    %c146_319 = arith.constant 146 : index
    %c0_320 = arith.constant 0 : index
    %216 = vector.load %arg8[%c146_319, %c0_320] : memref<432x32xbf16, #tpu.memory_space<vmem>>, vector<16x32xbf16>
    %c80_321 = arith.constant 80 : index
    %c160_322 = arith.constant 160 : index
    %217 = vector.load %arg9[%c80_321, %c160_322] : memref<256x288xbf16, #tpu.memory_space<vmem>>, vector<16x32xbf16>
    tpu.vector_store %arg9[%c80_321, %c160_322], %216 {strides = array<i32>} : memref<256x288xbf16, #tpu.memory_space<vmem>>, vector<16x32xbf16>,
    %c170_323 = arith.constant 170 : index
    %c0_324 = arith.constant 0 : index
    %218 = vector.load %arg8[%c170_323, %c0_324] : memref<432x32xbf16, #tpu.memory_space<vmem>>, vector<16x32xbf16>
    %c96_325 = arith.constant 96 : index
    %c160_326 = arith.constant 160 : index
    %219 = vector.load %arg9[%c96_325, %c160_326] : memref<256x288xbf16, #tpu.memory_space<vmem>>, vector<16x32xbf16>
    tpu.vector_store %arg9[%c96_325, %c160_326], %218 {strides = array<i32>} : memref<256x288xbf16, #tpu.memory_space<vmem>>, vector<16x32xbf16>,
    %c194_327 = arith.constant 194 : index
    %c0_328 = arith.constant 0 : index
    %220 = vector.load %arg8[%c194_327, %c0_328] : memref<432x32xbf16, #tpu.memory_space<vmem>>, vector<16x32xbf16>
    %c112_329 = arith.constant 112 : index
    %c160_330 = arith.constant 160 : index
    %221 = vector.load %arg9[%c112_329, %c160_330] : memref<256x288xbf16, #tpu.memory_space<vmem>>, vector<16x32xbf16>
    tpu.vector_store %arg9[%c112_329, %c160_330], %220 {strides = array<i32>} : memref<256x288xbf16, #tpu.memory_space<vmem>>, vector<16x32xbf16>,
    %c218_331 = arith.constant 218 : index
    %c0_332 = arith.constant 0 : index
    %222 = vector.load %arg8[%c218_331, %c0_332] : memref<432x32xbf16, #tpu.memory_space<vmem>>, vector<16x32xbf16>
    %c128_333 = arith.constant 128 : index
    %c160_334 = arith.constant 160 : index
    %223 = vector.load %arg9[%c128_333, %c160_334] : memref<256x288xbf16, #tpu.memory_space<vmem>>, vector<16x32xbf16>
    tpu.vector_store %arg9[%c128_333, %c160_334], %222 {strides = array<i32>} : memref<256x288xbf16, #tpu.memory_space<vmem>>, vector<16x32xbf16>,
    %c242_335 = arith.constant 242 : index
    %c0_336 = arith.constant 0 : index
    %224 = vector.load %arg8[%c242_335, %c0_336] : memref<432x32xbf16, #tpu.memory_space<vmem>>, vector<16x32xbf16>
    %c144_337 = arith.constant 144 : index
    %c160_338 = arith.constant 160 : index
    %225 = vector.load %arg9[%c144_337, %c160_338] : memref<256x288xbf16, #tpu.memory_space<vmem>>, vector<16x32xbf16>
    tpu.vector_store %arg9[%c144_337, %c160_338], %224 {strides = array<i32>} : memref<256x288xbf16, #tpu.memory_space<vmem>>, vector<16x32xbf16>,
    %c266_339 = arith.constant 266 : index
    %c0_340 = arith.constant 0 : index
    %226 = vector.load %arg8[%c266_339, %c0_340] : memref<432x32xbf16, #tpu.memory_space<vmem>>, vector<16x32xbf16>
    %c160_341 = arith.constant 160 : index
    %c160_342 = arith.constant 160 : index
    %227 = vector.load %arg9[%c160_341, %c160_342] : memref<256x288xbf16, #tpu.memory_space<vmem>>, vector<16x32xbf16>
    tpu.vector_store %arg9[%c160_341, %c160_342], %226 {strides = array<i32>} : memref<256x288xbf16, #tpu.memory_space<vmem>>, vector<16x32xbf16>,
    %c290_343 = arith.constant 290 : index
    %c0_344 = arith.constant 0 : index
    %228 = vector.load %arg8[%c290_343, %c0_344] : memref<432x32xbf16, #tpu.memory_space<vmem>>, vector<16x32xbf16>
    %c176_345 = arith.constant 176 : index
    %c160_346 = arith.constant 160 : index
    %229 = vector.load %arg9[%c176_345, %c160_346] : memref<256x288xbf16, #tpu.memory_space<vmem>>, vector<16x32xbf16>
    tpu.vector_store %arg9[%c176_345, %c160_346], %228 {strides = array<i32>} : memref<256x288xbf16, #tpu.memory_space<vmem>>, vector<16x32xbf16>,
    %c314_347 = arith.constant 314 : index
    %c0_348 = arith.constant 0 : index
    %230 = vector.load %arg8[%c314_347, %c0_348] : memref<432x32xbf16, #tpu.memory_space<vmem>>, vector<16x32xbf16>
    %c192_349 = arith.constant 192 : index
    %c160_350 = arith.constant 160 : index
    %231 = vector.load %arg9[%c192_349, %c160_350] : memref<256x288xbf16, #tpu.memory_space<vmem>>, vector<16x32xbf16>
    tpu.vector_store %arg9[%c192_349, %c160_350], %230 {strides = array<i32>} : memref<256x288xbf16, #tpu.memory_space<vmem>>, vector<16x32xbf16>,
    %c338_351 = arith.constant 338 : index
    %c0_352 = arith.constant 0 : index
    %232 = vector.load %arg8[%c338_351, %c0_352] : memref<432x32xbf16, #tpu.memory_space<vmem>>, vector<16x32xbf16>
    %c208_353 = arith.constant 208 : index
    %c160_354 = arith.constant 160 : index
    %233 = vector.load %arg9[%c208_353, %c160_354] : memref<256x288xbf16, #tpu.memory_space<vmem>>, vector<16x32xbf16>
    tpu.vector_store %arg9[%c208_353, %c160_354], %232 {strides = array<i32>} : memref<256x288xbf16, #tpu.memory_space<vmem>>, vector<16x32xbf16>,
    %c362_355 = arith.constant 362 : index
    %c0_356 = arith.constant 0 : index
    %234 = vector.load %arg8[%c362_355, %c0_356] : memref<432x32xbf16, #tpu.memory_space<vmem>>, vector<16x32xbf16>
    %c224_357 = arith.constant 224 : index
    %c160_358 = arith.constant 160 : index
    %235 = vector.load %arg9[%c224_357, %c160_358] : memref<256x288xbf16, #tpu.memory_space<vmem>>, vector<16x32xbf16>
    tpu.vector_store %arg9[%c224_357, %c160_358], %234 {strides = array<i32>} : memref<256x288xbf16, #tpu.memory_space<vmem>>, vector<16x32xbf16>,
    %c386 = arith.constant 386 : index
    %c0_359 = arith.constant 0 : index
    %236 = vector.load %arg8[%c386, %c0_359] : memref<432x32xbf16, #tpu.memory_space<vmem>>, vector<16x32xbf16>
    %c240_360 = arith.constant 240 : index
    %c160_361 = arith.constant 160 : index
    %237 = vector.load %arg9[%c240_360, %c160_361] : memref<256x288xbf16, #tpu.memory_space<vmem>>, vector<16x32xbf16>
    tpu.vector_store %arg9[%c240_360, %c160_361], %236 {strides = array<i32>} : memref<256x288xbf16, #tpu.memory_space<vmem>>, vector<16x32xbf16>,
    %c48_362 = arith.constant 48 : index
    %c0_363 = arith.constant 0 : index
    %238 = vector.load %arg8[%c48_362, %c0_363] : memref<432x32xbf16, #tpu.memory_space<vmem>>, vector<16x32xbf16>
    %c0_364 = arith.constant 0 : index
    %c192_365 = arith.constant 192 : index
    %239 = vector.load %arg9[%c0_364, %c192_365] : memref<256x288xbf16, #tpu.memory_space<vmem>>, vector<16x32xbf16>
    tpu.vector_store %arg9[%c0_364, %c192_365], %238 {strides = array<i32>} : memref<256x288xbf16, #tpu.memory_space<vmem>>, vector<16x32xbf16>,
    %c72_366 = arith.constant 72 : index
    %c0_367 = arith.constant 0 : index
    %240 = vector.load %arg8[%c72_366, %c0_367] : memref<432x32xbf16, #tpu.memory_space<vmem>>, vector<16x32xbf16>
    %c16_368 = arith.constant 16 : index
    %c192_369 = arith.constant 192 : index
    %241 = vector.load %arg9[%c16_368, %c192_369] : memref<256x288xbf16, #tpu.memory_space<vmem>>, vector<16x32xbf16>
    tpu.vector_store %arg9[%c16_368, %c192_369], %240 {strides = array<i32>} : memref<256x288xbf16, #tpu.memory_space<vmem>>, vector<16x32xbf16>,
    %c96_370 = arith.constant 96 : index
    %c0_371 = arith.constant 0 : index
    %242 = vector.load %arg8[%c96_370, %c0_371] : memref<432x32xbf16, #tpu.memory_space<vmem>>, vector<16x32xbf16>
    %c32_372 = arith.constant 32 : index
    %c192_373 = arith.constant 192 : index
    %243 = vector.load %arg9[%c32_372, %c192_373] : memref<256x288xbf16, #tpu.memory_space<vmem>>, vector<16x32xbf16>
    tpu.vector_store %arg9[%c32_372, %c192_373], %242 {strides = array<i32>} : memref<256x288xbf16, #tpu.memory_space<vmem>>, vector<16x32xbf16>,
    %c120_374 = arith.constant 120 : index
    %c0_375 = arith.constant 0 : index
    %244 = vector.load %arg8[%c120_374, %c0_375] : memref<432x32xbf16, #tpu.memory_space<vmem>>, vector<16x32xbf16>
    %c48_376 = arith.constant 48 : index
    %c192_377 = arith.constant 192 : index
    %245 = vector.load %arg9[%c48_376, %c192_377] : memref<256x288xbf16, #tpu.memory_space<vmem>>, vector<16x32xbf16>
    tpu.vector_store %arg9[%c48_376, %c192_377], %244 {strides = array<i32>} : memref<256x288xbf16, #tpu.memory_space<vmem>>, vector<16x32xbf16>,
    %c144_378 = arith.constant 144 : index
    %c0_379 = arith.constant 0 : index
    %246 = vector.load %arg8[%c144_378, %c0_379] : memref<432x32xbf16, #tpu.memory_space<vmem>>, vector<16x32xbf16>
    %c64_380 = arith.constant 64 : index
    %c192_381 = arith.constant 192 : index
    %247 = vector.load %arg9[%c64_380, %c192_381] : memref<256x288xbf16, #tpu.memory_space<vmem>>, vector<16x32xbf16>
    tpu.vector_store %arg9[%c64_380, %c192_381], %246 {strides = array<i32>} : memref<256x288xbf16, #tpu.memory_space<vmem>>, vector<16x32xbf16>,
    %c168_382 = arith.constant 168 : index
    %c0_383 = arith.constant 0 : index
    %248 = vector.load %arg8[%c168_382, %c0_383] : memref<432x32xbf16, #tpu.memory_space<vmem>>, vector<16x32xbf16>
    %c80_384 = arith.constant 80 : index
    %c192_385 = arith.constant 192 : index
    %249 = vector.load %arg9[%c80_384, %c192_385] : memref<256x288xbf16, #tpu.memory_space<vmem>>, vector<16x32xbf16>
    tpu.vector_store %arg9[%c80_384, %c192_385], %248 {strides = array<i32>} : memref<256x288xbf16, #tpu.memory_space<vmem>>, vector<16x32xbf16>,
    %c192_386 = arith.constant 192 : index
    %c0_387 = arith.constant 0 : index
    %250 = vector.load %arg8[%c192_386, %c0_387] : memref<432x32xbf16, #tpu.memory_space<vmem>>, vector<16x32xbf16>
    %c96_388 = arith.constant 96 : index
    %c192_389 = arith.constant 192 : index
    %251 = vector.load %arg9[%c96_388, %c192_389] : memref<256x288xbf16, #tpu.memory_space<vmem>>, vector<16x32xbf16>
    tpu.vector_store %arg9[%c96_388, %c192_389], %250 {strides = array<i32>} : memref<256x288xbf16, #tpu.memory_space<vmem>>, vector<16x32xbf16>,
    %c216_390 = arith.constant 216 : index
    %c0_391 = arith.constant 0 : index
    %252 = vector.load %arg8[%c216_390, %c0_391] : memref<432x32xbf16, #tpu.memory_space<vmem>>, vector<16x32xbf16>
    %c112_392 = arith.constant 112 : index
    %c192_393 = arith.constant 192 : index
    %253 = vector.load %arg9[%c112_392, %c192_393] : memref<256x288xbf16, #tpu.memory_space<vmem>>, vector<16x32xbf16>
    tpu.vector_store %arg9[%c112_392, %c192_393], %252 {strides = array<i32>} : memref<256x288xbf16, #tpu.memory_space<vmem>>, vector<16x32xbf16>,
    %c240_394 = arith.constant 240 : index
    %c0_395 = arith.constant 0 : index
    %254 = vector.load %arg8[%c240_394, %c0_395] : memref<432x32xbf16, #tpu.memory_space<vmem>>, vector<16x32xbf16>
    %c128_396 = arith.constant 128 : index
    %c192_397 = arith.constant 192 : index
    %255 = vector.load %arg9[%c128_396, %c192_397] : memref<256x288xbf16, #tpu.memory_space<vmem>>, vector<16x32xbf16>
    tpu.vector_store %arg9[%c128_396, %c192_397], %254 {strides = array<i32>} : memref<256x288xbf16, #tpu.memory_space<vmem>>, vector<16x32xbf16>,
    %c264_398 = arith.constant 264 : index
    %c0_399 = arith.constant 0 : index
    %256 = vector.load %arg8[%c264_398, %c0_399] : memref<432x32xbf16, #tpu.memory_space<vmem>>, vector<16x32xbf16>
    %c144_400 = arith.constant 144 : index
    %c192_401 = arith.constant 192 : index
    %257 = vector.load %arg9[%c144_400, %c192_401] : memref<256x288xbf16, #tpu.memory_space<vmem>>, vector<16x32xbf16>
    tpu.vector_store %arg9[%c144_400, %c192_401], %256 {strides = array<i32>} : memref<256x288xbf16, #tpu.memory_space<vmem>>, vector<16x32xbf16>,
    %c288_402 = arith.constant 288 : index
    %c0_403 = arith.constant 0 : index
    %258 = vector.load %arg8[%c288_402, %c0_403] : memref<432x32xbf16, #tpu.memory_space<vmem>>, vector<16x32xbf16>
    %c160_404 = arith.constant 160 : index
    %c192_405 = arith.constant 192 : index
    %259 = vector.load %arg9[%c160_404, %c192_405] : memref<256x288xbf16, #tpu.memory_space<vmem>>, vector<16x32xbf16>
    tpu.vector_store %arg9[%c160_404, %c192_405], %258 {strides = array<i32>} : memref<256x288xbf16, #tpu.memory_space<vmem>>, vector<16x32xbf16>,
    %c312_406 = arith.constant 312 : index
    %c0_407 = arith.constant 0 : index
    %260 = vector.load %arg8[%c312_406, %c0_407] : memref<432x32xbf16, #tpu.memory_space<vmem>>, vector<16x32xbf16>
    %c176_408 = arith.constant 176 : index
    %c192_409 = arith.constant 192 : index
    %261 = vector.load %arg9[%c176_408, %c192_409] : memref<256x288xbf16, #tpu.memory_space<vmem>>, vector<16x32xbf16>
    tpu.vector_store %arg9[%c176_408, %c192_409], %260 {strides = array<i32>} : memref<256x288xbf16, #tpu.memory_space<vmem>>, vector<16x32xbf16>,
    %c336_410 = arith.constant 336 : index
    %c0_411 = arith.constant 0 : index
    %262 = vector.load %arg8[%c336_410, %c0_411] : memref<432x32xbf16, #tpu.memory_space<vmem>>, vector<16x32xbf16>
    %c192_412 = arith.constant 192 : index
    %c192_413 = arith.constant 192 : index
    %263 = vector.load %arg9[%c192_412, %c192_413] : memref<256x288xbf16, #tpu.memory_space<vmem>>, vector<16x32xbf16>
    tpu.vector_store %arg9[%c192_412, %c192_413], %262 {strides = array<i32>} : memref<256x288xbf16, #tpu.memory_space<vmem>>, vector<16x32xbf16>,
    %c360_414 = arith.constant 360 : index
    %c0_415 = arith.constant 0 : index
    %264 = vector.load %arg8[%c360_414, %c0_415] : memref<432x32xbf16, #tpu.memory_space<vmem>>, vector<16x32xbf16>
    %c208_416 = arith.constant 208 : index
    %c192_417 = arith.constant 192 : index
    %265 = vector.load %arg9[%c208_416, %c192_417] : memref<256x288xbf16, #tpu.memory_space<vmem>>, vector<16x32xbf16>
    tpu.vector_store %arg9[%c208_416, %c192_417], %264 {strides = array<i32>} : memref<256x288xbf16, #tpu.memory_space<vmem>>, vector<16x32xbf16>,
    %c384_418 = arith.constant 384 : index
    %c0_419 = arith.constant 0 : index
    %266 = vector.load %arg8[%c384_418, %c0_419] : memref<432x32xbf16, #tpu.memory_space<vmem>>, vector<16x32xbf16>
    %c224_420 = arith.constant 224 : index
    %c192_421 = arith.constant 192 : index
    %267 = vector.load %arg9[%c224_420, %c192_421] : memref<256x288xbf16, #tpu.memory_space<vmem>>, vector<16x32xbf16>
    tpu.vector_store %arg9[%c224_420, %c192_421], %266 {strides = array<i32>} : memref<256x288xbf16, #tpu.memory_space<vmem>>, vector<16x32xbf16>,
    %c408 = arith.constant 408 : index
    %c0_422 = arith.constant 0 : index
    %268 = vector.load %arg8[%c408, %c0_422] : memref<432x32xbf16, #tpu.memory_space<vmem>>, vector<16x32xbf16>
    %c240_423 = arith.constant 240 : index
    %c192_424 = arith.constant 192 : index
    %269 = vector.load %arg9[%c240_423, %c192_424] : memref<256x288xbf16, #tpu.memory_space<vmem>>, vector<16x32xbf16>
    tpu.vector_store %arg9[%c240_423, %c192_424], %268 {strides = array<i32>} : memref<256x288xbf16, #tpu.memory_space<vmem>>, vector<16x32xbf16>,
    %c49_425 = arith.constant 49 : index
    %c0_426 = arith.constant 0 : index
    %270 = vector.load %arg8[%c49_425, %c0_426] : memref<432x32xbf16, #tpu.memory_space<vmem>>, vector<16x32xbf16>
    %c0_427 = arith.constant 0 : index
    %c224_428 = arith.constant 224 : index
    %271 = vector.load %arg9[%c0_427, %c224_428] : memref<256x288xbf16, #tpu.memory_space<vmem>>, vector<16x32xbf16>
    tpu.vector_store %arg9[%c0_427, %c224_428], %270 {strides = array<i32>} : memref<256x288xbf16, #tpu.memory_space<vmem>>, vector<16x32xbf16>,
    %c73_429 = arith.constant 73 : index
    %c0_430 = arith.constant 0 : index
    %272 = vector.load %arg8[%c73_429, %c0_430] : memref<432x32xbf16, #tpu.memory_space<vmem>>, vector<16x32xbf16>
    %c16_431 = arith.constant 16 : index
    %c224_432 = arith.constant 224 : index
    %273 = vector.load %arg9[%c16_431, %c224_432] : memref<256x288xbf16, #tpu.memory_space<vmem>>, vector<16x32xbf16>
    tpu.vector_store %arg9[%c16_431, %c224_432], %272 {strides = array<i32>} : memref<256x288xbf16, #tpu.memory_space<vmem>>, vector<16x32xbf16>,
    %c97_433 = arith.constant 97 : index
    %c0_434 = arith.constant 0 : index
    %274 = vector.load %arg8[%c97_433, %c0_434] : memref<432x32xbf16, #tpu.memory_space<vmem>>, vector<16x32xbf16>
    %c32_435 = arith.constant 32 : index
    %c224_436 = arith.constant 224 : index
    %275 = vector.load %arg9[%c32_435, %c224_436] : memref<256x288xbf16, #tpu.memory_space<vmem>>, vector<16x32xbf16>
    tpu.vector_store %arg9[%c32_435, %c224_436], %274 {strides = array<i32>} : memref<256x288xbf16, #tpu.memory_space<vmem>>, vector<16x32xbf16>,
    %c121_437 = arith.constant 121 : index
    %c0_438 = arith.constant 0 : index
    %276 = vector.load %arg8[%c121_437, %c0_438] : memref<432x32xbf16, #tpu.memory_space<vmem>>, vector<16x32xbf16>
    %c48_439 = arith.constant 48 : index
    %c224_440 = arith.constant 224 : index
    %277 = vector.load %arg9[%c48_439, %c224_440] : memref<256x288xbf16, #tpu.memory_space<vmem>>, vector<16x32xbf16>
    tpu.vector_store %arg9[%c48_439, %c224_440], %276 {strides = array<i32>} : memref<256x288xbf16, #tpu.memory_space<vmem>>, vector<16x32xbf16>,
    %c145_441 = arith.constant 145 : index
    %c0_442 = arith.constant 0 : index
    %278 = vector.load %arg8[%c145_441, %c0_442] : memref<432x32xbf16, #tpu.memory_space<vmem>>, vector<16x32xbf16>
    %c64_443 = arith.constant 64 : index
    %c224_444 = arith.constant 224 : index
    %279 = vector.load %arg9[%c64_443, %c224_444] : memref<256x288xbf16, #tpu.memory_space<vmem>>, vector<16x32xbf16>
    tpu.vector_store %arg9[%c64_443, %c224_444], %278 {strides = array<i32>} : memref<256x288xbf16, #tpu.memory_space<vmem>>, vector<16x32xbf16>,
    %c169_445 = arith.constant 169 : index
    %c0_446 = arith.constant 0 : index
    %280 = vector.load %arg8[%c169_445, %c0_446] : memref<432x32xbf16, #tpu.memory_space<vmem>>, vector<16x32xbf16>
    %c80_447 = arith.constant 80 : index
    %c224_448 = arith.constant 224 : index
    %281 = vector.load %arg9[%c80_447, %c224_448] : memref<256x288xbf16, #tpu.memory_space<vmem>>, vector<16x32xbf16>
    tpu.vector_store %arg9[%c80_447, %c224_448], %280 {strides = array<i32>} : memref<256x288xbf16, #tpu.memory_space<vmem>>, vector<16x32xbf16>,
    %c193_449 = arith.constant 193 : index
    %c0_450 = arith.constant 0 : index
    %282 = vector.load %arg8[%c193_449, %c0_450] : memref<432x32xbf16, #tpu.memory_space<vmem>>, vector<16x32xbf16>
    %c96_451 = arith.constant 96 : index
    %c224_452 = arith.constant 224 : index
    %283 = vector.load %arg9[%c96_451, %c224_452] : memref<256x288xbf16, #tpu.memory_space<vmem>>, vector<16x32xbf16>
    tpu.vector_store %arg9[%c96_451, %c224_452], %282 {strides = array<i32>} : memref<256x288xbf16, #tpu.memory_space<vmem>>, vector<16x32xbf16>,
    %c217_453 = arith.constant 217 : index
    %c0_454 = arith.constant 0 : index
    %284 = vector.load %arg8[%c217_453, %c0_454] : memref<432x32xbf16, #tpu.memory_space<vmem>>, vector<16x32xbf16>
    %c112_455 = arith.constant 112 : index
    %c224_456 = arith.constant 224 : index
    %285 = vector.load %arg9[%c112_455, %c224_456] : memref<256x288xbf16, #tpu.memory_space<vmem>>, vector<16x32xbf16>
    tpu.vector_store %arg9[%c112_455, %c224_456], %284 {strides = array<i32>} : memref<256x288xbf16, #tpu.memory_space<vmem>>, vector<16x32xbf16>,
    %c241_457 = arith.constant 241 : index
    %c0_458 = arith.constant 0 : index
    %286 = vector.load %arg8[%c241_457, %c0_458] : memref<432x32xbf16, #tpu.memory_space<vmem>>, vector<16x32xbf16>
    %c128_459 = arith.constant 128 : index
    %c224_460 = arith.constant 224 : index
    %287 = vector.load %arg9[%c128_459, %c224_460] : memref<256x288xbf16, #tpu.memory_space<vmem>>, vector<16x32xbf16>
    tpu.vector_store %arg9[%c128_459, %c224_460], %286 {strides = array<i32>} : memref<256x288xbf16, #tpu.memory_space<vmem>>, vector<16x32xbf16>,
    %c265_461 = arith.constant 265 : index
    %c0_462 = arith.constant 0 : index
    %288 = vector.load %arg8[%c265_461, %c0_462] : memref<432x32xbf16, #tpu.memory_space<vmem>>, vector<16x32xbf16>
    %c144_463 = arith.constant 144 : index
    %c224_464 = arith.constant 224 : index
    %289 = vector.load %arg9[%c144_463, %c224_464] : memref<256x288xbf16, #tpu.memory_space<vmem>>, vector<16x32xbf16>
    tpu.vector_store %arg9[%c144_463, %c224_464], %288 {strides = array<i32>} : memref<256x288xbf16, #tpu.memory_space<vmem>>, vector<16x32xbf16>,
    %c289_465 = arith.constant 289 : index
    %c0_466 = arith.constant 0 : index
    %290 = vector.load %arg8[%c289_465, %c0_466] : memref<432x32xbf16, #tpu.memory_space<vmem>>, vector<16x32xbf16>
    %c160_467 = arith.constant 160 : index
    %c224_468 = arith.constant 224 : index
    %291 = vector.load %arg9[%c160_467, %c224_468] : memref<256x288xbf16, #tpu.memory_space<vmem>>, vector<16x32xbf16>
    tpu.vector_store %arg9[%c160_467, %c224_468], %290 {strides = array<i32>} : memref<256x288xbf16, #tpu.memory_space<vmem>>, vector<16x32xbf16>,
    %c313_469 = arith.constant 313 : index
    %c0_470 = arith.constant 0 : index
    %292 = vector.load %arg8[%c313_469, %c0_470] : memref<432x32xbf16, #tpu.memory_space<vmem>>, vector<16x32xbf16>
    %c176_471 = arith.constant 176 : index
    %c224_472 = arith.constant 224 : index
    %293 = vector.load %arg9[%c176_471, %c224_472] : memref<256x288xbf16, #tpu.memory_space<vmem>>, vector<16x32xbf16>
    tpu.vector_store %arg9[%c176_471, %c224_472], %292 {strides = array<i32>} : memref<256x288xbf16, #tpu.memory_space<vmem>>, vector<16x32xbf16>,
    %c337_473 = arith.constant 337 : index
    %c0_474 = arith.constant 0 : index
    %294 = vector.load %arg8[%c337_473, %c0_474] : memref<432x32xbf16, #tpu.memory_space<vmem>>, vector<16x32xbf16>
    %c192_475 = arith.constant 192 : index
    %c224_476 = arith.constant 224 : index
    %295 = vector.load %arg9[%c192_475, %c224_476] : memref<256x288xbf16, #tpu.memory_space<vmem>>, vector<16x32xbf16>
    tpu.vector_store %arg9[%c192_475, %c224_476], %294 {strides = array<i32>} : memref<256x288xbf16, #tpu.memory_space<vmem>>, vector<16x32xbf16>,
    %c361_477 = arith.constant 361 : index
    %c0_478 = arith.constant 0 : index
    %296 = vector.load %arg8[%c361_477, %c0_478] : memref<432x32xbf16, #tpu.memory_space<vmem>>, vector<16x32xbf16>
    %c208_479 = arith.constant 208 : index
    %c224_480 = arith.constant 224 : index
    %297 = vector.load %arg9[%c208_479, %c224_480] : memref<256x288xbf16, #tpu.memory_space<vmem>>, vector<16x32xbf16>
    tpu.vector_store %arg9[%c208_479, %c224_480], %296 {strides = array<i32>} : memref<256x288xbf16, #tpu.memory_space<vmem>>, vector<16x32xbf16>,
    %c385_481 = arith.constant 385 : index
    %c0_482 = arith.constant 0 : index
    %298 = vector.load %arg8[%c385_481, %c0_482] : memref<432x32xbf16, #tpu.memory_space<vmem>>, vector<16x32xbf16>
    %c224_483 = arith.constant 224 : index
    %c224_484 = arith.constant 224 : index
    %299 = vector.load %arg9[%c224_483, %c224_484] : memref<256x288xbf16, #tpu.memory_space<vmem>>, vector<16x32xbf16>
    tpu.vector_store %arg9[%c224_483, %c224_484], %298 {strides = array<i32>} : memref<256x288xbf16, #tpu.memory_space<vmem>>, vector<16x32xbf16>,
    %c409 = arith.constant 409 : index
    %c0_485 = arith.constant 0 : index
    %300 = vector.load %arg8[%c409, %c0_485] : memref<432x32xbf16, #tpu.memory_space<vmem>>, vector<16x32xbf16>
    %c240_486 = arith.constant 240 : index
    %c224_487 = arith.constant 224 : index
    %301 = vector.load %arg9[%c240_486, %c224_487] : memref<256x288xbf16, #tpu.memory_space<vmem>>, vector<16x32xbf16>
    tpu.vector_store %arg9[%c240_486, %c224_487], %300 {strides = array<i32>} : memref<256x288xbf16, #tpu.memory_space<vmem>>, vector<16x32xbf16>,
    %c50_488 = arith.constant 50 : index
    %c0_489 = arith.constant 0 : index
    %302 = vector.load %arg8[%c50_488, %c0_489] : memref<432x32xbf16, #tpu.memory_space<vmem>>, vector<16x32xbf16>
    %c0_490 = arith.constant 0 : index
    %c256 = arith.constant 256 : index
    %303 = vector.load %arg9[%c0_490, %c256] : memref<256x288xbf16, #tpu.memory_space<vmem>>, vector<16x32xbf16>
    tpu.vector_store %arg9[%c0_490, %c256], %302 {strides = array<i32>} : memref<256x288xbf16, #tpu.memory_space<vmem>>, vector<16x32xbf16>,
    %c74_491 = arith.constant 74 : index
    %c0_492 = arith.constant 0 : index
    %304 = vector.load %arg8[%c74_491, %c0_492] : memref<432x32xbf16, #tpu.memory_space<vmem>>, vector<16x32xbf16>
    %c16_493 = arith.constant 16 : index
    %c256_494 = arith.constant 256 : index
    %305 = vector.load %arg9[%c16_493, %c256_494] : memref<256x288xbf16, #tpu.memory_space<vmem>>, vector<16x32xbf16>
    tpu.vector_store %arg9[%c16_493, %c256_494], %304 {strides = array<i32>} : memref<256x288xbf16, #tpu.memory_space<vmem>>, vector<16x32xbf16>,
    %c98_495 = arith.constant 98 : index
    %c0_496 = arith.constant 0 : index
    %306 = vector.load %arg8[%c98_495, %c0_496] : memref<432x32xbf16, #tpu.memory_space<vmem>>, vector<16x32xbf16>
    %c32_497 = arith.constant 32 : index
    %c256_498 = arith.constant 256 : index
    %307 = vector.load %arg9[%c32_497, %c256_498] : memref<256x288xbf16, #tpu.memory_space<vmem>>, vector<16x32xbf16>
    tpu.vector_store %arg9[%c32_497, %c256_498], %306 {strides = array<i32>} : memref<256x288xbf16, #tpu.memory_space<vmem>>, vector<16x32xbf16>,
    %c122_499 = arith.constant 122 : index
    %c0_500 = arith.constant 0 : index
    %308 = vector.load %arg8[%c122_499, %c0_500] : memref<432x32xbf16, #tpu.memory_space<vmem>>, vector<16x32xbf16>
    %c48_501 = arith.constant 48 : index
    %c256_502 = arith.constant 256 : index
    %309 = vector.load %arg9[%c48_501, %c256_502] : memref<256x288xbf16, #tpu.memory_space<vmem>>, vector<16x32xbf16>
    tpu.vector_store %arg9[%c48_501, %c256_502], %308 {strides = array<i32>} : memref<256x288xbf16, #tpu.memory_space<vmem>>, vector<16x32xbf16>,
    %c146_503 = arith.constant 146 : index
    %c0_504 = arith.constant 0 : index
    %310 = vector.load %arg8[%c146_503, %c0_504] : memref<432x32xbf16, #tpu.memory_space<vmem>>, vector<16x32xbf16>
    %c64_505 = arith.constant 64 : index
    %c256_506 = arith.constant 256 : index
    %311 = vector.load %arg9[%c64_505, %c256_506] : memref<256x288xbf16, #tpu.memory_space<vmem>>, vector<16x32xbf16>
    tpu.vector_store %arg9[%c64_505, %c256_506], %310 {strides = array<i32>} : memref<256x288xbf16, #tpu.memory_space<vmem>>, vector<16x32xbf16>,
    %c170_507 = arith.constant 170 : index
    %c0_508 = arith.constant 0 : index
    %312 = vector.load %arg8[%c170_507, %c0_508] : memref<432x32xbf16, #tpu.memory_space<vmem>>, vector<16x32xbf16>
    %c80_509 = arith.constant 80 : index
    %c256_510 = arith.constant 256 : index
    %313 = vector.load %arg9[%c80_509, %c256_510] : memref<256x288xbf16, #tpu.memory_space<vmem>>, vector<16x32xbf16>
    tpu.vector_store %arg9[%c80_509, %c256_510], %312 {strides = array<i32>} : memref<256x288xbf16, #tpu.memory_space<vmem>>, vector<16x32xbf16>,
    %c194_511 = arith.constant 194 : index
    %c0_512 = arith.constant 0 : index
    %314 = vector.load %arg8[%c194_511, %c0_512] : memref<432x32xbf16, #tpu.memory_space<vmem>>, vector<16x32xbf16>
    %c96_513 = arith.constant 96 : index
    %c256_514 = arith.constant 256 : index
    %315 = vector.load %arg9[%c96_513, %c256_514] : memref<256x288xbf16, #tpu.memory_space<vmem>>, vector<16x32xbf16>
    tpu.vector_store %arg9[%c96_513, %c256_514], %314 {strides = array<i32>} : memref<256x288xbf16, #tpu.memory_space<vmem>>, vector<16x32xbf16>,
    %c218_515 = arith.constant 218 : index
    %c0_516 = arith.constant 0 : index
    %316 = vector.load %arg8[%c218_515, %c0_516] : memref<432x32xbf16, #tpu.memory_space<vmem>>, vector<16x32xbf16>
    %c112_517 = arith.constant 112 : index
    %c256_518 = arith.constant 256 : index
    %317 = vector.load %arg9[%c112_517, %c256_518] : memref<256x288xbf16, #tpu.memory_space<vmem>>, vector<16x32xbf16>
    tpu.vector_store %arg9[%c112_517, %c256_518], %316 {strides = array<i32>} : memref<256x288xbf16, #tpu.memory_space<vmem>>, vector<16x32xbf16>,
    %c242_519 = arith.constant 242 : index
    %c0_520 = arith.constant 0 : index
    %318 = vector.load %arg8[%c242_519, %c0_520] : memref<432x32xbf16, #tpu.memory_space<vmem>>, vector<16x32xbf16>
    %c128_521 = arith.constant 128 : index
    %c256_522 = arith.constant 256 : index
    %319 = vector.load %arg9[%c128_521, %c256_522] : memref<256x288xbf16, #tpu.memory_space<vmem>>, vector<16x32xbf16>
    tpu.vector_store %arg9[%c128_521, %c256_522], %318 {strides = array<i32>} : memref<256x288xbf16, #tpu.memory_space<vmem>>, vector<16x32xbf16>,
    %c266_523 = arith.constant 266 : index
    %c0_524 = arith.constant 0 : index
    %320 = vector.load %arg8[%c266_523, %c0_524] : memref<432x32xbf16, #tpu.memory_space<vmem>>, vector<16x32xbf16>
    %c144_525 = arith.constant 144 : index
    %c256_526 = arith.constant 256 : index
    %321 = vector.load %arg9[%c144_525, %c256_526] : memref<256x288xbf16, #tpu.memory_space<vmem>>, vector<16x32xbf16>
    tpu.vector_store %arg9[%c144_525, %c256_526], %320 {strides = array<i32>} : memref<256x288xbf16, #tpu.memory_space<vmem>>, vector<16x32xbf16>,
    %c290_527 = arith.constant 290 : index
    %c0_528 = arith.constant 0 : index
    %322 = vector.load %arg8[%c290_527, %c0_528] : memref<432x32xbf16, #tpu.memory_space<vmem>>, vector<16x32xbf16>
    %c160_529 = arith.constant 160 : index
    %c256_530 = arith.constant 256 : index
    %323 = vector.load %arg9[%c160_529, %c256_530] : memref<256x288xbf16, #tpu.memory_space<vmem>>, vector<16x32xbf16>
    tpu.vector_store %arg9[%c160_529, %c256_530], %322 {strides = array<i32>} : memref<256x288xbf16, #tpu.memory_space<vmem>>, vector<16x32xbf16>,
    %c314_531 = arith.constant 314 : index
    %c0_532 = arith.constant 0 : index
    %324 = vector.load %arg8[%c314_531, %c0_532] : memref<432x32xbf16, #tpu.memory_space<vmem>>, vector<16x32xbf16>
    %c176_533 = arith.constant 176 : index
    %c256_534 = arith.constant 256 : index
    %325 = vector.load %arg9[%c176_533, %c256_534] : memref<256x288xbf16, #tpu.memory_space<vmem>>, vector<16x32xbf16>
    tpu.vector_store %arg9[%c176_533, %c256_534], %324 {strides = array<i32>} : memref<256x288xbf16, #tpu.memory_space<vmem>>, vector<16x32xbf16>,
    %c338_535 = arith.constant 338 : index
    %c0_536 = arith.constant 0 : index
    %326 = vector.load %arg8[%c338_535, %c0_536] : memref<432x32xbf16, #tpu.memory_space<vmem>>, vector<16x32xbf16>
    %c192_537 = arith.constant 192 : index
    %c256_538 = arith.constant 256 : index
    %327 = vector.load %arg9[%c192_537, %c256_538] : memref<256x288xbf16, #tpu.memory_space<vmem>>, vector<16x32xbf16>
    tpu.vector_store %arg9[%c192_537, %c256_538], %326 {strides = array<i32>} : memref<256x288xbf16, #tpu.memory_space<vmem>>, vector<16x32xbf16>,
    %c362_539 = arith.constant 362 : index
    %c0_540 = arith.constant 0 : index
    %328 = vector.load %arg8[%c362_539, %c0_540] : memref<432x32xbf16, #tpu.memory_space<vmem>>, vector<16x32xbf16>
    %c208_541 = arith.constant 208 : index
    %c256_542 = arith.constant 256 : index
    %329 = vector.load %arg9[%c208_541, %c256_542] : memref<256x288xbf16, #tpu.memory_space<vmem>>, vector<16x32xbf16>
    tpu.vector_store %arg9[%c208_541, %c256_542], %328 {strides = array<i32>} : memref<256x288xbf16, #tpu.memory_space<vmem>>, vector<16x32xbf16>,
    %c386_543 = arith.constant 386 : index
    %c0_544 = arith.constant 0 : index
    %330 = vector.load %arg8[%c386_543, %c0_544] : memref<432x32xbf16, #tpu.memory_space<vmem>>, vector<16x32xbf16>
    %c224_545 = arith.constant 224 : index
    %c256_546 = arith.constant 256 : index
    %331 = vector.load %arg9[%c224_545, %c256_546] : memref<256x288xbf16, #tpu.memory_space<vmem>>, vector<16x32xbf16>
    tpu.vector_store %arg9[%c224_545, %c256_546], %330 {strides = array<i32>} : memref<256x288xbf16, #tpu.memory_space<vmem>>, vector<16x32xbf16>,
    %c410 = arith.constant 410 : index
    %c0_547 = arith.constant 0 : index
    %332 = vector.load %arg8[%c410, %c0_547] : memref<432x32xbf16, #tpu.memory_space<vmem>>, vector<16x32xbf16>
    %c240_548 = arith.constant 240 : index
    %c256_549 = arith.constant 256 : index
    %333 = vector.load %arg9[%c240_548, %c256_549] : memref<256x288xbf16, #tpu.memory_space<vmem>>, vector<16x32xbf16>
    tpu.vector_store %arg9[%c240_548, %c256_549], %332 {strides = array<i32>} : memref<256x288xbf16, #tpu.memory_space<vmem>>, vector<16x32xbf16>,
    %c0_550 = arith.constant 0 : index
    %c0_551 = arith.constant 0 : index
    %334 = vector.load %arg9[%c0_550, %c0_551] : memref<256x288xbf16, #tpu.memory_space<vmem>>, vector<256x288xbf16>
    %c0_552 = arith.constant 0 : index
    %c0_553 = arith.constant 0 : index
    %335 = vector.load %arg4[%c0_552, %c0_553] : memref<288x32xbf16, #tpu.memory_space<vmem>>, vector<288x32xbf16>
    %cst_554 = arith.constant dense<0.000000e+00> : vector<256x32xf32>
    %336 = tpu.matmul %334, %335, %cst_554 {dimension_numbers = #tpu.dot_dimension_numbers<[1], [0], [0], [1], [0, 0, 1, 1], [], []>} : vector<256x288xbf16>, vector<288x32xbf16>, vector<256x32xf32> -> vector<256x32xf32>
    %c0_555 = arith.constant 0 : index
    %c0_556 = arith.constant 0 : index
    %337 = vector.load %arg6[%c0_555, %c0_556] : memref<1x32xf32, #tpu.memory_space<vmem>>, vector<1x32xf32>
    %cst_557 = arith.constant dense<0.000000e+00> : vector<32xf32>
    %338 = vector.multi_reduction <add>, %336, %cst_557 [0] : vector<256x32xf32> to vector<32xf32>
    %339 = vector.shape_cast %338 : vector<32xf32> to vector<1x32xf32>
    %340 = arith.addf %337, %339 : vector<1x32xf32>
    %c0_558 = arith.constant 0 : index
    %c0_559 = arith.constant 0 : index
    %341 = vector.load %arg6[%c0_558, %c0_559] : memref<1x32xf32, #tpu.memory_space<vmem>>, vector<1x32xf32>
    tpu.vector_store %arg6[%c0_558, %c0_559], %340 {strides = array<i32>} : memref<1x32xf32, #tpu.memory_space<vmem>>, vector<1x32xf32>,
    %c0_560 = arith.constant 0 : index
    %c0_561 = arith.constant 0 : index
    %342 = vector.load %arg7[%c0_560, %c0_561] : memref<1x32xf32, #tpu.memory_space<vmem>>, vector<1x32xf32>
    %343 = arith.mulf %336, %336 : vector<256x32xf32>
    %cst_562 = arith.constant dense<0.000000e+00> : vector<32xf32>
    %344 = vector.multi_reduction <add>, %343, %cst_562 [0] : vector<256x32xf32> to vector<32xf32>
    %345 = vector.shape_cast %344 : vector<32xf32> to vector<1x32xf32>
    %346 = arith.addf %342, %345 : vector<1x32xf32>
    %c0_563 = arith.constant 0 : index
    %c0_564 = arith.constant 0 : index
    %347 = vector.load %arg7[%c0_563, %c0_564] : memref<1x32xf32, #tpu.memory_space<vmem>>, vector<1x32xf32>
    tpu.vector_store %arg7[%c0_563, %c0_564], %346 {strides = array<i32>} : memref<1x32xf32, #tpu.memory_space<vmem>>, vector<1x32xf32>,
    %348 = arith.truncf %336 : vector<256x32xf32> to vector<256x32xbf16>
    %c0_565 = arith.constant 0 : index
    %c0_566 = arith.constant 0 : index
    %349 = vector.load %arg5[%c0_565, %c0_566] : memref<256x32xbf16, #tpu.memory_space<vmem>>, vector<256x32xbf16>
    tpu.vector_store %arg5[%c0_565, %c0_566], %348 {strides = array<i32>} : memref<256x32xbf16, #tpu.memory_space<vmem>>, vector<256x32xbf16>,
    return
  }
  func.func @transform_0(%arg0: i32) -> (i32, i32) {
    %c0_i32 = arith.constant 0 : i32
    %c0_i32_0 = arith.constant 0 : i32
    return %arg0, %c0_i32 : i32, i32
  }
  func.func @transform_1(%arg0: i32) -> (i32, i32) {
    %c0_i32 = arith.constant 0 : i32
    %c0_i32_0 = arith.constant 0 : i32
    %c0_i32_1 = arith.constant 0 : i32
    return %c0_i32, %c0_i32_0 : i32, i32
  }
  func.func @transform_2(%arg0: i32) -> (i32, i32) {
    %c0_i32 = arith.constant 0 : i32
    %c0_i32_0 = arith.constant 0 : i32
    %c0_i32_1 = arith.constant 0 : i32
    return %c0_i32, %c0_i32_0 : i32, i32
  }
  func.func @transform_3(%arg0: i32) -> (i32, i32) {
    %c0_i32 = arith.constant 0 : i32
    %c0_i32_0 = arith.constant 0 : i32
    %c0_i32_1 = arith.constant 0 : i32
    return %c0_i32, %c0_i32_0 : i32, i32
  }
  func.func @transform_4(%arg0: i32) -> (i32, i32) {
    %c0_i32 = arith.constant 0 : i32
    %c0_i32_0 = arith.constant 0 : i32
    return %arg0, %c0_i32 : i32, i32
  }
  func.func @transform_5(%arg0: i32) -> (i32, i32) {
    %c0_i32 = arith.constant 0 : i32
    %c0_i32_0 = arith.constant 0 : i32
    %c0_i32_1 = arith.constant 0 : i32
    return %c0_i32, %c0_i32_0 : i32, i32
  }
  func.func @transform_6(%arg0: i32) -> (i32, i32) {
    %c0_i32 = arith.constant 0 : i32
    %c0_i32_0 = arith.constant 0 : i32
    %c0_i32_1 = arith.constant 0 : i32
    return %c0_i32, %c0_i32_0 : i32, i32
  }
}

module attributes {stable_mosaic.version = 11 : i64} {
  func.func @_bn_residual_relu_kernel(%arg0: i32, %arg1: memref<256x64xf32, #tpu.memory_space<vmem>>, %arg2: memref<1x64xf32, #tpu.memory_space<vmem>>, %arg3: memref<1x64xf32, #tpu.memory_space<vmem>>, %arg4: memref<256x64xf32, #tpu.memory_space<vmem>>, %arg5: memref<256x64xf32, #tpu.memory_space<vmem>>) attributes {dimension_semantics = [#tpu.dimension_semantics<parallel>], iteration_bounds = array<i64: 2>, scalar_prefetch = 0 : i64, scratch_operands = 0 : i64, tpu.core_type = #tpu.core_type<tc>, window_params = [{transform_indices = @transform_0, window_bounds = array<i64: 256, 64>}, {pipeline_mode = #tpu.pipeline_mode<synchronous>, transform_indices = @transform_1, window_bounds = array<i64: 1, 64>}, {pipeline_mode = #tpu.pipeline_mode<synchronous>, transform_indices = @transform_2, window_bounds = array<i64: 1, 64>}, {transform_indices = @transform_3, window_bounds = array<i64: 256, 64>}, {transform_indices = @transform_4, window_bounds = array<i64: 256, 64>}]} {
    %c0 = arith.constant 0 : index
    %c0_0 = arith.constant 0 : index
    %0 = vector.load %arg1[%c0, %c0_0] : memref<256x64xf32, #tpu.memory_space<vmem>>, vector<256x64xf32>
    %c0_1 = arith.constant 0 : index
    %c0_2 = arith.constant 0 : index
    %1 = vector.load %arg2[%c0_1, %c0_2] : memref<1x64xf32, #tpu.memory_space<vmem>>, vector<1x64xf32>
    %2 = vector.broadcast %1 : vector<1x64xf32> to vector<256x64xf32>
    %3 = arith.mulf %0, %2 : vector<256x64xf32>
    %c0_3 = arith.constant 0 : index
    %c0_4 = arith.constant 0 : index
    %4 = vector.load %arg3[%c0_3, %c0_4] : memref<1x64xf32, #tpu.memory_space<vmem>>, vector<1x64xf32>
    %5 = vector.broadcast %4 : vector<1x64xf32> to vector<256x64xf32>
    %6 = arith.addf %3, %5 : vector<256x64xf32>
    %c0_5 = arith.constant 0 : index
    %c0_6 = arith.constant 0 : index
    %7 = vector.load %arg4[%c0_5, %c0_6] : memref<256x64xf32, #tpu.memory_space<vmem>>, vector<256x64xf32>
    %8 = arith.addf %6, %7 : vector<256x64xf32>
    %cst = arith.constant 0.000000e+00 : f32
    %9 = vector.broadcast %cst : f32 to vector<256x64xf32>
    %10 = arith.maximumf %8, %9 : vector<256x64xf32>
    %c0_7 = arith.constant 0 : index
    %c0_8 = arith.constant 0 : index
    %11 = vector.load %arg5[%c0_7, %c0_8] : memref<256x64xf32, #tpu.memory_space<vmem>>, vector<256x64xf32>
    tpu.vector_store %arg5[%c0_7, %c0_8], %10 {strides = array<i32>} : memref<256x64xf32, #tpu.memory_space<vmem>>, vector<256x64xf32>,
    return
  }
  func.func @transform_0(%arg0: i32) -> (i32, i32) {
    %c0_i32 = arith.constant 0 : i32
    %c0_i32_0 = arith.constant 0 : i32
    return %arg0, %c0_i32 : i32, i32
  }
  func.func @transform_1(%arg0: i32) -> (i32, i32) {
    %c0_i32 = arith.constant 0 : i32
    %c0_i32_0 = arith.constant 0 : i32
    %c0_i32_1 = arith.constant 0 : i32
    return %c0_i32, %c0_i32_0 : i32, i32
  }
  func.func @transform_2(%arg0: i32) -> (i32, i32) {
    %c0_i32 = arith.constant 0 : i32
    %c0_i32_0 = arith.constant 0 : i32
    %c0_i32_1 = arith.constant 0 : i32
    return %c0_i32, %c0_i32_0 : i32, i32
  }
  func.func @transform_3(%arg0: i32) -> (i32, i32) {
    %c0_i32 = arith.constant 0 : i32
    %c0_i32_0 = arith.constant 0 : i32
    return %arg0, %c0_i32 : i32, i32
  }
  func.func @transform_4(%arg0: i32) -> (i32, i32) {
    %c0_i32 = arith.constant 0 : i32
    %c0_i32_0 = arith.constant 0 : i32
    return %arg0, %c0_i32 : i32, i32
  }
}

</mosaic_0001>

<llo_original>
// kernel: resnext_bottleneck_forward.7
$region0: #{resnext_bottleneck_forward.7}
  #allocation0 [shape = 'u32[]', space=smem, size = 0x4, offset = 0x4, fixed_abs, tag = 'smem constant byte address 0x4 - core index']
  #allocation1 [shape = 'u32[72,128]{1,0:T(1,128)}', space=vmem, size = 0x9000, scoped, tag = 'internal scratch']
  %s0 = inlined_call_operand.vmem [shape: f32[512,64], index: 0, kind: input, shape index: {}]
  %s1 = inlined_call_operand.vmem [shape: f32[1,64], index: 1, kind: input, shape index: {}]
  %s2 = inlined_call_operand.vmem [shape: f32[1,64], index: 2, kind: input, shape index: {}]
  %s3 = inlined_call_operand.vmem [shape: f32[512,64], index: 3, kind: input, shape index: {}]
  %s4 = inlined_call_operand.hbm [shape: f32[512,64], index: 4, kind: output, shape index: {}]
  %s5 = sld [smem:[#allocation0]]
  $region49: #{resnext_bottleneck_forward.7} parent=0
    _
  %s7 = ssub.s32 1, %s5
  %s8 = scalar_select 0, %s7, %s5
  $region1: #{resnext_bottleneck_forward.7} parent=0
    #allocation2 [shape = 'u8[262144]{0}', space=vmem, size = 0x40000, scoped, tag = 'output window, operand 0']
    #allocation3 [shape = 's32[2]{0}', space=sflag, size = 0x8, scoped, tag = 'scoped memory for resnext_bottleneck_forward.7']
    %9 = vsyncpa [#allocation3], 0
    %s10 = scalar_lea.sflag [#allocation3], 1
    %11 = vsyncpa %s10, 0
    loop: start=0, step=1, limit=4
    $region2: #{resnext_bottleneck_forward.7} parent=1 // loop_pre_header
      _
    $region3: #{resnext_bottleneck_forward.7} parent=1 // loop_header
      %s13 = sphi 0, %s17
      %p14 = scmp.ge.s32.totalorder %s13, 4
      %s23 = sphi 0, %s25
      %s26 = sphi 0, %s23
      %s27 = sphi 0, %s26
      %s43 = sphi 0, %s27
      %s47 = sphi 0, %s47
      %s49 = sphi 0, %s47
      %s50 = sphi 0, %s49
      %s64 = sphi 0, %s50
      %s68 = sphi 0, %s68
      %s70 = sphi 0, %s68
      %s71 = sphi 0, %s70
      %s85 = sphi 0, %s71
      %s91 = sphi 0, %s93
      %s94 = sphi 0, %s91
      %s95 = sphi 0, %s94
      %s111 = sphi 0, %s95
      %s117 = sphi 0, %s119
      %s120 = sphi 0, %s117
      %s121 = sphi 0, %s120
      %s137 = sphi 0, %s121
    $region4: #{resnext_bottleneck_forward.7} parent=1 // loop_header_branch
      %16 = sbr.rel (%p14) target = $region8
    $region5: #{resnext_bottleneck_forward.7} parent=1 // loop_body
      %s18 = ssub.s32 %s13, 1
      %s19 = ssub.s32 %s13, 2
      %s20 = sadd.s32 %s13, 1
      %s21 = ssub.s32 %s13, %s20
      %p22 = scmp.eq.s32.totalorder %s21, 0
      %s24 = sadd.s32 %s23, 1
      %s25 = scalar_select %p22, %s23, %s24
      %p28 = pneg %p22
      %p29 = scmp.eq.s32.totalorder %s13, 1
      %p30 = por %p28, %p29
      %p31 = scmp.ne.s32.totalorder %s23, %s26
      %p32 = scmp.eq.s32.totalorder %s13, 0
      %p33 = por %p31, %p32
      %p34 = scmp.ne.s32.totalorder %s23, %s26
      %p35 = scmp.eq.s32.totalorder %s18, 1
      %p36 = por %p34, %p35
      %p37 = scmp.ne.s32.totalorder %s26, %s27
      %p38 = scmp.eq.s32.totalorder %s18, 0
      %p39 = por %p37, %p38
      %p40 = scmp.ne.s32.totalorder %s26, %s27
      %p41 = scmp.eq.s32.totalorder %s19, 1
      %p42 = por %p40, %p41
      %p44 = scmp.ne.s32.totalorder %s27, %s43
      %p45 = scmp.eq.s32.totalorder %s19, 0
      %p46 = por %p44, %p45
      %s48 = sadd.s32 %s47, 1
      %p51 = scmp.eq.s32.totalorder %s13, 1
      %p52 = scmp.ne.s32.totalorder %s47, %s49
      %p53 = scmp.eq.s32.totalorder %s13, 0
      %p54 = por %p52, %p53
      %p55 = scmp.ne.s32.totalorder %s47, %s49
      %p56 = scmp.eq.s32.totalorder %s18, 1
      %p57 = por %p55, %p56
      %p58 = scmp.ne.s32.totalorder %s49, %s50
      %p59 = scmp.eq.s32.totalorder %s18, 0
      %p60 = por %p58, %p59
      %p61 = scmp.ne.s32.totalorder %s49, %s50
      %p62 = scmp.eq.s32.totalorder %s19, 1
      %p63 = por %p61, %p62
      %p65 = scmp.ne.s32.totalorder %s50, %s64
      %p66 = scmp.eq.s32.totalorder %s19, 0
      %p67 = por %p65, %p66
      %s69 = sadd.s32 %s68, 1
      %p72 = scmp.eq.s32.totalorder %s13, 1
      %p73 = scmp.ne.s32.totalorder %s68, %s70
      %p74 = scmp.eq.s32.totalorder %s13, 0
      %p75 = por %p73, %p74
      %p76 = scmp.ne.s32.totalorder %s68, %s70
      %p77 = scmp.eq.s32.totalorder %s18, 1
      %p78 = por %p76, %p77
      %p79 = scmp.ne.s32.totalorder %s70, %s71
      %p80 = scmp.eq.s32.totalorder %s18, 0
      %p81 = por %p79, %p80
      %p82 = scmp.ne.s32.totalorder %s70, %s71
      %p83 = scmp.eq.s32.totalorder %s19, 1
      %p84 = por %p82, %p83
      %p86 = scmp.ne.s32.totalorder %s71, %s85
      %p87 = scmp.eq.s32.totalorder %s19, 0
      %p88 = por %p86, %p87
      %s89 = ssub.s32 %s13, %s20
      %p90 = scmp.eq.s32.totalorder %s89, 0
      %s92 = sadd.s32 %s91, 1
      %s93 = scalar_select %p90, %s91, %s92
      %p96 = pneg %p90
      %p97 = scmp.eq.s32.totalorder %s13, 1
      %p98 = por %p96, %p97
      %p99 = scmp.ne.s32.totalorder %s91, %s94
      %p100 = scmp.eq.s32.totalorder %s13, 0
      %p101 = por %p99, %p100
      %p102 = scmp.ne.s32.totalorder %s91, %s94
      %p103 = scmp.eq.s32.totalorder %s18, 1
      %p104 = por %p102, %p103
      %p105 = scmp.ne.s32.totalorder %s94, %s95
      %p106 = scmp.eq.s32.totalorder %s18, 0
      %p107 = por %p105, %p106
      %p108 = scmp.ne.s32.totalorder %s94, %s95
      %p109 = scmp.eq.s32.totalorder %s19, 1
      %p110 = por %p108, %p109
      %p112 = scmp.ne.s32.totalorder %s95, %s111
      %p113 = scmp.eq.s32.totalorder %s19, 0
      %p114 = por %p112, %p113
      %s115 = ssub.s32 %s13, %s20
      %p116 = scmp.eq.s32.totalorder %s115, 0
      %s118 = sadd.s32 %s117, 1
      %s119 = scalar_select %p116, %s117, %s118
      %p122 = pneg %p116
      %p123 = scmp.eq.s32.totalorder %s13, 1
      %p124 = por %p122, %p123
      %p125 = scmp.ne.s32.totalorder %s117, %s120
      %p126 = scmp.eq.s32.totalorder %s13, 0
      %p127 = por %p125, %p126
      %p128 = scmp.ne.s32.totalorder %s117, %s120
      %p129 = scmp.eq.s32.totalorder %s18, 1
      %p130 = por %p128, %p129
      %p131 = scmp.ne.s32.totalorder %s120, %s121
      %p132 = scmp.eq.s32.totalorder %s18, 0
      %p133 = por %p131, %p132
      %p134 = scmp.ne.s32.totalorder %s120, %s121
      %p135 = scmp.eq.s32.totalorder %s19, 1
      %p136 = por %p134, %p135
      %p138 = scmp.ne.s32.totalorder %s121, %s137
      %p139 = scmp.eq.s32.totalorder %s19, 0
      %p140 = por %p138, %p139
      %p141 = scmp.le.s32.totalorder 1, %s13
      %p142 = scmp.lt.s32.totalorder %s13, 3
      %p143 = pnand %p141, %p142
      %p144 = pneg %p143
      // Predicated region
      $region9: #{resnext_bottleneck_forward.7} parent=5 // pred_check
        _
      $region10: #{resnext_bottleneck_forward.7} parent=5 // pred_check_branch
        %146 = sbr.rel (%p143) target = $region12
      $region11: #{resnext_bottleneck_forward.7} parent=5 // pred_region
        %s147 = ssub.s32 %s13, 1
        // Predicated region
        $region13: #{resnext_bottleneck_forward.7} parent=11 // pred_check
          %p148 = pneg %p60
        $region14: #{resnext_bottleneck_forward.7} parent=11 // pred_check_branch
          %150 = sbr.rel (%p148) target = $region16
        $region15: #{resnext_bottleneck_forward.7} parent=11 // pred_region
          _
        $region16: #{resnext_bottleneck_forward.7} parent=11 // pred_fallthru
          _
        // Predicated region
        $region17: #{resnext_bottleneck_forward.7} parent=11 // pred_check
          %p151 = pneg %p81
        $region18: #{resnext_bottleneck_forward.7} parent=11 // pred_check_branch
          %153 = sbr.rel (%p151) target = $region20
        $region19: #{resnext_bottleneck_forward.7} parent=11 // pred_region
          _
        $region20: #{resnext_bottleneck_forward.7} parent=11 // pred_fallthru
          _
      $region12: #{resnext_bottleneck_forward.7} parent=5 // pred_fallthru
        _
      %p154 = scmp.lt.s32.totalorder %s13, 2
      // Predicated region
      $region21: #{resnext_bottleneck_forward.7} parent=5 // pred_check
        %p155 = pneg %p154
      $region22: #{resnext_bottleneck_forward.7} parent=5 // pred_check_branch
        %157 = sbr.rel (%p155) target = $region24
      $region23: #{resnext_bottleneck_forward.7} parent=5 // pred_region
        // Predicated region
        $region25: #{resnext_bottleneck_forward.7} parent=23 // pred_check
          %p158 = pneg %p33
        $region26: #{resnext_bottleneck_forward.7} parent=23 // pred_check_branch
          %160 = sbr.rel (%p158) target = $region28
        $region27: #{resnext_bottleneck_forward.7} parent=23 // pred_region
          %s161 = smul.u32 32, %s13
          %p162 = scmp.lt.s32.totalorder %s161, 63
          %s163 = scalar_select %p162, %s161, 63
          %s164 = smul.addr %s163, 8
          %s165 = scalar_lea.vmem %s0, %s164
          %s166 = smul.u32 32, %s13
        $region28: #{resnext_bottleneck_forward.7} parent=23 // pred_fallthru
          _
        // Predicated region
        $region29: #{resnext_bottleneck_forward.7} parent=23 // pred_check
          %p167 = pneg %p101
        $region30: #{resnext_bottleneck_forward.7} parent=23 // pred_check_branch
          %169 = sbr.rel (%p167) target = $region32
        $region31: #{resnext_bottleneck_forward.7} parent=23 // pred_region
          %s170 = smul.u32 32, %s13
          %p171 = scmp.lt.s32.totalorder %s170, 63
          %s172 = scalar_select %p171, %s170, 63
          %s173 = smul.addr %s172, 8
          %s174 = scalar_lea.vmem %s3, %s173
          %s175 = smul.u32 32, %s13
        $region32: #{resnext_bottleneck_forward.7} parent=23 // pred_fallthru
          _
      $region24: #{resnext_bottleneck_forward.7} parent=5 // pred_fallthru
        _
      %p176 = scmp.le.s32.totalorder 1, %s13
      %p177 = scmp.lt.s32.totalorder %s13, 3
      %p178 = pnand %p176, %p177
      %p179 = pneg %p178
      // Predicated region
      $region33: #{resnext_bottleneck_forward.7} parent=5 // pred_check
        _
      $region34: #{resnext_bottleneck_forward.7} parent=5 // pred_check_branch
        %181 = sbr.rel (%p178) target = $region36
      $region35: #{resnext_bottleneck_forward.7} parent=5 // pred_region
        %s182 = ssub.s32 %s13, 1
        %s183 = smul.u32 32, %s18
        %p184 = scmp.lt.s32.totalorder %s183, 63
        %s185 = scalar_select %p184, %s183, 63
        %s186 = smul.addr %s185, 8
        %s187 = scalar_lea.vmem %s0, %s186
        %p188 = pneg %p39
        %p189 = pneg %p36
        %p190 = pneg %p60
        %p191 = pneg %p57
        %p192 = pneg %p81
        %p193 = pneg %p78
        %s194 = smul.u32 32, %s18
        %p195 = scmp.lt.s32.totalorder %s194, 63
        %s196 = scalar_select %p195, %s194, 63
        %s197 = smul.addr %s196, 8
        %s198 = scalar_lea.vmem %s3, %s197
        %p199 = pneg %p107
        %p200 = pneg %p104
        %p201 = pneg %p133
        %p202 = pneg %p130
        %s203 = sand.u32 %s120, 1
        %s204 = scalar_lea.sflag [#allocation3], %s203
        %s205 = sand.u32 %s120, 1
        %s206 = smul.addr %s205, 256
        %s207 = scalar_lea.vmem [#allocation2], %s206
        %s208 = smul.u32 32, %s18
        %p209 = scmp.lt.s32.totalorder %s208, 63
        %s210 = scalar_select %p209, %s208, 63
        %s211 = smul.addr %s210, 8
        %s212 = scalar_lea.vmem %s0, %s211
        %s213 = smul.u32 32, %s18
        %s214 = smul.u32 32, %s18
        %p215 = scmp.lt.s32.totalorder %s214, 63
        %s216 = scalar_select %p215, %s214, 63
        %s217 = smul.addr %s216, 8
        %s218 = scalar_lea.vmem %s3, %s217
        %s219 = smul.u32 32, %s18
        %s220 = smul.u32 32, %s18
        %v221 = vld [vmem:[%s212] sm:$0xff]
        %v222 = vld [vmem:[%s212 + $0x8] sm:$0xff]
        %v223 = vld [vmem:[%s212 + $0x10] sm:$0xff]
        %v224 = vld [vmem:[%s212 + $0x18] sm:$0xff]
        %v225 = vld [vmem:[%s212 + $0x20] sm:$0xff]
        %v226 = vld [vmem:[%s212 + $0x28] sm:$0xff]
        %v227 = vld [vmem:[%s212 + $0x30] sm:$0xff]
        %v228 = vld [vmem:[%s212 + $0x38] sm:$0xff]
        %v229 = vld [vmem:[%s212 + $0x40] sm:$0xff]
        %v230 = vld [vmem:[%s212 + $0x48] sm:$0xff]
        %v231 = vld [vmem:[%s212 + $0x50] sm:$0xff]
        %v232 = vld [vmem:[%s212 + $0x58] sm:$0xff]
        %v233 = vld [vmem:[%s212 + $0x60] sm:$0xff]
        %v234 = vld [vmem:[%s212 + $0x68] sm:$0xff]
        %v235 = vld [vmem:[%s212 + $0x70] sm:$0xff]
        %v236 = vld [vmem:[%s212 + $0x78] sm:$0xff]
        %v237 = vld [vmem:[%s212 + $0x80] sm:$0xff]
        %v238 = vld [vmem:[%s212 + $0x88] sm:$0xff]
        %v239 = vld [vmem:[%s212 + $0x90] sm:$0xff]
        %v240 = vld [vmem:[%s212 + $0x98] sm:$0xff]
        %v241 = vld [vmem:[%s212 + $0xa0] sm:$0xff]
        %v242 = vld [vmem:[%s212 + $0xa8] sm:$0xff]
        %v243 = vld [vmem:[%s212 + $0xb0] sm:$0xff]
        %v244 = vld [vmem:[%s212 + $0xb8] sm:$0xff]
        %v245 = vld [vmem:[%s212 + $0xc0] sm:$0xff]
        %v246 = vld [vmem:[%s212 + $0xc8] sm:$0xff]
        %v247 = vld [vmem:[%s212 + $0xd0] sm:$0xff]
        %v248 = vld [vmem:[%s212 + $0xd8] sm:$0xff]
        %v249 = vld [vmem:[%s212 + $0xe0] sm:$0xff]
        %v250 = vld [vmem:[%s212 + $0xe8] sm:$0xff]
        %v251 = vld [vmem:[%s212 + $0xf0] sm:$0xff]
        %v252 = vld [vmem:[%s212 + $0xf8] sm:$0xff]
        %v253 = vld [vmem:[%s1] sm:$0x1]
        %v255 = vperm.slane %v253, 0
        %v257 = vmul.f32 %v221, %v255
        %v258 = vmul.f32 %v222, %v255
        %v259 = vmul.f32 %v223, %v255
        %v260 = vmul.f32 %v224, %v255
        %v261 = vmul.f32 %v225, %v255
        %v262 = vmul.f32 %v226, %v255
        %v263 = vmul.f32 %v227, %v255
        %v264 = vmul.f32 %v228, %v255
        %v265 = vmul.f32 %v229, %v255
        %v266 = vmul.f32 %v230, %v255
        %v267 = vmul.f32 %v231, %v255
        %v268 = vmul.f32 %v232, %v255
        %v269 = vmul.f32 %v233, %v255
        %v270 = vmul.f32 %v234, %v255
        %v271 = vmul.f32 %v235, %v255
        %v272 = vmul.f32 %v236, %v255
        %v273 = vmul.f32 %v237, %v255
        %v274 = vmul.f32 %v238, %v255
        %v275 = vmul.f32 %v239, %v255
        %v276 = vmul.f32 %v240, %v255
        %v277 = vmul.f32 %v241, %v255
        %v278 = vmul.f32 %v242, %v255
        %v279 = vmul.f32 %v243, %v255
        %v280 = vmul.f32 %v244, %v255
        %v281 = vmul.f32 %v245, %v255
        %v282 = vmul.f32 %v246, %v255
        %v283 = vmul.f32 %v247, %v255
        %v284 = vmul.f32 %v248, %v255
        %v285 = vmul.f32 %v249, %v255
        %v286 = vmul.f32 %v250, %v255
        %v287 = vmul.f32 %v251, %v255
        %v288 = vmul.f32 %v252, %v255
        %v289 = vld [vmem:[%s2] sm:$0x1]
        %v291 = vperm.slane %v289, 0
        %v293 = vadd.f32 %v257, %v291
        %v294 = vadd.f32 %v258, %v291
        %v295 = vadd.f32 %v259, %v291
        %v296 = vadd.f32 %v260, %v291
        %v297 = vadd.f32 %v261, %v291
        %v298 = vadd.f32 %v262, %v291
        %v299 = vadd.f32 %v263, %v291
        %v300 = vadd.f32 %v264, %v291
        %v301 = vadd.f32 %v265, %v291
        %v302 = vadd.f32 %v266, %v291
        %v303 = vadd.f32 %v267, %v291
        %v304 = vadd.f32 %v268, %v291
        %v305 = vadd.f32 %v269, %v291
        %v306 = vadd.f32 %v270, %v291
        %v307 = vadd.f32 %v271, %v291
        %v308 = vadd.f32 %v272, %v291
        %v309 = vadd.f32 %v273, %v291
        %v310 = vadd.f32 %v274, %v291
        %v311 = vadd.f32 %v275, %v291
        %v312 = vadd.f32 %v276, %v291
        %v313 = vadd.f32 %v277, %v291
        %v314 = vadd.f32 %v278, %v291
        %v315 = vadd.f32 %v279, %v291
        %v316 = vadd.f32 %v280, %v291
        %v317 = vadd.f32 %v281, %v291
        %v318 = vadd.f32 %v282, %v291
        %v319 = vadd.f32 %v283, %v291
        %v320 = vadd.f32 %v284, %v291
        %v321 = vadd.f32 %v285, %v291
        %v322 = vadd.f32 %v286, %v291
        %v323 = vadd.f32 %v287, %v291
        %v324 = vadd.f32 %v288, %v291
        %v325 = vld [vmem:[%s218] sm:$0xff]
        %v326 = vld [vmem:[%s218 + $0x8] sm:$0xff]
        %v327 = vld [vmem:[%s218 + $0x10] sm:$0xff]
        %v328 = vld [vmem:[%s218 + $0x18] sm:$0xff]
        %v329 = vld [vmem:[%s218 + $0x20] sm:$0xff]
        %v330 = vld [vmem:[%s218 + $0x28] sm:$0xff]
        %v331 = vld [vmem:[%s218 + $0x30] sm:$0xff]
        %v332 = vld [vmem:[%s218 + $0x38] sm:$0xff]
        %v333 = vld [vmem:[%s218 + $0x40] sm:$0xff]
        %v334 = vld [vmem:[%s218 + $0x48] sm:$0xff]
        %v335 = vld [vmem:[%s218 + $0x50] sm:$0xff]
        %v336 = vld [vmem:[%s218 + $0x58] sm:$0xff]
        %v337 = vld [vmem:[%s218 + $0x60] sm:$0xff]
        %v338 = vld [vmem:[%s218 + $0x68] sm:$0xff]
        %v339 = vld [vmem:[%s218 + $0x70] sm:$0xff]
        %v340 = vld [vmem:[%s218 + $0x78] sm:$0xff]
        %v341 = vld [vmem:[%s218 + $0x80] sm:$0xff]
        %v342 = vld [vmem:[%s218 + $0x88] sm:$0xff]
        %v343 = vld [vmem:[%s218 + $0x90] sm:$0xff]
        %v344 = vld [vmem:[%s218 + $0x98] sm:$0xff]
        %v345 = vld [vmem:[%s218 + $0xa0] sm:$0xff]
        %v346 = vld [vmem:[%s218 + $0xa8] sm:$0xff]
        %v347 = vld [vmem:[%s218 + $0xb0] sm:$0xff]
        %v348 = vld [vmem:[%s218 + $0xb8] sm:$0xff]
        %v349 = vld [vmem:[%s218 + $0xc0] sm:$0xff]
        %v350 = vld [vmem:[%s218 + $0xc8] sm:$0xff]
        %v351 = vld [vmem:[%s218 + $0xd0] sm:$0xff]
        %v352 = vld [vmem:[%s218 + $0xd8] sm:$0xff]
        %v353 = vld [vmem:[%s218 + $0xe0] sm:$0xff]
        %v354 = vld [vmem:[%s218 + $0xe8] sm:$0xff]
        %v355 = vld [vmem:[%s218 + $0xf0] sm:$0xff]
        %v356 = vld [vmem:[%s218 + $0xf8] sm:$0xff]
        %v357 = vadd.f32 %v293, %v325
        %v358 = vadd.f32 %v294, %v326
        %v359 = vadd.f32 %v295, %v327
        %v360 = vadd.f32 %v296, %v328
        %v361 = vadd.f32 %v297, %v329
        %v362 = vadd.f32 %v298, %v330
        %v363 = vadd.f32 %v299, %v331
        %v364 = vadd.f32 %v300, %v332
        %v365 = vadd.f32 %v301, %v333
        %v366 = vadd.f32 %v302, %v334
        %v367 = vadd.f32 %v303, %v335
        %v368 = vadd.f32 %v304, %v336
        %v369 = vadd.f32 %v305, %v337
        %v370 = vadd.f32 %v306, %v338
        %v371 = vadd.f32 %v307, %v339
        %v372 = vadd.f32 %v308, %v340
        %v373 = vadd.f32 %v309, %v341
        %v374 = vadd.f32 %v310, %v342
        %v375 = vadd.f32 %v311, %v343
        %v376 = vadd.f32 %v312, %v344
        %v377 = vadd.f32 %v313, %v345
        %v378 = vadd.f32 %v314, %v346
        %v379 = vadd.f32 %v315, %v347
        %v380 = vadd.f32 %v316, %v348
        %v381 = vadd.f32 %v317, %v349
        %v382 = vadd.f32 %v318, %v350
        %v383 = vadd.f32 %v319, %v351
        %v384 = vadd.f32 %v320, %v352
        %v385 = vadd.f32 %v321, %v353
        %v386 = vadd.f32 %v322, %v354
        %v387 = vadd.f32 %v323, %v355
        %v388 = vadd.f32 %v324, %v356
        %v389 = vmax.f32 %v357, 0.0
        %v390 = vmax.f32 %v358, 0.0
        %v391 = vmax.f32 %v359, 0.0
        %v392 = vmax.f32 %v360, 0.0
        %v393 = vmax.f32 %v361, 0.0
        %v394 = vmax.f32 %v362, 0.0
        %v395 = vmax.f32 %v363, 0.0
        %v396 = vmax.f32 %v364, 0.0
        %v397 = vmax.f32 %v365, 0.0
        %v398 = vmax.f32 %v366, 0.0
        %v399 = vmax.f32 %v367, 0.0
        %v400 = vmax.f32 %v368, 0.0
        %v401 = vmax.f32 %v369, 0.0
        %v402 = vmax.f32 %v370, 0.0
        %v403 = vmax.f32 %v371, 0.0
        %v404 = vmax.f32 %v372, 0.0
        %v405 = vmax.f32 %v373, 0.0
        %v406 = vmax.f32 %v374, 0.0
        %v407 = vmax.f32 %v375, 0.0
        %v408 = vmax.f32 %v376, 0.0
        %v409 = vmax.f32 %v377, 0.0
        %v410 = vmax.f32 %v378, 0.0
        %v411 = vmax.f32 %v379, 0.0
        %v412 = vmax.f32 %v380, 0.0
        %v413 = vmax.f32 %v381, 0.0
        %v414 = vmax.f32 %v382, 0.0
        %v415 = vmax.f32 %v383, 0.0
        %v416 = vmax.f32 %v384, 0.0
        %v417 = vmax.f32 %v385, 0.0
        %v418 = vmax.f32 %v386, 0.0
        %v419 = vmax.f32 %v387, 0.0
        %v420 = vmax.f32 %v388, 0.0
        %vm421 = vcmask 523264
        %422 = vst.msk [vmem:[%s207] sm:$0xff] %vm421, %v389
        %423 = vst.msk [vmem:[%s207 + $0x8] sm:$0xff] %vm421, %v390
        %424 = vst.msk [vmem:[%s207 + $0x10] sm:$0xff] %vm421, %v391
        %425 = vst.msk [vmem:[%s207 + $0x18] sm:$0xff] %vm421, %v392
        %426 = vst.msk [vmem:[%s207 + $0x20] sm:$0xff] %vm421, %v393
        %427 = vst.msk [vmem:[%s207 + $0x28] sm:$0xff] %vm421, %v394
        %428 = vst.msk [vmem:[%s207 + $0x30] sm:$0xff] %vm421, %v395
        %429 = vst.msk [vmem:[%s207 + $0x38] sm:$0xff] %vm421, %v396
        %430 = vst.msk [vmem:[%s207 + $0x40] sm:$0xff] %vm421, %v397
        %431 = vst.msk [vmem:[%s207 + $0x48] sm:$0xff] %vm421, %v398
        %432 = vst.msk [vmem:[%s207 + $0x50] sm:$0xff] %vm421, %v399
        %433 = vst.msk [vmem:[%s207 + $0x58] sm:$0xff] %vm421, %v400
        %434 = vst.msk [vmem:[%s207 + $0x60] sm:$0xff] %vm421, %v401
        %435 = vst.msk [vmem:[%s207 + $0x68] sm:$0xff] %vm421, %v402
        %436 = vst.msk [vmem:[%s207 + $0x70] sm:$0xff] %vm421, %v403
        %437 = vst.msk [vmem:[%s207 + $0x78] sm:$0xff] %vm421, %v404
        %438 = vst.msk [vmem:[%s207 + $0x80] sm:$0xff] %vm421, %v405
        %439 = vst.msk [vmem:[%s207 + $0x88] sm:$0xff] %vm421, %v406
        %440 = vst.msk [vmem:[%s207 + $0x90] sm:$0xff] %vm421, %v407
        %441 = vst.msk [vmem:[%s207 + $0x98] sm:$0xff] %vm421, %v408
        %442 = vst.msk [vmem:[%s207 + $0xa0] sm:$0xff] %vm421, %v409
        %443 = vst.msk [vmem:[%s207 + $0xa8] sm:$0xff] %vm421, %v410
        %444 = vst.msk [vmem:[%s207 + $0xb0] sm:$0xff] %vm421, %v411
        %445 = vst.msk [vmem:[%s207 + $0xb8] sm:$0xff] %vm421, %v412
        %446 = vst.msk [vmem:[%s207 + $0xc0] sm:$0xff] %vm421, %v413
        %447 = vst.msk [vmem:[%s207 + $0xc8] sm:$0xff] %vm421, %v414
        %448 = vst.msk [vmem:[%s207 + $0xd0] sm:$0xff] %vm421, %v415
        %449 = vst.msk [vmem:[%s207 + $0xd8] sm:$0xff] %vm421, %v416
        %450 = vst.msk [vmem:[%s207 + $0xe0] sm:$0xff] %vm421, %v417
        %451 = vst.msk [vmem:[%s207 + $0xe8] sm:$0xff] %vm421, %v418
        %452 = vst.msk [vmem:[%s207 + $0xf0] sm:$0xff] %vm421, %v419
        %453 = vst.msk [vmem:[%s207 + $0xf8] sm:$0xff] %vm421, %v420
        %s454 = sand.u32 %s120, 1
        %s455 = scalar_lea.sflag [#allocation3], %s454
        %s456 = sand.u32 %s120, 1
        %s457 = smul.addr %s456, 256
        %s458 = scalar_lea.vmem [#allocation2], %s457
        // Predicated region
        $region37: #{resnext_bottleneck_forward.7} parent=35 // pred_check
          %p459 = pneg %p130
        $region38: #{resnext_bottleneck_forward.7} parent=35 // pred_check_branch
          %461 = sbr.rel (%p459) target = $region40
        $region39: #{resnext_bottleneck_forward.7} parent=35 // pred_region
          %s462 = smul.u32 32, %s18
          %464 = vsyncadd %s455, 0
          %s465 = smul.addr %s462, 8
          %s466 = scalar_lea.hbm %s4, %s465
          %s467 = sshll.u32 %s458, 4
          %s468 = int_to_ptr.vmem [resolvable:$true] %s467
          %s469 = sshll.u32 %s466, 4
          %s470 = int_to_ptr.hbm [resolvable:$true] %s469
          %475 = dma.vmem_to_hbm [thread:$0]  %s468, 4096, %s470, %s455, 128, 128, 8
        $region40: #{resnext_bottleneck_forward.7} parent=35 // pred_fallthru
          _
      $region36: #{resnext_bottleneck_forward.7} parent=5 // pred_fallthru
        _
      %p476 = scmp.le.s32.totalorder 2, %s13
      // Predicated region
      $region41: #{resnext_bottleneck_forward.7} parent=5 // pred_check
        %p477 = pneg %p476
      $region42: #{resnext_bottleneck_forward.7} parent=5 // pred_check_branch
        %479 = sbr.rel (%p477) target = $region44
      $region43: #{resnext_bottleneck_forward.7} parent=5 // pred_region
        %s480 = ssub.s32 %s13, 2
        // Predicated region
        $region45: #{resnext_bottleneck_forward.7} parent=43 // pred_check
          %p481 = pneg %p136
        $region46: #{resnext_bottleneck_forward.7} parent=43 // pred_check_branch
          %483 = sbr.rel (%p481) target = $region48
        $region47: #{resnext_bottleneck_forward.7} parent=43 // pred_region
          %s484 = sand.u32 %s121, 1
          %s485 = scalar_lea.sflag [#allocation3], %s484
          %s486 = sand.u32 %s121, 1
          %s487 = smul.addr %s486, 256
          %s488 = scalar_lea.vmem [#allocation2], %s487
          %490 = dma.done %s485, 4096
        $region48: #{resnext_bottleneck_forward.7} parent=43 // pred_fallthru
          _
      $region44: #{resnext_bottleneck_forward.7} parent=5 // pred_fallthru
        _
    $region6: #{resnext_bottleneck_forward.7} parent=1 // loop_footer
      %s17 = sadd.s32 1, %s13
    $region7: #{resnext_bottleneck_forward.7} parent=1 // loop_footer_branch
      %12 = sbr.rel target = $region3
    $region8: #{resnext_bottleneck_forward.7} parent=1 // loop_exit
      _
    %491 = vsyncpa [#allocation3], 1
    %s492 = scalar_lea.sflag [#allocation3], 1
    %493 = vsyncpa %s492, 1

// kernel: resnext_bottleneck_forward.6
$region0: #{resnext_bottleneck_forward.6}
  #allocation0 [shape = 'u32[]', space=smem, size = 0x4, offset = 0x4, fixed_abs, tag = 'smem constant byte address 0x4 - core index']
  #allocation1 [shape = 'u32[72,128]{1,0:T(1,128)}', space=vmem, size = 0x9000, scoped, tag = 'internal scratch']
  %s0 = inlined_call_operand.vmem [shape: bf16[512,32], index: 0, kind: input, shape index: {}]
  %s1 = inlined_call_operand.vmem [shape: f32[1,32], index: 1, kind: input, shape index: {}]
  %s2 = inlined_call_operand.vmem [shape: f32[1,32], index: 2, kind: input, shape index: {}]
  %s3 = inlined_call_operand.vmem [shape: bf16[32,64], index: 3, kind: input, shape index: {}]
  %s4 = inlined_call_operand.vmem [shape: f32[512,64], index: 4, kind: output, shape index: {0}]
  %s5 = inlined_call_operand.vmem [shape: f32[1,64], index: 5, kind: output, shape index: {1}]
  %s6 = inlined_call_operand.vmem [shape: f32[1,64], index: 6, kind: output, shape index: {2}]
  %7 = xla_tuple %s4, %s5, %s6
  %s8 = sld [smem:[#allocation0]]
  $region69: #{resnext_bottleneck_forward.6} parent=0
    _
  %s10 = ssub.s32 1, %s8
  %s11 = scalar_select 0, %s10, %s8
  loop: start=0, step=1, limit=4
  $region2: #{resnext_bottleneck_forward.6} parent=0 // loop_pre_header
    _
  $region3: #{resnext_bottleneck_forward.6} parent=0 // loop_header
    %s13 = sphi 0, %s17
    %p14 = scmp.ge.s32.totalorder %s13, 4
    %s23 = sphi 0, %s25
    %s26 = sphi 0, %s23
    %s27 = sphi 0, %s26
    %s43 = sphi 0, %s27
    %s47 = sphi 0, %s47
    %s49 = sphi 0, %s47
    %s50 = sphi 0, %s49
    %s64 = sphi 0, %s50
    %s68 = sphi 0, %s68
    %s70 = sphi 0, %s68
    %s71 = sphi 0, %s70
    %s85 = sphi 0, %s71
    %s89 = sphi 0, %s89
    %s91 = sphi 0, %s89
    %s92 = sphi 0, %s91
    %s106 = sphi 0, %s92
    %s112 = sphi 0, %s114
    %s115 = sphi 0, %s112
    %s116 = sphi 0, %s115
    %s132 = sphi 0, %s116
    %s136 = sphi 0, %s136
    %s138 = sphi 0, %s136
    %s139 = sphi 0, %s138
    %s153 = sphi 0, %s139
    %s157 = sphi 0, %s157
    %s159 = sphi 0, %s157
    %s160 = sphi 0, %s159
    %s174 = sphi 0, %s160
  $region4: #{resnext_bottleneck_forward.6} parent=0 // loop_header_branch
    %16 = sbr.rel (%p14) target = $region8
  $region5: #{resnext_bottleneck_forward.6} parent=0 // loop_body
    %s18 = ssub.s32 %s13, 1
    %s19 = ssub.s32 %s13, 2
    %s20 = sadd.s32 %s13, 1
    %s21 = ssub.s32 %s13, %s20
    %p22 = scmp.eq.s32.totalorder %s21, 0
    %s24 = sadd.s32 %s23, 1
    %s25 = scalar_select %p22, %s23, %s24
    %p28 = pneg %p22
    %p29 = scmp.eq.s32.totalorder %s13, 1
    %p30 = por %p28, %p29
    %p31 = scmp.ne.s32.totalorder %s23, %s26
    %p32 = scmp.eq.s32.totalorder %s13, 0
    %p33 = por %p31, %p32
    %p34 = scmp.ne.s32.totalorder %s23, %s26
    %p35 = scmp.eq.s32.totalorder %s18, 1
    %p36 = por %p34, %p35
    %p37 = scmp.ne.s32.totalorder %s26, %s27
    %p38 = scmp.eq.s32.totalorder %s18, 0
    %p39 = por %p37, %p38
    %p40 = scmp.ne.s32.totalorder %s26, %s27
    %p41 = scmp.eq.s32.totalorder %s19, 1
    %p42 = por %p40, %p41
    %p44 = scmp.ne.s32.totalorder %s27, %s43
    %p45 = scmp.eq.s32.totalorder %s19, 0
    %p46 = por %p44, %p45
    %s48 = sadd.s32 %s47, 1
    %p51 = scmp.eq.s32.totalorder %s13, 1
    %p52 = scmp.ne.s32.totalorder %s47, %s49
    %p53 = scmp.eq.s32.totalorder %s13, 0
    %p54 = por %p52, %p53
    %p55 = scmp.ne.s32.totalorder %s47, %s49
    %p56 = scmp.eq.s32.totalorder %s18, 1
    %p57 = por %p55, %p56
    %p58 = scmp.ne.s32.totalorder %s49, %s50
    %p59 = scmp.eq.s32.totalorder %s18, 0
    %p60 = por %p58, %p59
    %p61 = scmp.ne.s32.totalorder %s49, %s50
    %p62 = scmp.eq.s32.totalorder %s19, 1
    %p63 = por %p61, %p62
    %p65 = scmp.ne.s32.totalorder %s50, %s64
    %p66 = scmp.eq.s32.totalorder %s19, 0
    %p67 = por %p65, %p66
    %s69 = sadd.s32 %s68, 1
    %p72 = scmp.eq.s32.totalorder %s13, 1
    %p73 = scmp.ne.s32.totalorder %s68, %s70
    %p74 = scmp.eq.s32.totalorder %s13, 0
    %p75 = por %p73, %p74
    %p76 = scmp.ne.s32.totalorder %s68, %s70
    %p77 = scmp.eq.s32.totalorder %s18, 1
    %p78 = por %p76, %p77
    %p79 = scmp.ne.s32.totalorder %s70, %s71
    %p80 = scmp.eq.s32.totalorder %s18, 0
    %p81 = por %p79, %p80
    %p82 = scmp.ne.s32.totalorder %s70, %s71
    %p83 = scmp.eq.s32.totalorder %s19, 1
    %p84 = por %p82, %p83
    %p86 = scmp.ne.s32.totalorder %s71, %s85
    %p87 = scmp.eq.s32.totalorder %s19, 0
    %p88 = por %p86, %p87
    %s90 = sadd.s32 %s89, 1
    %p93 = scmp.eq.s32.totalorder %s13, 1
    %p94 = scmp.ne.s32.totalorder %s89, %s91
    %p95 = scmp.eq.s32.totalorder %s13, 0
    %p96 = por %p94, %p95
    %p97 = scmp.ne.s32.totalorder %s89, %s91
    %p98 = scmp.eq.s32.totalorder %s18, 1
    %p99 = por %p97, %p98
    %p100 = scmp.ne.s32.totalorder %s91, %s92
    %p101 = scmp.eq.s32.totalorder %s18, 0
    %p102 = por %p100, %p101
    %p103 = scmp.ne.s32.totalorder %s91, %s92
    %p104 = scmp.eq.s32.totalorder %s19, 1
    %p105 = por %p103, %p104
    %p107 = scmp.ne.s32.totalorder %s92, %s106
    %p108 = scmp.eq.s32.totalorder %s19, 0
    %p109 = por %p107, %p108
    %s110 = ssub.s32 %s13, %s20
    %p111 = scmp.eq.s32.totalorder %s110, 0
    %s113 = sadd.s32 %s112, 1
    %s114 = scalar_select %p111, %s112, %s113
    %p117 = pneg %p111
    %p118 = scmp.eq.s32.totalorder %s13, 1
    %p119 = por %p117, %p118
    %p120 = scmp.ne.s32.totalorder %s112, %s115
    %p121 = scmp.eq.s32.totalorder %s13, 0
    %p122 = por %p120, %p121
    %p123 = scmp.ne.s32.totalorder %s112, %s115
    %p124 = scmp.eq.s32.totalorder %s18, 1
    %p125 = por %p123, %p124
    %p126 = scmp.ne.s32.totalorder %s115, %s116
    %p127 = scmp.eq.s32.totalorder %s18, 0
    %p128 = por %p126, %p127
    %p129 = scmp.ne.s32.totalorder %s115, %s116
    %p130 = scmp.eq.s32.totalorder %s19, 1
    %p131 = por %p129, %p130
    %p133 = scmp.ne.s32.totalorder %s116, %s132
    %p134 = scmp.eq.s32.totalorder %s19, 0
    %p135 = por %p133, %p134
    %s137 = sadd.s32 %s136, 1
    %p140 = scmp.eq.s32.totalorder %s13, 1
    %p141 = scmp.ne.s32.totalorder %s136, %s138
    %p142 = scmp.eq.s32.totalorder %s13, 0
    %p143 = por %p141, %p142
    %p144 = scmp.ne.s32.totalorder %s136, %s138
    %p145 = scmp.eq.s32.totalorder %s18, 1
    %p146 = por %p144, %p145
    %p147 = scmp.ne.s32.totalorder %s138, %s139
    %p148 = scmp.eq.s32.totalorder %s18, 0
    %p149 = por %p147, %p148
    %p150 = scmp.ne.s32.totalorder %s138, %s139
    %p151 = scmp.eq.s32.totalorder %s19, 1
    %p152 = por %p150, %p151
    %p154 = scmp.ne.s32.totalorder %s139, %s153
    %p155 = scmp.eq.s32.totalorder %s19, 0
    %p156 = por %p154, %p155
    %s158 = sadd.s32 %s157, 1
    %p161 = scmp.eq.s32.totalorder %s13, 1
    %p162 = scmp.ne.s32.totalorder %s157, %s159
    %p163 = scmp.eq.s32.totalorder %s13, 0
    %p164 = por %p162, %p163
    %p165 = scmp.ne.s32.totalorder %s157, %s159
    %p166 = scmp.eq.s32.totalorder %s18, 1
    %p167 = por %p165, %p166
    %p168 = scmp.ne.s32.totalorder %s159, %s160
    %p169 = scmp.eq.s32.totalorder %s18, 0
    %p170 = por %p168, %p169
    %p171 = scmp.ne.s32.totalorder %s159, %s160
    %p172 = scmp.eq.s32.totalorder %s19, 1
    %p173 = por %p171, %p172
    %p175 = scmp.ne.s32.totalorder %s160, %s174
    %p176 = scmp.eq.s32.totalorder %s19, 0
    %p177 = por %p175, %p176
    %p178 = scmp.le.s32.totalorder 1, %s13
    %p179 = scmp.lt.s32.totalorder %s13, 3
    %p180 = pnand %p178, %p179
    %p181 = pneg %p180
    // Predicated region
    $region9: #{resnext_bottleneck_forward.6} parent=5 // pred_check
      _
    $region10: #{resnext_bottleneck_forward.6} parent=5 // pred_check_branch
      %183 = sbr.rel (%p180) target = $region12
    $region11: #{resnext_bottleneck_forward.6} parent=5 // pred_region
      %s184 = ssub.s32 %s13, 1
      // Predicated region
      $region13: #{resnext_bottleneck_forward.6} parent=11 // pred_check
        %p185 = pneg %p60
      $region14: #{resnext_bottleneck_forward.6} parent=11 // pred_check_branch
        %187 = sbr.rel (%p185) target = $region16
      $region15: #{resnext_bottleneck_forward.6} parent=11 // pred_region
        _
      $region16: #{resnext_bottleneck_forward.6} parent=11 // pred_fallthru
        _
      // Predicated region
      $region17: #{resnext_bottleneck_forward.6} parent=11 // pred_check
        %p188 = pneg %p81
      $region18: #{resnext_bottleneck_forward.6} parent=11 // pred_check_branch
        %190 = sbr.rel (%p188) target = $region20
      $region19: #{resnext_bottleneck_forward.6} parent=11 // pred_region
        _
      $region20: #{resnext_bottleneck_forward.6} parent=11 // pred_fallthru
        _
      // Predicated region
      $region21: #{resnext_bottleneck_forward.6} parent=11 // pred_check
        %p191 = pneg %p102
      $region22: #{resnext_bottleneck_forward.6} parent=11 // pred_check_branch
        %193 = sbr.rel (%p191) target = $region24
      $region23: #{resnext_bottleneck_forward.6} parent=11 // pred_region
        _
      $region24: #{resnext_bottleneck_forward.6} parent=11 // pred_fallthru
        _
    $region12: #{resnext_bottleneck_forward.6} parent=5 // pred_fallthru
      _
    %p194 = scmp.lt.s32.totalorder %s13, 2
    // Predicated region
    $region25: #{resnext_bottleneck_forward.6} parent=5 // pred_check
      %p195 = pneg %p194
    $region26: #{resnext_bottleneck_forward.6} parent=5 // pred_check_branch
      %197 = sbr.rel (%p195) target = $region28
    $region27: #{resnext_bottleneck_forward.6} parent=5 // pred_region
      // Predicated region
      $region29: #{resnext_bottleneck_forward.6} parent=27 // pred_check
        %p198 = pneg %p33
      $region30: #{resnext_bottleneck_forward.6} parent=27 // pred_check_branch
        %200 = sbr.rel (%p198) target = $region32
      $region31: #{resnext_bottleneck_forward.6} parent=27 // pred_region
        %s201 = smul.u32 32, %s13
        %p202 = scmp.lt.s32.totalorder %s201, 63
        %s203 = scalar_select %p202, %s201, 63
        %s204 = smul.addr %s203, 4
        %s205 = scalar_lea.vmem %s0, %s204
        %s206 = smul.u32 32, %s13
      $region32: #{resnext_bottleneck_forward.6} parent=27 // pred_fallthru
        _
    $region28: #{resnext_bottleneck_forward.6} parent=5 // pred_fallthru
      _
    %p207 = scmp.le.s32.totalorder 1, %s13
    %p208 = scmp.lt.s32.totalorder %s13, 3
    %p209 = pnand %p207, %p208
    %p210 = pneg %p209
    // Predicated region
    $region33: #{resnext_bottleneck_forward.6} parent=5 // pred_check
      _
    $region34: #{resnext_bottleneck_forward.6} parent=5 // pred_check_branch
      %212 = sbr.rel (%p209) target = $region36
    $region35: #{resnext_bottleneck_forward.6} parent=5 // pred_region
      %s213 = ssub.s32 %s13, 1
      %s214 = smul.u32 32, %s18
      %p215 = scmp.lt.s32.totalorder %s214, 63
      %s216 = scalar_select %p215, %s214, 63
      %s217 = smul.addr %s216, 4
      %s218 = scalar_lea.vmem %s0, %s217
      %p219 = pneg %p39
      %p220 = pneg %p36
      %p221 = pneg %p60
      %p222 = pneg %p57
      %p223 = pneg %p81
      %p224 = pneg %p78
      %p225 = pneg %p102
      %p226 = pneg %p99
      %p227 = pneg %p128
      %p228 = pneg %p125
      %s229 = smul.u32 32, %s18
      %p230 = scmp.lt.s32.totalorder %s229, 63
      %s231 = scalar_select %p230, %s229, 63
      %s232 = smul.addr %s231, 8
      %s233 = scalar_lea.vmem %s4, %s232
      %p234 = pneg %p149
      %p235 = pneg %p146
      %p236 = pneg %p170
      %p237 = pneg %p167
      %s238 = smul.u32 32, %s18
      %p239 = scmp.lt.s32.totalorder %s238, 63
      %s240 = scalar_select %p239, %s238, 63
      %s241 = smul.addr %s240, 4
      %s242 = scalar_lea.vmem %s0, %s241
      %s243 = smul.u32 32, %s18
      %s244 = smul.u32 32, %s18
      %p245 = scmp.lt.s32.totalorder %s244, 63
      %s246 = scalar_select %p245, %s244, 63
      %s247 = smul.addr %s246, 8
      %s248 = scalar_lea.vmem %s4, %s247
      %s249 = smul.u32 32, %s18
      %p251 = scmp.eq.s32.totalorder %s18, 0
      // Predicated region
      $region37: #{resnext_bottleneck_forward.6} parent=35 // pred_check
        %p252 = pneg %p251
      $region38: #{resnext_bottleneck_forward.6} parent=35 // pred_check_branch
        %254 = sbr.rel (%p252) target = $region40
      $region39: #{resnext_bottleneck_forward.6} parent=35 // pred_region
        %vm255 = vcmask 516096
        %256 = vst.msk [vmem:[%s5] sm:$0x1] %vm255, 0.0
        %257 = vst.msk [vmem:[%s6] sm:$0x1] %vm255, 0.0
      $region40: #{resnext_bottleneck_forward.6} parent=35 // pred_fallthru
        _
      %v258 = vld [vmem:[%s242] sm:$0xf]
      %v259 = vld [vmem:[%s242 + $0x4] sm:$0xf]
      %v260 = vld [vmem:[%s242 + $0x8] sm:$0xf]
      %v261 = vld [vmem:[%s242 + $0xc] sm:$0xf]
      %v262 = vld [vmem:[%s242 + $0x10] sm:$0xf]
      %v263 = vld [vmem:[%s242 + $0x14] sm:$0xf]
      %v264 = vld [vmem:[%s242 + $0x18] sm:$0xf]
      %v265 = vld [vmem:[%s242 + $0x1c] sm:$0xf]
      %v266 = vld [vmem:[%s242 + $0x20] sm:$0xf]
      %v267 = vld [vmem:[%s242 + $0x24] sm:$0xf]
      %v268 = vld [vmem:[%s242 + $0x28] sm:$0xf]
      %v269 = vld [vmem:[%s242 + $0x2c] sm:$0xf]
      %v270 = vld [vmem:[%s242 + $0x30] sm:$0xf]
      %v271 = vld [vmem:[%s242 + $0x34] sm:$0xf]
      %v272 = vld [vmem:[%s242 + $0x38] sm:$0xf]
      %v273 = vld [vmem:[%s242 + $0x3c] sm:$0xf]
      %v274 = vld [vmem:[%s242 + $0x40] sm:$0xf]
      %v275 = vld [vmem:[%s242 + $0x44] sm:$0xf]
      %v276 = vld [vmem:[%s242 + $0x48] sm:$0xf]
      %v277 = vld [vmem:[%s242 + $0x4c] sm:$0xf]
      %v278 = vld [vmem:[%s242 + $0x50] sm:$0xf]
      %v279 = vld [vmem:[%s242 + $0x54] sm:$0xf]
      %v280 = vld [vmem:[%s242 + $0x58] sm:$0xf]
      %v281 = vld [vmem:[%s242 + $0x5c] sm:$0xf]
      %v282 = vld [vmem:[%s242 + $0x60] sm:$0xf]
      %v283 = vld [vmem:[%s242 + $0x64] sm:$0xf]
      %v284 = vld [vmem:[%s242 + $0x68] sm:$0xf]
      %v285 = vld [vmem:[%s242 + $0x6c] sm:$0xf]
      %v286 = vld [vmem:[%s242 + $0x70] sm:$0xf]
      %v287 = vld [vmem:[%s242 + $0x74] sm:$0xf]
      %v288 = vld [vmem:[%s242 + $0x78] sm:$0xf]
      %v289 = vld [vmem:[%s242 + $0x7c] sm:$0xf]
      %v290 = vunpack.c.l.bf16 %v258
      %v291 = vunpack.c.l.bf16 %v259
      %v292 = vunpack.c.l.bf16 %v260
      %v293 = vunpack.c.l.bf16 %v261
      %v294 = vunpack.c.l.bf16 %v262
      %v295 = vunpack.c.l.bf16 %v263
      %v296 = vunpack.c.l.bf16 %v264
      %v297 = vunpack.c.l.bf16 %v265
      %v298 = vunpack.c.l.bf16 %v266
      %v299 = vunpack.c.l.bf16 %v267
      %v300 = vunpack.c.l.bf16 %v268
      %v301 = vunpack.c.l.bf16 %v269
      %v302 = vunpack.c.l.bf16 %v270
      %v303 = vunpack.c.l.bf16 %v271
      %v304 = vunpack.c.l.bf16 %v272
      %v305 = vunpack.c.l.bf16 %v273
      %v306 = vunpack.c.l.bf16 %v274
      %v307 = vunpack.c.l.bf16 %v275
      %v308 = vunpack.c.l.bf16 %v276
      %v309 = vunpack.c.l.bf16 %v277
      %v310 = vunpack.c.l.bf16 %v278
      %v311 = vunpack.c.l.bf16 %v279
      %v312 = vunpack.c.l.bf16 %v280
      %v313 = vunpack.c.l.bf16 %v281
      %v314 = vunpack.c.l.bf16 %v282
      %v315 = vunpack.c.l.bf16 %v283
      %v316 = vunpack.c.l.bf16 %v284
      %v317 = vunpack.c.l.bf16 %v285
      %v318 = vunpack.c.l.bf16 %v286
      %v319 = vunpack.c.l.bf16 %v287
      %v320 = vunpack.c.l.bf16 %v288
      %v321 = vunpack.c.l.bf16 %v289
      %v322 = vld [vmem:[%s1] sm:$0x1]
      %v324 = vperm.slane %v322, 0
      %v326 = vmul.f32 %v290, %v324
      %v327 = vmul.f32 %v291, %v324
      %v328 = vmul.f32 %v292, %v324
      %v329 = vmul.f32 %v293, %v324
      %v330 = vmul.f32 %v294, %v324
      %v331 = vmul.f32 %v295, %v324
      %v332 = vmul.f32 %v296, %v324
      %v333 = vmul.f32 %v297, %v324
      %v334 = vmul.f32 %v298, %v324
      %v335 = vmul.f32 %v299, %v324
      %v336 = vmul.f32 %v300, %v324
      %v337 = vmul.f32 %v301, %v324
      %v338 = vmul.f32 %v302, %v324
      %v339 = vmul.f32 %v303, %v324
      %v340 = vmul.f32 %v304, %v324
      %v341 = vmul.f32 %v305, %v324
      %v342 = vmul.f32 %v306, %v324
      %v343 = vmul.f32 %v307, %v324
      %v344 = vmul.f32 %v308, %v324
      %v345 = vmul.f32 %v309, %v324
      %v346 = vmul.f32 %v310, %v324
      %v347 = vmul.f32 %v311, %v324
      %v348 = vmul.f32 %v312, %v324
      %v349 = vmul.f32 %v313, %v324
      %v350 = vmul.f32 %v314, %v324
      %v351 = vmul.f32 %v315, %v324
      %v352 = vmul.f32 %v316, %v324
      %v353 = vmul.f32 %v317, %v324
      %v354 = vmul.f32 %v318, %v324
      %v355 = vmul.f32 %v319, %v324
      %v356 = vmul.f32 %v320, %v324
      %v357 = vmul.f32 %v321, %v324
      %v358 = vld [vmem:[%s2] sm:$0x1]
      %v360 = vperm.slane %v358, 0
      %v362 = vadd.f32 %v326, %v360
      %v363 = vadd.f32 %v327, %v360
      %v364 = vadd.f32 %v328, %v360
      %v365 = vadd.f32 %v329, %v360
      %v366 = vadd.f32 %v330, %v360
      %v367 = vadd.f32 %v331, %v360
      %v368 = vadd.f32 %v332, %v360
      %v369 = vadd.f32 %v333, %v360
      %v370 = vadd.f32 %v334, %v360
      %v371 = vadd.f32 %v335, %v360
      %v372 = vadd.f32 %v336, %v360
      %v373 = vadd.f32 %v337, %v360
      %v374 = vadd.f32 %v338, %v360
      %v375 = vadd.f32 %v339, %v360
      %v376 = vadd.f32 %v340, %v360
      %v377 = vadd.f32 %v341, %v360
      %v378 = vadd.f32 %v342, %v360
      %v379 = vadd.f32 %v343, %v360
      %v380 = vadd.f32 %v344, %v360
      %v381 = vadd.f32 %v345, %v360
      %v382 = vadd.f32 %v346, %v360
      %v383 = vadd.f32 %v347, %v360
      %v384 = vadd.f32 %v348, %v360
      %v385 = vadd.f32 %v349, %v360
      %v386 = vadd.f32 %v350, %v360
      %v387 = vadd.f32 %v351, %v360
      %v388 = vadd.f32 %v352, %v360
      %v389 = vadd.f32 %v353, %v360
      %v390 = vadd.f32 %v354, %v360
      %v391 = vadd.f32 %v355, %v360
      %v392 = vadd.f32 %v356, %v360
      %v393 = vadd.f32 %v357, %v360
      %v394 = vmax.f32 %v362, 0.0
      %v395 = vmax.f32 %v363, 0.0
      %v396 = vmax.f32 %v364, 0.0
      %v397 = vmax.f32 %v365, 0.0
      %v398 = vmax.f32 %v366, 0.0
      %v399 = vmax.f32 %v367, 0.0
      %v400 = vmax.f32 %v368, 0.0
      %v401 = vmax.f32 %v369, 0.0
      %v402 = vmax.f32 %v370, 0.0
      %v403 = vmax.f32 %v371, 0.0
      %v404 = vmax.f32 %v372, 0.0
      %v405 = vmax.f32 %v373, 0.0
      %v406 = vmax.f32 %v374, 0.0
      %v407 = vmax.f32 %v375, 0.0
      %v408 = vmax.f32 %v376, 0.0
      %v409 = vmax.f32 %v377, 0.0
      %v410 = vmax.f32 %v378, 0.0
      %v411 = vmax.f32 %v379, 0.0
      %v412 = vmax.f32 %v380, 0.0
      %v413 = vmax.f32 %v381, 0.0
      %v414 = vmax.f32 %v382, 0.0
      %v415 = vmax.f32 %v383, 0.0
      %v416 = vmax.f32 %v384, 0.0
      %v417 = vmax.f32 %v385, 0.0
      %v418 = vmax.f32 %v386, 0.0
      %v419 = vmax.f32 %v387, 0.0
      %v420 = vmax.f32 %v388, 0.0
      %v421 = vmax.f32 %v389, 0.0
      %v422 = vmax.f32 %v390, 0.0
      %v423 = vmax.f32 %v391, 0.0
      %v424 = vmax.f32 %v392, 0.0
      %v425 = vmax.f32 %v393, 0.0
      %v426 = vpack.c.bf16 %v395, %v394
      %v427 = vpack.c.bf16 %v397, %v396
      %v428 = vpack.c.bf16 %v399, %v398
      %v429 = vpack.c.bf16 %v401, %v400
      %v430 = vpack.c.bf16 %v403, %v402
      %v431 = vpack.c.bf16 %v405, %v404
      %v432 = vpack.c.bf16 %v407, %v406
      %v433 = vpack.c.bf16 %v409, %v408
      %v434 = vpack.c.bf16 %v411, %v410
      %v435 = vpack.c.bf16 %v413, %v412
      %v436 = vpack.c.bf16 %v415, %v414
      %v437 = vpack.c.bf16 %v417, %v416
      %v438 = vpack.c.bf16 %v419, %v418
      %v439 = vpack.c.bf16 %v421, %v420
      %v440 = vpack.c.bf16 %v423, %v422
      %v441 = vpack.c.bf16 %v425, %v424
      %v442 = vld [vmem:[%s3] sm:$0xf]
      %v443 = vld [vmem:[%s3 + $0x4] sm:$0xf]
      %v444 = vld [vmem:[%s3 + $0x8] sm:$0xf]
      %v445 = vld [vmem:[%s3 + $0xc] sm:$0xf]
      %v450 = vunpack.c.l.b16 %v442
      %v451 = vunpack.c.l.b16 %v443
      %v452 = vunpack.c.l.b16 %v444
      %v453 = vunpack.c.l.b16 %v445
      %v454 = vpack.c.b16 %v451, %v450
      %v455 = vpack.c.b16 %v453, %v452
      %vm458 = vcmask 261120
      %v460 = vsel %vm458, %v426, 0
      %v463 = vsel %vm458, %v427, 0
      %v466 = vsel %vm458, %v428, 0
      %v469 = vsel %vm458, %v429, 0
      %v472 = vsel %vm458, %v430, 0
      %v475 = vsel %vm458, %v431, 0
      %v478 = vsel %vm458, %v432, 0
      %v481 = vsel %vm458, %v433, 0
      %v484 = vsel %vm458, %v434, 0
      %v487 = vsel %vm458, %v435, 0
      %v490 = vsel %vm458, %v436, 0
      %v493 = vsel %vm458, %v437, 0
      %v496 = vsel %vm458, %v438, 0
      %v499 = vsel %vm458, %v439, 0
      %v502 = vsel %vm458, %v440, 0
      %v505 = vsel %vm458, %v441, 0
      %507 = vmatpush.bf16.msra.mxu0 0
      %508 = vmatpush.bf16.msra.mxu0 0
      %509 = vmatpush.bf16.msra.mxu0 0
      %510 = vmatpush.bf16.msra.mxu0 0
      %511 = vmatpush.bf16.msra.mxu0 0
      %512 = vmatpush.bf16.msra.mxu0 0
      %513 = vmatpush.bf16.msra.mxu0 %v455
      %514 = vmatpush.bf16.msra.mxu0 %v454
      %515 = vmatmul.bf16.gmra.mxu0 %v460
      %v516 = vpop.f32.mrf.mxu0
      %v517 = vadd.f32 0.0, %v516
      %v518 = vpop.f32.mrf.mxu0
      %v519 = vadd.f32 0.0, %v518
      %520 = vmatmul.bf16.gmra.mxu0 %v463
      %v521 = vpop.f32.mrf.mxu0
      %v522 = vadd.f32 0.0, %v521
      %v523 = vpop.f32.mrf.mxu0
      %v524 = vadd.f32 0.0, %v523
      %525 = vmatmul.bf16.gmra.mxu0 %v466
      %v526 = vpop.f32.mrf.mxu0
      %v527 = vadd.f32 0.0, %v526
      %v528 = vpop.f32.mrf.mxu0
      %v529 = vadd.f32 0.0, %v528
      %530 = vmatmul.bf16.gmra.mxu0 %v469
      %v531 = vpop.f32.mrf.mxu0
      %v532 = vadd.f32 0.0, %v531
      %v533 = vpop.f32.mrf.mxu0
      %v534 = vadd.f32 0.0, %v533
      %535 = vmatmul.bf16.gmra.mxu0 %v472
      %v536 = vpop.f32.mrf.mxu0
      %v537 = vadd.f32 0.0, %v536
      %v538 = vpop.f32.mrf.mxu0
      %v539 = vadd.f32 0.0, %v538
      %540 = vmatmul.bf16.gmra.mxu0 %v475
      %v541 = vpop.f32.mrf.mxu0
      %v542 = vadd.f32 0.0, %v541
      %v543 = vpop.f32.mrf.mxu0
      %v544 = vadd.f32 0.0, %v543
      %545 = vmatmul.bf16.gmra.mxu0 %v478
      %v546 = vpop.f32.mrf.mxu0
      %v547 = vadd.f32 0.0, %v546
      %v548 = vpop.f32.mrf.mxu0
      %v549 = vadd.f32 0.0, %v548
      %550 = vmatmul.bf16.gmra.mxu0 %v481
      %v551 = vpop.f32.mrf.mxu0
      %v552 = vadd.f32 0.0, %v551
      %v553 = vpop.f32.mrf.mxu0
      %v554 = vadd.f32 0.0, %v553
      %555 = vmatmul.bf16.gmra.mxu0 %v484
      %v556 = vpop.f32.mrf.mxu0
      %v557 = vadd.f32 0.0, %v556
      %v558 = vpop.f32.mrf.mxu0
      %v559 = vadd.f32 0.0, %v558
      %560 = vmatmul.bf16.gmra.mxu0 %v487
      %v561 = vpop.f32.mrf.mxu0
      %v562 = vadd.f32 0.0, %v561
      %v563 = vpop.f32.mrf.mxu0
      %v564 = vadd.f32 0.0, %v563
      %565 = vmatmul.bf16.gmra.mxu0 %v490
      %v566 = vpop.f32.mrf.mxu0
      %v567 = vadd.f32 0.0, %v566
      %v568 = vpop.f32.mrf.mxu0
      %v569 = vadd.f32 0.0, %v568
      %570 = vmatmul.bf16.gmra.mxu0 %v493
      %v571 = vpop.f32.mrf.mxu0
      %v572 = vadd.f32 0.0, %v571
      %v573 = vpop.f32.mrf.mxu0
      %v574 = vadd.f32 0.0, %v573
      %575 = vmatmul.bf16.gmra.mxu0 %v496
      %v576 = vpop.f32.mrf.mxu0
      %v577 = vadd.f32 0.0, %v576
      %v578 = vpop.f32.mrf.mxu0
      %v579 = vadd.f32 0.0, %v578
      %580 = vmatmul.bf16.gmra.mxu0 %v499
      %v581 = vpop.f32.mrf.mxu0
      %v582 = vadd.f32 0.0, %v581
      %v583 = vpop.f32.mrf.mxu0
      %v584 = vadd.f32 0.0, %v583
      %585 = vmatmul.bf16.gmra.mxu0 %v502
      %v586 = vpop.f32.mrf.mxu0
      %v587 = vadd.f32 0.0, %v586
      %v588 = vpop.f32.mrf.mxu0
      %v589 = vadd.f32 0.0, %v588
      %590 = vmatmul.bf16.gmra.mxu0 %v505
      %v591 = vpop.f32.mrf.mxu0
      %v592 = vadd.f32 0.0, %v591
      %v593 = vpop.f32.mrf.mxu0
      %v594 = vadd.f32 0.0, %v593
      %595 = vdwg.mxu0
      %v596 = vld [vmem:[%s5] sm:$0x1]
      %vm597 = vcmask 523264
      %v598 = vsel %vm597, %v517, 0.0
      %v599 = vsel %vm597, %v519, 0.0
      %v600 = vadd.f32 %v598, %v599
      %v601 = vsel %vm597, %v522, 0.0
      %v602 = vadd.f32 %v600, %v601
      %v603 = vsel %vm597, %v524, 0.0
      %v604 = vadd.f32 %v602, %v603
      %v605 = vsel %vm597, %v527, 0.0
      %v606 = vadd.f32 %v604, %v605
      %v607 = vsel %vm597, %v529, 0.0
      %v608 = vadd.f32 %v606, %v607
      %v609 = vsel %vm597, %v532, 0.0
      %v610 = vadd.f32 %v608, %v609
      %v611 = vsel %vm597, %v534, 0.0
      %v612 = vadd.f32 %v610, %v611
      %v613 = vsel %vm597, %v537, 0.0
      %v614 = vadd.f32 %v612, %v613
      %v615 = vsel %vm597, %v539, 0.0
      %v616 = vadd.f32 %v614, %v615
      %v617 = vsel %vm597, %v542, 0.0
      %v618 = vadd.f32 %v616, %v617
      %v619 = vsel %vm597, %v544, 0.0
      %v620 = vadd.f32 %v618, %v619
      %v621 = vsel %vm597, %v547, 0.0
      %v622 = vadd.f32 %v620, %v621
      %v623 = vsel %vm597, %v549, 0.0
      %v624 = vadd.f32 %v622, %v623
      %v625 = vsel %vm597, %v552, 0.0
      %v626 = vadd.f32 %v624, %v625
      %v627 = vsel %vm597, %v554, 0.0
      %v628 = vadd.f32 %v626, %v627
      %v629 = vsel %vm597, %v557, 0.0
      %v630 = vadd.f32 %v628, %v629
      %v631 = vsel %vm597, %v559, 0.0
      %v632 = vadd.f32 %v630, %v631
      %v633 = vsel %vm597, %v562, 0.0
      %v634 = vadd.f32 %v632, %v633
      %v635 = vsel %vm597, %v564, 0.0
      %v636 = vadd.f32 %v634, %v635
      %v637 = vsel %vm597, %v567, 0.0
      %v638 = vadd.f32 %v636, %v637
      %v639 = vsel %vm597, %v569, 0.0
      %v640 = vadd.f32 %v638, %v639
      %v641 = vsel %vm597, %v572, 0.0
      %v642 = vadd.f32 %v640, %v641
      %v643 = vsel %vm597, %v574, 0.0
      %v644 = vadd.f32 %v642, %v643
      %v645 = vsel %vm597, %v577, 0.0
      %v646 = vadd.f32 %v644, %v645
      %v647 = vsel %vm597, %v579, 0.0
      %v648 = vadd.f32 %v646, %v647
      %v649 = vsel %vm597, %v582, 0.0
      %v650 = vadd.f32 %v648, %v649
      %v651 = vsel %vm597, %v584, 0.0
      %v652 = vadd.f32 %v650, %v651
      %v653 = vsel %vm597, %v587, 0.0
      %v654 = vadd.f32 %v652, %v653
      %v655 = vsel %vm597, %v589, 0.0
      %v656 = vadd.f32 %v654, %v655
      %v657 = vsel %vm597, %v592, 0.0
      %v658 = vadd.f32 %v656, %v657
      %v659 = vsel %vm597, %v594, 0.0
      %v660 = vadd.f32 %v658, %v659
      %v661 = vrot.slane %v660, 4
      %v662 = vadd.f32 %v660, %v661
      %v663 = vrot.slane %v662, 2
      %v664 = vadd.f32 %v662, %v663
      %v665 = vrot.slane %v664, 1
      %v666 = vadd.f32 %v664, %v665
      %v667 = vadd.f32 %v596, %v666
      %vm668 = vcmask 516096
      %669 = vst.msk [vmem:[%s5] sm:$0x1] %vm668, %v667
      %v670 = vld [vmem:[%s6] sm:$0x1]
      %v671 = vmul.f32 %v517, %v517
      %v672 = vmul.f32 %v519, %v519
      %v673 = vmul.f32 %v522, %v522
      %v674 = vmul.f32 %v524, %v524
      %v675 = vmul.f32 %v527, %v527
      %v676 = vmul.f32 %v529, %v529
      %v677 = vmul.f32 %v532, %v532
      %v678 = vmul.f32 %v534, %v534
      %v679 = vmul.f32 %v537, %v537
      %v680 = vmul.f32 %v539, %v539
      %v681 = vmul.f32 %v542, %v542
      %v682 = vmul.f32 %v544, %v544
      %v683 = vmul.f32 %v547, %v547
      %v684 = vmul.f32 %v549, %v549
      %v685 = vmul.f32 %v552, %v552
      %v686 = vmul.f32 %v554, %v554
      %v687 = vmul.f32 %v557, %v557
      %v688 = vmul.f32 %v559, %v559
      %v689 = vmul.f32 %v562, %v562
      %v690 = vmul.f32 %v564, %v564
      %v691 = vmul.f32 %v567, %v567
      %v692 = vmul.f32 %v569, %v569
      %v693 = vmul.f32 %v572, %v572
      %v694 = vmul.f32 %v574, %v574
      %v695 = vmul.f32 %v577, %v577
      %v696 = vmul.f32 %v579, %v579
      %v697 = vmul.f32 %v582, %v582
      %v698 = vmul.f32 %v584, %v584
      %v699 = vmul.f32 %v587, %v587
      %v700 = vmul.f32 %v589, %v589
      %v701 = vmul.f32 %v592, %v592
      %v702 = vmul.f32 %v594, %v594
      %v703 = vsel %vm597, %v671, 0.0
      %v704 = vsel %vm597, %v672, 0.0
      %v705 = vadd.f32 %v703, %v704
      %v706 = vsel %vm597, %v673, 0.0
      %v707 = vadd.f32 %v705, %v706
      %v708 = vsel %vm597, %v674, 0.0
      %v709 = vadd.f32 %v707, %v708
      %v710 = vsel %vm597, %v675, 0.0
      %v711 = vadd.f32 %v709, %v710
      %v712 = vsel %vm597, %v676, 0.0
      %v713 = vadd.f32 %v711, %v712
      %v714 = vsel %vm597, %v677, 0.0
      %v715 = vadd.f32 %v713, %v714
      %v716 = vsel %vm597, %v678, 0.0
      %v717 = vadd.f32 %v715, %v716
      %v718 = vsel %vm597, %v679, 0.0
      %v719 = vadd.f32 %v717, %v718
      %v720 = vsel %vm597, %v680, 0.0
      %v721 = vadd.f32 %v719, %v720
      %v722 = vsel %vm597, %v681, 0.0
      %v723 = vadd.f32 %v721, %v722
      %v724 = vsel %vm597, %v682, 0.0
      %v725 = vadd.f32 %v723, %v724
      %v726 = vsel %vm597, %v683, 0.0
      %v727 = vadd.f32 %v725, %v726
      %v728 = vsel %vm597, %v684, 0.0
      %v729 = vadd.f32 %v727, %v728
      %v730 = vsel %vm597, %v685, 0.0
      %v731 = vadd.f32 %v729, %v730
      %v732 = vsel %vm597, %v686, 0.0
      %v733 = vadd.f32 %v731, %v732
      %v734 = vsel %vm597, %v687, 0.0
      %v735 = vadd.f32 %v733, %v734
      %v736 = vsel %vm597, %v688, 0.0
      %v737 = vadd.f32 %v735, %v736
      %v738 = vsel %vm597, %v689, 0.0
      %v739 = vadd.f32 %v737, %v738
      %v740 = vsel %vm597, %v690, 0.0
      %v741 = vadd.f32 %v739, %v740
      %v742 = vsel %vm597, %v691, 0.0
      %v743 = vadd.f32 %v741, %v742
      %v744 = vsel %vm597, %v692, 0.0
      %v745 = vadd.f32 %v743, %v744
      %v746 = vsel %vm597, %v693, 0.0
      %v747 = vadd.f32 %v745, %v746
      %v748 = vsel %vm597, %v694, 0.0
      %v749 = vadd.f32 %v747, %v748
      %v750 = vsel %vm597, %v695, 0.0
      %v751 = vadd.f32 %v749, %v750
      %v752 = vsel %vm597, %v696, 0.0
      %v753 = vadd.f32 %v751, %v752
      %v754 = vsel %vm597, %v697, 0.0
      %v755 = vadd.f32 %v753, %v754
      %v756 = vsel %vm597, %v698, 0.0
      %v757 = vadd.f32 %v755, %v756
      %v758 = vsel %vm597, %v699, 0.0
      %v759 = vadd.f32 %v757, %v758
      %v760 = vsel %vm597, %v700, 0.0
      %v761 = vadd.f32 %v759, %v760
      %v762 = vsel %vm597, %v701, 0.0
      %v763 = vadd.f32 %v761, %v762
      %v764 = vsel %vm597, %v702, 0.0
      %v765 = vadd.f32 %v763, %v764
      %v766 = vrot.slane %v765, 4
      %v767 = vadd.f32 %v765, %v766
      %v768 = vrot.slane %v767, 2
      %v769 = vadd.f32 %v767, %v768
      %v770 = vrot.slane %v769, 1
      %v771 = vadd.f32 %v769, %v770
      %v772 = vadd.f32 %v670, %v771
      %773 = vst.msk [vmem:[%s6] sm:$0x1] %vm668, %v772
      %774 = vst.msk [vmem:[%s248] sm:$0xff] %vm597, %v517
      %775 = vst.msk [vmem:[%s248 + $0x8] sm:$0xff] %vm597, %v519
      %776 = vst.msk [vmem:[%s248 + $0x10] sm:$0xff] %vm597, %v522
      %777 = vst.msk [vmem:[%s248 + $0x18] sm:$0xff] %vm597, %v524
      %778 = vst.msk [vmem:[%s248 + $0x20] sm:$0xff] %vm597, %v527
      %779 = vst.msk [vmem:[%s248 + $0x28] sm:$0xff] %vm597, %v529
      %780 = vst.msk [vmem:[%s248 + $0x30] sm:$0xff] %vm597, %v532
      %781 = vst.msk [vmem:[%s248 + $0x38] sm:$0xff] %vm597, %v534
      %782 = vst.msk [vmem:[%s248 + $0x40] sm:$0xff] %vm597, %v537
      %783 = vst.msk [vmem:[%s248 + $0x48] sm:$0xff] %vm597, %v539
      %784 = vst.msk [vmem:[%s248 + $0x50] sm:$0xff] %vm597, %v542
      %785 = vst.msk [vmem:[%s248 + $0x58] sm:$0xff] %vm597, %v544
      %786 = vst.msk [vmem:[%s248 + $0x60] sm:$0xff] %vm597, %v547
      %787 = vst.msk [vmem:[%s248 + $0x68] sm:$0xff] %vm597, %v549
      %788 = vst.msk [vmem:[%s248 + $0x70] sm:$0xff] %vm597, %v552
      %789 = vst.msk [vmem:[%s248 + $0x78] sm:$0xff] %vm597, %v554
      %790 = vst.msk [vmem:[%s248 + $0x80] sm:$0xff] %vm597, %v557
      %791 = vst.msk [vmem:[%s248 + $0x88] sm:$0xff] %vm597, %v559
      %792 = vst.msk [vmem:[%s248 + $0x90] sm:$0xff] %vm597, %v562
      %793 = vst.msk [vmem:[%s248 + $0x98] sm:$0xff] %vm597, %v564
      %794 = vst.msk [vmem:[%s248 + $0xa0] sm:$0xff] %vm597, %v567
      %795 = vst.msk [vmem:[%s248 + $0xa8] sm:$0xff] %vm597, %v569
      %796 = vst.msk [vmem:[%s248 + $0xb0] sm:$0xff] %vm597, %v572
      %797 = vst.msk [vmem:[%s248 + $0xb8] sm:$0xff] %vm597, %v574
      %798 = vst.msk [vmem:[%s248 + $0xc0] sm:$0xff] %vm597, %v577
      %799 = vst.msk [vmem:[%s248 + $0xc8] sm:$0xff] %vm597, %v579
      %800 = vst.msk [vmem:[%s248 + $0xd0] sm:$0xff] %vm597, %v582
      %801 = vst.msk [vmem:[%s248 + $0xd8] sm:$0xff] %vm597, %v584
      %802 = vst.msk [vmem:[%s248 + $0xe0] sm:$0xff] %vm597, %v587
      %803 = vst.msk [vmem:[%s248 + $0xe8] sm:$0xff] %vm597, %v589
      %804 = vst.msk [vmem:[%s248 + $0xf0] sm:$0xff] %vm597, %v592
      %805 = vst.msk [vmem:[%s248 + $0xf8] sm:$0xff] %vm597, %v594
      %s806 = smul.u32 32, %s18
      %p807 = scmp.lt.s32.totalorder %s806, 63
      %s808 = scalar_select %p807, %s806, 63
      %s809 = smul.addr %s808, 8
      %s810 = scalar_lea.vmem %s4, %s809
      // Predicated region
      $region41: #{resnext_bottleneck_forward.6} parent=35 // pred_check
        %p811 = pneg %p125
      $region42: #{resnext_bottleneck_forward.6} parent=35 // pred_check_branch
        %813 = sbr.rel (%p811) target = $region44
      $region43: #{resnext_bottleneck_forward.6} parent=35 // pred_region
        %s814 = smul.u32 32, %s18
      $region44: #{resnext_bottleneck_forward.6} parent=35 // pred_fallthru
        _
      // Predicated region
      $region45: #{resnext_bottleneck_forward.6} parent=35 // pred_check
        %p815 = pneg %p146
      $region46: #{resnext_bottleneck_forward.6} parent=35 // pred_check_branch
        %817 = sbr.rel (%p815) target = $region48
      $region47: #{resnext_bottleneck_forward.6} parent=35 // pred_region
        _
      $region48: #{resnext_bottleneck_forward.6} parent=35 // pred_fallthru
        _
      // Predicated region
      $region49: #{resnext_bottleneck_forward.6} parent=35 // pred_check
        %p818 = pneg %p167
      $region50: #{resnext_bottleneck_forward.6} parent=35 // pred_check_branch
        %820 = sbr.rel (%p818) target = $region52
      $region51: #{resnext_bottleneck_forward.6} parent=35 // pred_region
        _
      $region52: #{resnext_bottleneck_forward.6} parent=35 // pred_fallthru
        _
      // Predicated region
      $region53: #{resnext_bottleneck_forward.6} parent=35 // pred_check
        %p821 = pneg %p146
      $region54: #{resnext_bottleneck_forward.6} parent=35 // pred_check_branch
        %823 = sbr.rel (%p821) target = $region56
      $region55: #{resnext_bottleneck_forward.6} parent=35 // pred_region
        _
      $region56: #{resnext_bottleneck_forward.6} parent=35 // pred_fallthru
        _
      // Predicated region
      $region57: #{resnext_bottleneck_forward.6} parent=35 // pred_check
        %p824 = pneg %p167
      $region58: #{resnext_bottleneck_forward.6} parent=35 // pred_check_branch
        %826 = sbr.rel (%p824) target = $region60
      $region59: #{resnext_bottleneck_forward.6} parent=35 // pred_region
        _
      $region60: #{resnext_bottleneck_forward.6} parent=35 // pred_fallthru
        _
    $region36: #{resnext_bottleneck_forward.6} parent=5 // pred_fallthru
      _
    %p827 = scmp.le.s32.totalorder 2, %s13
    // Predicated region
    $region61: #{resnext_bottleneck_forward.6} parent=5 // pred_check
      %p828 = pneg %p827
    $region62: #{resnext_bottleneck_forward.6} parent=5 // pred_check_branch
      %830 = sbr.rel (%p828) target = $region64
    $region63: #{resnext_bottleneck_forward.6} parent=5 // pred_region
      %s831 = ssub.s32 %s13, 2
      // Predicated region
      $region65: #{resnext_bottleneck_forward.6} parent=63 // pred_check
        %p832 = pneg %p131
      $region66: #{resnext_bottleneck_forward.6} parent=63 // pred_check_branch
        %834 = sbr.rel (%p832) target = $region68
      $region67: #{resnext_bottleneck_forward.6} parent=63 // pred_region
        %s835 = smul.u32 32, %s19
        %p836 = scmp.lt.s32.totalorder %s835, 63
        %s837 = scalar_select %p836, %s835, 63
        %s838 = smul.addr %s837, 8
        %s839 = scalar_lea.vmem %s4, %s838
      $region68: #{resnext_bottleneck_forward.6} parent=63 // pred_fallthru
        _
    $region64: #{resnext_bottleneck_forward.6} parent=5 // pred_fallthru
      _
  $region6: #{resnext_bottleneck_forward.6} parent=0 // loop_footer
    %s17 = sadd.s32 1, %s13
  $region7: #{resnext_bottleneck_forward.6} parent=0 // loop_footer_branch
    %12 = sbr.rel target = $region3
  $region8: #{resnext_bottleneck_forward.6} parent=0 // loop_exit
    _

// kernel: resnext_bottleneck_forward.4
$region0: #{resnext_bottleneck_forward.4}
  #allocation0 [shape = 'u32[]', space=smem, size = 0x4, offset = 0x4, fixed_abs, tag = 'smem constant byte address 0x4 - core index']
  #allocation1 [shape = 'u32[72,128]{1,0:T(1,128)}', space=vmem, size = 0x9000, scoped, tag = 'internal scratch']
  %s0 = inlined_call_operand.vmem [shape: bf16[512,64], index: 0, kind: input, shape index: {}]
  %s1 = inlined_call_operand.vmem [shape: bf16[64,32], index: 1, kind: input, shape index: {}]
  %s2 = inlined_call_operand.vmem [shape: bf16[512,32], index: 2, kind: output, shape index: {0}]
  %s3 = inlined_call_operand.vmem [shape: f32[1,32], index: 3, kind: output, shape index: {1}]
  %s4 = inlined_call_operand.vmem [shape: f32[1,32], index: 4, kind: output, shape index: {2}]
  %5 = xla_tuple %s2, %s3, %s4
  %s6 = sld [smem:[#allocation0]]
  $region61: #{resnext_bottleneck_forward.4} parent=0
    _
  %s8 = ssub.s32 1, %s6
  %s9 = scalar_select 0, %s8, %s6
  loop: start=0, step=1, limit=4
  $region2: #{resnext_bottleneck_forward.4} parent=0 // loop_pre_header
    _
  $region3: #{resnext_bottleneck_forward.4} parent=0 // loop_header
    %s11 = sphi 0, %s15
    %p12 = scmp.ge.s32.totalorder %s11, 4
    %s21 = sphi 0, %s23
    %s24 = sphi 0, %s21
    %s25 = sphi 0, %s24
    %s41 = sphi 0, %s25
    %s45 = sphi 0, %s45
    %s47 = sphi 0, %s45
    %s48 = sphi 0, %s47
    %s62 = sphi 0, %s48
    %s68 = sphi 0, %s70
    %s71 = sphi 0, %s68
    %s72 = sphi 0, %s71
    %s88 = sphi 0, %s72
    %s92 = sphi 0, %s92
    %s94 = sphi 0, %s92
    %s95 = sphi 0, %s94
    %s109 = sphi 0, %s95
    %s113 = sphi 0, %s113
    %s115 = sphi 0, %s113
    %s116 = sphi 0, %s115
    %s130 = sphi 0, %s116
  $region4: #{resnext_bottleneck_forward.4} parent=0 // loop_header_branch
    %14 = sbr.rel (%p12) target = $region8
  $region5: #{resnext_bottleneck_forward.4} parent=0 // loop_body
    %s16 = ssub.s32 %s11, 1
    %s17 = ssub.s32 %s11, 2
    %s18 = sadd.s32 %s11, 1
    %s19 = ssub.s32 %s11, %s18
    %p20 = scmp.eq.s32.totalorder %s19, 0
    %s22 = sadd.s32 %s21, 1
    %s23 = scalar_select %p20, %s21, %s22
    %p26 = pneg %p20
    %p27 = scmp.eq.s32.totalorder %s11, 1
    %p28 = por %p26, %p27
    %p29 = scmp.ne.s32.totalorder %s21, %s24
    %p30 = scmp.eq.s32.totalorder %s11, 0
    %p31 = por %p29, %p30
    %p32 = scmp.ne.s32.totalorder %s21, %s24
    %p33 = scmp.eq.s32.totalorder %s16, 1
    %p34 = por %p32, %p33
    %p35 = scmp.ne.s32.totalorder %s24, %s25
    %p36 = scmp.eq.s32.totalorder %s16, 0
    %p37 = por %p35, %p36
    %p38 = scmp.ne.s32.totalorder %s24, %s25
    %p39 = scmp.eq.s32.totalorder %s17, 1
    %p40 = por %p38, %p39
    %p42 = scmp.ne.s32.totalorder %s25, %s41
    %p43 = scmp.eq.s32.totalorder %s17, 0
    %p44 = por %p42, %p43
    %s46 = sadd.s32 %s45, 1
    %p49 = scmp.eq.s32.totalorder %s11, 1
    %p50 = scmp.ne.s32.totalorder %s45, %s47
    %p51 = scmp.eq.s32.totalorder %s11, 0
    %p52 = por %p50, %p51
    %p53 = scmp.ne.s32.totalorder %s45, %s47
    %p54 = scmp.eq.s32.totalorder %s16, 1
    %p55 = por %p53, %p54
    %p56 = scmp.ne.s32.totalorder %s47, %s48
    %p57 = scmp.eq.s32.totalorder %s16, 0
    %p58 = por %p56, %p57
    %p59 = scmp.ne.s32.totalorder %s47, %s48
    %p60 = scmp.eq.s32.totalorder %s17, 1
    %p61 = por %p59, %p60
    %p63 = scmp.ne.s32.totalorder %s48, %s62
    %p64 = scmp.eq.s32.totalorder %s17, 0
    %p65 = por %p63, %p64
    %s66 = ssub.s32 %s11, %s18
    %p67 = scmp.eq.s32.totalorder %s66, 0
    %s69 = sadd.s32 %s68, 1
    %s70 = scalar_select %p67, %s68, %s69
    %p73 = pneg %p67
    %p74 = scmp.eq.s32.totalorder %s11, 1
    %p75 = por %p73, %p74
    %p76 = scmp.ne.s32.totalorder %s68, %s71
    %p77 = scmp.eq.s32.totalorder %s11, 0
    %p78 = por %p76, %p77
    %p79 = scmp.ne.s32.totalorder %s68, %s71
    %p80 = scmp.eq.s32.totalorder %s16, 1
    %p81 = por %p79, %p80
    %p82 = scmp.ne.s32.totalorder %s71, %s72
    %p83 = scmp.eq.s32.totalorder %s16, 0
    %p84 = por %p82, %p83
    %p85 = scmp.ne.s32.totalorder %s71, %s72
    %p86 = scmp.eq.s32.totalorder %s17, 1
    %p87 = por %p85, %p86
    %p89 = scmp.ne.s32.totalorder %s72, %s88
    %p90 = scmp.eq.s32.totalorder %s17, 0
    %p91 = por %p89, %p90
    %s93 = sadd.s32 %s92, 1
    %p96 = scmp.eq.s32.totalorder %s11, 1
    %p97 = scmp.ne.s32.totalorder %s92, %s94
    %p98 = scmp.eq.s32.totalorder %s11, 0
    %p99 = por %p97, %p98
    %p100 = scmp.ne.s32.totalorder %s92, %s94
    %p101 = scmp.eq.s32.totalorder %s16, 1
    %p102 = por %p100, %p101
    %p103 = scmp.ne.s32.totalorder %s94, %s95
    %p104 = scmp.eq.s32.totalorder %s16, 0
    %p105 = por %p103, %p104
    %p106 = scmp.ne.s32.totalorder %s94, %s95
    %p107 = scmp.eq.s32.totalorder %s17, 1
    %p108 = por %p106, %p107
    %p110 = scmp.ne.s32.totalorder %s95, %s109
    %p111 = scmp.eq.s32.totalorder %s17, 0
    %p112 = por %p110, %p111
    %s114 = sadd.s32 %s113, 1
    %p117 = scmp.eq.s32.totalorder %s11, 1
    %p118 = scmp.ne.s32.totalorder %s113, %s115
    %p119 = scmp.eq.s32.totalorder %s11, 0
    %p120 = por %p118, %p119
    %p121 = scmp.ne.s32.totalorder %s113, %s115
    %p122 = scmp.eq.s32.totalorder %s16, 1
    %p123 = por %p121, %p122
    %p124 = scmp.ne.s32.totalorder %s115, %s116
    %p125 = scmp.eq.s32.totalorder %s16, 0
    %p126 = por %p124, %p125
    %p127 = scmp.ne.s32.totalorder %s115, %s116
    %p128 = scmp.eq.s32.totalorder %s17, 1
    %p129 = por %p127, %p128
    %p131 = scmp.ne.s32.totalorder %s116, %s130
    %p132 = scmp.eq.s32.totalorder %s17, 0
    %p133 = por %p131, %p132
    %p134 = scmp.le.s32.totalorder 1, %s11
    %p135 = scmp.lt.s32.totalorder %s11, 3
    %p136 = pnand %p134, %p135
    %p137 = pneg %p136
    // Predicated region
    $region9: #{resnext_bottleneck_forward.4} parent=5 // pred_check
      _
    $region10: #{resnext_bottleneck_forward.4} parent=5 // pred_check_branch
      %139 = sbr.rel (%p136) target = $region12
    $region11: #{resnext_bottleneck_forward.4} parent=5 // pred_region
      %s140 = ssub.s32 %s11, 1
      // Predicated region
      $region13: #{resnext_bottleneck_forward.4} parent=11 // pred_check
        %p141 = pneg %p58
      $region14: #{resnext_bottleneck_forward.4} parent=11 // pred_check_branch
        %143 = sbr.rel (%p141) target = $region16
      $region15: #{resnext_bottleneck_forward.4} parent=11 // pred_region
        _
      $region16: #{resnext_bottleneck_forward.4} parent=11 // pred_fallthru
        _
    $region12: #{resnext_bottleneck_forward.4} parent=5 // pred_fallthru
      _
    %p144 = scmp.lt.s32.totalorder %s11, 2
    // Predicated region
    $region17: #{resnext_bottleneck_forward.4} parent=5 // pred_check
      %p145 = pneg %p144
    $region18: #{resnext_bottleneck_forward.4} parent=5 // pred_check_branch
      %147 = sbr.rel (%p145) target = $region20
    $region19: #{resnext_bottleneck_forward.4} parent=5 // pred_region
      // Predicated region
      $region21: #{resnext_bottleneck_forward.4} parent=19 // pred_check
        %p148 = pneg %p31
      $region22: #{resnext_bottleneck_forward.4} parent=19 // pred_check_branch
        %150 = sbr.rel (%p148) target = $region24
      $region23: #{resnext_bottleneck_forward.4} parent=19 // pred_region
        %s151 = smul.u32 32, %s11
        %p152 = scmp.lt.s32.totalorder %s151, 63
        %s153 = scalar_select %p152, %s151, 63
        %s154 = smul.addr %s153, 4
        %s155 = scalar_lea.vmem %s0, %s154
        %s156 = smul.u32 32, %s11
      $region24: #{resnext_bottleneck_forward.4} parent=19 // pred_fallthru
        _
    $region20: #{resnext_bottleneck_forward.4} parent=5 // pred_fallthru
      _
    %p157 = scmp.le.s32.totalorder 1, %s11
    %p158 = scmp.lt.s32.totalorder %s11, 3
    %p159 = pnand %p157, %p158
    %p160 = pneg %p159
    // Predicated region
    $region25: #{resnext_bottleneck_forward.4} parent=5 // pred_check
      _
    $region26: #{resnext_bottleneck_forward.4} parent=5 // pred_check_branch
      %162 = sbr.rel (%p159) target = $region28
    $region27: #{resnext_bottleneck_forward.4} parent=5 // pred_region
      %s163 = ssub.s32 %s11, 1
      %s164 = smul.u32 32, %s16
      %p165 = scmp.lt.s32.totalorder %s164, 63
      %s166 = scalar_select %p165, %s164, 63
      %s167 = smul.addr %s166, 4
      %s168 = scalar_lea.vmem %s0, %s167
      %p169 = pneg %p37
      %p170 = pneg %p34
      %p171 = pneg %p58
      %p172 = pneg %p55
      %p173 = pneg %p84
      %p174 = pneg %p81
      %s175 = smul.u32 32, %s16
      %p176 = scmp.lt.s32.totalorder %s175, 63
      %s177 = scalar_select %p176, %s175, 63
      %s178 = smul.addr %s177, 4
      %s179 = scalar_lea.vmem %s2, %s178
      %p180 = pneg %p105
      %p181 = pneg %p102
      %p182 = pneg %p126
      %p183 = pneg %p123
      %s184 = smul.u32 32, %s16
      %p185 = scmp.lt.s32.totalorder %s184, 63
      %s186 = scalar_select %p185, %s184, 63
      %s187 = smul.addr %s186, 4
      %s188 = scalar_lea.vmem %s0, %s187
      %s189 = smul.u32 32, %s16
      %s190 = smul.u32 32, %s16
      %p191 = scmp.lt.s32.totalorder %s190, 63
      %s192 = scalar_select %p191, %s190, 63
      %s193 = smul.addr %s192, 4
      %s194 = scalar_lea.vmem %s2, %s193
      %s195 = smul.u32 32, %s16
      %p197 = scmp.eq.s32.totalorder %s16, 0
      // Predicated region
      $region29: #{resnext_bottleneck_forward.4} parent=27 // pred_check
        %p198 = pneg %p197
      $region30: #{resnext_bottleneck_forward.4} parent=27 // pred_check_branch
        %200 = sbr.rel (%p198) target = $region32
      $region31: #{resnext_bottleneck_forward.4} parent=27 // pred_region
        %vm201 = vcmask 253952
        %202 = vst.msk [vmem:[%s3] sm:$0x1] %vm201, 0.0
        %203 = vst.msk [vmem:[%s4] sm:$0x1] %vm201, 0.0
      $region32: #{resnext_bottleneck_forward.4} parent=27 // pred_fallthru
        _
      %v204 = vld [vmem:[%s188] sm:$0xf]
      %v205 = vld [vmem:[%s188 + $0x4] sm:$0xf]
      %v206 = vld [vmem:[%s188 + $0x8] sm:$0xf]
      %v207 = vld [vmem:[%s188 + $0xc] sm:$0xf]
      %v208 = vld [vmem:[%s188 + $0x10] sm:$0xf]
      %v209 = vld [vmem:[%s188 + $0x14] sm:$0xf]
      %v210 = vld [vmem:[%s188 + $0x18] sm:$0xf]
      %v211 = vld [vmem:[%s188 + $0x1c] sm:$0xf]
      %v212 = vld [vmem:[%s188 + $0x20] sm:$0xf]
      %v213 = vld [vmem:[%s188 + $0x24] sm:$0xf]
      %v214 = vld [vmem:[%s188 + $0x28] sm:$0xf]
      %v215 = vld [vmem:[%s188 + $0x2c] sm:$0xf]
      %v216 = vld [vmem:[%s188 + $0x30] sm:$0xf]
      %v217 = vld [vmem:[%s188 + $0x34] sm:$0xf]
      %v218 = vld [vmem:[%s188 + $0x38] sm:$0xf]
      %v219 = vld [vmem:[%s188 + $0x3c] sm:$0xf]
      %v220 = vld [vmem:[%s188 + $0x40] sm:$0xf]
      %v221 = vld [vmem:[%s188 + $0x44] sm:$0xf]
      %v222 = vld [vmem:[%s188 + $0x48] sm:$0xf]
      %v223 = vld [vmem:[%s188 + $0x4c] sm:$0xf]
      %v224 = vld [vmem:[%s188 + $0x50] sm:$0xf]
      %v225 = vld [vmem:[%s188 + $0x54] sm:$0xf]
      %v226 = vld [vmem:[%s188 + $0x58] sm:$0xf]
      %v227 = vld [vmem:[%s188 + $0x5c] sm:$0xf]
      %v228 = vld [vmem:[%s188 + $0x60] sm:$0xf]
      %v229 = vld [vmem:[%s188 + $0x64] sm:$0xf]
      %v230 = vld [vmem:[%s188 + $0x68] sm:$0xf]
      %v231 = vld [vmem:[%s188 + $0x6c] sm:$0xf]
      %v232 = vld [vmem:[%s188 + $0x70] sm:$0xf]
      %v233 = vld [vmem:[%s188 + $0x74] sm:$0xf]
      %v234 = vld [vmem:[%s188 + $0x78] sm:$0xf]
      %v235 = vld [vmem:[%s188 + $0x7c] sm:$0xf]
      %v236 = vld [vmem:[%s1] sm:$0xf]
      %v237 = vld [vmem:[%s1 + $0x4] sm:$0xf]
      %v238 = vld [vmem:[%s1 + $0x8] sm:$0xf]
      %v239 = vld [vmem:[%s1 + $0xc] sm:$0xf]
      %v240 = vld [vmem:[%s1 + $0x10] sm:$0xf]
      %v241 = vld [vmem:[%s1 + $0x14] sm:$0xf]
      %v242 = vld [vmem:[%s1 + $0x18] sm:$0xf]
      %v243 = vld [vmem:[%s1 + $0x1c] sm:$0xf]
      %v276 = vunpack.c.l.b16 %v204
      %v277 = vunpack.c.l.b16 %v205
      %v278 = vunpack.c.l.b16 %v206
      %v279 = vunpack.c.l.b16 %v207
      %v280 = vunpack.c.l.b16 %v208
      %v281 = vunpack.c.l.b16 %v209
      %v282 = vunpack.c.l.b16 %v210
      %v283 = vunpack.c.l.b16 %v211
      %v284 = vunpack.c.l.b16 %v212
      %v285 = vunpack.c.l.b16 %v213
      %v286 = vunpack.c.l.b16 %v214
      %v287 = vunpack.c.l.b16 %v215
      %v288 = vunpack.c.l.b16 %v216
      %v289 = vunpack.c.l.b16 %v217
      %v290 = vunpack.c.l.b16 %v218
      %v291 = vunpack.c.l.b16 %v219
      %v292 = vunpack.c.l.b16 %v220
      %v293 = vunpack.c.l.b16 %v221
      %v294 = vunpack.c.l.b16 %v222
      %v295 = vunpack.c.l.b16 %v223
      %v296 = vunpack.c.l.b16 %v224
      %v297 = vunpack.c.l.b16 %v225
      %v298 = vunpack.c.l.b16 %v226
      %v299 = vunpack.c.l.b16 %v227
      %v300 = vunpack.c.l.b16 %v228
      %v301 = vunpack.c.l.b16 %v229
      %v302 = vunpack.c.l.b16 %v230
      %v303 = vunpack.c.l.b16 %v231
      %v304 = vunpack.c.l.b16 %v232
      %v305 = vunpack.c.l.b16 %v233
      %v306 = vunpack.c.l.b16 %v234
      %v307 = vunpack.c.l.b16 %v235
      %v308 = vpack.c.b16 %v277, %v276
      %v309 = vpack.c.b16 %v279, %v278
      %v310 = vpack.c.b16 %v281, %v280
      %v311 = vpack.c.b16 %v283, %v282
      %v312 = vpack.c.b16 %v285, %v284
      %v313 = vpack.c.b16 %v287, %v286
      %v314 = vpack.c.b16 %v289, %v288
      %v315 = vpack.c.b16 %v291, %v290
      %v316 = vpack.c.b16 %v293, %v292
      %v317 = vpack.c.b16 %v295, %v294
      %v318 = vpack.c.b16 %v297, %v296
      %v319 = vpack.c.b16 %v299, %v298
      %v320 = vpack.c.b16 %v301, %v300
      %v321 = vpack.c.b16 %v303, %v302
      %v322 = vpack.c.b16 %v305, %v304
      %v323 = vpack.c.b16 %v307, %v306
      %v332 = vunpack.c.l.b16 %v236
      %v333 = vunpack.c.l.b16 %v237
      %v334 = vunpack.c.l.b16 %v238
      %v335 = vunpack.c.l.b16 %v239
      %v336 = vunpack.c.l.b16 %v240
      %v337 = vunpack.c.l.b16 %v241
      %v338 = vunpack.c.l.b16 %v242
      %v339 = vunpack.c.l.b16 %v243
      %v340 = vpack.c.b16 %v333, %v332
      %v341 = vpack.c.b16 %v335, %v334
      %v342 = vpack.c.b16 %v337, %v336
      %v343 = vpack.c.b16 %v339, %v338
      %vm348 = vcmask 523264
      %v350 = vsel %vm348, %v308, 0
      %v353 = vsel %vm348, %v309, 0
      %v356 = vsel %vm348, %v310, 0
      %v359 = vsel %vm348, %v311, 0
      %v362 = vsel %vm348, %v312, 0
      %v365 = vsel %vm348, %v313, 0
      %v368 = vsel %vm348, %v314, 0
      %v371 = vsel %vm348, %v315, 0
      %v374 = vsel %vm348, %v316, 0
      %v377 = vsel %vm348, %v317, 0
      %v380 = vsel %vm348, %v318, 0
      %v383 = vsel %vm348, %v319, 0
      %v386 = vsel %vm348, %v320, 0
      %v389 = vsel %vm348, %v321, 0
      %v392 = vsel %vm348, %v322, 0
      %v395 = vsel %vm348, %v323, 0
      %397 = vmatpush.bf16.msra.mxu0 0
      %398 = vmatpush.bf16.msra.mxu0 0
      %399 = vmatpush.bf16.msra.mxu0 0
      %400 = vmatpush.bf16.msra.mxu0 0
      %401 = vmatpush.bf16.msra.mxu0 %v343
      %402 = vmatpush.bf16.msra.mxu0 %v342
      %403 = vmatpush.bf16.msra.mxu0 %v341
      %404 = vmatpush.bf16.msra.mxu0 %v340
      %405 = vmatmul.bf16.gmra.mxu0 %v350
      %v406 = vpop.f32.mrf.mxu0
      %v407 = vadd.f32 0.0, %v406
      %v408 = vpop.f32.mrf.mxu0
      %v409 = vadd.f32 0.0, %v408
      %410 = vmatmul.bf16.gmra.mxu0 %v353
      %v411 = vpop.f32.mrf.mxu0
      %v412 = vadd.f32 0.0, %v411
      %v413 = vpop.f32.mrf.mxu0
      %v414 = vadd.f32 0.0, %v413
      %415 = vmatmul.bf16.gmra.mxu0 %v356
      %v416 = vpop.f32.mrf.mxu0
      %v417 = vadd.f32 0.0, %v416
      %v418 = vpop.f32.mrf.mxu0
      %v419 = vadd.f32 0.0, %v418
      %420 = vmatmul.bf16.gmra.mxu0 %v359
      %v421 = vpop.f32.mrf.mxu0
      %v422 = vadd.f32 0.0, %v421
      %v423 = vpop.f32.mrf.mxu0
      %v424 = vadd.f32 0.0, %v423
      %425 = vmatmul.bf16.gmra.mxu0 %v362
      %v426 = vpop.f32.mrf.mxu0
      %v427 = vadd.f32 0.0, %v426
      %v428 = vpop.f32.mrf.mxu0
      %v429 = vadd.f32 0.0, %v428
      %430 = vmatmul.bf16.gmra.mxu0 %v365
      %v431 = vpop.f32.mrf.mxu0
      %v432 = vadd.f32 0.0, %v431
      %v433 = vpop.f32.mrf.mxu0
      %v434 = vadd.f32 0.0, %v433
      %435 = vmatmul.bf16.gmra.mxu0 %v368
      %v436 = vpop.f32.mrf.mxu0
      %v437 = vadd.f32 0.0, %v436
      %v438 = vpop.f32.mrf.mxu0
      %v439 = vadd.f32 0.0, %v438
      %440 = vmatmul.bf16.gmra.mxu0 %v371
      %v441 = vpop.f32.mrf.mxu0
      %v442 = vadd.f32 0.0, %v441
      %v443 = vpop.f32.mrf.mxu0
      %v444 = vadd.f32 0.0, %v443
      %445 = vmatmul.bf16.gmra.mxu0 %v374
      %v446 = vpop.f32.mrf.mxu0
      %v447 = vadd.f32 0.0, %v446
      %v448 = vpop.f32.mrf.mxu0
      %v449 = vadd.f32 0.0, %v448
      %450 = vmatmul.bf16.gmra.mxu0 %v377
      %v451 = vpop.f32.mrf.mxu0
      %v452 = vadd.f32 0.0, %v451
      %v453 = vpop.f32.mrf.mxu0
      %v454 = vadd.f32 0.0, %v453
      %455 = vmatmul.bf16.gmra.mxu0 %v380
      %v456 = vpop.f32.mrf.mxu0
      %v457 = vadd.f32 0.0, %v456
      %v458 = vpop.f32.mrf.mxu0
      %v459 = vadd.f32 0.0, %v458
      %460 = vmatmul.bf16.gmra.mxu0 %v383
      %v461 = vpop.f32.mrf.mxu0
      %v462 = vadd.f32 0.0, %v461
      %v463 = vpop.f32.mrf.mxu0
      %v464 = vadd.f32 0.0, %v463
      %465 = vmatmul.bf16.gmra.mxu0 %v386
      %v466 = vpop.f32.mrf.mxu0
      %v467 = vadd.f32 0.0, %v466
      %v468 = vpop.f32.mrf.mxu0
      %v469 = vadd.f32 0.0, %v468
      %470 = vmatmul.bf16.gmra.mxu0 %v389
      %v471 = vpop.f32.mrf.mxu0
      %v472 = vadd.f32 0.0, %v471
      %v473 = vpop.f32.mrf.mxu0
      %v474 = vadd.f32 0.0, %v473
      %475 = vmatmul.bf16.gmra.mxu0 %v392
      %v476 = vpop.f32.mrf.mxu0
      %v477 = vadd.f32 0.0, %v476
      %v478 = vpop.f32.mrf.mxu0
      %v479 = vadd.f32 0.0, %v478
      %480 = vmatmul.bf16.gmra.mxu0 %v395
      %v481 = vpop.f32.mrf.mxu0
      %v482 = vadd.f32 0.0, %v481
      %v483 = vpop.f32.mrf.mxu0
      %v484 = vadd.f32 0.0, %v483
      %485 = vdwg.mxu0
      %v486 = vld [vmem:[%s3] sm:$0x1]
      %vm487 = vcmask 261120
      %v488 = vsel %vm487, %v407, 0.0
      %v489 = vsel %vm487, %v409, 0.0
      %v490 = vadd.f32 %v488, %v489
      %v491 = vsel %vm487, %v412, 0.0
      %v492 = vadd.f32 %v490, %v491
      %v493 = vsel %vm487, %v414, 0.0
      %v494 = vadd.f32 %v492, %v493
      %v495 = vsel %vm487, %v417, 0.0
      %v496 = vadd.f32 %v494, %v495
      %v497 = vsel %vm487, %v419, 0.0
      %v498 = vadd.f32 %v496, %v497
      %v499 = vsel %vm487, %v422, 0.0
      %v500 = vadd.f32 %v498, %v499
      %v501 = vsel %vm487, %v424, 0.0
      %v502 = vadd.f32 %v500, %v501
      %v503 = vsel %vm487, %v427, 0.0
      %v504 = vadd.f32 %v502, %v503
      %v505 = vsel %vm487, %v429, 0.0
      %v506 = vadd.f32 %v504, %v505
      %v507 = vsel %vm487, %v432, 0.0
      %v508 = vadd.f32 %v506, %v507
      %v509 = vsel %vm487, %v434, 0.0
      %v510 = vadd.f32 %v508, %v509
      %v511 = vsel %vm487, %v437, 0.0
      %v512 = vadd.f32 %v510, %v511
      %v513 = vsel %vm487, %v439, 0.0
      %v514 = vadd.f32 %v512, %v513
      %v515 = vsel %vm487, %v442, 0.0
      %v516 = vadd.f32 %v514, %v515
      %v517 = vsel %vm487, %v444, 0.0
      %v518 = vadd.f32 %v516, %v517
      %v519 = vsel %vm487, %v447, 0.0
      %v520 = vadd.f32 %v518, %v519
      %v521 = vsel %vm487, %v449, 0.0
      %v522 = vadd.f32 %v520, %v521
      %v523 = vsel %vm487, %v452, 0.0
      %v524 = vadd.f32 %v522, %v523
      %v525 = vsel %vm487, %v454, 0.0
      %v526 = vadd.f32 %v524, %v525
      %v527 = vsel %vm487, %v457, 0.0
      %v528 = vadd.f32 %v526, %v527
      %v529 = vsel %vm487, %v459, 0.0
      %v530 = vadd.f32 %v528, %v529
      %v531 = vsel %vm487, %v462, 0.0
      %v532 = vadd.f32 %v530, %v531
      %v533 = vsel %vm487, %v464, 0.0
      %v534 = vadd.f32 %v532, %v533
      %v535 = vsel %vm487, %v467, 0.0
      %v536 = vadd.f32 %v534, %v535
      %v537 = vsel %vm487, %v469, 0.0
      %v538 = vadd.f32 %v536, %v537
      %v539 = vsel %vm487, %v472, 0.0
      %v540 = vadd.f32 %v538, %v539
      %v541 = vsel %vm487, %v474, 0.0
      %v542 = vadd.f32 %v540, %v541
      %v543 = vsel %vm487, %v477, 0.0
      %v544 = vadd.f32 %v542, %v543
      %v545 = vsel %vm487, %v479, 0.0
      %v546 = vadd.f32 %v544, %v545
      %v547 = vsel %vm487, %v482, 0.0
      %v548 = vadd.f32 %v546, %v547
      %v549 = vsel %vm487, %v484, 0.0
      %v550 = vadd.f32 %v548, %v549
      %v551 = vrot.slane %v550, 4
      %v552 = vadd.f32 %v550, %v551
      %v553 = vrot.slane %v552, 2
      %v554 = vadd.f32 %v552, %v553
      %v555 = vrot.slane %v554, 1
      %v556 = vadd.f32 %v554, %v555
      %v557 = vadd.f32 %v486, %v556
      %vm558 = vcmask 253952
      %559 = vst.msk [vmem:[%s3] sm:$0x1] %vm558, %v557
      %v560 = vld [vmem:[%s4] sm:$0x1]
      %v561 = vmul.f32 %v407, %v407
      %v562 = vmul.f32 %v409, %v409
      %v563 = vmul.f32 %v412, %v412
      %v564 = vmul.f32 %v414, %v414
      %v565 = vmul.f32 %v417, %v417
      %v566 = vmul.f32 %v419, %v419
      %v567 = vmul.f32 %v422, %v422
      %v568 = vmul.f32 %v424, %v424
      %v569 = vmul.f32 %v427, %v427
      %v570 = vmul.f32 %v429, %v429
      %v571 = vmul.f32 %v432, %v432
      %v572 = vmul.f32 %v434, %v434
      %v573 = vmul.f32 %v437, %v437
      %v574 = vmul.f32 %v439, %v439
      %v575 = vmul.f32 %v442, %v442
      %v576 = vmul.f32 %v444, %v444
      %v577 = vmul.f32 %v447, %v447
      %v578 = vmul.f32 %v449, %v449
      %v579 = vmul.f32 %v452, %v452
      %v580 = vmul.f32 %v454, %v454
      %v581 = vmul.f32 %v457, %v457
      %v582 = vmul.f32 %v459, %v459
      %v583 = vmul.f32 %v462, %v462
      %v584 = vmul.f32 %v464, %v464
      %v585 = vmul.f32 %v467, %v467
      %v586 = vmul.f32 %v469, %v469
      %v587 = vmul.f32 %v472, %v472
      %v588 = vmul.f32 %v474, %v474
      %v589 = vmul.f32 %v477, %v477
      %v590 = vmul.f32 %v479, %v479
      %v591 = vmul.f32 %v482, %v482
      %v592 = vmul.f32 %v484, %v484
      %v593 = vsel %vm487, %v561, 0.0
      %v594 = vsel %vm487, %v562, 0.0
      %v595 = vadd.f32 %v593, %v594
      %v596 = vsel %vm487, %v563, 0.0
      %v597 = vadd.f32 %v595, %v596
      %v598 = vsel %vm487, %v564, 0.0
      %v599 = vadd.f32 %v597, %v598
      %v600 = vsel %vm487, %v565, 0.0
      %v601 = vadd.f32 %v599, %v600
      %v602 = vsel %vm487, %v566, 0.0
      %v603 = vadd.f32 %v601, %v602
      %v604 = vsel %vm487, %v567, 0.0
      %v605 = vadd.f32 %v603, %v604
      %v606 = vsel %vm487, %v568, 0.0
      %v607 = vadd.f32 %v605, %v606
      %v608 = vsel %vm487, %v569, 0.0
      %v609 = vadd.f32 %v607, %v608
      %v610 = vsel %vm487, %v570, 0.0
      %v611 = vadd.f32 %v609, %v610
      %v612 = vsel %vm487, %v571, 0.0
      %v613 = vadd.f32 %v611, %v612
      %v614 = vsel %vm487, %v572, 0.0
      %v615 = vadd.f32 %v613, %v614
      %v616 = vsel %vm487, %v573, 0.0
      %v617 = vadd.f32 %v615, %v616
      %v618 = vsel %vm487, %v574, 0.0
      %v619 = vadd.f32 %v617, %v618
      %v620 = vsel %vm487, %v575, 0.0
      %v621 = vadd.f32 %v619, %v620
      %v622 = vsel %vm487, %v576, 0.0
      %v623 = vadd.f32 %v621, %v622
      %v624 = vsel %vm487, %v577, 0.0
      %v625 = vadd.f32 %v623, %v624
      %v626 = vsel %vm487, %v578, 0.0
      %v627 = vadd.f32 %v625, %v626
      %v628 = vsel %vm487, %v579, 0.0
      %v629 = vadd.f32 %v627, %v628
      %v630 = vsel %vm487, %v580, 0.0
      %v631 = vadd.f32 %v629, %v630
      %v632 = vsel %vm487, %v581, 0.0
      %v633 = vadd.f32 %v631, %v632
      %v634 = vsel %vm487, %v582, 0.0
      %v635 = vadd.f32 %v633, %v634
      %v636 = vsel %vm487, %v583, 0.0
      %v637 = vadd.f32 %v635, %v636
      %v638 = vsel %vm487, %v584, 0.0
      %v639 = vadd.f32 %v637, %v638
      %v640 = vsel %vm487, %v585, 0.0
      %v641 = vadd.f32 %v639, %v640
      %v642 = vsel %vm487, %v586, 0.0
      %v643 = vadd.f32 %v641, %v642
      %v644 = vsel %vm487, %v587, 0.0
      %v645 = vadd.f32 %v643, %v644
      %v646 = vsel %vm487, %v588, 0.0
      %v647 = vadd.f32 %v645, %v646
      %v648 = vsel %vm487, %v589, 0.0
      %v649 = vadd.f32 %v647, %v648
      %v650 = vsel %vm487, %v590, 0.0
      %v651 = vadd.f32 %v649, %v650
      %v652 = vsel %vm487, %v591, 0.0
      %v653 = vadd.f32 %v651, %v652
      %v654 = vsel %vm487, %v592, 0.0
      %v655 = vadd.f32 %v653, %v654
      %v656 = vrot.slane %v655, 4
      %v657 = vadd.f32 %v655, %v656
      %v658 = vrot.slane %v657, 2
      %v659 = vadd.f32 %v657, %v658
      %v660 = vrot.slane %v659, 1
      %v661 = vadd.f32 %v659, %v660
      %v662 = vadd.f32 %v560, %v661
      %663 = vst.msk [vmem:[%s4] sm:$0x1] %vm558, %v662
      %v664 = vpack.c.bf16 %v407, %v407
      %v665 = vpack.c.bf16 %v409, %v409
      %v666 = vpack.c.bf16 %v412, %v412
      %v667 = vpack.c.bf16 %v414, %v414
      %v668 = vpack.c.bf16 %v417, %v417
      %v669 = vpack.c.bf16 %v419, %v419
      %v670 = vpack.c.bf16 %v422, %v422
      %v671 = vpack.c.bf16 %v424, %v424
      %v672 = vpack.c.bf16 %v427, %v427
      %v673 = vpack.c.bf16 %v429, %v429
      %v674 = vpack.c.bf16 %v432, %v432
      %v675 = vpack.c.bf16 %v434, %v434
      %v676 = vpack.c.bf16 %v437, %v437
      %v677 = vpack.c.bf16 %v439, %v439
      %v678 = vpack.c.bf16 %v442, %v442
      %v679 = vpack.c.bf16 %v444, %v444
      %v680 = vpack.c.bf16 %v447, %v447
      %v681 = vpack.c.bf16 %v449, %v449
      %v682 = vpack.c.bf16 %v452, %v452
      %v683 = vpack.c.bf16 %v454, %v454
      %v684 = vpack.c.bf16 %v457, %v457
      %v685 = vpack.c.bf16 %v459, %v459
      %v686 = vpack.c.bf16 %v462, %v462
      %v687 = vpack.c.bf16 %v464, %v464
      %v688 = vpack.c.bf16 %v467, %v467
      %v689 = vpack.c.bf16 %v469, %v469
      %v690 = vpack.c.bf16 %v472, %v472
      %v691 = vpack.c.bf16 %v474, %v474
      %v692 = vpack.c.bf16 %v477, %v477
      %v693 = vpack.c.bf16 %v479, %v479
      %v694 = vpack.c.bf16 %v482, %v482
      %v695 = vpack.c.bf16 %v484, %v484
      %vm696 = vcmask 257024
      %697 = vst.msk [vmem:[%s194] sm:$0xf] %vm696, %v664
      %698 = vst.msk [vmem:[%s194 + $0x4] sm:$0xf] %vm696, %v665
      %699 = vst.msk [vmem:[%s194 + $0x8] sm:$0xf] %vm696, %v666
      %700 = vst.msk [vmem:[%s194 + $0xc] sm:$0xf] %vm696, %v667
      %701 = vst.msk [vmem:[%s194 + $0x10] sm:$0xf] %vm696, %v668
      %702 = vst.msk [vmem:[%s194 + $0x14] sm:$0xf] %vm696, %v669
      %703 = vst.msk [vmem:[%s194 + $0x18] sm:$0xf] %vm696, %v670
      %704 = vst.msk [vmem:[%s194 + $0x1c] sm:$0xf] %vm696, %v671
      %705 = vst.msk [vmem:[%s194 + $0x20] sm:$0xf] %vm696, %v672
      %706 = vst.msk [vmem:[%s194 + $0x24] sm:$0xf] %vm696, %v673
      %707 = vst.msk [vmem:[%s194 + $0x28] sm:$0xf] %vm696, %v674
      %708 = vst.msk [vmem:[%s194 + $0x2c] sm:$0xf] %vm696, %v675
      %709 = vst.msk [vmem:[%s194 + $0x30] sm:$0xf] %vm696, %v676
      %710 = vst.msk [vmem:[%s194 + $0x34] sm:$0xf] %vm696, %v677
      %711 = vst.msk [vmem:[%s194 + $0x38] sm:$0xf] %vm696, %v678
      %712 = vst.msk [vmem:[%s194 + $0x3c] sm:$0xf] %vm696, %v679
      %713 = vst.msk [vmem:[%s194 + $0x40] sm:$0xf] %vm696, %v680
      %714 = vst.msk [vmem:[%s194 + $0x44] sm:$0xf] %vm696, %v681
      %715 = vst.msk [vmem:[%s194 + $0x48] sm:$0xf] %vm696, %v682
      %716 = vst.msk [vmem:[%s194 + $0x4c] sm:$0xf] %vm696, %v683
      %717 = vst.msk [vmem:[%s194 + $0x50] sm:$0xf] %vm696, %v684
      %718 = vst.msk [vmem:[%s194 + $0x54] sm:$0xf] %vm696, %v685
      %719 = vst.msk [vmem:[%s194 + $0x58] sm:$0xf] %vm696, %v686
      %720 = vst.msk [vmem:[%s194 + $0x5c] sm:$0xf] %vm696, %v687
      %721 = vst.msk [vmem:[%s194 + $0x60] sm:$0xf] %vm696, %v688
      %722 = vst.msk [vmem:[%s194 + $0x64] sm:$0xf] %vm696, %v689
      %723 = vst.msk [vmem:[%s194 + $0x68] sm:$0xf] %vm696, %v690
      %724 = vst.msk [vmem:[%s194 + $0x6c] sm:$0xf] %vm696, %v691
      %725 = vst.msk [vmem:[%s194 + $0x70] sm:$0xf] %vm696, %v692
      %726 = vst.msk [vmem:[%s194 + $0x74] sm:$0xf] %vm696, %v693
      %727 = vst.msk [vmem:[%s194 + $0x78] sm:$0xf] %vm696, %v694
      %728 = vst.msk [vmem:[%s194 + $0x7c] sm:$0xf] %vm696, %v695
      %s729 = smul.u32 32, %s16
      %p730 = scmp.lt.s32.totalorder %s729, 63
      %s731 = scalar_select %p730, %s729, 63
      %s732 = smul.addr %s731, 4
      %s733 = scalar_lea.vmem %s2, %s732
      // Predicated region
      $region33: #{resnext_bottleneck_forward.4} parent=27 // pred_check
        %p734 = pneg %p81
      $region34: #{resnext_bottleneck_forward.4} parent=27 // pred_check_branch
        %736 = sbr.rel (%p734) target = $region36
      $region35: #{resnext_bottleneck_forward.4} parent=27 // pred_region
        %s737 = smul.u32 32, %s16
      $region36: #{resnext_bottleneck_forward.4} parent=27 // pred_fallthru
        _
      // Predicated region
      $region37: #{resnext_bottleneck_forward.4} parent=27 // pred_check
        %p738 = pneg %p102
      $region38: #{resnext_bottleneck_forward.4} parent=27 // pred_check_branch
        %740 = sbr.rel (%p738) target = $region40
      $region39: #{resnext_bottleneck_forward.4} parent=27 // pred_region
        _
      $region40: #{resnext_bottleneck_forward.4} parent=27 // pred_fallthru
        _
      // Predicated region
      $region41: #{resnext_bottleneck_forward.4} parent=27 // pred_check
        %p741 = pneg %p123
      $region42: #{resnext_bottleneck_forward.4} parent=27 // pred_check_branch
        %743 = sbr.rel (%p741) target = $region44
      $region43: #{resnext_bottleneck_forward.4} parent=27 // pred_region
        _
      $region44: #{resnext_bottleneck_forward.4} parent=27 // pred_fallthru
        _
      // Predicated region
      $region45: #{resnext_bottleneck_forward.4} parent=27 // pred_check
        %p744 = pneg %p102
      $region46: #{resnext_bottleneck_forward.4} parent=27 // pred_check_branch
        %746 = sbr.rel (%p744) target = $region48
      $region47: #{resnext_bottleneck_forward.4} parent=27 // pred_region
        _
      $region48: #{resnext_bottleneck_forward.4} parent=27 // pred_fallthru
        _
      // Predicated region
      $region49: #{resnext_bottleneck_forward.4} parent=27 // pred_check
        %p747 = pneg %p123
      $region50: #{resnext_bottleneck_forward.4} parent=27 // pred_check_branch
        %749 = sbr.rel (%p747) target = $region52
      $region51: #{resnext_bottleneck_forward.4} parent=27 // pred_region
        _
      $region52: #{resnext_bottleneck_forward.4} parent=27 // pred_fallthru
        _
    $region28: #{resnext_bottleneck_forward.4} parent=5 // pred_fallthru
      _
    %p750 = scmp.le.s32.totalorder 2, %s11
    // Predicated region
    $region53: #{resnext_bottleneck_forward.4} parent=5 // pred_check
      %p751 = pneg %p750
    $region54: #{resnext_bottleneck_forward.4} parent=5 // pred_check_branch
      %753 = sbr.rel (%p751) target = $region56
    $region55: #{resnext_bottleneck_forward.4} parent=5 // pred_region
      %s754 = ssub.s32 %s11, 2
      // Predicated region
      $region57: #{resnext_bottleneck_forward.4} parent=55 // pred_check
        %p755 = pneg %p87
      $region58: #{resnext_bottleneck_forward.4} parent=55 // pred_check_branch
        %757 = sbr.rel (%p755) target = $region60
      $region59: #{resnext_bottleneck_forward.4} parent=55 // pred_region
        %s758 = smul.u32 32, %s17
        %p759 = scmp.lt.s32.totalorder %s758, 63
        %s760 = scalar_select %p759, %s758, 63
        %s761 = smul.addr %s760, 4
        %s762 = scalar_lea.vmem %s2, %s761
      $region60: #{resnext_bottleneck_forward.4} parent=55 // pred_fallthru
        _
    $region56: #{resnext_bottleneck_forward.4} parent=5 // pred_fallthru
      _
  $region6: #{resnext_bottleneck_forward.4} parent=0 // loop_footer
    %s15 = sadd.s32 1, %s11
  $region7: #{resnext_bottleneck_forward.4} parent=0 // loop_footer_branch
    %10 = sbr.rel target = $region3
  $region8: #{resnext_bottleneck_forward.4} parent=0 // loop_exit
    _

// kernel: resnext_bottleneck_forward.5
$region0: #{resnext_bottleneck_forward.5}
  #allocation0 [shape = 'u32[]', space=smem, size = 0x4, offset = 0x4, fixed_abs, tag = 'smem constant byte address 0x4 - core index']
  #allocation1 [shape = 'u32[72,128]{1,0:T(1,128)}', space=vmem, size = 0x9000, scoped, tag = 'internal scratch']
  #allocation2 [shape = 'bf16[432,32]{1,0:T(8,128)(2,1)}', space=vmem, size = 0x1b000, scoped, tag = 'scratch operand']
  #allocation3 [shape = 'bf16[256,288]{1,0:T(8,128)(2,1)}', space=vmem, size = 0x30000, scoped, tag = 'scratch operand']
  %s0 = inlined_call_operand.vmem [shape: bf16[512,32], index: 0, kind: input, shape index: {}]
  %s1 = inlined_call_operand.vmem [shape: f32[1,32], index: 1, kind: input, shape index: {}]
  %s2 = inlined_call_operand.vmem [shape: f32[1,32], index: 2, kind: input, shape index: {}]
  %s3 = inlined_call_operand.vmem [shape: bf16[288,32], index: 3, kind: input, shape index: {}]
  %s4 = inlined_call_operand.vmem [shape: bf16[512,32], index: 4, kind: output, shape index: {0}]
  %s5 = inlined_call_operand.vmem [shape: f32[1,32], index: 5, kind: output, shape index: {1}]
  %s6 = inlined_call_operand.vmem [shape: f32[1,32], index: 6, kind: output, shape index: {2}]
  %7 = xla_tuple %s4, %s5, %s6
  %s8 = sld [smem:[#allocation0]]
  $region69: #{resnext_bottleneck_forward.5} parent=0
    _
  %s10 = ssub.s32 1, %s8
  %s11 = scalar_select 0, %s10, %s8
  loop: start=0, step=1, limit=4
  $region2: #{resnext_bottleneck_forward.5} parent=0 // loop_pre_header
    _
  $region3: #{resnext_bottleneck_forward.5} parent=0 // loop_header
    %s13 = sphi 0, %s17
    %p14 = scmp.ge.s32.totalorder %s13, 4
    %s23 = sphi 0, %s25
    %s26 = sphi 0, %s23
    %s27 = sphi 0, %s26
    %s43 = sphi 0, %s27
    %s47 = sphi 0, %s47
    %s49 = sphi 0, %s47
    %s50 = sphi 0, %s49
    %s64 = sphi 0, %s50
    %s68 = sphi 0, %s68
    %s70 = sphi 0, %s68
    %s71 = sphi 0, %s70
    %s85 = sphi 0, %s71
    %s89 = sphi 0, %s89
    %s91 = sphi 0, %s89
    %s92 = sphi 0, %s91
    %s106 = sphi 0, %s92
    %s112 = sphi 0, %s114
    %s115 = sphi 0, %s112
    %s116 = sphi 0, %s115
    %s132 = sphi 0, %s116
    %s136 = sphi 0, %s136
    %s138 = sphi 0, %s136
    %s139 = sphi 0, %s138
    %s153 = sphi 0, %s139
    %s157 = sphi 0, %s157
    %s159 = sphi 0, %s157
    %s160 = sphi 0, %s159
    %s174 = sphi 0, %s160
  $region4: #{resnext_bottleneck_forward.5} parent=0 // loop_header_branch
    %16 = sbr.rel (%p14) target = $region8
  $region5: #{resnext_bottleneck_forward.5} parent=0 // loop_body
    %s18 = ssub.s32 %s13, 1
    %s19 = ssub.s32 %s13, 2
    %s20 = sadd.s32 %s13, 1
    %s21 = ssub.s32 %s13, %s20
    %p22 = scmp.eq.s32.totalorder %s21, 0
    %s24 = sadd.s32 %s23, 1
    %s25 = scalar_select %p22, %s23, %s24
    %p28 = pneg %p22
    %p29 = scmp.eq.s32.totalorder %s13, 1
    %p30 = por %p28, %p29
    %p31 = scmp.ne.s32.totalorder %s23, %s26
    %p32 = scmp.eq.s32.totalorder %s13, 0
    %p33 = por %p31, %p32
    %p34 = scmp.ne.s32.totalorder %s23, %s26
    %p35 = scmp.eq.s32.totalorder %s18, 1
    %p36 = por %p34, %p35
    %p37 = scmp.ne.s32.totalorder %s26, %s27
    %p38 = scmp.eq.s32.totalorder %s18, 0
    %p39 = por %p37, %p38
    %p40 = scmp.ne.s32.totalorder %s26, %s27
    %p41 = scmp.eq.s32.totalorder %s19, 1
    %p42 = por %p40, %p41
    %p44 = scmp.ne.s32.totalorder %s27, %s43
    %p45 = scmp.eq.s32.totalorder %s19, 0
    %p46 = por %p44, %p45
    %s48 = sadd.s32 %s47, 1
    %p51 = scmp.eq.s32.totalorder %s13, 1
    %p52 = scmp.ne.s32.totalorder %s47, %s49
    %p53 = scmp.eq.s32.totalorder %s13, 0
    %p54 = por %p52, %p53
    %p55 = scmp.ne.s32.totalorder %s47, %s49
    %p56 = scmp.eq.s32.totalorder %s18, 1
    %p57 = por %p55, %p56
    %p58 = scmp.ne.s32.totalorder %s49, %s50
    %p59 = scmp.eq.s32.totalorder %s18, 0
    %p60 = por %p58, %p59
    %p61 = scmp.ne.s32.totalorder %s49, %s50
    %p62 = scmp.eq.s32.totalorder %s19, 1
    %p63 = por %p61, %p62
    %p65 = scmp.ne.s32.totalorder %s50, %s64
    %p66 = scmp.eq.s32.totalorder %s19, 0
    %p67 = por %p65, %p66
    %s69 = sadd.s32 %s68, 1
    %p72 = scmp.eq.s32.totalorder %s13, 1
    %p73 = scmp.ne.s32.totalorder %s68, %s70
    %p74 = scmp.eq.s32.totalorder %s13, 0
    %p75 = por %p73, %p74
    %p76 = scmp.ne.s32.totalorder %s68, %s70
    %p77 = scmp.eq.s32.totalorder %s18, 1
    %p78 = por %p76, %p77
    %p79 = scmp.ne.s32.totalorder %s70, %s71
    %p80 = scmp.eq.s32.totalorder %s18, 0
    %p81 = por %p79, %p80
    %p82 = scmp.ne.s32.totalorder %s70, %s71
    %p83 = scmp.eq.s32.totalorder %s19, 1
    %p84 = por %p82, %p83
    %p86 = scmp.ne.s32.totalorder %s71, %s85
    %p87 = scmp.eq.s32.totalorder %s19, 0
    %p88 = por %p86, %p87
    %s90 = sadd.s32 %s89, 1
    %p93 = scmp.eq.s32.totalorder %s13, 1
    %p94 = scmp.ne.s32.totalorder %s89, %s91
    %p95 = scmp.eq.s32.totalorder %s13, 0
    %p96 = por %p94, %p95
    %p97 = scmp.ne.s32.totalorder %s89, %s91
    %p98 = scmp.eq.s32.totalorder %s18, 1
    %p99 = por %p97, %p98
    %p100 = scmp.ne.s32.totalorder %s91, %s92
    %p101 = scmp.eq.s32.totalorder %s18, 0
    %p102 = por %p100, %p101
    %p103 = scmp.ne.s32.totalorder %s91, %s92
    %p104 = scmp.eq.s32.totalorder %s19, 1
    %p105 = por %p103, %p104
    %p107 = scmp.ne.s32.totalorder %s92, %s106
    %p108 = scmp.eq.s32.totalorder %s19, 0
    %p109 = por %p107, %p108
    %s110 = ssub.s32 %s13, %s20
    %p111 = scmp.eq.s32.totalorder %s110, 0
    %s113 = sadd.s32 %s112, 1
    %s114 = scalar_select %p111, %s112, %s113
    %p117 = pneg %p111
    %p118 = scmp.eq.s32.totalorder %s13, 1
    %p119 = por %p117, %p118
    %p120 = scmp.ne.s32.totalorder %s112, %s115
    %p121 = scmp.eq.s32.totalorder %s13, 0
    %p122 = por %p120, %p121
    %p123 = scmp.ne.s32.totalorder %s112, %s115
    %p124 = scmp.eq.s32.totalorder %s18, 1
    %p125 = por %p123, %p124
    %p126 = scmp.ne.s32.totalorder %s115, %s116
    %p127 = scmp.eq.s32.totalorder %s18, 0
    %p128 = por %p126, %p127
    %p129 = scmp.ne.s32.totalorder %s115, %s116
    %p130 = scmp.eq.s32.totalorder %s19, 1
    %p131 = por %p129, %p130
    %p133 = scmp.ne.s32.totalorder %s116, %s132
    %p134 = scmp.eq.s32.totalorder %s19, 0
    %p135 = por %p133, %p134
    %s137 = sadd.s32 %s136, 1
    %p140 = scmp.eq.s32.totalorder %s13, 1
    %p141 = scmp.ne.s32.totalorder %s136, %s138
    %p142 = scmp.eq.s32.totalorder %s13, 0
    %p143 = por %p141, %p142
    %p144 = scmp.ne.s32.totalorder %s136, %s138
    %p145 = scmp.eq.s32.totalorder %s18, 1
    %p146 = por %p144, %p145
    %p147 = scmp.ne.s32.totalorder %s138, %s139
    %p148 = scmp.eq.s32.totalorder %s18, 0
    %p149 = por %p147, %p148
    %p150 = scmp.ne.s32.totalorder %s138, %s139
    %p151 = scmp.eq.s32.totalorder %s19, 1
    %p152 = por %p150, %p151
    %p154 = scmp.ne.s32.totalorder %s139, %s153
    %p155 = scmp.eq.s32.totalorder %s19, 0
    %p156 = por %p154, %p155
    %s158 = sadd.s32 %s157, 1
    %p161 = scmp.eq.s32.totalorder %s13, 1
    %p162 = scmp.ne.s32.totalorder %s157, %s159
    %p163 = scmp.eq.s32.totalorder %s13, 0
    %p164 = por %p162, %p163
    %p165 = scmp.ne.s32.totalorder %s157, %s159
    %p166 = scmp.eq.s32.totalorder %s18, 1
    %p167 = por %p165, %p166
    %p168 = scmp.ne.s32.totalorder %s159, %s160
    %p169 = scmp.eq.s32.totalorder %s18, 0
    %p170 = por %p168, %p169
    %p171 = scmp.ne.s32.totalorder %s159, %s160
    %p172 = scmp.eq.s32.totalorder %s19, 1
    %p173 = por %p171, %p172
    %p175 = scmp.ne.s32.totalorder %s160, %s174
    %p176 = scmp.eq.s32.totalorder %s19, 0
    %p177 = por %p175, %p176
    %p178 = scmp.le.s32.totalorder 1, %s13
    %p179 = scmp.lt.s32.totalorder %s13, 3
    %p180 = pnand %p178, %p179
    %p181 = pneg %p180
    // Predicated region
    $region9: #{resnext_bottleneck_forward.5} parent=5 // pred_check
      _
    $region10: #{resnext_bottleneck_forward.5} parent=5 // pred_check_branch
      %183 = sbr.rel (%p180) target = $region12
    $region11: #{resnext_bottleneck_forward.5} parent=5 // pred_region
      %s184 = ssub.s32 %s13, 1
      // Predicated region
      $region13: #{resnext_bottleneck_forward.5} parent=11 // pred_check
        %p185 = pneg %p60
      $region14: #{resnext_bottleneck_forward.5} parent=11 // pred_check_branch
        %187 = sbr.rel (%p185) target = $region16
      $region15: #{resnext_bottleneck_forward.5} parent=11 // pred_region
        _
      $region16: #{resnext_bottleneck_forward.5} parent=11 // pred_fallthru
        _
      // Predicated region
      $region17: #{resnext_bottleneck_forward.5} parent=11 // pred_check
        %p188 = pneg %p81
      $region18: #{resnext_bottleneck_forward.5} parent=11 // pred_check_branch
        %190 = sbr.rel (%p188) target = $region20
      $region19: #{resnext_bottleneck_forward.5} parent=11 // pred_region
        _
      $region20: #{resnext_bottleneck_forward.5} parent=11 // pred_fallthru
        _
      // Predicated region
      $region21: #{resnext_bottleneck_forward.5} parent=11 // pred_check
        %p191 = pneg %p102
      $region22: #{resnext_bottleneck_forward.5} parent=11 // pred_check_branch
        %193 = sbr.rel (%p191) target = $region24
      $region23: #{resnext_bottleneck_forward.5} parent=11 // pred_region
        _
      $region24: #{resnext_bottleneck_forward.5} parent=11 // pred_fallthru
        _
    $region12: #{resnext_bottleneck_forward.5} parent=5 // pred_fallthru
      _
    %p194 = scmp.lt.s32.totalorder %s13, 2
    // Predicated region
    $region25: #{resnext_bottleneck_forward.5} parent=5 // pred_check
      %p195 = pneg %p194
    $region26: #{resnext_bottleneck_forward.5} parent=5 // pred_check_branch
      %197 = sbr.rel (%p195) target = $region28
    $region27: #{resnext_bottleneck_forward.5} parent=5 // pred_region
      // Predicated region
      $region29: #{resnext_bottleneck_forward.5} parent=27 // pred_check
        %p198 = pneg %p33
      $region30: #{resnext_bottleneck_forward.5} parent=27 // pred_check_branch
        %200 = sbr.rel (%p198) target = $region32
      $region31: #{resnext_bottleneck_forward.5} parent=27 // pred_region
        %s201 = smul.u32 32, %s13
        %p202 = scmp.lt.s32.totalorder %s201, 63
        %s203 = scalar_select %p202, %s201, 63
        %s204 = smul.addr %s203, 4
        %s205 = scalar_lea.vmem %s0, %s204
        %s206 = smul.u32 32, %s13
      $region32: #{resnext_bottleneck_forward.5} parent=27 // pred_fallthru
        _
    $region28: #{resnext_bottleneck_forward.5} parent=5 // pred_fallthru
      _
    %p207 = scmp.le.s32.totalorder 1, %s13
    %p208 = scmp.lt.s32.totalorder %s13, 3
    %p209 = pnand %p207, %p208
    %p210 = pneg %p209
    // Predicated region
    $region33: #{resnext_bottleneck_forward.5} parent=5 // pred_check
      _
    $region34: #{resnext_bottleneck_forward.5} parent=5 // pred_check_branch
      %212 = sbr.rel (%p209) target = $region36
    $region35: #{resnext_bottleneck_forward.5} parent=5 // pred_region
      %s213 = ssub.s32 %s13, 1
      %s214 = smul.u32 32, %s18
      %p215 = scmp.lt.s32.totalorder %s214, 63
      %s216 = scalar_select %p215, %s214, 63
      %s217 = smul.addr %s216, 4
      %s218 = scalar_lea.vmem %s0, %s217
      %p219 = pneg %p39
      %p220 = pneg %p36
      %p221 = pneg %p60
      %p222 = pneg %p57
      %p223 = pneg %p81
      %p224 = pneg %p78
      %p225 = pneg %p102
      %p226 = pneg %p99
      %p227 = pneg %p128
      %p228 = pneg %p125
      %s229 = smul.u32 32, %s18
      %p230 = scmp.lt.s32.totalorder %s229, 63
      %s231 = scalar_select %p230, %s229, 63
      %s232 = smul.addr %s231, 4
      %s233 = scalar_lea.vmem %s4, %s232
      %p234 = pneg %p149
      %p235 = pneg %p146
      %p236 = pneg %p170
      %p237 = pneg %p167
      %s238 = smul.u32 32, %s18
      %p239 = scmp.lt.s32.totalorder %s238, 63
      %s240 = scalar_select %p239, %s238, 63
      %s241 = smul.addr %s240, 4
      %s242 = scalar_lea.vmem %s0, %s241
      %s243 = smul.u32 32, %s18
      %s244 = smul.u32 32, %s18
      %p245 = scmp.lt.s32.totalorder %s244, 63
      %s246 = scalar_select %p245, %s244, 63
      %s247 = smul.addr %s246, 4
      %s248 = scalar_lea.vmem %s4, %s247
      %s249 = smul.u32 32, %s18
      %p251 = scmp.eq.s32.totalorder %s18, 0
      // Predicated region
      $region37: #{resnext_bottleneck_forward.5} parent=35 // pred_check
        %p252 = pneg %p251
      $region38: #{resnext_bottleneck_forward.5} parent=35 // pred_check_branch
        %254 = sbr.rel (%p252) target = $region40
      $region39: #{resnext_bottleneck_forward.5} parent=35 // pred_region
        %vm255 = vcmask 253952
        %256 = vst.msk [vmem:[%s5] sm:$0x1] %vm255, 0.0
        %257 = vst.msk [vmem:[%s6] sm:$0x1] %vm255, 0.0
        %vm258 = vcmask 257024
        %259 = vst.msk [vmem:[#allocation2] sm:$0xf] %vm258, 0
        %260 = vst.msk [vmem:[#allocation2 + $0x4] sm:$0xf] %vm258, 0
        %261 = vst.msk [vmem:[#allocation2 + $0x8] sm:$0xf] %vm258, 0
        %262 = vst.msk [vmem:[#allocation2 + $0xc] sm:$0xf] %vm258, 0
        %263 = vst.msk [vmem:[#allocation2 + $0x10] sm:$0xf] %vm258, 0
        %264 = vst.msk [vmem:[#allocation2 + $0x14] sm:$0xf] %vm258, 0
        %265 = vst.msk [vmem:[#allocation2 + $0x18] sm:$0xf] %vm258, 0
        %266 = vst.msk [vmem:[#allocation2 + $0x1c] sm:$0xf] %vm258, 0
        %267 = vst.msk [vmem:[#allocation2 + $0x20] sm:$0xf] %vm258, 0
        %268 = vst.msk [vmem:[#allocation2 + $0x24] sm:$0xf] %vm258, 0
        %269 = vst.msk [vmem:[#allocation2 + $0x28] sm:$0xf] %vm258, 0
        %270 = vst.msk [vmem:[#allocation2 + $0x2c] sm:$0xf] %vm258, 0
        %271 = vst.msk [vmem:[#allocation2 + $0x30] sm:$0xf] %vm258, 0
        %272 = vst.msk [vmem:[#allocation2 + $0x34] sm:$0xf] %vm258, 0
        %273 = vst.msk [vmem:[#allocation2 + $0x38] sm:$0xf] %vm258, 0
        %274 = vst.msk [vmem:[#allocation2 + $0x3c] sm:$0xf] %vm258, 0
        %275 = vst.msk [vmem:[#allocation2 + $0x40] sm:$0xf] %vm258, 0
        %276 = vst.msk [vmem:[#allocation2 + $0x44] sm:$0xf] %vm258, 0
        %277 = vst.msk [vmem:[#allocation2 + $0x48] sm:$0xf] %vm258, 0
        %278 = vst.msk [vmem:[#allocation2 + $0x4c] sm:$0xf] %vm258, 0
        %279 = vst.msk [vmem:[#allocation2 + $0x50] sm:$0xf] %vm258, 0
        %280 = vst.msk [vmem:[#allocation2 + $0x54] sm:$0xf] %vm258, 0
        %281 = vst.msk [vmem:[#allocation2 + $0x58] sm:$0xf] %vm258, 0
        %282 = vst.msk [vmem:[#allocation2 + $0x5c] sm:$0xf] %vm258, 0
        %283 = vst.msk [vmem:[#allocation2 + $0x60] sm:$0xf] %vm258, 0
        %284 = vst.msk [vmem:[#allocation2 + $0x64] sm:$0xf] %vm258, 0
        %285 = vst.msk [vmem:[#allocation2 + $0x68] sm:$0xf] %vm258, 0
        %286 = vst.msk [vmem:[#allocation2 + $0x6c] sm:$0xf] %vm258, 0
        %287 = vst.msk [vmem:[#allocation2 + $0x70] sm:$0xf] %vm258, 0
        %288 = vst.msk [vmem:[#allocation2 + $0x74] sm:$0xf] %vm258, 0
        %289 = vst.msk [vmem:[#allocation2 + $0x78] sm:$0xf] %vm258, 0
        %290 = vst.msk [vmem:[#allocation2 + $0x7c] sm:$0xf] %vm258, 0
        %291 = vst.msk [vmem:[#allocation2 + $0x80] sm:$0xf] %vm258, 0
        %292 = vst.msk [vmem:[#allocation2 + $0x84] sm:$0xf] %vm258, 0
        %293 = vst.msk [vmem:[#allocation2 + $0x88] sm:$0xf] %vm258, 0
        %294 = vst.msk [vmem:[#allocation2 + $0x8c] sm:$0xf] %vm258, 0
        %295 = vst.msk [vmem:[#allocation2 + $0x90] sm:$0xf] %vm258, 0
        %296 = vst.msk [vmem:[#allocation2 + $0x94] sm:$0xf] %vm258, 0
        %297 = vst.msk [vmem:[#allocation2 + $0x98] sm:$0xf] %vm258, 0
        %298 = vst.msk [vmem:[#allocation2 + $0x9c] sm:$0xf] %vm258, 0
        %299 = vst.msk [vmem:[#allocation2 + $0xa0] sm:$0xf] %vm258, 0
        %300 = vst.msk [vmem:[#allocation2 + $0xa4] sm:$0xf] %vm258, 0
        %301 = vst.msk [vmem:[#allocation2 + $0xa8] sm:$0xf] %vm258, 0
        %302 = vst.msk [vmem:[#allocation2 + $0xac] sm:$0xf] %vm258, 0
        %303 = vst.msk [vmem:[#allocation2 + $0xb0] sm:$0xf] %vm258, 0
        %304 = vst.msk [vmem:[#allocation2 + $0xb4] sm:$0xf] %vm258, 0
        %305 = vst.msk [vmem:[#allocation2 + $0xb8] sm:$0xf] %vm258, 0
        %306 = vst.msk [vmem:[#allocation2 + $0xbc] sm:$0xf] %vm258, 0
        %307 = vst.msk [vmem:[#allocation2 + $0xc0] sm:$0xf] %vm258, 0
        %308 = vst.msk [vmem:[#allocation2 + $0xc4] sm:$0xf] %vm258, 0
        %309 = vst.msk [vmem:[#allocation2 + $0xc8] sm:$0xf] %vm258, 0
        %310 = vst.msk [vmem:[#allocation2 + $0xcc] sm:$0xf] %vm258, 0
        %311 = vst.msk [vmem:[#allocation2 + $0xd0] sm:$0xf] %vm258, 0
        %312 = vst.msk [vmem:[#allocation2 + $0xd4] sm:$0xf] %vm258, 0
      $region40: #{resnext_bottleneck_forward.5} parent=35 // pred_fallthru
        _
      %v313 = vld [vmem:[%s242] sm:$0xf]
      %v314 = vld [vmem:[%s242 + $0x4] sm:$0xf]
      %v315 = vld [vmem:[%s242 + $0x8] sm:$0xf]
      %v316 = vld [vmem:[%s242 + $0xc] sm:$0xf]
      %v317 = vld [vmem:[%s242 + $0x10] sm:$0xf]
      %v318 = vld [vmem:[%s242 + $0x14] sm:$0xf]
      %v319 = vld [vmem:[%s242 + $0x18] sm:$0xf]
      %v320 = vld [vmem:[%s242 + $0x1c] sm:$0xf]
      %v321 = vld [vmem:[%s242 + $0x20] sm:$0xf]
      %v322 = vld [vmem:[%s242 + $0x24] sm:$0xf]
      %v323 = vld [vmem:[%s242 + $0x28] sm:$0xf]
      %v324 = vld [vmem:[%s242 + $0x2c] sm:$0xf]
      %v325 = vld [vmem:[%s242 + $0x30] sm:$0xf]
      %v326 = vld [vmem:[%s242 + $0x34] sm:$0xf]
      %v327 = vld [vmem:[%s242 + $0x38] sm:$0xf]
      %v328 = vld [vmem:[%s242 + $0x3c] sm:$0xf]
      %v329 = vld [vmem:[%s242 + $0x40] sm:$0xf]
      %v330 = vld [vmem:[%s242 + $0x44] sm:$0xf]
      %v331 = vld [vmem:[%s242 + $0x48] sm:$0xf]
      %v332 = vld [vmem:[%s242 + $0x4c] sm:$0xf]
      %v333 = vld [vmem:[%s242 + $0x50] sm:$0xf]
      %v334 = vld [vmem:[%s242 + $0x54] sm:$0xf]
      %v335 = vld [vmem:[%s242 + $0x58] sm:$0xf]
      %v336 = vld [vmem:[%s242 + $0x5c] sm:$0xf]
      %v337 = vld [vmem:[%s242 + $0x60] sm:$0xf]
      %v338 = vld [vmem:[%s242 + $0x64] sm:$0xf]
      %v339 = vld [vmem:[%s242 + $0x68] sm:$0xf]
      %v340 = vld [vmem:[%s242 + $0x6c] sm:$0xf]
      %v341 = vld [vmem:[%s242 + $0x70] sm:$0xf]
      %v342 = vld [vmem:[%s242 + $0x74] sm:$0xf]
      %v343 = vld [vmem:[%s242 + $0x78] sm:$0xf]
      %v344 = vld [vmem:[%s242 + $0x7c] sm:$0xf]
      %v345 = vunpack.c.l.bf16 %v313
      %v346 = vunpack.c.l.bf16 %v314
      %v347 = vunpack.c.l.bf16 %v315
      %v348 = vunpack.c.l.bf16 %v316
      %v349 = vunpack.c.l.bf16 %v317
      %v350 = vunpack.c.l.bf16 %v318
      %v351 = vunpack.c.l.bf16 %v319
      %v352 = vunpack.c.l.bf16 %v320
      %v353 = vunpack.c.l.bf16 %v321
      %v354 = vunpack.c.l.bf16 %v322
      %v355 = vunpack.c.l.bf16 %v323
      %v356 = vunpack.c.l.bf16 %v324
      %v357 = vunpack.c.l.bf16 %v325
      %v358 = vunpack.c.l.bf16 %v326
      %v359 = vunpack.c.l.bf16 %v327
      %v360 = vunpack.c.l.bf16 %v328
      %v361 = vunpack.c.l.bf16 %v329
      %v362 = vunpack.c.l.bf16 %v330
      %v363 = vunpack.c.l.bf16 %v331
      %v364 = vunpack.c.l.bf16 %v332
      %v365 = vunpack.c.l.bf16 %v333
      %v366 = vunpack.c.l.bf16 %v334
      %v367 = vunpack.c.l.bf16 %v335
      %v368 = vunpack.c.l.bf16 %v336
      %v369 = vunpack.c.l.bf16 %v337
      %v370 = vunpack.c.l.bf16 %v338
      %v371 = vunpack.c.l.bf16 %v339
      %v372 = vunpack.c.l.bf16 %v340
      %v373 = vunpack.c.l.bf16 %v341
      %v374 = vunpack.c.l.bf16 %v342
      %v375 = vunpack.c.l.bf16 %v343
      %v376 = vunpack.c.l.bf16 %v344
      %v377 = vld [vmem:[%s1] sm:$0x1]
      %v379 = vperm.slane %v377, 0
      %v381 = vmul.f32 %v345, %v379
      %v382 = vmul.f32 %v346, %v379
      %v383 = vmul.f32 %v347, %v379
      %v384 = vmul.f32 %v348, %v379
      %v385 = vmul.f32 %v349, %v379
      %v386 = vmul.f32 %v350, %v379
      %v387 = vmul.f32 %v351, %v379
      %v388 = vmul.f32 %v352, %v379
      %v389 = vmul.f32 %v353, %v379
      %v390 = vmul.f32 %v354, %v379
      %v391 = vmul.f32 %v355, %v379
      %v392 = vmul.f32 %v356, %v379
      %v393 = vmul.f32 %v357, %v379
      %v394 = vmul.f32 %v358, %v379
      %v395 = vmul.f32 %v359, %v379
      %v396 = vmul.f32 %v360, %v379
      %v397 = vmul.f32 %v361, %v379
      %v398 = vmul.f32 %v362, %v379
      %v399 = vmul.f32 %v363, %v379
      %v400 = vmul.f32 %v364, %v379
      %v401 = vmul.f32 %v365, %v379
      %v402 = vmul.f32 %v366, %v379
      %v403 = vmul.f32 %v367, %v379
      %v404 = vmul.f32 %v368, %v379
      %v405 = vmul.f32 %v369, %v379
      %v406 = vmul.f32 %v370, %v379
      %v407 = vmul.f32 %v371, %v379
      %v408 = vmul.f32 %v372, %v379
      %v409 = vmul.f32 %v373, %v379
      %v410 = vmul.f32 %v374, %v379
      %v411 = vmul.f32 %v375, %v379
      %v412 = vmul.f32 %v376, %v379
      %v413 = vld [vmem:[%s2] sm:$0x1]
      %v415 = vperm.slane %v413, 0
      %v417 = vadd.f32 %v381, %v415
      %v418 = vadd.f32 %v382, %v415
      %v419 = vadd.f32 %v383, %v415
      %v420 = vadd.f32 %v384, %v415
      %v421 = vadd.f32 %v385, %v415
      %v422 = vadd.f32 %v386, %v415
      %v423 = vadd.f32 %v387, %v415
      %v424 = vadd.f32 %v388, %v415
      %v425 = vadd.f32 %v389, %v415
      %v426 = vadd.f32 %v390, %v415
      %v427 = vadd.f32 %v391, %v415
      %v428 = vadd.f32 %v392, %v415
      %v429 = vadd.f32 %v393, %v415
      %v430 = vadd.f32 %v394, %v415
      %v431 = vadd.f32 %v395, %v415
      %v432 = vadd.f32 %v396, %v415
      %v433 = vadd.f32 %v397, %v415
      %v434 = vadd.f32 %v398, %v415
      %v435 = vadd.f32 %v399, %v415
      %v436 = vadd.f32 %v400, %v415
      %v437 = vadd.f32 %v401, %v415
      %v438 = vadd.f32 %v402, %v415
      %v439 = vadd.f32 %v403, %v415
      %v440 = vadd.f32 %v404, %v415
      %v441 = vadd.f32 %v405, %v415
      %v442 = vadd.f32 %v406, %v415
      %v443 = vadd.f32 %v407, %v415
      %v444 = vadd.f32 %v408, %v415
      %v445 = vadd.f32 %v409, %v415
      %v446 = vadd.f32 %v410, %v415
      %v447 = vadd.f32 %v411, %v415
      %v448 = vadd.f32 %v412, %v415
      %v449 = vmax.f32 %v417, 0.0
      %v450 = vmax.f32 %v418, 0.0
      %v451 = vmax.f32 %v419, 0.0
      %v452 = vmax.f32 %v420, 0.0
      %v453 = vmax.f32 %v421, 0.0
      %v454 = vmax.f32 %v422, 0.0
      %v455 = vmax.f32 %v423, 0.0
      %v456 = vmax.f32 %v424, 0.0
      %v457 = vmax.f32 %v425, 0.0
      %v458 = vmax.f32 %v426, 0.0
      %v459 = vmax.f32 %v427, 0.0
      %v460 = vmax.f32 %v428, 0.0
      %v461 = vmax.f32 %v429, 0.0
      %v462 = vmax.f32 %v430, 0.0
      %v463 = vmax.f32 %v431, 0.0
      %v464 = vmax.f32 %v432, 0.0
      %v465 = vmax.f32 %v433, 0.0
      %v466 = vmax.f32 %v434, 0.0
      %v467 = vmax.f32 %v435, 0.0
      %v468 = vmax.f32 %v436, 0.0
      %v469 = vmax.f32 %v437, 0.0
      %v470 = vmax.f32 %v438, 0.0
      %v471 = vmax.f32 %v439, 0.0
      %v472 = vmax.f32 %v440, 0.0
      %v473 = vmax.f32 %v441, 0.0
      %v474 = vmax.f32 %v442, 0.0
      %v475 = vmax.f32 %v443, 0.0
      %v476 = vmax.f32 %v444, 0.0
      %v477 = vmax.f32 %v445, 0.0
      %v478 = vmax.f32 %v446, 0.0
      %v479 = vmax.f32 %v447, 0.0
      %v480 = vmax.f32 %v448, 0.0
      %v481 = vpack.c.bf16 %v449, %v449
      %v482 = vpack.c.bf16 %v450, %v450
      %v483 = vpack.c.bf16 %v451, %v451
      %v484 = vpack.c.bf16 %v452, %v452
      %v485 = vpack.c.bf16 %v453, %v453
      %v486 = vpack.c.bf16 %v454, %v454
      %v487 = vpack.c.bf16 %v455, %v455
      %v488 = vpack.c.bf16 %v456, %v456
      %v489 = vpack.c.bf16 %v457, %v457
      %v490 = vpack.c.bf16 %v458, %v458
      %v491 = vpack.c.bf16 %v459, %v459
      %v492 = vpack.c.bf16 %v460, %v460
      %v493 = vpack.c.bf16 %v461, %v461
      %v494 = vpack.c.bf16 %v462, %v462
      %v495 = vpack.c.bf16 %v463, %v463
      %v496 = vpack.c.bf16 %v464, %v464
      %v497 = vpack.c.bf16 %v465, %v465
      %v498 = vpack.c.bf16 %v466, %v466
      %v499 = vpack.c.bf16 %v467, %v467
      %v500 = vpack.c.bf16 %v468, %v468
      %v501 = vpack.c.bf16 %v469, %v469
      %v502 = vpack.c.bf16 %v470, %v470
      %v503 = vpack.c.bf16 %v471, %v471
      %v504 = vpack.c.bf16 %v472, %v472
      %v505 = vpack.c.bf16 %v473, %v473
      %v506 = vpack.c.bf16 %v474, %v474
      %v507 = vpack.c.bf16 %v475, %v475
      %v508 = vpack.c.bf16 %v476, %v476
      %v509 = vpack.c.bf16 %v477, %v477
      %v510 = vpack.c.bf16 %v478, %v478
      %v511 = vpack.c.bf16 %v479, %v479
      %v512 = vpack.c.bf16 %v480, %v480
      %vm513 = vsmask.f32 256
      %vm514 = vsmask.f32 4368
      %vm515 = vmor %vm513, %vm514
      %v517 = vshrl.u32 %v481, 16
      %v519 = vrot.slane %v517, 7
      %v520 = vshll.u32 %v481, 16
      %v522 = vor.u32 %v519, %v520
      %v523 = vrot.slane %v519, 4
      %v525 = vshrl.u32 %v482, 16
      %v527 = vrot.slane %v525, 7
      %v528 = vshll.u32 %v482, 16
      %v530 = vor.u32 %v527, %v528
      %v531 = vsel %vm515, %v523, %v530
      %v532 = vrot.slane %v527, 4
      %vm536 = vcmask 257024
      %vm537 = vsmask.f32 7938
      %vm538 = vmand %vm536, %vm537
      %v539 = vld [vmem:[#allocation2 + $0xc] sm:$0xf]
      %v540 = vsel %vm538, %v522, %v539
      %541 = vst [vmem:[#allocation2 + $0xc] sm:$0xf] %v540
      %vm542 = vcmask 257024
      %543 = vst.msk [vmem:[#allocation2 + $0x10] sm:$0xf] %vm542, %v531
      %vm544 = vcmask 253952
      %vm545 = vmand %vm544, %vm513
      %v546 = vld [vmem:[#allocation2 + $0x14] sm:$0x1]
      %v547 = vsel %vm545, %v532, %v546
      %548 = vst [vmem:[#allocation2 + $0x14] sm:$0x1] %v547
      %v550 = vshrl.u32 %v483, 16
      %v552 = vrot.slane %v550, 7
      %v553 = vshll.u32 %v483, 16
      %v555 = vor.u32 %v552, %v553
      %v556 = vrot.slane %v552, 4
      %v558 = vshrl.u32 %v484, 16
      %v560 = vrot.slane %v558, 7
      %v561 = vshll.u32 %v484, 16
      %v563 = vor.u32 %v560, %v561
      %v564 = vsel %vm515, %v556, %v563
      %v565 = vrot.slane %v560, 4
      %v569 = vld [vmem:[#allocation2 + $0x18] sm:$0xf]
      %v570 = vsel %vm538, %v555, %v569
      %571 = vst [vmem:[#allocation2 + $0x18] sm:$0xf] %v570
      %572 = vst.msk [vmem:[#allocation2 + $0x1c] sm:$0xf] %vm542, %v564
      %v573 = vld [vmem:[#allocation2 + $0x20] sm:$0x1]
      %v574 = vsel %vm545, %v565, %v573
      %575 = vst [vmem:[#allocation2 + $0x20] sm:$0x1] %v574
      %v577 = vshrl.u32 %v485, 16
      %v579 = vrot.slane %v577, 7
      %v580 = vshll.u32 %v485, 16
      %v582 = vor.u32 %v579, %v580
      %v583 = vrot.slane %v579, 4
      %v585 = vshrl.u32 %v486, 16
      %v587 = vrot.slane %v585, 7
      %v588 = vshll.u32 %v486, 16
      %v590 = vor.u32 %v587, %v588
      %v591 = vsel %vm515, %v583, %v590
      %v592 = vrot.slane %v587, 4
      %v596 = vld [vmem:[#allocation2 + $0x24] sm:$0xf]
      %v597 = vsel %vm538, %v582, %v596
      %598 = vst [vmem:[#allocation2 + $0x24] sm:$0xf] %v597
      %599 = vst.msk [vmem:[#allocation2 + $0x28] sm:$0xf] %vm542, %v591
      %v600 = vld [vmem:[#allocation2 + $0x2c] sm:$0x1]
      %v601 = vsel %vm545, %v592, %v600
      %602 = vst [vmem:[#allocation2 + $0x2c] sm:$0x1] %v601
      %v604 = vshrl.u32 %v487, 16
      %v606 = vrot.slane %v604, 7
      %v607 = vshll.u32 %v487, 16
      %v609 = vor.u32 %v606, %v607
      %v610 = vrot.slane %v606, 4
      %v612 = vshrl.u32 %v488, 16
      %v614 = vrot.slane %v612, 7
      %v615 = vshll.u32 %v488, 16
      %v617 = vor.u32 %v614, %v615
      %v618 = vsel %vm515, %v610, %v617
      %v619 = vrot.slane %v614, 4
      %v623 = vld [vmem:[#allocation2 + $0x30] sm:$0xf]
      %v624 = vsel %vm538, %v609, %v623
      %625 = vst [vmem:[#allocation2 + $0x30] sm:$0xf] %v624
      %626 = vst.msk [vmem:[#allocation2 + $0x34] sm:$0xf] %vm542, %v618
      %v627 = vld [vmem:[#allocation2 + $0x38] sm:$0x1]
      %v628 = vsel %vm545, %v619, %v627
      %629 = vst [vmem:[#allocation2 + $0x38] sm:$0x1] %v628
      %v631 = vshrl.u32 %v489, 16
      %v633 = vrot.slane %v631, 7
      %v634 = vshll.u32 %v489, 16
      %v636 = vor.u32 %v633, %v634
      %v637 = vrot.slane %v633, 4
      %v639 = vshrl.u32 %v490, 16
      %v641 = vrot.slane %v639, 7
      %v642 = vshll.u32 %v490, 16
      %v644 = vor.u32 %v641, %v642
      %v645 = vsel %vm515, %v637, %v644
      %v646 = vrot.slane %v641, 4
      %v650 = vld [vmem:[#allocation2 + $0x3c] sm:$0xf]
      %v651 = vsel %vm538, %v636, %v650
      %652 = vst [vmem:[#allocation2 + $0x3c] sm:$0xf] %v651
      %653 = vst.msk [vmem:[#allocation2 + $0x40] sm:$0xf] %vm542, %v645
      %v654 = vld [vmem:[#allocation2 + $0x44] sm:$0x1]
      %v655 = vsel %vm545, %v646, %v654
      %656 = vst [vmem:[#allocation2 + $0x44] sm:$0x1] %v655
      %v658 = vshrl.u32 %v491, 16
      %v660 = vrot.slane %v658, 7
      %v661 = vshll.u32 %v491, 16
      %v663 = vor.u32 %v660, %v661
      %v664 = vrot.slane %v660, 4
      %v666 = vshrl.u32 %v492, 16
      %v668 = vrot.slane %v666, 7
      %v669 = vshll.u32 %v492, 16
      %v671 = vor.u32 %v668, %v669
      %v672 = vsel %vm515, %v664, %v671
      %v673 = vrot.slane %v668, 4
      %v677 = vld [vmem:[#allocation2 + $0x48] sm:$0xf]
      %v678 = vsel %vm538, %v663, %v677
      %679 = vst [vmem:[#allocation2 + $0x48] sm:$0xf] %v678
      %680 = vst.msk [vmem:[#allocation2 + $0x4c] sm:$0xf] %vm542, %v672
      %v681 = vld [vmem:[#allocation2 + $0x50] sm:$0x1]
      %v682 = vsel %vm545, %v673, %v681
      %683 = vst [vmem:[#allocation2 + $0x50] sm:$0x1] %v682
      %v685 = vshrl.u32 %v493, 16
      %v687 = vrot.slane %v685, 7
      %v688 = vshll.u32 %v493, 16
      %v690 = vor.u32 %v687, %v688
      %v691 = vrot.slane %v687, 4
      %v693 = vshrl.u32 %v494, 16
      %v695 = vrot.slane %v693, 7
      %v696 = vshll.u32 %v494, 16
      %v698 = vor.u32 %v695, %v696
      %v699 = vsel %vm515, %v691, %v698
      %v700 = vrot.slane %v695, 4
      %v704 = vld [vmem:[#allocation2 + $0x54] sm:$0xf]
      %v705 = vsel %vm538, %v690, %v704
      %706 = vst [vmem:[#allocation2 + $0x54] sm:$0xf] %v705
      %707 = vst.msk [vmem:[#allocation2 + $0x58] sm:$0xf] %vm542, %v699
      %v708 = vld [vmem:[#allocation2 + $0x5c] sm:$0x1]
      %v709 = vsel %vm545, %v700, %v708
      %710 = vst [vmem:[#allocation2 + $0x5c] sm:$0x1] %v709
      %v712 = vshrl.u32 %v495, 16
      %v714 = vrot.slane %v712, 7
      %v715 = vshll.u32 %v495, 16
      %v717 = vor.u32 %v714, %v715
      %v718 = vrot.slane %v714, 4
      %v720 = vshrl.u32 %v496, 16
      %v722 = vrot.slane %v720, 7
      %v723 = vshll.u32 %v496, 16
      %v725 = vor.u32 %v722, %v723
      %v726 = vsel %vm515, %v718, %v725
      %v727 = vrot.slane %v722, 4
      %v731 = vld [vmem:[#allocation2 + $0x60] sm:$0xf]
      %v732 = vsel %vm538, %v717, %v731
      %733 = vst [vmem:[#allocation2 + $0x60] sm:$0xf] %v732
      %734 = vst.msk [vmem:[#allocation2 + $0x64] sm:$0xf] %vm542, %v726
      %v735 = vld [vmem:[#allocation2 + $0x68] sm:$0x1]
      %v736 = vsel %vm545, %v727, %v735
      %737 = vst [vmem:[#allocation2 + $0x68] sm:$0x1] %v736
      %v739 = vshrl.u32 %v497, 16
      %v741 = vrot.slane %v739, 7
      %v742 = vshll.u32 %v497, 16
      %v744 = vor.u32 %v741, %v742
      %v745 = vrot.slane %v741, 4
      %v747 = vshrl.u32 %v498, 16
      %v749 = vrot.slane %v747, 7
      %v750 = vshll.u32 %v498, 16
      %v752 = vor.u32 %v749, %v750
      %v753 = vsel %vm515, %v745, %v752
      %v754 = vrot.slane %v749, 4
      %v758 = vld [vmem:[#allocation2 + $0x6c] sm:$0xf]
      %v759 = vsel %vm538, %v744, %v758
      %760 = vst [vmem:[#allocation2 + $0x6c] sm:$0xf] %v759
      %761 = vst.msk [vmem:[#allocation2 + $0x70] sm:$0xf] %vm542, %v753
      %v762 = vld [vmem:[#allocation2 + $0x74] sm:$0x1]
      %v763 = vsel %vm545, %v754, %v762
      %764 = vst [vmem:[#allocation2 + $0x74] sm:$0x1] %v763
      %v766 = vshrl.u32 %v499, 16
      %v768 = vrot.slane %v766, 7
      %v769 = vshll.u32 %v499, 16
      %v771 = vor.u32 %v768, %v769
      %v772 = vrot.slane %v768, 4
      %v774 = vshrl.u32 %v500, 16
      %v776 = vrot.slane %v774, 7
      %v777 = vshll.u32 %v500, 16
      %v779 = vor.u32 %v776, %v777
      %v780 = vsel %vm515, %v772, %v779
      %v781 = vrot.slane %v776, 4
      %v785 = vld [vmem:[#allocation2 + $0x78] sm:$0xf]
      %v786 = vsel %vm538, %v771, %v785
      %787 = vst [vmem:[#allocation2 + $0x78] sm:$0xf] %v786
      %788 = vst.msk [vmem:[#allocation2 + $0x7c] sm:$0xf] %vm542, %v780
      %v789 = vld [vmem:[#allocation2 + $0x80] sm:$0x1]
      %v790 = vsel %vm545, %v781, %v789
      %791 = vst [vmem:[#allocation2 + $0x80] sm:$0x1] %v790
      %v793 = vshrl.u32 %v501, 16
      %v795 = vrot.slane %v793, 7
      %v796 = vshll.u32 %v501, 16
      %v798 = vor.u32 %v795, %v796
      %v799 = vrot.slane %v795, 4
      %v801 = vshrl.u32 %v502, 16
      %v803 = vrot.slane %v801, 7
      %v804 = vshll.u32 %v502, 16
      %v806 = vor.u32 %v803, %v804
      %v807 = vsel %vm515, %v799, %v806
      %v808 = vrot.slane %v803, 4
      %v812 = vld [vmem:[#allocation2 + $0x84] sm:$0xf]
      %v813 = vsel %vm538, %v798, %v812
      %814 = vst [vmem:[#allocation2 + $0x84] sm:$0xf] %v813
      %815 = vst.msk [vmem:[#allocation2 + $0x88] sm:$0xf] %vm542, %v807
      %v816 = vld [vmem:[#allocation2 + $0x8c] sm:$0x1]
      %v817 = vsel %vm545, %v808, %v816
      %818 = vst [vmem:[#allocation2 + $0x8c] sm:$0x1] %v817
      %v820 = vshrl.u32 %v503, 16
      %v822 = vrot.slane %v820, 7
      %v823 = vshll.u32 %v503, 16
      %v825 = vor.u32 %v822, %v823
      %v826 = vrot.slane %v822, 4
      %v828 = vshrl.u32 %v504, 16
      %v830 = vrot.slane %v828, 7
      %v831 = vshll.u32 %v504, 16
      %v833 = vor.u32 %v830, %v831
      %v834 = vsel %vm515, %v826, %v833
      %v835 = vrot.slane %v830, 4
      %v839 = vld [vmem:[#allocation2 + $0x90] sm:$0xf]
      %v840 = vsel %vm538, %v825, %v839
      %841 = vst [vmem:[#allocation2 + $0x90] sm:$0xf] %v840
      %842 = vst.msk [vmem:[#allocation2 + $0x94] sm:$0xf] %vm542, %v834
      %v843 = vld [vmem:[#allocation2 + $0x98] sm:$0x1]
      %v844 = vsel %vm545, %v835, %v843
      %845 = vst [vmem:[#allocation2 + $0x98] sm:$0x1] %v844
      %v847 = vshrl.u32 %v505, 16
      %v849 = vrot.slane %v847, 7
      %v850 = vshll.u32 %v505, 16
      %v852 = vor.u32 %v849, %v850
      %v853 = vrot.slane %v849, 4
      %v855 = vshrl.u32 %v506, 16
      %v857 = vrot.slane %v855, 7
      %v858 = vshll.u32 %v506, 16
      %v860 = vor.u32 %v857, %v858
      %v861 = vsel %vm515, %v853, %v860
      %v862 = vrot.slane %v857, 4
      %v866 = vld [vmem:[#allocation2 + $0x9c] sm:$0xf]
      %v867 = vsel %vm538, %v852, %v866
      %868 = vst [vmem:[#allocation2 + $0x9c] sm:$0xf] %v867
      %869 = vst.msk [vmem:[#allocation2 + $0xa0] sm:$0xf] %vm542, %v861
      %v870 = vld [vmem:[#allocation2 + $0xa4] sm:$0x1]
      %v871 = vsel %vm545, %v862, %v870
      %872 = vst [vmem:[#allocation2 + $0xa4] sm:$0x1] %v871
      %v874 = vshrl.u32 %v507, 16
      %v876 = vrot.slane %v874, 7
      %v877 = vshll.u32 %v507, 16
      %v879 = vor.u32 %v876, %v877
      %v880 = vrot.slane %v876, 4
      %v882 = vshrl.u32 %v508, 16
      %v884 = vrot.slane %v882, 7
      %v885 = vshll.u32 %v508, 16
      %v887 = vor.u32 %v884, %v885
      %v888 = vsel %vm515, %v880, %v887
      %v889 = vrot.slane %v884, 4
      %v893 = vld [vmem:[#allocation2 + $0xa8] sm:$0xf]
      %v894 = vsel %vm538, %v879, %v893
      %895 = vst [vmem:[#allocation2 + $0xa8] sm:$0xf] %v894
      %896 = vst.msk [vmem:[#allocation2 + $0xac] sm:$0xf] %vm542, %v888
      %v897 = vld [vmem:[#allocation2 + $0xb0] sm:$0x1]
      %v898 = vsel %vm545, %v889, %v897
      %899 = vst [vmem:[#allocation2 + $0xb0] sm:$0x1] %v898
      %v901 = vshrl.u32 %v509, 16
      %v903 = vrot.slane %v901, 7
      %v904 = vshll.u32 %v509, 16
      %v906 = vor.u32 %v903, %v904
      %v907 = vrot.slane %v903, 4
      %v909 = vshrl.u32 %v510, 16
      %v911 = vrot.slane %v909, 7
      %v912 = vshll.u32 %v510, 16
      %v914 = vor.u32 %v911, %v912
      %v915 = vsel %vm515, %v907, %v914
      %v916 = vrot.slane %v911, 4
      %v920 = vld [vmem:[#allocation2 + $0xb4] sm:$0xf]
      %v921 = vsel %vm538, %v906, %v920
      %922 = vst [vmem:[#allocation2 + $0xb4] sm:$0xf] %v921
      %923 = vst.msk [vmem:[#allocation2 + $0xb8] sm:$0xf] %vm542, %v915
      %v924 = vld [vmem:[#allocation2 + $0xbc] sm:$0x1]
      %v925 = vsel %vm545, %v916, %v924
      %926 = vst [vmem:[#allocation2 + $0xbc] sm:$0x1] %v925
      %v928 = vshrl.u32 %v511, 16
      %v930 = vrot.slane %v928, 7
      %v931 = vshll.u32 %v511, 16
      %v933 = vor.u32 %v930, %v931
      %v934 = vrot.slane %v930, 4
      %v936 = vshrl.u32 %v512, 16
      %v938 = vrot.slane %v936, 7
      %v939 = vshll.u32 %v512, 16
      %v941 = vor.u32 %v938, %v939
      %v942 = vsel %vm515, %v934, %v941
      %v943 = vrot.slane %v938, 4
      %v947 = vld [vmem:[#allocation2 + $0xc0] sm:$0xf]
      %v948 = vsel %vm538, %v933, %v947
      %949 = vst [vmem:[#allocation2 + $0xc0] sm:$0xf] %v948
      %950 = vst.msk [vmem:[#allocation2 + $0xc4] sm:$0xf] %vm542, %v942
      %v951 = vld [vmem:[#allocation2 + $0xc8] sm:$0x1]
      %v952 = vsel %vm545, %v943, %v951
      %953 = vst [vmem:[#allocation2 + $0xc8] sm:$0x1] %v952
      %v954 = vld [vmem:[#allocation2] sm:$0xf]
      %v955 = vld [vmem:[#allocation2 + $0x4] sm:$0xf]
      %956 = vst.msk [vmem:[#allocation3] sm:$0xf] %vm542, %v954
      %957 = vst.msk [vmem:[#allocation3 + $0xc] sm:$0xf] %vm542, %v955
      %v958 = vld [vmem:[#allocation2 + $0xc] sm:$0xf]
      %v959 = vld [vmem:[#allocation2 + $0x10] sm:$0xf]
      %960 = vst.msk [vmem:[#allocation3 + $0x18] sm:$0xf] %vm542, %v958
      %961 = vst.msk [vmem:[#allocation3 + $0x24] sm:$0xf] %vm542, %v959
      %v962 = vld [vmem:[#allocation2 + $0x18] sm:$0xf]
      %v963 = vld [vmem:[#allocation2 + $0x1c] sm:$0xf]
      %964 = vst.msk [vmem:[#allocation3 + $0x30] sm:$0xf] %vm542, %v962
      %965 = vst.msk [vmem:[#allocation3 + $0x3c] sm:$0xf] %vm542, %v963
      %v966 = vld [vmem:[#allocation2 + $0x24] sm:$0xf]
      %v967 = vld [vmem:[#allocation2 + $0x28] sm:$0xf]
      %968 = vst.msk [vmem:[#allocation3 + $0x48] sm:$0xf] %vm542, %v966
      %969 = vst.msk [vmem:[#allocation3 + $0x54] sm:$0xf] %vm542, %v967
      %v970 = vld [vmem:[#allocation2 + $0x30] sm:$0xf]
      %v971 = vld [vmem:[#allocation2 + $0x34] sm:$0xf]
      %972 = vst.msk [vmem:[#allocation3 + $0x60] sm:$0xf] %vm542, %v970
      %973 = vst.msk [vmem:[#allocation3 + $0x6c] sm:$0xf] %vm542, %v971
      %v974 = vld [vmem:[#allocation2 + $0x3c] sm:$0xf]
      %v975 = vld [vmem:[#allocation2 + $0x40] sm:$0xf]
      %976 = vst.msk [vmem:[#allocation3 + $0x78] sm:$0xf] %vm542, %v974
      %977 = vst.msk [vmem:[#allocation3 + $0x84] sm:$0xf] %vm542, %v975
      %v978 = vld [vmem:[#allocation2 + $0x48] sm:$0xf]
      %v979 = vld [vmem:[#allocation2 + $0x4c] sm:$0xf]
      %980 = vst.msk [vmem:[#allocation3 + $0x90] sm:$0xf] %vm542, %v978
      %981 = vst.msk [vmem:[#allocation3 + $0x9c] sm:$0xf] %vm542, %v979
      %v982 = vld [vmem:[#allocation2 + $0x54] sm:$0xf]
      %v983 = vld [vmem:[#allocation2 + $0x58] sm:$0xf]
      %984 = vst.msk [vmem:[#allocation3 + $0xa8] sm:$0xf] %vm542, %v982
      %985 = vst.msk [vmem:[#allocation3 + $0xb4] sm:$0xf] %vm542, %v983
      %v986 = vld [vmem:[#allocation2 + $0x60] sm:$0xf]
      %v987 = vld [vmem:[#allocation2 + $0x64] sm:$0xf]
      %988 = vst.msk [vmem:[#allocation3 + $0xc0] sm:$0xf] %vm542, %v986
      %989 = vst.msk [vmem:[#allocation3 + $0xcc] sm:$0xf] %vm542, %v987
      %v990 = vld [vmem:[#allocation2 + $0x6c] sm:$0xf]
      %v991 = vld [vmem:[#allocation2 + $0x70] sm:$0xf]
      %992 = vst.msk [vmem:[#allocation3 + $0xd8] sm:$0xf] %vm542, %v990
      %993 = vst.msk [vmem:[#allocation3 + $0xe4] sm:$0xf] %vm542, %v991
      %v994 = vld [vmem:[#allocation2 + $0x78] sm:$0xf]
      %v995 = vld [vmem:[#allocation2 + $0x7c] sm:$0xf]
      %996 = vst.msk [vmem:[#allocation3 + $0xf0] sm:$0xf] %vm542, %v994
      %997 = vst.msk [vmem:[#allocation3 + $0xfc] sm:$0xf] %vm542, %v995
      %v998 = vld [vmem:[#allocation2 + $0x84] sm:$0xf]
      %v999 = vld [vmem:[#allocation2 + $0x88] sm:$0xf]
      %1000 = vst.msk [vmem:[#allocation3 + $0x108] sm:$0xf] %vm542, %v998
      %1001 = vst.msk [vmem:[#allocation3 + $0x114] sm:$0xf] %vm542, %v999
      %v1002 = vld [vmem:[#allocation2 + $0x90] sm:$0xf]
      %v1003 = vld [vmem:[#allocation2 + $0x94] sm:$0xf]
      %1004 = vst.msk [vmem:[#allocation3 + $0x120] sm:$0xf] %vm542, %v1002
      %1005 = vst.msk [vmem:[#allocation3 + $0x12c] sm:$0xf] %vm542, %v1003
      %v1006 = vld [vmem:[#allocation2 + $0x9c] sm:$0xf]
      %v1007 = vld [vmem:[#allocation2 + $0xa0] sm:$0xf]
      %1008 = vst.msk [vmem:[#allocation3 + $0x138] sm:$0xf] %vm542, %v1006
      %1009 = vst.msk [vmem:[#allocation3 + $0x144] sm:$0xf] %vm542, %v1007
      %v1010 = vld [vmem:[#allocation2 + $0xa8] sm:$0xf]
      %v1011 = vld [vmem:[#allocation2 + $0xac] sm:$0xf]
      %1012 = vst.msk [vmem:[#allocation3 + $0x150] sm:$0xf] %vm542, %v1010
      %1013 = vst.msk [vmem:[#allocation3 + $0x15c] sm:$0xf] %vm542, %v1011
      %v1014 = vld [vmem:[#allocation2 + $0xb4] sm:$0xf]
      %v1015 = vld [vmem:[#allocation2 + $0xb8] sm:$0xf]
      %1016 = vst.msk [vmem:[#allocation3 + $0x168] sm:$0xf] %vm542, %v1014
      %1017 = vst.msk [vmem:[#allocation3 + $0x174] sm:$0xf] %vm542, %v1015
      %v1018 = vld [vmem:[#allocation2] sm:$0xf]
      %v1019 = vld [vmem:[#allocation2 + $0x4] sm:$0xf]
      %v1020 = vld [vmem:[#allocation2 + $0x8] sm:$0x1]
      %vm1021 = vsmask.f32 3328
      %vm1022 = vsmask.f32 7440
      %vm1023 = vmor %vm1021, %vm1022
      %v1025 = vshrl.u32 %v1018, 16
      %v1027 = vrot.slane %v1025, 4
      %v1028 = vshll.u32 %v1018, 16
      %v1030 = vrot.slane %v1028, 5
      %v1031 = vor.u32 %v1027, %v1030
      %v1032 = vrot.slane %v1031, 4
      %v1034 = vshll.u32 %v1019, 16
      %v1036 = vrot.slane %v1034, 5
      %v1037 = vsel %vm1023, %v1032, %v1036
      %v1038 = vshrl.u32 %v1019, 16
      %v1040 = vrot.slane %v1038, 4
      %v1041 = vor.u32 %v1040, %v1036
      %v1042 = vrot.slane %v1041, 4
      %v1044 = vshll.u32 %v1020, 16
      %v1046 = vrot.slane %v1044, 5
      %v1047 = vsel %vm1023, %v1042, %v1046
      %1048 = vrot.lane.b32.xlu0 %v1037, 32
      %v1049 = vpop.permute.xlu0 %1048
      %1050 = vrot.lane.b32.xlu0 %v1047, 32
      %v1051 = vpop.permute.xlu0 %1050
      %vm1054 = vcmask 519424
      %1055 = vst.msk [vmem:[#allocation3] sm:$0xf] %vm1054, %v1049
      %1056 = vst.msk [vmem:[#allocation3 + $0xc] sm:$0xf] %vm1054, %v1051
      %v1057 = vld [vmem:[#allocation2 + $0xc] sm:$0xf]
      %v1058 = vld [vmem:[#allocation2 + $0x10] sm:$0xf]
      %v1059 = vld [vmem:[#allocation2 + $0x14] sm:$0x1]
      %v1061 = vshrl.u32 %v1057, 16
      %v1063 = vrot.slane %v1061, 4
      %v1064 = vshll.u32 %v1057, 16
      %v1066 = vrot.slane %v1064, 5
      %v1067 = vor.u32 %v1063, %v1066
      %v1068 = vrot.slane %v1067, 4
      %v1070 = vshll.u32 %v1058, 16
      %v1072 = vrot.slane %v1070, 5
      %v1073 = vsel %vm1023, %v1068, %v1072
      %v1074 = vshrl.u32 %v1058, 16
      %v1076 = vrot.slane %v1074, 4
      %v1077 = vor.u32 %v1076, %v1072
      %v1078 = vrot.slane %v1077, 4
      %v1080 = vshll.u32 %v1059, 16
      %v1082 = vrot.slane %v1080, 5
      %v1083 = vsel %vm1023, %v1078, %v1082
      %1084 = vrot.lane.b32.xlu0 %v1073, 32
      %v1085 = vpop.permute.xlu0 %1084
      %1086 = vrot.lane.b32.xlu0 %v1083, 32
      %v1087 = vpop.permute.xlu0 %1086
      %1090 = vst.msk [vmem:[#allocation3 + $0x18] sm:$0xf] %vm1054, %v1085
      %1091 = vst.msk [vmem:[#allocation3 + $0x24] sm:$0xf] %vm1054, %v1087
      %v1092 = vld [vmem:[#allocation2 + $0x18] sm:$0xf]
      %v1093 = vld [vmem:[#allocation2 + $0x1c] sm:$0xf]
      %v1094 = vld [vmem:[#allocation2 + $0x20] sm:$0x1]
      %v1096 = vshrl.u32 %v1092, 16
      %v1098 = vrot.slane %v1096, 4
      %v1099 = vshll.u32 %v1092, 16
      %v1101 = vrot.slane %v1099, 5
      %v1102 = vor.u32 %v1098, %v1101
      %v1103 = vrot.slane %v1102, 4
      %v1105 = vshll.u32 %v1093, 16
      %v1107 = vrot.slane %v1105, 5
      %v1108 = vsel %vm1023, %v1103, %v1107
      %v1109 = vshrl.u32 %v1093, 16
      %v1111 = vrot.slane %v1109, 4
      %v1112 = vor.u32 %v1111, %v1107
      %v1113 = vrot.slane %v1112, 4
      %v1115 = vshll.u32 %v1094, 16
      %v1117 = vrot.slane %v1115, 5
      %v1118 = vsel %vm1023, %v1113, %v1117
      %1119 = vrot.lane.b32.xlu0 %v1108, 32
      %v1120 = vpop.permute.xlu0 %1119
      %1121 = vrot.lane.b32.xlu0 %v1118, 32
      %v1122 = vpop.permute.xlu0 %1121
      %1125 = vst.msk [vmem:[#allocation3 + $0x30] sm:$0xf] %vm1054, %v1120
      %1126 = vst.msk [vmem:[#allocation3 + $0x3c] sm:$0xf] %vm1054, %v1122
      %v1127 = vld [vmem:[#allocation2 + $0x24] sm:$0xf]
      %v1128 = vld [vmem:[#allocation2 + $0x28] sm:$0xf]
      %v1129 = vld [vmem:[#allocation2 + $0x2c] sm:$0x1]
      %v1131 = vshrl.u32 %v1127, 16
      %v1133 = vrot.slane %v1131, 4
      %v1134 = vshll.u32 %v1127, 16
      %v1136 = vrot.slane %v1134, 5
      %v1137 = vor.u32 %v1133, %v1136
      %v1138 = vrot.slane %v1137, 4
      %v1140 = vshll.u32 %v1128, 16
      %v1142 = vrot.slane %v1140, 5
      %v1143 = vsel %vm1023, %v1138, %v1142
      %v1144 = vshrl.u32 %v1128, 16
      %v1146 = vrot.slane %v1144, 4
      %v1147 = vor.u32 %v1146, %v1142
      %v1148 = vrot.slane %v1147, 4
      %v1150 = vshll.u32 %v1129, 16
      %v1152 = vrot.slane %v1150, 5
      %v1153 = vsel %vm1023, %v1148, %v1152
      %1154 = vrot.lane.b32.xlu0 %v1143, 32
      %v1155 = vpop.permute.xlu0 %1154
      %1156 = vrot.lane.b32.xlu0 %v1153, 32
      %v1157 = vpop.permute.xlu0 %1156
      %1160 = vst.msk [vmem:[#allocation3 + $0x48] sm:$0xf] %vm1054, %v1155
      %1161 = vst.msk [vmem:[#allocation3 + $0x54] sm:$0xf] %vm1054, %v1157
      %v1162 = vld [vmem:[#allocation2 + $0x30] sm:$0xf]
      %v1163 = vld [vmem:[#allocation2 + $0x34] sm:$0xf]
      %v1164 = vld [vmem:[#allocation2 + $0x38] sm:$0x1]
      %v1166 = vshrl.u32 %v1162, 16
      %v1168 = vrot.slane %v1166, 4
      %v1169 = vshll.u32 %v1162, 16
      %v1171 = vrot.slane %v1169, 5
      %v1172 = vor.u32 %v1168, %v1171
      %v1173 = vrot.slane %v1172, 4
      %v1175 = vshll.u32 %v1163, 16
      %v1177 = vrot.slane %v1175, 5
      %v1178 = vsel %vm1023, %v1173, %v1177
      %v1179 = vshrl.u32 %v1163, 16
      %v1181 = vrot.slane %v1179, 4
      %v1182 = vor.u32 %v1181, %v1177
      %v1183 = vrot.slane %v1182, 4
      %v1185 = vshll.u32 %v1164, 16
      %v1187 = vrot.slane %v1185, 5
      %v1188 = vsel %vm1023, %v1183, %v1187
      %1189 = vrot.lane.b32.xlu0 %v1178, 32
      %v1190 = vpop.permute.xlu0 %1189
      %1191 = vrot.lane.b32.xlu0 %v1188, 32
      %v1192 = vpop.permute.xlu0 %1191
      %1195 = vst.msk [vmem:[#allocation3 + $0x60] sm:$0xf] %vm1054, %v1190
      %1196 = vst.msk [vmem:[#allocation3 + $0x6c] sm:$0xf] %vm1054, %v1192
      %v1197 = vld [vmem:[#allocation2 + $0x3c] sm:$0xf]
      %v1198 = vld [vmem:[#allocation2 + $0x40] sm:$0xf]
      %v1199 = vld [vmem:[#allocation2 + $0x44] sm:$0x1]
      %v1201 = vshrl.u32 %v1197, 16
      %v1203 = vrot.slane %v1201, 4
      %v1204 = vshll.u32 %v1197, 16
      %v1206 = vrot.slane %v1204, 5
      %v1207 = vor.u32 %v1203, %v1206
      %v1208 = vrot.slane %v1207, 4
      %v1210 = vshll.u32 %v1198, 16
      %v1212 = vrot.slane %v1210, 5
      %v1213 = vsel %vm1023, %v1208, %v1212
      %v1214 = vshrl.u32 %v1198, 16
      %v1216 = vrot.slane %v1214, 4
      %v1217 = vor.u32 %v1216, %v1212
      %v1218 = vrot.slane %v1217, 4
      %v1220 = vshll.u32 %v1199, 16
      %v1222 = vrot.slane %v1220, 5
      %v1223 = vsel %vm1023, %v1218, %v1222
      %1224 = vrot.lane.b32.xlu0 %v1213, 32
      %v1225 = vpop.permute.xlu0 %1224
      %1226 = vrot.lane.b32.xlu0 %v1223, 32
      %v1227 = vpop.permute.xlu0 %1226
      %1230 = vst.msk [vmem:[#allocation3 + $0x78] sm:$0xf] %vm1054, %v1225
      %1231 = vst.msk [vmem:[#allocation3 + $0x84] sm:$0xf] %vm1054, %v1227
      %v1232 = vld [vmem:[#allocation2 + $0x48] sm:$0xf]
      %v1233 = vld [vmem:[#allocation2 + $0x4c] sm:$0xf]
      %v1234 = vld [vmem:[#allocation2 + $0x50] sm:$0x1]
      %v1236 = vshrl.u32 %v1232, 16
      %v1238 = vrot.slane %v1236, 4
      %v1239 = vshll.u32 %v1232, 16
      %v1241 = vrot.slane %v1239, 5
      %v1242 = vor.u32 %v1238, %v1241
      %v1243 = vrot.slane %v1242, 4
      %v1245 = vshll.u32 %v1233, 16
      %v1247 = vrot.slane %v1245, 5
      %v1248 = vsel %vm1023, %v1243, %v1247
      %v1249 = vshrl.u32 %v1233, 16
      %v1251 = vrot.slane %v1249, 4
      %v1252 = vor.u32 %v1251, %v1247
      %v1253 = vrot.slane %v1252, 4
      %v1255 = vshll.u32 %v1234, 16
      %v1257 = vrot.slane %v1255, 5
      %v1258 = vsel %vm1023, %v1253, %v1257
      %1259 = vrot.lane.b32.xlu0 %v1248, 32
      %v1260 = vpop.permute.xlu0 %1259
      %1261 = vrot.lane.b32.xlu0 %v1258, 32
      %v1262 = vpop.permute.xlu0 %1261
      %1265 = vst.msk [vmem:[#allocation3 + $0x90] sm:$0xf] %vm1054, %v1260
      %1266 = vst.msk [vmem:[#allocation3 + $0x9c] sm:$0xf] %vm1054, %v1262
      %v1267 = vld [vmem:[#allocation2 + $0x54] sm:$0xf]
      %v1268 = vld [vmem:[#allocation2 + $0x58] sm:$0xf]
      %v1269 = vld [vmem:[#allocation2 + $0x5c] sm:$0x1]
      %v1271 = vshrl.u32 %v1267, 16
      %v1273 = vrot.slane %v1271, 4
      %v1274 = vshll.u32 %v1267, 16
      %v1276 = vrot.slane %v1274, 5
      %v1277 = vor.u32 %v1273, %v1276
      %v1278 = vrot.slane %v1277, 4
      %v1280 = vshll.u32 %v1268, 16
      %v1282 = vrot.slane %v1280, 5
      %v1283 = vsel %vm1023, %v1278, %v1282
      %v1284 = vshrl.u32 %v1268, 16
      %v1286 = vrot.slane %v1284, 4
      %v1287 = vor.u32 %v1286, %v1282
      %v1288 = vrot.slane %v1287, 4
      %v1290 = vshll.u32 %v1269, 16
      %v1292 = vrot.slane %v1290, 5
      %v1293 = vsel %vm1023, %v1288, %v1292
      %1294 = vrot.lane.b32.xlu0 %v1283, 32
      %v1295 = vpop.permute.xlu0 %1294
      %1296 = vrot.lane.b32.xlu0 %v1293, 32
      %v1297 = vpop.permute.xlu0 %1296
      %1300 = vst.msk [vmem:[#allocation3 + $0xa8] sm:$0xf] %vm1054, %v1295
      %1301 = vst.msk [vmem:[#allocation3 + $0xb4] sm:$0xf] %vm1054, %v1297
      %v1302 = vld [vmem:[#allocation2 + $0x60] sm:$0xf]
      %v1303 = vld [vmem:[#allocation2 + $0x64] sm:$0xf]
      %v1304 = vld [vmem:[#allocation2 + $0x68] sm:$0x1]
      %v1306 = vshrl.u32 %v1302, 16
      %v1308 = vrot.slane %v1306, 4
      %v1309 = vshll.u32 %v1302, 16
      %v1311 = vrot.slane %v1309, 5
      %v1312 = vor.u32 %v1308, %v1311
      %v1313 = vrot.slane %v1312, 4
      %v1315 = vshll.u32 %v1303, 16
      %v1317 = vrot.slane %v1315, 5
      %v1318 = vsel %vm1023, %v1313, %v1317
      %v1319 = vshrl.u32 %v1303, 16
      %v1321 = vrot.slane %v1319, 4
      %v1322 = vor.u32 %v1321, %v1317
      %v1323 = vrot.slane %v1322, 4
      %v1325 = vshll.u32 %v1304, 16
      %v1327 = vrot.slane %v1325, 5
      %v1328 = vsel %vm1023, %v1323, %v1327
      %1329 = vrot.lane.b32.xlu0 %v1318, 32
      %v1330 = vpop.permute.xlu0 %1329
      %1331 = vrot.lane.b32.xlu0 %v1328, 32
      %v1332 = vpop.permute.xlu0 %1331
      %1335 = vst.msk [vmem:[#allocation3 + $0xc0] sm:$0xf] %vm1054, %v1330
      %1336 = vst.msk [vmem:[#allocation3 + $0xcc] sm:$0xf] %vm1054, %v1332
      %v1337 = vld [vmem:[#allocation2 + $0x6c] sm:$0xf]
      %v1338 = vld [vmem:[#allocation2 + $0x70] sm:$0xf]
      %v1339 = vld [vmem:[#allocation2 + $0x74] sm:$0x1]
      %v1341 = vshrl.u32 %v1337, 16
      %v1343 = vrot.slane %v1341, 4
      %v1344 = vshll.u32 %v1337, 16
      %v1346 = vrot.slane %v1344, 5
      %v1347 = vor.u32 %v1343, %v1346
      %v1348 = vrot.slane %v1347, 4
      %v1350 = vshll.u32 %v1338, 16
      %v1352 = vrot.slane %v1350, 5
      %v1353 = vsel %vm1023, %v1348, %v1352
      %v1354 = vshrl.u32 %v1338, 16
      %v1356 = vrot.slane %v1354, 4
      %v1357 = vor.u32 %v1356, %v1352
      %v1358 = vrot.slane %v1357, 4
      %v1360 = vshll.u32 %v1339, 16
      %v1362 = vrot.slane %v1360, 5
      %v1363 = vsel %vm1023, %v1358, %v1362
      %1364 = vrot.lane.b32.xlu0 %v1353, 32
      %v1365 = vpop.permute.xlu0 %1364
      %1366 = vrot.lane.b32.xlu0 %v1363, 32
      %v1367 = vpop.permute.xlu0 %1366
      %1370 = vst.msk [vmem:[#allocation3 + $0xd8] sm:$0xf] %vm1054, %v1365
      %1371 = vst.msk [vmem:[#allocation3 + $0xe4] sm:$0xf] %vm1054, %v1367
      %v1372 = vld [vmem:[#allocation2 + $0x78] sm:$0xf]
      %v1373 = vld [vmem:[#allocation2 + $0x7c] sm:$0xf]
      %v1374 = vld [vmem:[#allocation2 + $0x80] sm:$0x1]
      %v1376 = vshrl.u32 %v1372, 16
      %v1378 = vrot.slane %v1376, 4
      %v1379 = vshll.u32 %v1372, 16
      %v1381 = vrot.slane %v1379, 5
      %v1382 = vor.u32 %v1378, %v1381
      %v1383 = vrot.slane %v1382, 4
      %v1385 = vshll.u32 %v1373, 16
      %v1387 = vrot.slane %v1385, 5
      %v1388 = vsel %vm1023, %v1383, %v1387
      %v1389 = vshrl.u32 %v1373, 16
      %v1391 = vrot.slane %v1389, 4
      %v1392 = vor.u32 %v1391, %v1387
      %v1393 = vrot.slane %v1392, 4
      %v1395 = vshll.u32 %v1374, 16
      %v1397 = vrot.slane %v1395, 5
      %v1398 = vsel %vm1023, %v1393, %v1397
      %1399 = vrot.lane.b32.xlu0 %v1388, 32
      %v1400 = vpop.permute.xlu0 %1399
      %1401 = vrot.lane.b32.xlu0 %v1398, 32
      %v1402 = vpop.permute.xlu0 %1401
      %1405 = vst.msk [vmem:[#allocation3 + $0xf0] sm:$0xf] %vm1054, %v1400
      %1406 = vst.msk [vmem:[#allocation3 + $0xfc] sm:$0xf] %vm1054, %v1402
      %v1407 = vld [vmem:[#allocation2 + $0x84] sm:$0xf]
      %v1408 = vld [vmem:[#allocation2 + $0x88] sm:$0xf]
      %v1409 = vld [vmem:[#allocation2 + $0x8c] sm:$0x1]
      %v1411 = vshrl.u32 %v1407, 16
      %v1413 = vrot.slane %v1411, 4
      %v1414 = vshll.u32 %v1407, 16
      %v1416 = vrot.slane %v1414, 5
      %v1417 = vor.u32 %v1413, %v1416
      %v1418 = vrot.slane %v1417, 4
      %v1420 = vshll.u32 %v1408, 16
      %v1422 = vrot.slane %v1420, 5
      %v1423 = vsel %vm1023, %v1418, %v1422
      %v1424 = vshrl.u32 %v1408, 16
      %v1426 = vrot.slane %v1424, 4
      %v1427 = vor.u32 %v1426, %v1422
      %v1428 = vrot.slane %v1427, 4
      %v1430 = vshll.u32 %v1409, 16
      %v1432 = vrot.slane %v1430, 5
      %v1433 = vsel %vm1023, %v1428, %v1432
      %1434 = vrot.lane.b32.xlu0 %v1423, 32
      %v1435 = vpop.permute.xlu0 %1434
      %1436 = vrot.lane.b32.xlu0 %v1433, 32
      %v1437 = vpop.permute.xlu0 %1436
      %1440 = vst.msk [vmem:[#allocation3 + $0x108] sm:$0xf] %vm1054, %v1435
      %1441 = vst.msk [vmem:[#allocation3 + $0x114] sm:$0xf] %vm1054, %v1437
      %v1442 = vld [vmem:[#allocation2 + $0x90] sm:$0xf]
      %v1443 = vld [vmem:[#allocation2 + $0x94] sm:$0xf]
      %v1444 = vld [vmem:[#allocation2 + $0x98] sm:$0x1]
      %v1446 = vshrl.u32 %v1442, 16
      %v1448 = vrot.slane %v1446, 4
      %v1449 = vshll.u32 %v1442, 16
      %v1451 = vrot.slane %v1449, 5
      %v1452 = vor.u32 %v1448, %v1451
      %v1453 = vrot.slane %v1452, 4
      %v1455 = vshll.u32 %v1443, 16
      %v1457 = vrot.slane %v1455, 5
      %v1458 = vsel %vm1023, %v1453, %v1457
      %v1459 = vshrl.u32 %v1443, 16
      %v1461 = vrot.slane %v1459, 4
      %v1462 = vor.u32 %v1461, %v1457
      %v1463 = vrot.slane %v1462, 4
      %v1465 = vshll.u32 %v1444, 16
      %v1467 = vrot.slane %v1465, 5
      %v1468 = vsel %vm1023, %v1463, %v1467
      %1469 = vrot.lane.b32.xlu0 %v1458, 32
      %v1470 = vpop.permute.xlu0 %1469
      %1471 = vrot.lane.b32.xlu0 %v1468, 32
      %v1472 = vpop.permute.xlu0 %1471
      %1475 = vst.msk [vmem:[#allocation3 + $0x120] sm:$0xf] %vm1054, %v1470
      %1476 = vst.msk [vmem:[#allocation3 + $0x12c] sm:$0xf] %vm1054, %v1472
      %v1477 = vld [vmem:[#allocation2 + $0x9c] sm:$0xf]
      %v1478 = vld [vmem:[#allocation2 + $0xa0] sm:$0xf]
      %v1479 = vld [vmem:[#allocation2 + $0xa4] sm:$0x1]
      %v1481 = vshrl.u32 %v1477, 16
      %v1483 = vrot.slane %v1481, 4
      %v1484 = vshll.u32 %v1477, 16
      %v1486 = vrot.slane %v1484, 5
      %v1487 = vor.u32 %v1483, %v1486
      %v1488 = vrot.slane %v1487, 4
      %v1490 = vshll.u32 %v1478, 16
      %v1492 = vrot.slane %v1490, 5
      %v1493 = vsel %vm1023, %v1488, %v1492
      %v1494 = vshrl.u32 %v1478, 16
      %v1496 = vrot.slane %v1494, 4
      %v1497 = vor.u32 %v1496, %v1492
      %v1498 = vrot.slane %v1497, 4
      %v1500 = vshll.u32 %v1479, 16
      %v1502 = vrot.slane %v1500, 5
      %v1503 = vsel %vm1023, %v1498, %v1502
      %1504 = vrot.lane.b32.xlu0 %v1493, 32
      %v1505 = vpop.permute.xlu0 %1504
      %1506 = vrot.lane.b32.xlu0 %v1503, 32
      %v1507 = vpop.permute.xlu0 %1506
      %1510 = vst.msk [vmem:[#allocation3 + $0x138] sm:$0xf] %vm1054, %v1505
      %1511 = vst.msk [vmem:[#allocation3 + $0x144] sm:$0xf] %vm1054, %v1507
      %v1512 = vld [vmem:[#allocation2 + $0xa8] sm:$0xf]
      %v1513 = vld [vmem:[#allocation2 + $0xac] sm:$0xf]
      %v1514 = vld [vmem:[#allocation2 + $0xb0] sm:$0x1]
      %v1516 = vshrl.u32 %v1512, 16
      %v1518 = vrot.slane %v1516, 4
      %v1519 = vshll.u32 %v1512, 16
      %v1521 = vrot.slane %v1519, 5
      %v1522 = vor.u32 %v1518, %v1521
      %v1523 = vrot.slane %v1522, 4
      %v1525 = vshll.u32 %v1513, 16
      %v1527 = vrot.slane %v1525, 5
      %v1528 = vsel %vm1023, %v1523, %v1527
      %v1529 = vshrl.u32 %v1513, 16
      %v1531 = vrot.slane %v1529, 4
      %v1532 = vor.u32 %v1531, %v1527
      %v1533 = vrot.slane %v1532, 4
      %v1535 = vshll.u32 %v1514, 16
      %v1537 = vrot.slane %v1535, 5
      %v1538 = vsel %vm1023, %v1533, %v1537
      %1539 = vrot.lane.b32.xlu0 %v1528, 32
      %v1540 = vpop.permute.xlu0 %1539
      %1541 = vrot.lane.b32.xlu0 %v1538, 32
      %v1542 = vpop.permute.xlu0 %1541
      %1545 = vst.msk [vmem:[#allocation3 + $0x150] sm:$0xf] %vm1054, %v1540
      %1546 = vst.msk [vmem:[#allocation3 + $0x15c] sm:$0xf] %vm1054, %v1542
      %v1547 = vld [vmem:[#allocation2 + $0xb4] sm:$0xf]
      %v1548 = vld [vmem:[#allocation2 + $0xb8] sm:$0xf]
      %v1549 = vld [vmem:[#allocation2 + $0xbc] sm:$0x1]
      %v1551 = vshrl.u32 %v1547, 16
      %v1553 = vrot.slane %v1551, 4
      %v1554 = vshll.u32 %v1547, 16
      %v1556 = vrot.slane %v1554, 5
      %v1557 = vor.u32 %v1553, %v1556
      %v1558 = vrot.slane %v1557, 4
      %v1560 = vshll.u32 %v1548, 16
      %v1562 = vrot.slane %v1560, 5
      %v1563 = vsel %vm1023, %v1558, %v1562
      %v1564 = vshrl.u32 %v1548, 16
      %v1566 = vrot.slane %v1564, 4
      %v1567 = vor.u32 %v1566, %v1562
      %v1568 = vrot.slane %v1567, 4
      %v1570 = vshll.u32 %v1549, 16
      %v1572 = vrot.slane %v1570, 5
      %v1573 = vsel %vm1023, %v1568, %v1572
      %1574 = vrot.lane.b32.xlu0 %v1563, 32
      %v1575 = vpop.permute.xlu0 %1574
      %1576 = vrot.lane.b32.xlu0 %v1573, 32
      %v1577 = vpop.permute.xlu0 %1576
      %1580 = vst.msk [vmem:[#allocation3 + $0x168] sm:$0xf] %vm1054, %v1575
      %1581 = vst.msk [vmem:[#allocation3 + $0x174] sm:$0xf] %vm1054, %v1577
      %v1582 = vld [vmem:[#allocation2] sm:$0xe]
      %v1583 = vld [vmem:[#allocation2 + $0x4] sm:$0xf]
      %v1584 = vld [vmem:[#allocation2 + $0x8] sm:$0x1]
      %vm1588 = vcmask 1042432
      %vm1589 = vcmask 1046532
      %vm1590 = vmor %vm1588, %vm1589
      %v1591 = vrot.slane %v1582, 5
      %v1592 = vrot.slane %v1591, 4
      %v1593 = vrot.slane %v1583, 5
      %v1594 = vsel %vm1590, %v1592, %v1593
      %v1595 = vrot.slane %v1593, 4
      %v1596 = vrot.slane %v1584, 5
      %v1597 = vsel %vm1590, %v1595, %v1596
      %1598 = vrot.lane.b32.xlu0 %v1594, 64
      %v1599 = vpop.permute.xlu0 %1598
      %1600 = vrot.lane.b32.xlu0 %v1597, 64
      %v1601 = vpop.permute.xlu0 %1600
      %vm1604 = vcmask 781824
      %1605 = vst.msk [vmem:[#allocation3] sm:$0xf] %vm1604, %v1599
      %1606 = vst.msk [vmem:[#allocation3 + $0xc] sm:$0xf] %vm1604, %v1601
      %v1607 = vld [vmem:[#allocation2 + $0xc] sm:$0xe]
      %v1608 = vld [vmem:[#allocation2 + $0x10] sm:$0xf]
      %v1609 = vld [vmem:[#allocation2 + $0x14] sm:$0x1]
      %v1613 = vrot.slane %v1607, 5
      %v1614 = vrot.slane %v1613, 4
      %v1615 = vrot.slane %v1608, 5
      %v1616 = vsel %vm1590, %v1614, %v1615
      %v1617 = vrot.slane %v1615, 4
      %v1618 = vrot.slane %v1609, 5
      %v1619 = vsel %vm1590, %v1617, %v1618
      %1620 = vrot.lane.b32.xlu0 %v1616, 64
      %v1621 = vpop.permute.xlu0 %1620
      %1622 = vrot.lane.b32.xlu0 %v1619, 64
      %v1623 = vpop.permute.xlu0 %1622
      %1626 = vst.msk [vmem:[#allocation3 + $0x18] sm:$0xf] %vm1604, %v1621
      %1627 = vst.msk [vmem:[#allocation3 + $0x24] sm:$0xf] %vm1604, %v1623
      %v1628 = vld [vmem:[#allocation2 + $0x18] sm:$0xe]
      %v1629 = vld [vmem:[#allocation2 + $0x1c] sm:$0xf]
      %v1630 = vld [vmem:[#allocation2 + $0x20] sm:$0x1]
      %v1634 = vrot.slane %v1628, 5
      %v1635 = vrot.slane %v1634, 4
      %v1636 = vrot.slane %v1629, 5
      %v1637 = vsel %vm1590, %v1635, %v1636
      %v1638 = vrot.slane %v1636, 4
      %v1639 = vrot.slane %v1630, 5
      %v1640 = vsel %vm1590, %v1638, %v1639
      %1641 = vrot.lane.b32.xlu0 %v1637, 64
      %v1642 = vpop.permute.xlu0 %1641
      %1643 = vrot.lane.b32.xlu0 %v1640, 64
      %v1644 = vpop.permute.xlu0 %1643
      %1647 = vst.msk [vmem:[#allocation3 + $0x30] sm:$0xf] %vm1604, %v1642
      %1648 = vst.msk [vmem:[#allocation3 + $0x3c] sm:$0xf] %vm1604, %v1644
      %v1649 = vld [vmem:[#allocation2 + $0x24] sm:$0xe]
      %v1650 = vld [vmem:[#allocation2 + $0x28] sm:$0xf]
      %v1651 = vld [vmem:[#allocation2 + $0x2c] sm:$0x1]
      %v1655 = vrot.slane %v1649, 5
      %v1656 = vrot.slane %v1655, 4
      %v1657 = vrot.slane %v1650, 5
      %v1658 = vsel %vm1590, %v1656, %v1657
      %v1659 = vrot.slane %v1657, 4
      %v1660 = vrot.slane %v1651, 5
      %v1661 = vsel %vm1590, %v1659, %v1660
      %1662 = vrot.lane.b32.xlu0 %v1658, 64
      %v1663 = vpop.permute.xlu0 %1662
      %1664 = vrot.lane.b32.xlu0 %v1661, 64
      %v1665 = vpop.permute.xlu0 %1664
      %1668 = vst.msk [vmem:[#allocation3 + $0x48] sm:$0xf] %vm1604, %v1663
      %1669 = vst.msk [vmem:[#allocation3 + $0x54] sm:$0xf] %vm1604, %v1665
      %v1670 = vld [vmem:[#allocation2 + $0x30] sm:$0xe]
      %v1671 = vld [vmem:[#allocation2 + $0x34] sm:$0xf]
      %v1672 = vld [vmem:[#allocation2 + $0x38] sm:$0x1]
      %v1676 = vrot.slane %v1670, 5
      %v1677 = vrot.slane %v1676, 4
      %v1678 = vrot.slane %v1671, 5
      %v1679 = vsel %vm1590, %v1677, %v1678
      %v1680 = vrot.slane %v1678, 4
      %v1681 = vrot.slane %v1672, 5
      %v1682 = vsel %vm1590, %v1680, %v1681
      %1683 = vrot.lane.b32.xlu0 %v1679, 64
      %v1684 = vpop.permute.xlu0 %1683
      %1685 = vrot.lane.b32.xlu0 %v1682, 64
      %v1686 = vpop.permute.xlu0 %1685
      %1689 = vst.msk [vmem:[#allocation3 + $0x60] sm:$0xf] %vm1604, %v1684
      %1690 = vst.msk [vmem:[#allocation3 + $0x6c] sm:$0xf] %vm1604, %v1686
      %v1691 = vld [vmem:[#allocation2 + $0x3c] sm:$0xe]
      %v1692 = vld [vmem:[#allocation2 + $0x40] sm:$0xf]
      %v1693 = vld [vmem:[#allocation2 + $0x44] sm:$0x1]
      %v1697 = vrot.slane %v1691, 5
      %v1698 = vrot.slane %v1697, 4
      %v1699 = vrot.slane %v1692, 5
      %v1700 = vsel %vm1590, %v1698, %v1699
      %v1701 = vrot.slane %v1699, 4
      %v1702 = vrot.slane %v1693, 5
      %v1703 = vsel %vm1590, %v1701, %v1702
      %1704 = vrot.lane.b32.xlu0 %v1700, 64
      %v1705 = vpop.permute.xlu0 %1704
      %1706 = vrot.lane.b32.xlu0 %v1703, 64
      %v1707 = vpop.permute.xlu0 %1706
      %1710 = vst.msk [vmem:[#allocation3 + $0x78] sm:$0xf] %vm1604, %v1705
      %1711 = vst.msk [vmem:[#allocation3 + $0x84] sm:$0xf] %vm1604, %v1707
      %v1712 = vld [vmem:[#allocation2 + $0x48] sm:$0xe]
      %v1713 = vld [vmem:[#allocation2 + $0x4c] sm:$0xf]
      %v1714 = vld [vmem:[#allocation2 + $0x50] sm:$0x1]
      %v1718 = vrot.slane %v1712, 5
      %v1719 = vrot.slane %v1718, 4
      %v1720 = vrot.slane %v1713, 5
      %v1721 = vsel %vm1590, %v1719, %v1720
      %v1722 = vrot.slane %v1720, 4
      %v1723 = vrot.slane %v1714, 5
      %v1724 = vsel %vm1590, %v1722, %v1723
      %1725 = vrot.lane.b32.xlu0 %v1721, 64
      %v1726 = vpop.permute.xlu0 %1725
      %1727 = vrot.lane.b32.xlu0 %v1724, 64
      %v1728 = vpop.permute.xlu0 %1727
      %1731 = vst.msk [vmem:[#allocation3 + $0x90] sm:$0xf] %vm1604, %v1726
      %1732 = vst.msk [vmem:[#allocation3 + $0x9c] sm:$0xf] %vm1604, %v1728
      %v1733 = vld [vmem:[#allocation2 + $0x54] sm:$0xe]
      %v1734 = vld [vmem:[#allocation2 + $0x58] sm:$0xf]
      %v1735 = vld [vmem:[#allocation2 + $0x5c] sm:$0x1]
      %v1739 = vrot.slane %v1733, 5
      %v1740 = vrot.slane %v1739, 4
      %v1741 = vrot.slane %v1734, 5
      %v1742 = vsel %vm1590, %v1740, %v1741
      %v1743 = vrot.slane %v1741, 4
      %v1744 = vrot.slane %v1735, 5
      %v1745 = vsel %vm1590, %v1743, %v1744
      %1746 = vrot.lane.b32.xlu0 %v1742, 64
      %v1747 = vpop.permute.xlu0 %1746
      %1748 = vrot.lane.b32.xlu0 %v1745, 64
      %v1749 = vpop.permute.xlu0 %1748
      %1752 = vst.msk [vmem:[#allocation3 + $0xa8] sm:$0xf] %vm1604, %v1747
      %1753 = vst.msk [vmem:[#allocation3 + $0xb4] sm:$0xf] %vm1604, %v1749
      %v1754 = vld [vmem:[#allocation2 + $0x60] sm:$0xe]
      %v1755 = vld [vmem:[#allocation2 + $0x64] sm:$0xf]
      %v1756 = vld [vmem:[#allocation2 + $0x68] sm:$0x1]
      %v1760 = vrot.slane %v1754, 5
      %v1761 = vrot.slane %v1760, 4
      %v1762 = vrot.slane %v1755, 5
      %v1763 = vsel %vm1590, %v1761, %v1762
      %v1764 = vrot.slane %v1762, 4
      %v1765 = vrot.slane %v1756, 5
      %v1766 = vsel %vm1590, %v1764, %v1765
      %1767 = vrot.lane.b32.xlu0 %v1763, 64
      %v1768 = vpop.permute.xlu0 %1767
      %1769 = vrot.lane.b32.xlu0 %v1766, 64
      %v1770 = vpop.permute.xlu0 %1769
      %1773 = vst.msk [vmem:[#allocation3 + $0xc0] sm:$0xf] %vm1604, %v1768
      %1774 = vst.msk [vmem:[#allocation3 + $0xcc] sm:$0xf] %vm1604, %v1770
      %v1775 = vld [vmem:[#allocation2 + $0x6c] sm:$0xe]
      %v1776 = vld [vmem:[#allocation2 + $0x70] sm:$0xf]
      %v1777 = vld [vmem:[#allocation2 + $0x74] sm:$0x1]
      %v1781 = vrot.slane %v1775, 5
      %v1782 = vrot.slane %v1781, 4
      %v1783 = vrot.slane %v1776, 5
      %v1784 = vsel %vm1590, %v1782, %v1783
      %v1785 = vrot.slane %v1783, 4
      %v1786 = vrot.slane %v1777, 5
      %v1787 = vsel %vm1590, %v1785, %v1786
      %1788 = vrot.lane.b32.xlu0 %v1784, 64
      %v1789 = vpop.permute.xlu0 %1788
      %1790 = vrot.lane.b32.xlu0 %v1787, 64
      %v1791 = vpop.permute.xlu0 %1790
      %1794 = vst.msk [vmem:[#allocation3 + $0xd8] sm:$0xf] %vm1604, %v1789
      %1795 = vst.msk [vmem:[#allocation3 + $0xe4] sm:$0xf] %vm1604, %v1791
      %v1796 = vld [vmem:[#allocation2 + $0x78] sm:$0xe]
      %v1797 = vld [vmem:[#allocation2 + $0x7c] sm:$0xf]
      %v1798 = vld [vmem:[#allocation2 + $0x80] sm:$0x1]
      %v1802 = vrot.slane %v1796, 5
      %v1803 = vrot.slane %v1802, 4
      %v1804 = vrot.slane %v1797, 5
      %v1805 = vsel %vm1590, %v1803, %v1804
      %v1806 = vrot.slane %v1804, 4
      %v1807 = vrot.slane %v1798, 5
      %v1808 = vsel %vm1590, %v1806, %v1807
      %1809 = vrot.lane.b32.xlu0 %v1805, 64
      %v1810 = vpop.permute.xlu0 %1809
      %1811 = vrot.lane.b32.xlu0 %v1808, 64
      %v1812 = vpop.permute.xlu0 %1811
      %1815 = vst.msk [vmem:[#allocation3 + $0xf0] sm:$0xf] %vm1604, %v1810
      %1816 = vst.msk [vmem:[#allocation3 + $0xfc] sm:$0xf] %vm1604, %v1812
      %v1817 = vld [vmem:[#allocation2 + $0x84] sm:$0xe]
      %v1818 = vld [vmem:[#allocation2 + $0x88] sm:$0xf]
      %v1819 = vld [vmem:[#allocation2 + $0x8c] sm:$0x1]
      %v1823 = vrot.slane %v1817, 5
      %v1824 = vrot.slane %v1823, 4
      %v1825 = vrot.slane %v1818, 5
      %v1826 = vsel %vm1590, %v1824, %v1825
      %v1827 = vrot.slane %v1825, 4
      %v1828 = vrot.slane %v1819, 5
      %v1829 = vsel %vm1590, %v1827, %v1828
      %1830 = vrot.lane.b32.xlu0 %v1826, 64
      %v1831 = vpop.permute.xlu0 %1830
      %1832 = vrot.lane.b32.xlu0 %v1829, 64
      %v1833 = vpop.permute.xlu0 %1832
      %1836 = vst.msk [vmem:[#allocation3 + $0x108] sm:$0xf] %vm1604, %v1831
      %1837 = vst.msk [vmem:[#allocation3 + $0x114] sm:$0xf] %vm1604, %v1833
      %v1838 = vld [vmem:[#allocation2 + $0x90] sm:$0xe]
      %v1839 = vld [vmem:[#allocation2 + $0x94] sm:$0xf]
      %v1840 = vld [vmem:[#allocation2 + $0x98] sm:$0x1]
      %v1844 = vrot.slane %v1838, 5
      %v1845 = vrot.slane %v1844, 4
      %v1846 = vrot.slane %v1839, 5
      %v1847 = vsel %vm1590, %v1845, %v1846
      %v1848 = vrot.slane %v1846, 4
      %v1849 = vrot.slane %v1840, 5
      %v1850 = vsel %vm1590, %v1848, %v1849
      %1851 = vrot.lane.b32.xlu0 %v1847, 64
      %v1852 = vpop.permute.xlu0 %1851
      %1853 = vrot.lane.b32.xlu0 %v1850, 64
      %v1854 = vpop.permute.xlu0 %1853
      %1857 = vst.msk [vmem:[#allocation3 + $0x120] sm:$0xf] %vm1604, %v1852
      %1858 = vst.msk [vmem:[#allocation3 + $0x12c] sm:$0xf] %vm1604, %v1854
      %v1859 = vld [vmem:[#allocation2 + $0x9c] sm:$0xe]
      %v1860 = vld [vmem:[#allocation2 + $0xa0] sm:$0xf]
      %v1861 = vld [vmem:[#allocation2 + $0xa4] sm:$0x1]
      %v1865 = vrot.slane %v1859, 5
      %v1866 = vrot.slane %v1865, 4
      %v1867 = vrot.slane %v1860, 5
      %v1868 = vsel %vm1590, %v1866, %v1867
      %v1869 = vrot.slane %v1867, 4
      %v1870 = vrot.slane %v1861, 5
      %v1871 = vsel %vm1590, %v1869, %v1870
      %1872 = vrot.lane.b32.xlu0 %v1868, 64
      %v1873 = vpop.permute.xlu0 %1872
      %1874 = vrot.lane.b32.xlu0 %v1871, 64
      %v1875 = vpop.permute.xlu0 %1874
      %1878 = vst.msk [vmem:[#allocation3 + $0x138] sm:$0xf] %vm1604, %v1873
      %1879 = vst.msk [vmem:[#allocation3 + $0x144] sm:$0xf] %vm1604, %v1875
      %v1880 = vld [vmem:[#allocation2 + $0xa8] sm:$0xe]
      %v1881 = vld [vmem:[#allocation2 + $0xac] sm:$0xf]
      %v1882 = vld [vmem:[#allocation2 + $0xb0] sm:$0x1]
      %v1886 = vrot.slane %v1880, 5
      %v1887 = vrot.slane %v1886, 4
      %v1888 = vrot.slane %v1881, 5
      %v1889 = vsel %vm1590, %v1887, %v1888
      %v1890 = vrot.slane %v1888, 4
      %v1891 = vrot.slane %v1882, 5
      %v1892 = vsel %vm1590, %v1890, %v1891
      %1893 = vrot.lane.b32.xlu0 %v1889, 64
      %v1894 = vpop.permute.xlu0 %1893
      %1895 = vrot.lane.b32.xlu0 %v1892, 64
      %v1896 = vpop.permute.xlu0 %1895
      %1899 = vst.msk [vmem:[#allocation3 + $0x150] sm:$0xf] %vm1604, %v1894
      %1900 = vst.msk [vmem:[#allocation3 + $0x15c] sm:$0xf] %vm1604, %v1896
      %v1901 = vld [vmem:[#allocation2 + $0xb4] sm:$0xe]
      %v1902 = vld [vmem:[#allocation2 + $0xb8] sm:$0xf]
      %v1903 = vld [vmem:[#allocation2 + $0xbc] sm:$0x1]
      %v1907 = vrot.slane %v1901, 5
      %v1908 = vrot.slane %v1907, 4
      %v1909 = vrot.slane %v1902, 5
      %v1910 = vsel %vm1590, %v1908, %v1909
      %v1911 = vrot.slane %v1909, 4
      %v1912 = vrot.slane %v1903, 5
      %v1913 = vsel %vm1590, %v1911, %v1912
      %1914 = vrot.lane.b32.xlu0 %v1910, 64
      %v1915 = vpop.permute.xlu0 %1914
      %1916 = vrot.lane.b32.xlu0 %v1913, 64
      %v1917 = vpop.permute.xlu0 %1916
      %1920 = vst.msk [vmem:[#allocation3 + $0x168] sm:$0xf] %vm1604, %v1915
      %1921 = vst.msk [vmem:[#allocation3 + $0x174] sm:$0xf] %vm1604, %v1917
      %v1922 = vld [vmem:[#allocation2 + $0xc] sm:$0xf]
      %v1923 = vld [vmem:[#allocation2 + $0x10] sm:$0xf]
      %1926 = vrot.lane.b32.xlu0 %v1922, 96
      %v1927 = vpop.permute.xlu0 %1926
      %1928 = vrot.lane.b32.xlu0 %v1923, 96
      %v1929 = vpop.permute.xlu0 %1928
      %vm1932 = vcmask 1044224
      %1933 = vst.msk [vmem:[#allocation3] sm:$0xf] %vm1932, %v1927
      %1934 = vst.msk [vmem:[#allocation3 + $0xc] sm:$0xf] %vm1932, %v1929
      %v1935 = vld [vmem:[#allocation2 + $0x18] sm:$0xf]
      %v1936 = vld [vmem:[#allocation2 + $0x1c] sm:$0xf]
      %1939 = vrot.lane.b32.xlu0 %v1935, 96
      %v1940 = vpop.permute.xlu0 %1939
      %1941 = vrot.lane.b32.xlu0 %v1936, 96
      %v1942 = vpop.permute.xlu0 %1941
      %1945 = vst.msk [vmem:[#allocation3 + $0x18] sm:$0xf] %vm1932, %v1940
      %1946 = vst.msk [vmem:[#allocation3 + $0x24] sm:$0xf] %vm1932, %v1942
      %v1947 = vld [vmem:[#allocation2 + $0x24] sm:$0xf]
      %v1948 = vld [vmem:[#allocation2 + $0x28] sm:$0xf]
      %1951 = vrot.lane.b32.xlu0 %v1947, 96
      %v1952 = vpop.permute.xlu0 %1951
      %1953 = vrot.lane.b32.xlu0 %v1948, 96
      %v1954 = vpop.permute.xlu0 %1953
      %1957 = vst.msk [vmem:[#allocation3 + $0x30] sm:$0xf] %vm1932, %v1952
      %1958 = vst.msk [vmem:[#allocation3 + $0x3c] sm:$0xf] %vm1932, %v1954
      %v1959 = vld [vmem:[#allocation2 + $0x30] sm:$0xf]
      %v1960 = vld [vmem:[#allocation2 + $0x34] sm:$0xf]
      %1963 = vrot.lane.b32.xlu0 %v1959, 96
      %v1964 = vpop.permute.xlu0 %1963
      %1965 = vrot.lane.b32.xlu0 %v1960, 96
      %v1966 = vpop.permute.xlu0 %1965
      %1969 = vst.msk [vmem:[#allocation3 + $0x48] sm:$0xf] %vm1932, %v1964
      %1970 = vst.msk [vmem:[#allocation3 + $0x54] sm:$0xf] %vm1932, %v1966
      %v1971 = vld [vmem:[#allocation2 + $0x3c] sm:$0xf]
      %v1972 = vld [vmem:[#allocation2 + $0x40] sm:$0xf]
      %1975 = vrot.lane.b32.xlu0 %v1971, 96
      %v1976 = vpop.permute.xlu0 %1975
      %1977 = vrot.lane.b32.xlu0 %v1972, 96
      %v1978 = vpop.permute.xlu0 %1977
      %1981 = vst.msk [vmem:[#allocation3 + $0x60] sm:$0xf] %vm1932, %v1976
      %1982 = vst.msk [vmem:[#allocation3 + $0x6c] sm:$0xf] %vm1932, %v1978
      %v1983 = vld [vmem:[#allocation2 + $0x48] sm:$0xf]
      %v1984 = vld [vmem:[#allocation2 + $0x4c] sm:$0xf]
      %1987 = vrot.lane.b32.xlu0 %v1983, 96
      %v1988 = vpop.permute.xlu0 %1987
      %1989 = vrot.lane.b32.xlu0 %v1984, 96
      %v1990 = vpop.permute.xlu0 %1989
      %1993 = vst.msk [vmem:[#allocation3 + $0x78] sm:$0xf] %vm1932, %v1988
      %1994 = vst.msk [vmem:[#allocation3 + $0x84] sm:$0xf] %vm1932, %v1990
      %v1995 = vld [vmem:[#allocation2 + $0x54] sm:$0xf]
      %v1996 = vld [vmem:[#allocation2 + $0x58] sm:$0xf]
      %1999 = vrot.lane.b32.xlu0 %v1995, 96
      %v2000 = vpop.permute.xlu0 %1999
      %2001 = vrot.lane.b32.xlu0 %v1996, 96
      %v2002 = vpop.permute.xlu0 %2001
      %2005 = vst.msk [vmem:[#allocation3 + $0x90] sm:$0xf] %vm1932, %v2000
      %2006 = vst.msk [vmem:[#allocation3 + $0x9c] sm:$0xf] %vm1932, %v2002
      %v2007 = vld [vmem:[#allocation2 + $0x60] sm:$0xf]
      %v2008 = vld [vmem:[#allocation2 + $0x64] sm:$0xf]
      %2011 = vrot.lane.b32.xlu0 %v2007, 96
      %v2012 = vpop.permute.xlu0 %2011
      %2013 = vrot.lane.b32.xlu0 %v2008, 96
      %v2014 = vpop.permute.xlu0 %2013
      %2017 = vst.msk [vmem:[#allocation3 + $0xa8] sm:$0xf] %vm1932, %v2012
      %2018 = vst.msk [vmem:[#allocation3 + $0xb4] sm:$0xf] %vm1932, %v2014
      %v2019 = vld [vmem:[#allocation2 + $0x6c] sm:$0xf]
      %v2020 = vld [vmem:[#allocation2 + $0x70] sm:$0xf]
      %2023 = vrot.lane.b32.xlu0 %v2019, 96
      %v2024 = vpop.permute.xlu0 %2023
      %2025 = vrot.lane.b32.xlu0 %v2020, 96
      %v2026 = vpop.permute.xlu0 %2025
      %2029 = vst.msk [vmem:[#allocation3 + $0xc0] sm:$0xf] %vm1932, %v2024
      %2030 = vst.msk [vmem:[#allocation3 + $0xcc] sm:$0xf] %vm1932, %v2026
      %v2031 = vld [vmem:[#allocation2 + $0x78] sm:$0xf]
      %v2032 = vld [vmem:[#allocation2 + $0x7c] sm:$0xf]
      %2035 = vrot.lane.b32.xlu0 %v2031, 96
      %v2036 = vpop.permute.xlu0 %2035
      %2037 = vrot.lane.b32.xlu0 %v2032, 96
      %v2038 = vpop.permute.xlu0 %2037
      %2041 = vst.msk [vmem:[#allocation3 + $0xd8] sm:$0xf] %vm1932, %v2036
      %2042 = vst.msk [vmem:[#allocation3 + $0xe4] sm:$0xf] %vm1932, %v2038
      %v2043 = vld [vmem:[#allocation2 + $0x84] sm:$0xf]
      %v2044 = vld [vmem:[#allocation2 + $0x88] sm:$0xf]
      %2047 = vrot.lane.b32.xlu0 %v2043, 96
      %v2048 = vpop.permute.xlu0 %2047
      %2049 = vrot.lane.b32.xlu0 %v2044, 96
      %v2050 = vpop.permute.xlu0 %2049
      %2053 = vst.msk [vmem:[#allocation3 + $0xf0] sm:$0xf] %vm1932, %v2048
      %2054 = vst.msk [vmem:[#allocation3 + $0xfc] sm:$0xf] %vm1932, %v2050
      %v2055 = vld [vmem:[#allocation2 + $0x90] sm:$0xf]
      %v2056 = vld [vmem:[#allocation2 + $0x94] sm:$0xf]
      %2059 = vrot.lane.b32.xlu0 %v2055, 96
      %v2060 = vpop.permute.xlu0 %2059
      %2061 = vrot.lane.b32.xlu0 %v2056, 96
      %v2062 = vpop.permute.xlu0 %2061
      %2065 = vst.msk [vmem:[#allocation3 + $0x108] sm:$0xf] %vm1932, %v2060
      %2066 = vst.msk [vmem:[#allocation3 + $0x114] sm:$0xf] %vm1932, %v2062
      %v2067 = vld [vmem:[#allocation2 + $0x9c] sm:$0xf]
      %v2068 = vld [vmem:[#allocation2 + $0xa0] sm:$0xf]
      %2071 = vrot.lane.b32.xlu0 %v2067, 96
      %v2072 = vpop.permute.xlu0 %2071
      %2073 = vrot.lane.b32.xlu0 %v2068, 96
      %v2074 = vpop.permute.xlu0 %2073
      %2077 = vst.msk [vmem:[#allocation3 + $0x120] sm:$0xf] %vm1932, %v2072
      %2078 = vst.msk [vmem:[#allocation3 + $0x12c] sm:$0xf] %vm1932, %v2074
      %v2079 = vld [vmem:[#allocation2 + $0xa8] sm:$0xf]
      %v2080 = vld [vmem:[#allocation2 + $0xac] sm:$0xf]
      %2083 = vrot.lane.b32.xlu0 %v2079, 96
      %v2084 = vpop.permute.xlu0 %2083
      %2085 = vrot.lane.b32.xlu0 %v2080, 96
      %v2086 = vpop.permute.xlu0 %2085
      %2089 = vst.msk [vmem:[#allocation3 + $0x138] sm:$0xf] %vm1932, %v2084
      %2090 = vst.msk [vmem:[#allocation3 + $0x144] sm:$0xf] %vm1932, %v2086
      %v2091 = vld [vmem:[#allocation2 + $0xb4] sm:$0xf]
      %v2092 = vld [vmem:[#allocation2 + $0xb8] sm:$0xf]
      %2095 = vrot.lane.b32.xlu0 %v2091, 96
      %v2096 = vpop.permute.xlu0 %2095
      %2097 = vrot.lane.b32.xlu0 %v2092, 96
      %v2098 = vpop.permute.xlu0 %2097
      %2101 = vst.msk [vmem:[#allocation3 + $0x150] sm:$0xf] %vm1932, %v2096
      %2102 = vst.msk [vmem:[#allocation3 + $0x15c] sm:$0xf] %vm1932, %v2098
      %v2103 = vld [vmem:[#allocation2 + $0xc0] sm:$0xf]
      %v2104 = vld [vmem:[#allocation2 + $0xc4] sm:$0xf]
      %2107 = vrot.lane.b32.xlu0 %v2103, 96
      %v2108 = vpop.permute.xlu0 %2107
      %2109 = vrot.lane.b32.xlu0 %v2104, 96
      %v2110 = vpop.permute.xlu0 %2109
      %2113 = vst.msk [vmem:[#allocation3 + $0x168] sm:$0xf] %vm1932, %v2108
      %2114 = vst.msk [vmem:[#allocation3 + $0x174] sm:$0xf] %vm1932, %v2110
      %v2115 = vld [vmem:[#allocation2 + $0xc] sm:$0xf]
      %v2116 = vld [vmem:[#allocation2 + $0x10] sm:$0xf]
      %v2117 = vld [vmem:[#allocation2 + $0x14] sm:$0x1]
      %v2119 = vshrl.u32 %v2115, 16
      %v2121 = vrot.slane %v2119, 4
      %v2122 = vshll.u32 %v2115, 16
      %v2124 = vrot.slane %v2122, 5
      %v2125 = vor.u32 %v2121, %v2124
      %v2126 = vrot.slane %v2125, 4
      %v2128 = vshll.u32 %v2116, 16
      %v2130 = vrot.slane %v2128, 5
      %v2131 = vsel %vm1023, %v2126, %v2130
      %v2132 = vshrl.u32 %v2116, 16
      %v2134 = vrot.slane %v2132, 4
      %v2135 = vor.u32 %v2134, %v2130
      %v2136 = vrot.slane %v2135, 4
      %v2138 = vshll.u32 %v2117, 16
      %v2140 = vrot.slane %v2138, 5
      %v2141 = vsel %vm1023, %v2136, %v2140
      %2144 = vst.msk [vmem:[#allocation3 + $0x4] sm:$0xf] %vm542, %v2131
      %2145 = vst.msk [vmem:[#allocation3 + $0x10] sm:$0xf] %vm542, %v2141
      %v2146 = vld [vmem:[#allocation2 + $0x18] sm:$0xf]
      %v2147 = vld [vmem:[#allocation2 + $0x1c] sm:$0xf]
      %v2148 = vld [vmem:[#allocation2 + $0x20] sm:$0x1]
      %v2150 = vshrl.u32 %v2146, 16
      %v2152 = vrot.slane %v2150, 4
      %v2153 = vshll.u32 %v2146, 16
      %v2155 = vrot.slane %v2153, 5
      %v2156 = vor.u32 %v2152, %v2155
      %v2157 = vrot.slane %v2156, 4
      %v2159 = vshll.u32 %v2147, 16
      %v2161 = vrot.slane %v2159, 5
      %v2162 = vsel %vm1023, %v2157, %v2161
      %v2163 = vshrl.u32 %v2147, 16
      %v2165 = vrot.slane %v2163, 4
      %v2166 = vor.u32 %v2165, %v2161
      %v2167 = vrot.slane %v2166, 4
      %v2169 = vshll.u32 %v2148, 16
      %v2171 = vrot.slane %v2169, 5
      %v2172 = vsel %vm1023, %v2167, %v2171
      %2175 = vst.msk [vmem:[#allocation3 + $0x1c] sm:$0xf] %vm542, %v2162
      %2176 = vst.msk [vmem:[#allocation3 + $0x28] sm:$0xf] %vm542, %v2172
      %v2177 = vld [vmem:[#allocation2 + $0x24] sm:$0xf]
      %v2178 = vld [vmem:[#allocation2 + $0x28] sm:$0xf]
      %v2179 = vld [vmem:[#allocation2 + $0x2c] sm:$0x1]
      %v2181 = vshrl.u32 %v2177, 16
      %v2183 = vrot.slane %v2181, 4
      %v2184 = vshll.u32 %v2177, 16
      %v2186 = vrot.slane %v2184, 5
      %v2187 = vor.u32 %v2183, %v2186
      %v2188 = vrot.slane %v2187, 4
      %v2190 = vshll.u32 %v2178, 16
      %v2192 = vrot.slane %v2190, 5
      %v2193 = vsel %vm1023, %v2188, %v2192
      %v2194 = vshrl.u32 %v2178, 16
      %v2196 = vrot.slane %v2194, 4
      %v2197 = vor.u32 %v2196, %v2192
      %v2198 = vrot.slane %v2197, 4
      %v2200 = vshll.u32 %v2179, 16
      %v2202 = vrot.slane %v2200, 5
      %v2203 = vsel %vm1023, %v2198, %v2202
      %2206 = vst.msk [vmem:[#allocation3 + $0x34] sm:$0xf] %vm542, %v2193
      %2207 = vst.msk [vmem:[#allocation3 + $0x40] sm:$0xf] %vm542, %v2203
      %v2208 = vld [vmem:[#allocation2 + $0x30] sm:$0xf]
      %v2209 = vld [vmem:[#allocation2 + $0x34] sm:$0xf]
      %v2210 = vld [vmem:[#allocation2 + $0x38] sm:$0x1]
      %v2212 = vshrl.u32 %v2208, 16
      %v2214 = vrot.slane %v2212, 4
      %v2215 = vshll.u32 %v2208, 16
      %v2217 = vrot.slane %v2215, 5
      %v2218 = vor.u32 %v2214, %v2217
      %v2219 = vrot.slane %v2218, 4
      %v2221 = vshll.u32 %v2209, 16
      %v2223 = vrot.slane %v2221, 5
      %v2224 = vsel %vm1023, %v2219, %v2223
      %v2225 = vshrl.u32 %v2209, 16
      %v2227 = vrot.slane %v2225, 4
      %v2228 = vor.u32 %v2227, %v2223
      %v2229 = vrot.slane %v2228, 4
      %v2231 = vshll.u32 %v2210, 16
      %v2233 = vrot.slane %v2231, 5
      %v2234 = vsel %vm1023, %v2229, %v2233
      %2237 = vst.msk [vmem:[#allocation3 + $0x4c] sm:$0xf] %vm542, %v2224
      %2238 = vst.msk [vmem:[#allocation3 + $0x58] sm:$0xf] %vm542, %v2234
      %v2239 = vld [vmem:[#allocation2 + $0x3c] sm:$0xf]
      %v2240 = vld [vmem:[#allocation2 + $0x40] sm:$0xf]
      %v2241 = vld [vmem:[#allocation2 + $0x44] sm:$0x1]
      %v2243 = vshrl.u32 %v2239, 16
      %v2245 = vrot.slane %v2243, 4
      %v2246 = vshll.u32 %v2239, 16
      %v2248 = vrot.slane %v2246, 5
      %v2249 = vor.u32 %v2245, %v2248
      %v2250 = vrot.slane %v2249, 4
      %v2252 = vshll.u32 %v2240, 16
      %v2254 = vrot.slane %v2252, 5
      %v2255 = vsel %vm1023, %v2250, %v2254
      %v2256 = vshrl.u32 %v2240, 16
      %v2258 = vrot.slane %v2256, 4
      %v2259 = vor.u32 %v2258, %v2254
      %v2260 = vrot.slane %v2259, 4
      %v2262 = vshll.u32 %v2241, 16
      %v2264 = vrot.slane %v2262, 5
      %v2265 = vsel %vm1023, %v2260, %v2264
      %2268 = vst.msk [vmem:[#allocation3 + $0x64] sm:$0xf] %vm542, %v2255
      %2269 = vst.msk [vmem:[#allocation3 + $0x70] sm:$0xf] %vm542, %v2265
      %v2270 = vld [vmem:[#allocation2 + $0x48] sm:$0xf]
      %v2271 = vld [vmem:[#allocation2 + $0x4c] sm:$0xf]
      %v2272 = vld [vmem:[#allocation2 + $0x50] sm:$0x1]
      %v2274 = vshrl.u32 %v2270, 16
      %v2276 = vrot.slane %v2274, 4
      %v2277 = vshll.u32 %v2270, 16
      %v2279 = vrot.slane %v2277, 5
      %v2280 = vor.u32 %v2276, %v2279
      %v2281 = vrot.slane %v2280, 4
      %v2283 = vshll.u32 %v2271, 16
      %v2285 = vrot.slane %v2283, 5
      %v2286 = vsel %vm1023, %v2281, %v2285
      %v2287 = vshrl.u32 %v2271, 16
      %v2289 = vrot.slane %v2287, 4
      %v2290 = vor.u32 %v2289, %v2285
      %v2291 = vrot.slane %v2290, 4
      %v2293 = vshll.u32 %v2272, 16
      %v2295 = vrot.slane %v2293, 5
      %v2296 = vsel %vm1023, %v2291, %v2295
      %2299 = vst.msk [vmem:[#allocation3 + $0x7c] sm:$0xf] %vm542, %v2286
      %2300 = vst.msk [vmem:[#allocation3 + $0x88] sm:$0xf] %vm542, %v2296
      %v2301 = vld [vmem:[#allocation2 + $0x54] sm:$0xf]
      %v2302 = vld [vmem:[#allocation2 + $0x58] sm:$0xf]
      %v2303 = vld [vmem:[#allocation2 + $0x5c] sm:$0x1]
      %v2305 = vshrl.u32 %v2301, 16
      %v2307 = vrot.slane %v2305, 4
      %v2308 = vshll.u32 %v2301, 16
      %v2310 = vrot.slane %v2308, 5
      %v2311 = vor.u32 %v2307, %v2310
      %v2312 = vrot.slane %v2311, 4
      %v2314 = vshll.u32 %v2302, 16
      %v2316 = vrot.slane %v2314, 5
      %v2317 = vsel %vm1023, %v2312, %v2316
      %v2318 = vshrl.u32 %v2302, 16
      %v2320 = vrot.slane %v2318, 4
      %v2321 = vor.u32 %v2320, %v2316
      %v2322 = vrot.slane %v2321, 4
      %v2324 = vshll.u32 %v2303, 16
      %v2326 = vrot.slane %v2324, 5
      %v2327 = vsel %vm1023, %v2322, %v2326
      %2330 = vst.msk [vmem:[#allocation3 + $0x94] sm:$0xf] %vm542, %v2317
      %2331 = vst.msk [vmem:[#allocation3 + $0xa0] sm:$0xf] %vm542, %v2327
      %v2332 = vld [vmem:[#allocation2 + $0x60] sm:$0xf]
      %v2333 = vld [vmem:[#allocation2 + $0x64] sm:$0xf]
      %v2334 = vld [vmem:[#allocation2 + $0x68] sm:$0x1]
      %v2336 = vshrl.u32 %v2332, 16
      %v2338 = vrot.slane %v2336, 4
      %v2339 = vshll.u32 %v2332, 16
      %v2341 = vrot.slane %v2339, 5
      %v2342 = vor.u32 %v2338, %v2341
      %v2343 = vrot.slane %v2342, 4
      %v2345 = vshll.u32 %v2333, 16
      %v2347 = vrot.slane %v2345, 5
      %v2348 = vsel %vm1023, %v2343, %v2347
      %v2349 = vshrl.u32 %v2333, 16
      %v2351 = vrot.slane %v2349, 4
      %v2352 = vor.u32 %v2351, %v2347
      %v2353 = vrot.slane %v2352, 4
      %v2355 = vshll.u32 %v2334, 16
      %v2357 = vrot.slane %v2355, 5
      %v2358 = vsel %vm1023, %v2353, %v2357
      %2361 = vst.msk [vmem:[#allocation3 + $0xac] sm:$0xf] %vm542, %v2348
      %2362 = vst.msk [vmem:[#allocation3 + $0xb8] sm:$0xf] %vm542, %v2358
      %v2363 = vld [vmem:[#allocation2 + $0x6c] sm:$0xf]
      %v2364 = vld [vmem:[#allocation2 + $0x70] sm:$0xf]
      %v2365 = vld [vmem:[#allocation2 + $0x74] sm:$0x1]
      %v2367 = vshrl.u32 %v2363, 16
      %v2369 = vrot.slane %v2367, 4
      %v2370 = vshll.u32 %v2363, 16
      %v2372 = vrot.slane %v2370, 5
      %v2373 = vor.u32 %v2369, %v2372
      %v2374 = vrot.slane %v2373, 4
      %v2376 = vshll.u32 %v2364, 16
      %v2378 = vrot.slane %v2376, 5
      %v2379 = vsel %vm1023, %v2374, %v2378
      %v2380 = vshrl.u32 %v2364, 16
      %v2382 = vrot.slane %v2380, 4
      %v2383 = vor.u32 %v2382, %v2378
      %v2384 = vrot.slane %v2383, 4
      %v2386 = vshll.u32 %v2365, 16
      %v2388 = vrot.slane %v2386, 5
      %v2389 = vsel %vm1023, %v2384, %v2388
      %2392 = vst.msk [vmem:[#allocation3 + $0xc4] sm:$0xf] %vm542, %v2379
      %2393 = vst.msk [vmem:[#allocation3 + $0xd0] sm:$0xf] %vm542, %v2389
      %v2394 = vld [vmem:[#allocation2 + $0x78] sm:$0xf]
      %v2395 = vld [vmem:[#allocation2 + $0x7c] sm:$0xf]
      %v2396 = vld [vmem:[#allocation2 + $0x80] sm:$0x1]
      %v2398 = vshrl.u32 %v2394, 16
      %v2400 = vrot.slane %v2398, 4
      %v2401 = vshll.u32 %v2394, 16
      %v2403 = vrot.slane %v2401, 5
      %v2404 = vor.u32 %v2400, %v2403
      %v2405 = vrot.slane %v2404, 4
      %v2407 = vshll.u32 %v2395, 16
      %v2409 = vrot.slane %v2407, 5
      %v2410 = vsel %vm1023, %v2405, %v2409
      %v2411 = vshrl.u32 %v2395, 16
      %v2413 = vrot.slane %v2411, 4
      %v2414 = vor.u32 %v2413, %v2409
      %v2415 = vrot.slane %v2414, 4
      %v2417 = vshll.u32 %v2396, 16
      %v2419 = vrot.slane %v2417, 5
      %v2420 = vsel %vm1023, %v2415, %v2419
      %2423 = vst.msk [vmem:[#allocation3 + $0xdc] sm:$0xf] %vm542, %v2410
      %2424 = vst.msk [vmem:[#allocation3 + $0xe8] sm:$0xf] %vm542, %v2420
      %v2425 = vld [vmem:[#allocation2 + $0x84] sm:$0xf]
      %v2426 = vld [vmem:[#allocation2 + $0x88] sm:$0xf]
      %v2427 = vld [vmem:[#allocation2 + $0x8c] sm:$0x1]
      %v2429 = vshrl.u32 %v2425, 16
      %v2431 = vrot.slane %v2429, 4
      %v2432 = vshll.u32 %v2425, 16
      %v2434 = vrot.slane %v2432, 5
      %v2435 = vor.u32 %v2431, %v2434
      %v2436 = vrot.slane %v2435, 4
      %v2438 = vshll.u32 %v2426, 16
      %v2440 = vrot.slane %v2438, 5
      %v2441 = vsel %vm1023, %v2436, %v2440
      %v2442 = vshrl.u32 %v2426, 16
      %v2444 = vrot.slane %v2442, 4
      %v2445 = vor.u32 %v2444, %v2440
      %v2446 = vrot.slane %v2445, 4
      %v2448 = vshll.u32 %v2427, 16
      %v2450 = vrot.slane %v2448, 5
      %v2451 = vsel %vm1023, %v2446, %v2450
      %2454 = vst.msk [vmem:[#allocation3 + $0xf4] sm:$0xf] %vm542, %v2441
      %2455 = vst.msk [vmem:[#allocation3 + $0x100] sm:$0xf] %vm542, %v2451
      %v2456 = vld [vmem:[#allocation2 + $0x90] sm:$0xf]
      %v2457 = vld [vmem:[#allocation2 + $0x94] sm:$0xf]
      %v2458 = vld [vmem:[#allocation2 + $0x98] sm:$0x1]
      %v2460 = vshrl.u32 %v2456, 16
      %v2462 = vrot.slane %v2460, 4
      %v2463 = vshll.u32 %v2456, 16
      %v2465 = vrot.slane %v2463, 5
      %v2466 = vor.u32 %v2462, %v2465
      %v2467 = vrot.slane %v2466, 4
      %v2469 = vshll.u32 %v2457, 16
      %v2471 = vrot.slane %v2469, 5
      %v2472 = vsel %vm1023, %v2467, %v2471
      %v2473 = vshrl.u32 %v2457, 16
      %v2475 = vrot.slane %v2473, 4
      %v2476 = vor.u32 %v2475, %v2471
      %v2477 = vrot.slane %v2476, 4
      %v2479 = vshll.u32 %v2458, 16
      %v2481 = vrot.slane %v2479, 5
      %v2482 = vsel %vm1023, %v2477, %v2481
      %2485 = vst.msk [vmem:[#allocation3 + $0x10c] sm:$0xf] %vm542, %v2472
      %2486 = vst.msk [vmem:[#allocation3 + $0x118] sm:$0xf] %vm542, %v2482
      %v2487 = vld [vmem:[#allocation2 + $0x9c] sm:$0xf]
      %v2488 = vld [vmem:[#allocation2 + $0xa0] sm:$0xf]
      %v2489 = vld [vmem:[#allocation2 + $0xa4] sm:$0x1]
      %v2491 = vshrl.u32 %v2487, 16
      %v2493 = vrot.slane %v2491, 4
      %v2494 = vshll.u32 %v2487, 16
      %v2496 = vrot.slane %v2494, 5
      %v2497 = vor.u32 %v2493, %v2496
      %v2498 = vrot.slane %v2497, 4
      %v2500 = vshll.u32 %v2488, 16
      %v2502 = vrot.slane %v2500, 5
      %v2503 = vsel %vm1023, %v2498, %v2502
      %v2504 = vshrl.u32 %v2488, 16
      %v2506 = vrot.slane %v2504, 4
      %v2507 = vor.u32 %v2506, %v2502
      %v2508 = vrot.slane %v2507, 4
      %v2510 = vshll.u32 %v2489, 16
      %v2512 = vrot.slane %v2510, 5
      %v2513 = vsel %vm1023, %v2508, %v2512
      %2516 = vst.msk [vmem:[#allocation3 + $0x124] sm:$0xf] %vm542, %v2503
      %2517 = vst.msk [vmem:[#allocation3 + $0x130] sm:$0xf] %vm542, %v2513
      %v2518 = vld [vmem:[#allocation2 + $0xa8] sm:$0xf]
      %v2519 = vld [vmem:[#allocation2 + $0xac] sm:$0xf]
      %v2520 = vld [vmem:[#allocation2 + $0xb0] sm:$0x1]
      %v2522 = vshrl.u32 %v2518, 16
      %v2524 = vrot.slane %v2522, 4
      %v2525 = vshll.u32 %v2518, 16
      %v2527 = vrot.slane %v2525, 5
      %v2528 = vor.u32 %v2524, %v2527
      %v2529 = vrot.slane %v2528, 4
      %v2531 = vshll.u32 %v2519, 16
      %v2533 = vrot.slane %v2531, 5
      %v2534 = vsel %vm1023, %v2529, %v2533
      %v2535 = vshrl.u32 %v2519, 16
      %v2537 = vrot.slane %v2535, 4
      %v2538 = vor.u32 %v2537, %v2533
      %v2539 = vrot.slane %v2538, 4
      %v2541 = vshll.u32 %v2520, 16
      %v2543 = vrot.slane %v2541, 5
      %v2544 = vsel %vm1023, %v2539, %v2543
      %2547 = vst.msk [vmem:[#allocation3 + $0x13c] sm:$0xf] %vm542, %v2534
      %2548 = vst.msk [vmem:[#allocation3 + $0x148] sm:$0xf] %vm542, %v2544
      %v2549 = vld [vmem:[#allocation2 + $0xb4] sm:$0xf]
      %v2550 = vld [vmem:[#allocation2 + $0xb8] sm:$0xf]
      %v2551 = vld [vmem:[#allocation2 + $0xbc] sm:$0x1]
      %v2553 = vshrl.u32 %v2549, 16
      %v2555 = vrot.slane %v2553, 4
      %v2556 = vshll.u32 %v2549, 16
      %v2558 = vrot.slane %v2556, 5
      %v2559 = vor.u32 %v2555, %v2558
      %v2560 = vrot.slane %v2559, 4
      %v2562 = vshll.u32 %v2550, 16
      %v2564 = vrot.slane %v2562, 5
      %v2565 = vsel %vm1023, %v2560, %v2564
      %v2566 = vshrl.u32 %v2550, 16
      %v2568 = vrot.slane %v2566, 4
      %v2569 = vor.u32 %v2568, %v2564
      %v2570 = vrot.slane %v2569, 4
      %v2572 = vshll.u32 %v2551, 16
      %v2574 = vrot.slane %v2572, 5
      %v2575 = vsel %vm1023, %v2570, %v2574
      %2578 = vst.msk [vmem:[#allocation3 + $0x154] sm:$0xf] %vm542, %v2565
      %2579 = vst.msk [vmem:[#allocation3 + $0x160] sm:$0xf] %vm542, %v2575
      %v2580 = vld [vmem:[#allocation2 + $0xc0] sm:$0xf]
      %v2581 = vld [vmem:[#allocation2 + $0xc4] sm:$0xf]
      %v2582 = vld [vmem:[#allocation2 + $0xc8] sm:$0x1]
      %v2584 = vshrl.u32 %v2580, 16
      %v2586 = vrot.slane %v2584, 4
      %v2587 = vshll.u32 %v2580, 16
      %v2589 = vrot.slane %v2587, 5
      %v2590 = vor.u32 %v2586, %v2589
      %v2591 = vrot.slane %v2590, 4
      %v2593 = vshll.u32 %v2581, 16
      %v2595 = vrot.slane %v2593, 5
      %v2596 = vsel %vm1023, %v2591, %v2595
      %v2597 = vshrl.u32 %v2581, 16
      %v2599 = vrot.slane %v2597, 4
      %v2600 = vor.u32 %v2599, %v2595
      %v2601 = vrot.slane %v2600, 4
      %v2603 = vshll.u32 %v2582, 16
      %v2605 = vrot.slane %v2603, 5
      %v2606 = vsel %vm1023, %v2601, %v2605
      %2609 = vst.msk [vmem:[#allocation3 + $0x16c] sm:$0xf] %vm542, %v2596
      %2610 = vst.msk [vmem:[#allocation3 + $0x178] sm:$0xf] %vm542, %v2606
      %v2611 = vld [vmem:[#allocation2 + $0xc] sm:$0xe]
      %v2612 = vld [vmem:[#allocation2 + $0x10] sm:$0xf]
      %v2613 = vld [vmem:[#allocation2 + $0x14] sm:$0x1]
      %v2617 = vrot.slane %v2611, 5
      %v2618 = vrot.slane %v2617, 4
      %v2619 = vrot.slane %v2612, 5
      %v2620 = vsel %vm1590, %v2618, %v2619
      %v2621 = vrot.slane %v2619, 4
      %v2622 = vrot.slane %v2613, 5
      %v2623 = vsel %vm1590, %v2621, %v2622
      %2624 = vrot.lane.b32.xlu0 %v2620, 32
      %v2625 = vpop.permute.xlu0 %2624
      %2626 = vrot.lane.b32.xlu0 %v2623, 32
      %v2627 = vpop.permute.xlu0 %2626
      %2630 = vst.msk [vmem:[#allocation3 + $0x4] sm:$0xf] %vm1054, %v2625
      %2631 = vst.msk [vmem:[#allocation3 + $0x10] sm:$0xf] %vm1054, %v2627
      %v2632 = vld [vmem:[#allocation2 + $0x18] sm:$0xe]
      %v2633 = vld [vmem:[#allocation2 + $0x1c] sm:$0xf]
      %v2634 = vld [vmem:[#allocation2 + $0x20] sm:$0x1]
      %v2638 = vrot.slane %v2632, 5
      %v2639 = vrot.slane %v2638, 4
      %v2640 = vrot.slane %v2633, 5
      %v2641 = vsel %vm1590, %v2639, %v2640
      %v2642 = vrot.slane %v2640, 4
      %v2643 = vrot.slane %v2634, 5
      %v2644 = vsel %vm1590, %v2642, %v2643
      %2645 = vrot.lane.b32.xlu0 %v2641, 32
      %v2646 = vpop.permute.xlu0 %2645
      %2647 = vrot.lane.b32.xlu0 %v2644, 32
      %v2648 = vpop.permute.xlu0 %2647
      %2651 = vst.msk [vmem:[#allocation3 + $0x1c] sm:$0xf] %vm1054, %v2646
      %2652 = vst.msk [vmem:[#allocation3 + $0x28] sm:$0xf] %vm1054, %v2648
      %v2653 = vld [vmem:[#allocation2 + $0x24] sm:$0xe]
      %v2654 = vld [vmem:[#allocation2 + $0x28] sm:$0xf]
      %v2655 = vld [vmem:[#allocation2 + $0x2c] sm:$0x1]
      %v2659 = vrot.slane %v2653, 5
      %v2660 = vrot.slane %v2659, 4
      %v2661 = vrot.slane %v2654, 5
      %v2662 = vsel %vm1590, %v2660, %v2661
      %v2663 = vrot.slane %v2661, 4
      %v2664 = vrot.slane %v2655, 5
      %v2665 = vsel %vm1590, %v2663, %v2664
      %2666 = vrot.lane.b32.xlu0 %v2662, 32
      %v2667 = vpop.permute.xlu0 %2666
      %2668 = vrot.lane.b32.xlu0 %v2665, 32
      %v2669 = vpop.permute.xlu0 %2668
      %2672 = vst.msk [vmem:[#allocation3 + $0x34] sm:$0xf] %vm1054, %v2667
      %2673 = vst.msk [vmem:[#allocation3 + $0x40] sm:$0xf] %vm1054, %v2669
      %v2674 = vld [vmem:[#allocation2 + $0x30] sm:$0xe]
      %v2675 = vld [vmem:[#allocation2 + $0x34] sm:$0xf]
      %v2676 = vld [vmem:[#allocation2 + $0x38] sm:$0x1]
      %v2680 = vrot.slane %v2674, 5
      %v2681 = vrot.slane %v2680, 4
      %v2682 = vrot.slane %v2675, 5
      %v2683 = vsel %vm1590, %v2681, %v2682
      %v2684 = vrot.slane %v2682, 4
      %v2685 = vrot.slane %v2676, 5
      %v2686 = vsel %vm1590, %v2684, %v2685
      %2687 = vrot.lane.b32.xlu0 %v2683, 32
      %v2688 = vpop.permute.xlu0 %2687
      %2689 = vrot.lane.b32.xlu0 %v2686, 32
      %v2690 = vpop.permute.xlu0 %2689
      %2693 = vst.msk [vmem:[#allocation3 + $0x4c] sm:$0xf] %vm1054, %v2688
      %2694 = vst.msk [vmem:[#allocation3 + $0x58] sm:$0xf] %vm1054, %v2690
      %v2695 = vld [vmem:[#allocation2 + $0x3c] sm:$0xe]
      %v2696 = vld [vmem:[#allocation2 + $0x40] sm:$0xf]
      %v2697 = vld [vmem:[#allocation2 + $0x44] sm:$0x1]
      %v2701 = vrot.slane %v2695, 5
      %v2702 = vrot.slane %v2701, 4
      %v2703 = vrot.slane %v2696, 5
      %v2704 = vsel %vm1590, %v2702, %v2703
      %v2705 = vrot.slane %v2703, 4
      %v2706 = vrot.slane %v2697, 5
      %v2707 = vsel %vm1590, %v2705, %v2706
      %2708 = vrot.lane.b32.xlu0 %v2704, 32
      %v2709 = vpop.permute.xlu0 %2708
      %2710 = vrot.lane.b32.xlu0 %v2707, 32
      %v2711 = vpop.permute.xlu0 %2710
      %2714 = vst.msk [vmem:[#allocation3 + $0x64] sm:$0xf] %vm1054, %v2709
      %2715 = vst.msk [vmem:[#allocation3 + $0x70] sm:$0xf] %vm1054, %v2711
      %v2716 = vld [vmem:[#allocation2 + $0x48] sm:$0xe]
      %v2717 = vld [vmem:[#allocation2 + $0x4c] sm:$0xf]
      %v2718 = vld [vmem:[#allocation2 + $0x50] sm:$0x1]
      %v2722 = vrot.slane %v2716, 5
      %v2723 = vrot.slane %v2722, 4
      %v2724 = vrot.slane %v2717, 5
      %v2725 = vsel %vm1590, %v2723, %v2724
      %v2726 = vrot.slane %v2724, 4
      %v2727 = vrot.slane %v2718, 5
      %v2728 = vsel %vm1590, %v2726, %v2727
      %2729 = vrot.lane.b32.xlu0 %v2725, 32
      %v2730 = vpop.permute.xlu0 %2729
      %2731 = vrot.lane.b32.xlu0 %v2728, 32
      %v2732 = vpop.permute.xlu0 %2731
      %2735 = vst.msk [vmem:[#allocation3 + $0x7c] sm:$0xf] %vm1054, %v2730
      %2736 = vst.msk [vmem:[#allocation3 + $0x88] sm:$0xf] %vm1054, %v2732
      %v2737 = vld [vmem:[#allocation2 + $0x54] sm:$0xe]
      %v2738 = vld [vmem:[#allocation2 + $0x58] sm:$0xf]
      %v2739 = vld [vmem:[#allocation2 + $0x5c] sm:$0x1]
      %v2743 = vrot.slane %v2737, 5
      %v2744 = vrot.slane %v2743, 4
      %v2745 = vrot.slane %v2738, 5
      %v2746 = vsel %vm1590, %v2744, %v2745
      %v2747 = vrot.slane %v2745, 4
      %v2748 = vrot.slane %v2739, 5
      %v2749 = vsel %vm1590, %v2747, %v2748
      %2750 = vrot.lane.b32.xlu0 %v2746, 32
      %v2751 = vpop.permute.xlu0 %2750
      %2752 = vrot.lane.b32.xlu0 %v2749, 32
      %v2753 = vpop.permute.xlu0 %2752
      %2756 = vst.msk [vmem:[#allocation3 + $0x94] sm:$0xf] %vm1054, %v2751
      %2757 = vst.msk [vmem:[#allocation3 + $0xa0] sm:$0xf] %vm1054, %v2753
      %v2758 = vld [vmem:[#allocation2 + $0x60] sm:$0xe]
      %v2759 = vld [vmem:[#allocation2 + $0x64] sm:$0xf]
      %v2760 = vld [vmem:[#allocation2 + $0x68] sm:$0x1]
      %v2764 = vrot.slane %v2758, 5
      %v2765 = vrot.slane %v2764, 4
      %v2766 = vrot.slane %v2759, 5
      %v2767 = vsel %vm1590, %v2765, %v2766
      %v2768 = vrot.slane %v2766, 4
      %v2769 = vrot.slane %v2760, 5
      %v2770 = vsel %vm1590, %v2768, %v2769
      %2771 = vrot.lane.b32.xlu0 %v2767, 32
      %v2772 = vpop.permute.xlu0 %2771
      %2773 = vrot.lane.b32.xlu0 %v2770, 32
      %v2774 = vpop.permute.xlu0 %2773
      %2777 = vst.msk [vmem:[#allocation3 + $0xac] sm:$0xf] %vm1054, %v2772
      %2778 = vst.msk [vmem:[#allocation3 + $0xb8] sm:$0xf] %vm1054, %v2774
      %v2779 = vld [vmem:[#allocation2 + $0x6c] sm:$0xe]
      %v2780 = vld [vmem:[#allocation2 + $0x70] sm:$0xf]
      %v2781 = vld [vmem:[#allocation2 + $0x74] sm:$0x1]
      %v2785 = vrot.slane %v2779, 5
      %v2786 = vrot.slane %v2785, 4
      %v2787 = vrot.slane %v2780, 5
      %v2788 = vsel %vm1590, %v2786, %v2787
      %v2789 = vrot.slane %v2787, 4
      %v2790 = vrot.slane %v2781, 5
      %v2791 = vsel %vm1590, %v2789, %v2790
      %2792 = vrot.lane.b32.xlu0 %v2788, 32
      %v2793 = vpop.permute.xlu0 %2792
      %2794 = vrot.lane.b32.xlu0 %v2791, 32
      %v2795 = vpop.permute.xlu0 %2794
      %2798 = vst.msk [vmem:[#allocation3 + $0xc4] sm:$0xf] %vm1054, %v2793
      %2799 = vst.msk [vmem:[#allocation3 + $0xd0] sm:$0xf] %vm1054, %v2795
      %v2800 = vld [vmem:[#allocation2 + $0x78] sm:$0xe]
      %v2801 = vld [vmem:[#allocation2 + $0x7c] sm:$0xf]
      %v2802 = vld [vmem:[#allocation2 + $0x80] sm:$0x1]
      %v2806 = vrot.slane %v2800, 5
      %v2807 = vrot.slane %v2806, 4
      %v2808 = vrot.slane %v2801, 5
      %v2809 = vsel %vm1590, %v2807, %v2808
      %v2810 = vrot.slane %v2808, 4
      %v2811 = vrot.slane %v2802, 5
      %v2812 = vsel %vm1590, %v2810, %v2811
      %2813 = vrot.lane.b32.xlu0 %v2809, 32
      %v2814 = vpop.permute.xlu0 %2813
      %2815 = vrot.lane.b32.xlu0 %v2812, 32
      %v2816 = vpop.permute.xlu0 %2815
      %2819 = vst.msk [vmem:[#allocation3 + $0xdc] sm:$0xf] %vm1054, %v2814
      %2820 = vst.msk [vmem:[#allocation3 + $0xe8] sm:$0xf] %vm1054, %v2816
      %v2821 = vld [vmem:[#allocation2 + $0x84] sm:$0xe]
      %v2822 = vld [vmem:[#allocation2 + $0x88] sm:$0xf]
      %v2823 = vld [vmem:[#allocation2 + $0x8c] sm:$0x1]
      %v2827 = vrot.slane %v2821, 5
      %v2828 = vrot.slane %v2827, 4
      %v2829 = vrot.slane %v2822, 5
      %v2830 = vsel %vm1590, %v2828, %v2829
      %v2831 = vrot.slane %v2829, 4
      %v2832 = vrot.slane %v2823, 5
      %v2833 = vsel %vm1590, %v2831, %v2832
      %2834 = vrot.lane.b32.xlu0 %v2830, 32
      %v2835 = vpop.permute.xlu0 %2834
      %2836 = vrot.lane.b32.xlu0 %v2833, 32
      %v2837 = vpop.permute.xlu0 %2836
      %2840 = vst.msk [vmem:[#allocation3 + $0xf4] sm:$0xf] %vm1054, %v2835
      %2841 = vst.msk [vmem:[#allocation3 + $0x100] sm:$0xf] %vm1054, %v2837
      %v2842 = vld [vmem:[#allocation2 + $0x90] sm:$0xe]
      %v2843 = vld [vmem:[#allocation2 + $0x94] sm:$0xf]
      %v2844 = vld [vmem:[#allocation2 + $0x98] sm:$0x1]
      %v2848 = vrot.slane %v2842, 5
      %v2849 = vrot.slane %v2848, 4
      %v2850 = vrot.slane %v2843, 5
      %v2851 = vsel %vm1590, %v2849, %v2850
      %v2852 = vrot.slane %v2850, 4
      %v2853 = vrot.slane %v2844, 5
      %v2854 = vsel %vm1590, %v2852, %v2853
      %2855 = vrot.lane.b32.xlu0 %v2851, 32
      %v2856 = vpop.permute.xlu0 %2855
      %2857 = vrot.lane.b32.xlu0 %v2854, 32
      %v2858 = vpop.permute.xlu0 %2857
      %2861 = vst.msk [vmem:[#allocation3 + $0x10c] sm:$0xf] %vm1054, %v2856
      %2862 = vst.msk [vmem:[#allocation3 + $0x118] sm:$0xf] %vm1054, %v2858
      %v2863 = vld [vmem:[#allocation2 + $0x9c] sm:$0xe]
      %v2864 = vld [vmem:[#allocation2 + $0xa0] sm:$0xf]
      %v2865 = vld [vmem:[#allocation2 + $0xa4] sm:$0x1]
      %v2869 = vrot.slane %v2863, 5
      %v2870 = vrot.slane %v2869, 4
      %v2871 = vrot.slane %v2864, 5
      %v2872 = vsel %vm1590, %v2870, %v2871
      %v2873 = vrot.slane %v2871, 4
      %v2874 = vrot.slane %v2865, 5
      %v2875 = vsel %vm1590, %v2873, %v2874
      %2876 = vrot.lane.b32.xlu0 %v2872, 32
      %v2877 = vpop.permute.xlu0 %2876
      %2878 = vrot.lane.b32.xlu0 %v2875, 32
      %v2879 = vpop.permute.xlu0 %2878
      %2882 = vst.msk [vmem:[#allocation3 + $0x124] sm:$0xf] %vm1054, %v2877
      %2883 = vst.msk [vmem:[#allocation3 + $0x130] sm:$0xf] %vm1054, %v2879
      %v2884 = vld [vmem:[#allocation2 + $0xa8] sm:$0xe]
      %v2885 = vld [vmem:[#allocation2 + $0xac] sm:$0xf]
      %v2886 = vld [vmem:[#allocation2 + $0xb0] sm:$0x1]
      %v2890 = vrot.slane %v2884, 5
      %v2891 = vrot.slane %v2890, 4
      %v2892 = vrot.slane %v2885, 5
      %v2893 = vsel %vm1590, %v2891, %v2892
      %v2894 = vrot.slane %v2892, 4
      %v2895 = vrot.slane %v2886, 5
      %v2896 = vsel %vm1590, %v2894, %v2895
      %2897 = vrot.lane.b32.xlu0 %v2893, 32
      %v2898 = vpop.permute.xlu0 %2897
      %2899 = vrot.lane.b32.xlu0 %v2896, 32
      %v2900 = vpop.permute.xlu0 %2899
      %2903 = vst.msk [vmem:[#allocation3 + $0x13c] sm:$0xf] %vm1054, %v2898
      %2904 = vst.msk [vmem:[#allocation3 + $0x148] sm:$0xf] %vm1054, %v2900
      %v2905 = vld [vmem:[#allocation2 + $0xb4] sm:$0xe]
      %v2906 = vld [vmem:[#allocation2 + $0xb8] sm:$0xf]
      %v2907 = vld [vmem:[#allocation2 + $0xbc] sm:$0x1]
      %v2911 = vrot.slane %v2905, 5
      %v2912 = vrot.slane %v2911, 4
      %v2913 = vrot.slane %v2906, 5
      %v2914 = vsel %vm1590, %v2912, %v2913
      %v2915 = vrot.slane %v2913, 4
      %v2916 = vrot.slane %v2907, 5
      %v2917 = vsel %vm1590, %v2915, %v2916
      %2918 = vrot.lane.b32.xlu0 %v2914, 32
      %v2919 = vpop.permute.xlu0 %2918
      %2920 = vrot.lane.b32.xlu0 %v2917, 32
      %v2921 = vpop.permute.xlu0 %2920
      %2924 = vst.msk [vmem:[#allocation3 + $0x154] sm:$0xf] %vm1054, %v2919
      %2925 = vst.msk [vmem:[#allocation3 + $0x160] sm:$0xf] %vm1054, %v2921
      %v2926 = vld [vmem:[#allocation2 + $0xc0] sm:$0xe]
      %v2927 = vld [vmem:[#allocation2 + $0xc4] sm:$0xf]
      %v2928 = vld [vmem:[#allocation2 + $0xc8] sm:$0x1]
      %v2932 = vrot.slane %v2926, 5
      %v2933 = vrot.slane %v2932, 4
      %v2934 = vrot.slane %v2927, 5
      %v2935 = vsel %vm1590, %v2933, %v2934
      %v2936 = vrot.slane %v2934, 4
      %v2937 = vrot.slane %v2928, 5
      %v2938 = vsel %vm1590, %v2936, %v2937
      %2939 = vrot.lane.b32.xlu0 %v2935, 32
      %v2940 = vpop.permute.xlu0 %2939
      %2941 = vrot.lane.b32.xlu0 %v2938, 32
      %v2942 = vpop.permute.xlu0 %2941
      %2945 = vst.msk [vmem:[#allocation3 + $0x16c] sm:$0xf] %vm1054, %v2940
      %2946 = vst.msk [vmem:[#allocation3 + $0x178] sm:$0xf] %vm1054, %v2942
      %v2947 = vld [vmem:[#allocation2 + $0x18] sm:$0xf]
      %v2948 = vld [vmem:[#allocation2 + $0x1c] sm:$0xf]
      %2951 = vrot.lane.b32.xlu0 %v2947, 64
      %v2952 = vpop.permute.xlu0 %2951
      %2953 = vrot.lane.b32.xlu0 %v2948, 64
      %v2954 = vpop.permute.xlu0 %2953
      %2957 = vst.msk [vmem:[#allocation3 + $0x4] sm:$0xf] %vm1604, %v2952
      %2958 = vst.msk [vmem:[#allocation3 + $0x10] sm:$0xf] %vm1604, %v2954
      %v2959 = vld [vmem:[#allocation2 + $0x24] sm:$0xf]
      %v2960 = vld [vmem:[#allocation2 + $0x28] sm:$0xf]
      %2963 = vrot.lane.b32.xlu0 %v2959, 64
      %v2964 = vpop.permute.xlu0 %2963
      %2965 = vrot.lane.b32.xlu0 %v2960, 64
      %v2966 = vpop.permute.xlu0 %2965
      %2969 = vst.msk [vmem:[#allocation3 + $0x1c] sm:$0xf] %vm1604, %v2964
      %2970 = vst.msk [vmem:[#allocation3 + $0x28] sm:$0xf] %vm1604, %v2966
      %v2971 = vld [vmem:[#allocation2 + $0x30] sm:$0xf]
      %v2972 = vld [vmem:[#allocation2 + $0x34] sm:$0xf]
      %2975 = vrot.lane.b32.xlu0 %v2971, 64
      %v2976 = vpop.permute.xlu0 %2975
      %2977 = vrot.lane.b32.xlu0 %v2972, 64
      %v2978 = vpop.permute.xlu0 %2977
      %2981 = vst.msk [vmem:[#allocation3 + $0x34] sm:$0xf] %vm1604, %v2976
      %2982 = vst.msk [vmem:[#allocation3 + $0x40] sm:$0xf] %vm1604, %v2978
      %v2983 = vld [vmem:[#allocation2 + $0x3c] sm:$0xf]
      %v2984 = vld [vmem:[#allocation2 + $0x40] sm:$0xf]
      %2987 = vrot.lane.b32.xlu0 %v2983, 64
      %v2988 = vpop.permute.xlu0 %2987
      %2989 = vrot.lane.b32.xlu0 %v2984, 64
      %v2990 = vpop.permute.xlu0 %2989
      %2993 = vst.msk [vmem:[#allocation3 + $0x4c] sm:$0xf] %vm1604, %v2988
      %2994 = vst.msk [vmem:[#allocation3 + $0x58] sm:$0xf] %vm1604, %v2990
      %v2995 = vld [vmem:[#allocation2 + $0x48] sm:$0xf]
      %v2996 = vld [vmem:[#allocation2 + $0x4c] sm:$0xf]
      %2999 = vrot.lane.b32.xlu0 %v2995, 64
      %v3000 = vpop.permute.xlu0 %2999
      %3001 = vrot.lane.b32.xlu0 %v2996, 64
      %v3002 = vpop.permute.xlu0 %3001
      %3005 = vst.msk [vmem:[#allocation3 + $0x64] sm:$0xf] %vm1604, %v3000
      %3006 = vst.msk [vmem:[#allocation3 + $0x70] sm:$0xf] %vm1604, %v3002
      %v3007 = vld [vmem:[#allocation2 + $0x54] sm:$0xf]
      %v3008 = vld [vmem:[#allocation2 + $0x58] sm:$0xf]
      %3011 = vrot.lane.b32.xlu0 %v3007, 64
      %v3012 = vpop.permute.xlu0 %3011
      %3013 = vrot.lane.b32.xlu0 %v3008, 64
      %v3014 = vpop.permute.xlu0 %3013
      %3017 = vst.msk [vmem:[#allocation3 + $0x7c] sm:$0xf] %vm1604, %v3012
      %3018 = vst.msk [vmem:[#allocation3 + $0x88] sm:$0xf] %vm1604, %v3014
      %v3019 = vld [vmem:[#allocation2 + $0x60] sm:$0xf]
      %v3020 = vld [vmem:[#allocation2 + $0x64] sm:$0xf]
      %3023 = vrot.lane.b32.xlu0 %v3019, 64
      %v3024 = vpop.permute.xlu0 %3023
      %3025 = vrot.lane.b32.xlu0 %v3020, 64
      %v3026 = vpop.permute.xlu0 %3025
      %3029 = vst.msk [vmem:[#allocation3 + $0x94] sm:$0xf] %vm1604, %v3024
      %3030 = vst.msk [vmem:[#allocation3 + $0xa0] sm:$0xf] %vm1604, %v3026
      %v3031 = vld [vmem:[#allocation2 + $0x6c] sm:$0xf]
      %v3032 = vld [vmem:[#allocation2 + $0x70] sm:$0xf]
      %3035 = vrot.lane.b32.xlu0 %v3031, 64
      %v3036 = vpop.permute.xlu0 %3035
      %3037 = vrot.lane.b32.xlu0 %v3032, 64
      %v3038 = vpop.permute.xlu0 %3037
      %3041 = vst.msk [vmem:[#allocation3 + $0xac] sm:$0xf] %vm1604, %v3036
      %3042 = vst.msk [vmem:[#allocation3 + $0xb8] sm:$0xf] %vm1604, %v3038
      %v3043 = vld [vmem:[#allocation2 + $0x78] sm:$0xf]
      %v3044 = vld [vmem:[#allocation2 + $0x7c] sm:$0xf]
      %3047 = vrot.lane.b32.xlu0 %v3043, 64
      %v3048 = vpop.permute.xlu0 %3047
      %3049 = vrot.lane.b32.xlu0 %v3044, 64
      %v3050 = vpop.permute.xlu0 %3049
      %3053 = vst.msk [vmem:[#allocation3 + $0xc4] sm:$0xf] %vm1604, %v3048
      %3054 = vst.msk [vmem:[#allocation3 + $0xd0] sm:$0xf] %vm1604, %v3050
      %v3055 = vld [vmem:[#allocation2 + $0x84] sm:$0xf]
      %v3056 = vld [vmem:[#allocation2 + $0x88] sm:$0xf]
      %3059 = vrot.lane.b32.xlu0 %v3055, 64
      %v3060 = vpop.permute.xlu0 %3059
      %3061 = vrot.lane.b32.xlu0 %v3056, 64
      %v3062 = vpop.permute.xlu0 %3061
      %3065 = vst.msk [vmem:[#allocation3 + $0xdc] sm:$0xf] %vm1604, %v3060
      %3066 = vst.msk [vmem:[#allocation3 + $0xe8] sm:$0xf] %vm1604, %v3062
      %v3067 = vld [vmem:[#allocation2 + $0x90] sm:$0xf]
      %v3068 = vld [vmem:[#allocation2 + $0x94] sm:$0xf]
      %3071 = vrot.lane.b32.xlu0 %v3067, 64
      %v3072 = vpop.permute.xlu0 %3071
      %3073 = vrot.lane.b32.xlu0 %v3068, 64
      %v3074 = vpop.permute.xlu0 %3073
      %3077 = vst.msk [vmem:[#allocation3 + $0xf4] sm:$0xf] %vm1604, %v3072
      %3078 = vst.msk [vmem:[#allocation3 + $0x100] sm:$0xf] %vm1604, %v3074
      %v3079 = vld [vmem:[#allocation2 + $0x9c] sm:$0xf]
      %v3080 = vld [vmem:[#allocation2 + $0xa0] sm:$0xf]
      %3083 = vrot.lane.b32.xlu0 %v3079, 64
      %v3084 = vpop.permute.xlu0 %3083
      %3085 = vrot.lane.b32.xlu0 %v3080, 64
      %v3086 = vpop.permute.xlu0 %3085
      %3089 = vst.msk [vmem:[#allocation3 + $0x10c] sm:$0xf] %vm1604, %v3084
      %3090 = vst.msk [vmem:[#allocation3 + $0x118] sm:$0xf] %vm1604, %v3086
      %v3091 = vld [vmem:[#allocation2 + $0xa8] sm:$0xf]
      %v3092 = vld [vmem:[#allocation2 + $0xac] sm:$0xf]
      %3095 = vrot.lane.b32.xlu0 %v3091, 64
      %v3096 = vpop.permute.xlu0 %3095
      %3097 = vrot.lane.b32.xlu0 %v3092, 64
      %v3098 = vpop.permute.xlu0 %3097
      %3101 = vst.msk [vmem:[#allocation3 + $0x124] sm:$0xf] %vm1604, %v3096
      %3102 = vst.msk [vmem:[#allocation3 + $0x130] sm:$0xf] %vm1604, %v3098
      %v3103 = vld [vmem:[#allocation2 + $0xb4] sm:$0xf]
      %v3104 = vld [vmem:[#allocation2 + $0xb8] sm:$0xf]
      %3107 = vrot.lane.b32.xlu0 %v3103, 64
      %v3108 = vpop.permute.xlu0 %3107
      %3109 = vrot.lane.b32.xlu0 %v3104, 64
      %v3110 = vpop.permute.xlu0 %3109
      %3113 = vst.msk [vmem:[#allocation3 + $0x13c] sm:$0xf] %vm1604, %v3108
      %3114 = vst.msk [vmem:[#allocation3 + $0x148] sm:$0xf] %vm1604, %v3110
      %v3115 = vld [vmem:[#allocation2 + $0xc0] sm:$0xf]
      %v3116 = vld [vmem:[#allocation2 + $0xc4] sm:$0xf]
      %3119 = vrot.lane.b32.xlu0 %v3115, 64
      %v3120 = vpop.permute.xlu0 %3119
      %3121 = vrot.lane.b32.xlu0 %v3116, 64
      %v3122 = vpop.permute.xlu0 %3121
      %3125 = vst.msk [vmem:[#allocation3 + $0x154] sm:$0xf] %vm1604, %v3120
      %3126 = vst.msk [vmem:[#allocation3 + $0x160] sm:$0xf] %vm1604, %v3122
      %v3127 = vld [vmem:[#allocation2 + $0xcc] sm:$0xf]
      %v3128 = vld [vmem:[#allocation2 + $0xd0] sm:$0xf]
      %3131 = vrot.lane.b32.xlu0 %v3127, 64
      %v3132 = vpop.permute.xlu0 %3131
      %3133 = vrot.lane.b32.xlu0 %v3128, 64
      %v3134 = vpop.permute.xlu0 %3133
      %3137 = vst.msk [vmem:[#allocation3 + $0x16c] sm:$0xf] %vm1604, %v3132
      %3138 = vst.msk [vmem:[#allocation3 + $0x178] sm:$0xf] %vm1604, %v3134
      %v3139 = vld [vmem:[#allocation2 + $0x18] sm:$0xf]
      %v3140 = vld [vmem:[#allocation2 + $0x1c] sm:$0xf]
      %v3141 = vld [vmem:[#allocation2 + $0x20] sm:$0x1]
      %v3143 = vshrl.u32 %v3139, 16
      %v3145 = vrot.slane %v3143, 4
      %v3146 = vshll.u32 %v3139, 16
      %v3148 = vrot.slane %v3146, 5
      %v3149 = vor.u32 %v3145, %v3148
      %v3150 = vrot.slane %v3149, 4
      %v3152 = vshll.u32 %v3140, 16
      %v3154 = vrot.slane %v3152, 5
      %v3155 = vsel %vm1023, %v3150, %v3154
      %v3156 = vshrl.u32 %v3140, 16
      %v3158 = vrot.slane %v3156, 4
      %v3159 = vor.u32 %v3158, %v3154
      %v3160 = vrot.slane %v3159, 4
      %v3162 = vshll.u32 %v3141, 16
      %v3164 = vrot.slane %v3162, 5
      %v3165 = vsel %vm1023, %v3160, %v3164
      %3166 = vrot.lane.b32.xlu0 %v3155, 96
      %v3167 = vpop.permute.xlu0 %3166
      %3168 = vrot.lane.b32.xlu0 %v3165, 96
      %v3169 = vpop.permute.xlu0 %3168
      %3172 = vst.msk [vmem:[#allocation3 + $0x4] sm:$0xf] %vm1932, %v3167
      %3173 = vst.msk [vmem:[#allocation3 + $0x10] sm:$0xf] %vm1932, %v3169
      %v3174 = vld [vmem:[#allocation2 + $0x24] sm:$0xf]
      %v3175 = vld [vmem:[#allocation2 + $0x28] sm:$0xf]
      %v3176 = vld [vmem:[#allocation2 + $0x2c] sm:$0x1]
      %v3178 = vshrl.u32 %v3174, 16
      %v3180 = vrot.slane %v3178, 4
      %v3181 = vshll.u32 %v3174, 16
      %v3183 = vrot.slane %v3181, 5
      %v3184 = vor.u32 %v3180, %v3183
      %v3185 = vrot.slane %v3184, 4
      %v3187 = vshll.u32 %v3175, 16
      %v3189 = vrot.slane %v3187, 5
      %v3190 = vsel %vm1023, %v3185, %v3189
      %v3191 = vshrl.u32 %v3175, 16
      %v3193 = vrot.slane %v3191, 4
      %v3194 = vor.u32 %v3193, %v3189
      %v3195 = vrot.slane %v3194, 4
      %v3197 = vshll.u32 %v3176, 16
      %v3199 = vrot.slane %v3197, 5
      %v3200 = vsel %vm1023, %v3195, %v3199
      %3201 = vrot.lane.b32.xlu0 %v3190, 96
      %v3202 = vpop.permute.xlu0 %3201
      %3203 = vrot.lane.b32.xlu0 %v3200, 96
      %v3204 = vpop.permute.xlu0 %3203
      %3207 = vst.msk [vmem:[#allocation3 + $0x1c] sm:$0xf] %vm1932, %v3202
      %3208 = vst.msk [vmem:[#allocation3 + $0x28] sm:$0xf] %vm1932, %v3204
      %v3209 = vld [vmem:[#allocation2 + $0x30] sm:$0xf]
      %v3210 = vld [vmem:[#allocation2 + $0x34] sm:$0xf]
      %v3211 = vld [vmem:[#allocation2 + $0x38] sm:$0x1]
      %v3213 = vshrl.u32 %v3209, 16
      %v3215 = vrot.slane %v3213, 4
      %v3216 = vshll.u32 %v3209, 16
      %v3218 = vrot.slane %v3216, 5
      %v3219 = vor.u32 %v3215, %v3218
      %v3220 = vrot.slane %v3219, 4
      %v3222 = vshll.u32 %v3210, 16
      %v3224 = vrot.slane %v3222, 5
      %v3225 = vsel %vm1023, %v3220, %v3224
      %v3226 = vshrl.u32 %v3210, 16
      %v3228 = vrot.slane %v3226, 4
      %v3229 = vor.u32 %v3228, %v3224
      %v3230 = vrot.slane %v3229, 4
      %v3232 = vshll.u32 %v3211, 16
      %v3234 = vrot.slane %v3232, 5
      %v3235 = vsel %vm1023, %v3230, %v3234
      %3236 = vrot.lane.b32.xlu0 %v3225, 96
      %v3237 = vpop.permute.xlu0 %3236
      %3238 = vrot.lane.b32.xlu0 %v3235, 96
      %v3239 = vpop.permute.xlu0 %3238
      %3242 = vst.msk [vmem:[#allocation3 + $0x34] sm:$0xf] %vm1932, %v3237
      %3243 = vst.msk [vmem:[#allocation3 + $0x40] sm:$0xf] %vm1932, %v3239
      %v3244 = vld [vmem:[#allocation2 + $0x3c] sm:$0xf]
      %v3245 = vld [vmem:[#allocation2 + $0x40] sm:$0xf]
      %v3246 = vld [vmem:[#allocation2 + $0x44] sm:$0x1]
      %v3248 = vshrl.u32 %v3244, 16
      %v3250 = vrot.slane %v3248, 4
      %v3251 = vshll.u32 %v3244, 16
      %v3253 = vrot.slane %v3251, 5
      %v3254 = vor.u32 %v3250, %v3253
      %v3255 = vrot.slane %v3254, 4
      %v3257 = vshll.u32 %v3245, 16
      %v3259 = vrot.slane %v3257, 5
      %v3260 = vsel %vm1023, %v3255, %v3259
      %v3261 = vshrl.u32 %v3245, 16
      %v3263 = vrot.slane %v3261, 4
      %v3264 = vor.u32 %v3263, %v3259
      %v3265 = vrot.slane %v3264, 4
      %v3267 = vshll.u32 %v3246, 16
      %v3269 = vrot.slane %v3267, 5
      %v3270 = vsel %vm1023, %v3265, %v3269
      %3271 = vrot.lane.b32.xlu0 %v3260, 96
      %v3272 = vpop.permute.xlu0 %3271
      %3273 = vrot.lane.b32.xlu0 %v3270, 96
      %v3274 = vpop.permute.xlu0 %3273
      %3277 = vst.msk [vmem:[#allocation3 + $0x4c] sm:$0xf] %vm1932, %v3272
      %3278 = vst.msk [vmem:[#allocation3 + $0x58] sm:$0xf] %vm1932, %v3274
      %v3279 = vld [vmem:[#allocation2 + $0x48] sm:$0xf]
      %v3280 = vld [vmem:[#allocation2 + $0x4c] sm:$0xf]
      %v3281 = vld [vmem:[#allocation2 + $0x50] sm:$0x1]
      %v3283 = vshrl.u32 %v3279, 16
      %v3285 = vrot.slane %v3283, 4
      %v3286 = vshll.u32 %v3279, 16
      %v3288 = vrot.slane %v3286, 5
      %v3289 = vor.u32 %v3285, %v3288
      %v3290 = vrot.slane %v3289, 4
      %v3292 = vshll.u32 %v3280, 16
      %v3294 = vrot.slane %v3292, 5
      %v3295 = vsel %vm1023, %v3290, %v3294
      %v3296 = vshrl.u32 %v3280, 16
      %v3298 = vrot.slane %v3296, 4
      %v3299 = vor.u32 %v3298, %v3294
      %v3300 = vrot.slane %v3299, 4
      %v3302 = vshll.u32 %v3281, 16
      %v3304 = vrot.slane %v3302, 5
      %v3305 = vsel %vm1023, %v3300, %v3304
      %3306 = vrot.lane.b32.xlu0 %v3295, 96
      %v3307 = vpop.permute.xlu0 %3306
      %3308 = vrot.lane.b32.xlu0 %v3305, 96
      %v3309 = vpop.permute.xlu0 %3308
      %3312 = vst.msk [vmem:[#allocation3 + $0x64] sm:$0xf] %vm1932, %v3307
      %3313 = vst.msk [vmem:[#allocation3 + $0x70] sm:$0xf] %vm1932, %v3309
      %v3314 = vld [vmem:[#allocation2 + $0x54] sm:$0xf]
      %v3315 = vld [vmem:[#allocation2 + $0x58] sm:$0xf]
      %v3316 = vld [vmem:[#allocation2 + $0x5c] sm:$0x1]
      %v3318 = vshrl.u32 %v3314, 16
      %v3320 = vrot.slane %v3318, 4
      %v3321 = vshll.u32 %v3314, 16
      %v3323 = vrot.slane %v3321, 5
      %v3324 = vor.u32 %v3320, %v3323
      %v3325 = vrot.slane %v3324, 4
      %v3327 = vshll.u32 %v3315, 16
      %v3329 = vrot.slane %v3327, 5
      %v3330 = vsel %vm1023, %v3325, %v3329
      %v3331 = vshrl.u32 %v3315, 16
      %v3333 = vrot.slane %v3331, 4
      %v3334 = vor.u32 %v3333, %v3329
      %v3335 = vrot.slane %v3334, 4
      %v3337 = vshll.u32 %v3316, 16
      %v3339 = vrot.slane %v3337, 5
      %v3340 = vsel %vm1023, %v3335, %v3339
      %3341 = vrot.lane.b32.xlu0 %v3330, 96
      %v3342 = vpop.permute.xlu0 %3341
      %3343 = vrot.lane.b32.xlu0 %v3340, 96
      %v3344 = vpop.permute.xlu0 %3343
      %3347 = vst.msk [vmem:[#allocation3 + $0x7c] sm:$0xf] %vm1932, %v3342
      %3348 = vst.msk [vmem:[#allocation3 + $0x88] sm:$0xf] %vm1932, %v3344
      %v3349 = vld [vmem:[#allocation2 + $0x60] sm:$0xf]
      %v3350 = vld [vmem:[#allocation2 + $0x64] sm:$0xf]
      %v3351 = vld [vmem:[#allocation2 + $0x68] sm:$0x1]
      %v3353 = vshrl.u32 %v3349, 16
      %v3355 = vrot.slane %v3353, 4
      %v3356 = vshll.u32 %v3349, 16
      %v3358 = vrot.slane %v3356, 5
      %v3359 = vor.u32 %v3355, %v3358
      %v3360 = vrot.slane %v3359, 4
      %v3362 = vshll.u32 %v3350, 16
      %v3364 = vrot.slane %v3362, 5
      %v3365 = vsel %vm1023, %v3360, %v3364
      %v3366 = vshrl.u32 %v3350, 16
      %v3368 = vrot.slane %v3366, 4
      %v3369 = vor.u32 %v3368, %v3364
      %v3370 = vrot.slane %v3369, 4
      %v3372 = vshll.u32 %v3351, 16
      %v3374 = vrot.slane %v3372, 5
      %v3375 = vsel %vm1023, %v3370, %v3374
      %3376 = vrot.lane.b32.xlu0 %v3365, 96
      %v3377 = vpop.permute.xlu0 %3376
      %3378 = vrot.lane.b32.xlu0 %v3375, 96
      %v3379 = vpop.permute.xlu0 %3378
      %3382 = vst.msk [vmem:[#allocation3 + $0x94] sm:$0xf] %vm1932, %v3377
      %3383 = vst.msk [vmem:[#allocation3 + $0xa0] sm:$0xf] %vm1932, %v3379
      %v3384 = vld [vmem:[#allocation2 + $0x6c] sm:$0xf]
      %v3385 = vld [vmem:[#allocation2 + $0x70] sm:$0xf]
      %v3386 = vld [vmem:[#allocation2 + $0x74] sm:$0x1]
      %v3388 = vshrl.u32 %v3384, 16
      %v3390 = vrot.slane %v3388, 4
      %v3391 = vshll.u32 %v3384, 16
      %v3393 = vrot.slane %v3391, 5
      %v3394 = vor.u32 %v3390, %v3393
      %v3395 = vrot.slane %v3394, 4
      %v3397 = vshll.u32 %v3385, 16
      %v3399 = vrot.slane %v3397, 5
      %v3400 = vsel %vm1023, %v3395, %v3399
      %v3401 = vshrl.u32 %v3385, 16
      %v3403 = vrot.slane %v3401, 4
      %v3404 = vor.u32 %v3403, %v3399
      %v3405 = vrot.slane %v3404, 4
      %v3407 = vshll.u32 %v3386, 16
      %v3409 = vrot.slane %v3407, 5
      %v3410 = vsel %vm1023, %v3405, %v3409
      %3411 = vrot.lane.b32.xlu0 %v3400, 96
      %v3412 = vpop.permute.xlu0 %3411
      %3413 = vrot.lane.b32.xlu0 %v3410, 96
      %v3414 = vpop.permute.xlu0 %3413
      %3417 = vst.msk [vmem:[#allocation3 + $0xac] sm:$0xf] %vm1932, %v3412
      %3418 = vst.msk [vmem:[#allocation3 + $0xb8] sm:$0xf] %vm1932, %v3414
      %v3419 = vld [vmem:[#allocation2 + $0x78] sm:$0xf]
      %v3420 = vld [vmem:[#allocation2 + $0x7c] sm:$0xf]
      %v3421 = vld [vmem:[#allocation2 + $0x80] sm:$0x1]
      %v3423 = vshrl.u32 %v3419, 16
      %v3425 = vrot.slane %v3423, 4
      %v3426 = vshll.u32 %v3419, 16
      %v3428 = vrot.slane %v3426, 5
      %v3429 = vor.u32 %v3425, %v3428
      %v3430 = vrot.slane %v3429, 4
      %v3432 = vshll.u32 %v3420, 16
      %v3434 = vrot.slane %v3432, 5
      %v3435 = vsel %vm1023, %v3430, %v3434
      %v3436 = vshrl.u32 %v3420, 16
      %v3438 = vrot.slane %v3436, 4
      %v3439 = vor.u32 %v3438, %v3434
      %v3440 = vrot.slane %v3439, 4
      %v3442 = vshll.u32 %v3421, 16
      %v3444 = vrot.slane %v3442, 5
      %v3445 = vsel %vm1023, %v3440, %v3444
      %3446 = vrot.lane.b32.xlu0 %v3435, 96
      %v3447 = vpop.permute.xlu0 %3446
      %3448 = vrot.lane.b32.xlu0 %v3445, 96
      %v3449 = vpop.permute.xlu0 %3448
      %3452 = vst.msk [vmem:[#allocation3 + $0xc4] sm:$0xf] %vm1932, %v3447
      %3453 = vst.msk [vmem:[#allocation3 + $0xd0] sm:$0xf] %vm1932, %v3449
      %v3454 = vld [vmem:[#allocation2 + $0x84] sm:$0xf]
      %v3455 = vld [vmem:[#allocation2 + $0x88] sm:$0xf]
      %v3456 = vld [vmem:[#allocation2 + $0x8c] sm:$0x1]
      %v3458 = vshrl.u32 %v3454, 16
      %v3460 = vrot.slane %v3458, 4
      %v3461 = vshll.u32 %v3454, 16
      %v3463 = vrot.slane %v3461, 5
      %v3464 = vor.u32 %v3460, %v3463
      %v3465 = vrot.slane %v3464, 4
      %v3467 = vshll.u32 %v3455, 16
      %v3469 = vrot.slane %v3467, 5
      %v3470 = vsel %vm1023, %v3465, %v3469
      %v3471 = vshrl.u32 %v3455, 16
      %v3473 = vrot.slane %v3471, 4
      %v3474 = vor.u32 %v3473, %v3469
      %v3475 = vrot.slane %v3474, 4
      %v3477 = vshll.u32 %v3456, 16
      %v3479 = vrot.slane %v3477, 5
      %v3480 = vsel %vm1023, %v3475, %v3479
      %3481 = vrot.lane.b32.xlu0 %v3470, 96
      %v3482 = vpop.permute.xlu0 %3481
      %3483 = vrot.lane.b32.xlu0 %v3480, 96
      %v3484 = vpop.permute.xlu0 %3483
      %3487 = vst.msk [vmem:[#allocation3 + $0xdc] sm:$0xf] %vm1932, %v3482
      %3488 = vst.msk [vmem:[#allocation3 + $0xe8] sm:$0xf] %vm1932, %v3484
      %v3489 = vld [vmem:[#allocation2 + $0x90] sm:$0xf]
      %v3490 = vld [vmem:[#allocation2 + $0x94] sm:$0xf]
      %v3491 = vld [vmem:[#allocation2 + $0x98] sm:$0x1]
      %v3493 = vshrl.u32 %v3489, 16
      %v3495 = vrot.slane %v3493, 4
      %v3496 = vshll.u32 %v3489, 16
      %v3498 = vrot.slane %v3496, 5
      %v3499 = vor.u32 %v3495, %v3498
      %v3500 = vrot.slane %v3499, 4
      %v3502 = vshll.u32 %v3490, 16
      %v3504 = vrot.slane %v3502, 5
      %v3505 = vsel %vm1023, %v3500, %v3504
      %v3506 = vshrl.u32 %v3490, 16
      %v3508 = vrot.slane %v3506, 4
      %v3509 = vor.u32 %v3508, %v3504
      %v3510 = vrot.slane %v3509, 4
      %v3512 = vshll.u32 %v3491, 16
      %v3514 = vrot.slane %v3512, 5
      %v3515 = vsel %vm1023, %v3510, %v3514
      %3516 = vrot.lane.b32.xlu0 %v3505, 96
      %v3517 = vpop.permute.xlu0 %3516
      %3518 = vrot.lane.b32.xlu0 %v3515, 96
      %v3519 = vpop.permute.xlu0 %3518
      %3522 = vst.msk [vmem:[#allocation3 + $0xf4] sm:$0xf] %vm1932, %v3517
      %3523 = vst.msk [vmem:[#allocation3 + $0x100] sm:$0xf] %vm1932, %v3519
      %v3524 = vld [vmem:[#allocation2 + $0x9c] sm:$0xf]
      %v3525 = vld [vmem:[#allocation2 + $0xa0] sm:$0xf]
      %v3526 = vld [vmem:[#allocation2 + $0xa4] sm:$0x1]
      %v3528 = vshrl.u32 %v3524, 16
      %v3530 = vrot.slane %v3528, 4
      %v3531 = vshll.u32 %v3524, 16
      %v3533 = vrot.slane %v3531, 5
      %v3534 = vor.u32 %v3530, %v3533
      %v3535 = vrot.slane %v3534, 4
      %v3537 = vshll.u32 %v3525, 16
      %v3539 = vrot.slane %v3537, 5
      %v3540 = vsel %vm1023, %v3535, %v3539
      %v3541 = vshrl.u32 %v3525, 16
      %v3543 = vrot.slane %v3541, 4
      %v3544 = vor.u32 %v3543, %v3539
      %v3545 = vrot.slane %v3544, 4
      %v3547 = vshll.u32 %v3526, 16
      %v3549 = vrot.slane %v3547, 5
      %v3550 = vsel %vm1023, %v3545, %v3549
      %3551 = vrot.lane.b32.xlu0 %v3540, 96
      %v3552 = vpop.permute.xlu0 %3551
      %3553 = vrot.lane.b32.xlu0 %v3550, 96
      %v3554 = vpop.permute.xlu0 %3553
      %3557 = vst.msk [vmem:[#allocation3 + $0x10c] sm:$0xf] %vm1932, %v3552
      %3558 = vst.msk [vmem:[#allocation3 + $0x118] sm:$0xf] %vm1932, %v3554
      %v3559 = vld [vmem:[#allocation2 + $0xa8] sm:$0xf]
      %v3560 = vld [vmem:[#allocation2 + $0xac] sm:$0xf]
      %v3561 = vld [vmem:[#allocation2 + $0xb0] sm:$0x1]
      %v3563 = vshrl.u32 %v3559, 16
      %v3565 = vrot.slane %v3563, 4
      %v3566 = vshll.u32 %v3559, 16
      %v3568 = vrot.slane %v3566, 5
      %v3569 = vor.u32 %v3565, %v3568
      %v3570 = vrot.slane %v3569, 4
      %v3572 = vshll.u32 %v3560, 16
      %v3574 = vrot.slane %v3572, 5
      %v3575 = vsel %vm1023, %v3570, %v3574
      %v3576 = vshrl.u32 %v3560, 16
      %v3578 = vrot.slane %v3576, 4
      %v3579 = vor.u32 %v3578, %v3574
      %v3580 = vrot.slane %v3579, 4
      %v3582 = vshll.u32 %v3561, 16
      %v3584 = vrot.slane %v3582, 5
      %v3585 = vsel %vm1023, %v3580, %v3584
      %3586 = vrot.lane.b32.xlu0 %v3575, 96
      %v3587 = vpop.permute.xlu0 %3586
      %3588 = vrot.lane.b32.xlu0 %v3585, 96
      %v3589 = vpop.permute.xlu0 %3588
      %3592 = vst.msk [vmem:[#allocation3 + $0x124] sm:$0xf] %vm1932, %v3587
      %3593 = vst.msk [vmem:[#allocation3 + $0x130] sm:$0xf] %vm1932, %v3589
      %v3594 = vld [vmem:[#allocation2 + $0xb4] sm:$0xf]
      %v3595 = vld [vmem:[#allocation2 + $0xb8] sm:$0xf]
      %v3596 = vld [vmem:[#allocation2 + $0xbc] sm:$0x1]
      %v3598 = vshrl.u32 %v3594, 16
      %v3600 = vrot.slane %v3598, 4
      %v3601 = vshll.u32 %v3594, 16
      %v3603 = vrot.slane %v3601, 5
      %v3604 = vor.u32 %v3600, %v3603
      %v3605 = vrot.slane %v3604, 4
      %v3607 = vshll.u32 %v3595, 16
      %v3609 = vrot.slane %v3607, 5
      %v3610 = vsel %vm1023, %v3605, %v3609
      %v3611 = vshrl.u32 %v3595, 16
      %v3613 = vrot.slane %v3611, 4
      %v3614 = vor.u32 %v3613, %v3609
      %v3615 = vrot.slane %v3614, 4
      %v3617 = vshll.u32 %v3596, 16
      %v3619 = vrot.slane %v3617, 5
      %v3620 = vsel %vm1023, %v3615, %v3619
      %3621 = vrot.lane.b32.xlu0 %v3610, 96
      %v3622 = vpop.permute.xlu0 %3621
      %3623 = vrot.lane.b32.xlu0 %v3620, 96
      %v3624 = vpop.permute.xlu0 %3623
      %3627 = vst.msk [vmem:[#allocation3 + $0x13c] sm:$0xf] %vm1932, %v3622
      %3628 = vst.msk [vmem:[#allocation3 + $0x148] sm:$0xf] %vm1932, %v3624
      %v3629 = vld [vmem:[#allocation2 + $0xc0] sm:$0xf]
      %v3630 = vld [vmem:[#allocation2 + $0xc4] sm:$0xf]
      %v3631 = vld [vmem:[#allocation2 + $0xc8] sm:$0x1]
      %v3633 = vshrl.u32 %v3629, 16
      %v3635 = vrot.slane %v3633, 4
      %v3636 = vshll.u32 %v3629, 16
      %v3638 = vrot.slane %v3636, 5
      %v3639 = vor.u32 %v3635, %v3638
      %v3640 = vrot.slane %v3639, 4
      %v3642 = vshll.u32 %v3630, 16
      %v3644 = vrot.slane %v3642, 5
      %v3645 = vsel %vm1023, %v3640, %v3644
      %v3646 = vshrl.u32 %v3630, 16
      %v3648 = vrot.slane %v3646, 4
      %v3649 = vor.u32 %v3648, %v3644
      %v3650 = vrot.slane %v3649, 4
      %v3652 = vshll.u32 %v3631, 16
      %v3654 = vrot.slane %v3652, 5
      %v3655 = vsel %vm1023, %v3650, %v3654
      %3656 = vrot.lane.b32.xlu0 %v3645, 96
      %v3657 = vpop.permute.xlu0 %3656
      %3658 = vrot.lane.b32.xlu0 %v3655, 96
      %v3659 = vpop.permute.xlu0 %3658
      %3662 = vst.msk [vmem:[#allocation3 + $0x154] sm:$0xf] %vm1932, %v3657
      %3663 = vst.msk [vmem:[#allocation3 + $0x160] sm:$0xf] %vm1932, %v3659
      %v3664 = vld [vmem:[#allocation2 + $0xcc] sm:$0xf]
      %v3665 = vld [vmem:[#allocation2 + $0xd0] sm:$0xf]
      %v3666 = vld [vmem:[#allocation2 + $0xd4] sm:$0x1]
      %v3668 = vshrl.u32 %v3664, 16
      %v3670 = vrot.slane %v3668, 4
      %v3671 = vshll.u32 %v3664, 16
      %v3673 = vrot.slane %v3671, 5
      %v3674 = vor.u32 %v3670, %v3673
      %v3675 = vrot.slane %v3674, 4
      %v3677 = vshll.u32 %v3665, 16
      %v3679 = vrot.slane %v3677, 5
      %v3680 = vsel %vm1023, %v3675, %v3679
      %v3681 = vshrl.u32 %v3665, 16
      %v3683 = vrot.slane %v3681, 4
      %v3684 = vor.u32 %v3683, %v3679
      %v3685 = vrot.slane %v3684, 4
      %v3687 = vshll.u32 %v3666, 16
      %v3689 = vrot.slane %v3687, 5
      %v3690 = vsel %vm1023, %v3685, %v3689
      %3691 = vrot.lane.b32.xlu0 %v3680, 96
      %v3692 = vpop.permute.xlu0 %3691
      %3693 = vrot.lane.b32.xlu0 %v3690, 96
      %v3694 = vpop.permute.xlu0 %3693
      %3697 = vst.msk [vmem:[#allocation3 + $0x16c] sm:$0xf] %vm1932, %v3692
      %3698 = vst.msk [vmem:[#allocation3 + $0x178] sm:$0xf] %vm1932, %v3694
      %v3699 = vld [vmem:[#allocation2 + $0x18] sm:$0xe]
      %v3700 = vld [vmem:[#allocation2 + $0x1c] sm:$0xf]
      %v3701 = vld [vmem:[#allocation2 + $0x20] sm:$0x1]
      %v3705 = vrot.slane %v3699, 5
      %v3706 = vrot.slane %v3705, 4
      %v3707 = vrot.slane %v3700, 5
      %v3708 = vsel %vm1590, %v3706, %v3707
      %v3709 = vrot.slane %v3707, 4
      %v3710 = vrot.slane %v3701, 5
      %v3711 = vsel %vm1590, %v3709, %v3710
      %3714 = vst.msk [vmem:[#allocation3 + $0x8] sm:$0xf] %vm542, %v3708
      %3715 = vst.msk [vmem:[#allocation3 + $0x14] sm:$0xf] %vm542, %v3711
      %v3716 = vld [vmem:[#allocation2 + $0x24] sm:$0xe]
      %v3717 = vld [vmem:[#allocation2 + $0x28] sm:$0xf]
      %v3718 = vld [vmem:[#allocation2 + $0x2c] sm:$0x1]
      %v3722 = vrot.slane %v3716, 5
      %v3723 = vrot.slane %v3722, 4
      %v3724 = vrot.slane %v3717, 5
      %v3725 = vsel %vm1590, %v3723, %v3724
      %v3726 = vrot.slane %v3724, 4
      %v3727 = vrot.slane %v3718, 5
      %v3728 = vsel %vm1590, %v3726, %v3727
      %3731 = vst.msk [vmem:[#allocation3 + $0x20] sm:$0xf] %vm542, %v3725
      %3732 = vst.msk [vmem:[#allocation3 + $0x2c] sm:$0xf] %vm542, %v3728
      %v3733 = vld [vmem:[#allocation2 + $0x30] sm:$0xe]
      %v3734 = vld [vmem:[#allocation2 + $0x34] sm:$0xf]
      %v3735 = vld [vmem:[#allocation2 + $0x38] sm:$0x1]
      %v3739 = vrot.slane %v3733, 5
      %v3740 = vrot.slane %v3739, 4
      %v3741 = vrot.slane %v3734, 5
      %v3742 = vsel %vm1590, %v3740, %v3741
      %v3743 = vrot.slane %v3741, 4
      %v3744 = vrot.slane %v3735, 5
      %v3745 = vsel %vm1590, %v3743, %v3744
      %3748 = vst.msk [vmem:[#allocation3 + $0x38] sm:$0xf] %vm542, %v3742
      %3749 = vst.msk [vmem:[#allocation3 + $0x44] sm:$0xf] %vm542, %v3745
      %v3750 = vld [vmem:[#allocation2 + $0x3c] sm:$0xe]
      %v3751 = vld [vmem:[#allocation2 + $0x40] sm:$0xf]
      %v3752 = vld [vmem:[#allocation2 + $0x44] sm:$0x1]
      %v3756 = vrot.slane %v3750, 5
      %v3757 = vrot.slane %v3756, 4
      %v3758 = vrot.slane %v3751, 5
      %v3759 = vsel %vm1590, %v3757, %v3758
      %v3760 = vrot.slane %v3758, 4
      %v3761 = vrot.slane %v3752, 5
      %v3762 = vsel %vm1590, %v3760, %v3761
      %3765 = vst.msk [vmem:[#allocation3 + $0x50] sm:$0xf] %vm542, %v3759
      %3766 = vst.msk [vmem:[#allocation3 + $0x5c] sm:$0xf] %vm542, %v3762
      %v3767 = vld [vmem:[#allocation2 + $0x48] sm:$0xe]
      %v3768 = vld [vmem:[#allocation2 + $0x4c] sm:$0xf]
      %v3769 = vld [vmem:[#allocation2 + $0x50] sm:$0x1]
      %v3773 = vrot.slane %v3767, 5
      %v3774 = vrot.slane %v3773, 4
      %v3775 = vrot.slane %v3768, 5
      %v3776 = vsel %vm1590, %v3774, %v3775
      %v3777 = vrot.slane %v3775, 4
      %v3778 = vrot.slane %v3769, 5
      %v3779 = vsel %vm1590, %v3777, %v3778
      %3782 = vst.msk [vmem:[#allocation3 + $0x68] sm:$0xf] %vm542, %v3776
      %3783 = vst.msk [vmem:[#allocation3 + $0x74] sm:$0xf] %vm542, %v3779
      %v3784 = vld [vmem:[#allocation2 + $0x54] sm:$0xe]
      %v3785 = vld [vmem:[#allocation2 + $0x58] sm:$0xf]
      %v3786 = vld [vmem:[#allocation2 + $0x5c] sm:$0x1]
      %v3790 = vrot.slane %v3784, 5
      %v3791 = vrot.slane %v3790, 4
      %v3792 = vrot.slane %v3785, 5
      %v3793 = vsel %vm1590, %v3791, %v3792
      %v3794 = vrot.slane %v3792, 4
      %v3795 = vrot.slane %v3786, 5
      %v3796 = vsel %vm1590, %v3794, %v3795
      %3799 = vst.msk [vmem:[#allocation3 + $0x80] sm:$0xf] %vm542, %v3793
      %3800 = vst.msk [vmem:[#allocation3 + $0x8c] sm:$0xf] %vm542, %v3796
      %v3801 = vld [vmem:[#allocation2 + $0x60] sm:$0xe]
      %v3802 = vld [vmem:[#allocation2 + $0x64] sm:$0xf]
      %v3803 = vld [vmem:[#allocation2 + $0x68] sm:$0x1]
      %v3807 = vrot.slane %v3801, 5
      %v3808 = vrot.slane %v3807, 4
      %v3809 = vrot.slane %v3802, 5
      %v3810 = vsel %vm1590, %v3808, %v3809
      %v3811 = vrot.slane %v3809, 4
      %v3812 = vrot.slane %v3803, 5
      %v3813 = vsel %vm1590, %v3811, %v3812
      %3816 = vst.msk [vmem:[#allocation3 + $0x98] sm:$0xf] %vm542, %v3810
      %3817 = vst.msk [vmem:[#allocation3 + $0xa4] sm:$0xf] %vm542, %v3813
      %v3818 = vld [vmem:[#allocation2 + $0x6c] sm:$0xe]
      %v3819 = vld [vmem:[#allocation2 + $0x70] sm:$0xf]
      %v3820 = vld [vmem:[#allocation2 + $0x74] sm:$0x1]
      %v3824 = vrot.slane %v3818, 5
      %v3825 = vrot.slane %v3824, 4
      %v3826 = vrot.slane %v3819, 5
      %v3827 = vsel %vm1590, %v3825, %v3826
      %v3828 = vrot.slane %v3826, 4
      %v3829 = vrot.slane %v3820, 5
      %v3830 = vsel %vm1590, %v3828, %v3829
      %3833 = vst.msk [vmem:[#allocation3 + $0xb0] sm:$0xf] %vm542, %v3827
      %3834 = vst.msk [vmem:[#allocation3 + $0xbc] sm:$0xf] %vm542, %v3830
      %v3835 = vld [vmem:[#allocation2 + $0x78] sm:$0xe]
      %v3836 = vld [vmem:[#allocation2 + $0x7c] sm:$0xf]
      %v3837 = vld [vmem:[#allocation2 + $0x80] sm:$0x1]
      %v3841 = vrot.slane %v3835, 5
      %v3842 = vrot.slane %v3841, 4
      %v3843 = vrot.slane %v3836, 5
      %v3844 = vsel %vm1590, %v3842, %v3843
      %v3845 = vrot.slane %v3843, 4
      %v3846 = vrot.slane %v3837, 5
      %v3847 = vsel %vm1590, %v3845, %v3846
      %3850 = vst.msk [vmem:[#allocation3 + $0xc8] sm:$0xf] %vm542, %v3844
      %3851 = vst.msk [vmem:[#allocation3 + $0xd4] sm:$0xf] %vm542, %v3847
      %v3852 = vld [vmem:[#allocation2 + $0x84] sm:$0xe]
      %v3853 = vld [vmem:[#allocation2 + $0x88] sm:$0xf]
      %v3854 = vld [vmem:[#allocation2 + $0x8c] sm:$0x1]
      %v3858 = vrot.slane %v3852, 5
      %v3859 = vrot.slane %v3858, 4
      %v3860 = vrot.slane %v3853, 5
      %v3861 = vsel %vm1590, %v3859, %v3860
      %v3862 = vrot.slane %v3860, 4
      %v3863 = vrot.slane %v3854, 5
      %v3864 = vsel %vm1590, %v3862, %v3863
      %3867 = vst.msk [vmem:[#allocation3 + $0xe0] sm:$0xf] %vm542, %v3861
      %3868 = vst.msk [vmem:[#allocation3 + $0xec] sm:$0xf] %vm542, %v3864
      %v3869 = vld [vmem:[#allocation2 + $0x90] sm:$0xe]
      %v3870 = vld [vmem:[#allocation2 + $0x94] sm:$0xf]
      %v3871 = vld [vmem:[#allocation2 + $0x98] sm:$0x1]
      %v3875 = vrot.slane %v3869, 5
      %v3876 = vrot.slane %v3875, 4
      %v3877 = vrot.slane %v3870, 5
      %v3878 = vsel %vm1590, %v3876, %v3877
      %v3879 = vrot.slane %v3877, 4
      %v3880 = vrot.slane %v3871, 5
      %v3881 = vsel %vm1590, %v3879, %v3880
      %3884 = vst.msk [vmem:[#allocation3 + $0xf8] sm:$0xf] %vm542, %v3878
      %3885 = vst.msk [vmem:[#allocation3 + $0x104] sm:$0xf] %vm542, %v3881
      %v3886 = vld [vmem:[#allocation2 + $0x9c] sm:$0xe]
      %v3887 = vld [vmem:[#allocation2 + $0xa0] sm:$0xf]
      %v3888 = vld [vmem:[#allocation2 + $0xa4] sm:$0x1]
      %v3892 = vrot.slane %v3886, 5
      %v3893 = vrot.slane %v3892, 4
      %v3894 = vrot.slane %v3887, 5
      %v3895 = vsel %vm1590, %v3893, %v3894
      %v3896 = vrot.slane %v3894, 4
      %v3897 = vrot.slane %v3888, 5
      %v3898 = vsel %vm1590, %v3896, %v3897
      %3901 = vst.msk [vmem:[#allocation3 + $0x110] sm:$0xf] %vm542, %v3895
      %3902 = vst.msk [vmem:[#allocation3 + $0x11c] sm:$0xf] %vm542, %v3898
      %v3903 = vld [vmem:[#allocation2 + $0xa8] sm:$0xe]
      %v3904 = vld [vmem:[#allocation2 + $0xac] sm:$0xf]
      %v3905 = vld [vmem:[#allocation2 + $0xb0] sm:$0x1]
      %v3909 = vrot.slane %v3903, 5
      %v3910 = vrot.slane %v3909, 4
      %v3911 = vrot.slane %v3904, 5
      %v3912 = vsel %vm1590, %v3910, %v3911
      %v3913 = vrot.slane %v3911, 4
      %v3914 = vrot.slane %v3905, 5
      %v3915 = vsel %vm1590, %v3913, %v3914
      %3918 = vst.msk [vmem:[#allocation3 + $0x128] sm:$0xf] %vm542, %v3912
      %3919 = vst.msk [vmem:[#allocation3 + $0x134] sm:$0xf] %vm542, %v3915
      %v3920 = vld [vmem:[#allocation2 + $0xb4] sm:$0xe]
      %v3921 = vld [vmem:[#allocation2 + $0xb8] sm:$0xf]
      %v3922 = vld [vmem:[#allocation2 + $0xbc] sm:$0x1]
      %v3926 = vrot.slane %v3920, 5
      %v3927 = vrot.slane %v3926, 4
      %v3928 = vrot.slane %v3921, 5
      %v3929 = vsel %vm1590, %v3927, %v3928
      %v3930 = vrot.slane %v3928, 4
      %v3931 = vrot.slane %v3922, 5
      %v3932 = vsel %vm1590, %v3930, %v3931
      %3935 = vst.msk [vmem:[#allocation3 + $0x140] sm:$0xf] %vm542, %v3929
      %3936 = vst.msk [vmem:[#allocation3 + $0x14c] sm:$0xf] %vm542, %v3932
      %v3937 = vld [vmem:[#allocation2 + $0xc0] sm:$0xe]
      %v3938 = vld [vmem:[#allocation2 + $0xc4] sm:$0xf]
      %v3939 = vld [vmem:[#allocation2 + $0xc8] sm:$0x1]
      %v3943 = vrot.slane %v3937, 5
      %v3944 = vrot.slane %v3943, 4
      %v3945 = vrot.slane %v3938, 5
      %v3946 = vsel %vm1590, %v3944, %v3945
      %v3947 = vrot.slane %v3945, 4
      %v3948 = vrot.slane %v3939, 5
      %v3949 = vsel %vm1590, %v3947, %v3948
      %3952 = vst.msk [vmem:[#allocation3 + $0x158] sm:$0xf] %vm542, %v3946
      %3953 = vst.msk [vmem:[#allocation3 + $0x164] sm:$0xf] %vm542, %v3949
      %v3954 = vld [vmem:[#allocation2 + $0xcc] sm:$0xe]
      %v3955 = vld [vmem:[#allocation2 + $0xd0] sm:$0xf]
      %v3956 = vld [vmem:[#allocation2 + $0xd4] sm:$0x1]
      %v3960 = vrot.slane %v3954, 5
      %v3961 = vrot.slane %v3960, 4
      %v3962 = vrot.slane %v3955, 5
      %v3963 = vsel %vm1590, %v3961, %v3962
      %v3964 = vrot.slane %v3962, 4
      %v3965 = vrot.slane %v3956, 5
      %v3966 = vsel %vm1590, %v3964, %v3965
      %3969 = vst.msk [vmem:[#allocation3 + $0x170] sm:$0xf] %vm542, %v3963
      %3970 = vst.msk [vmem:[#allocation3 + $0x17c] sm:$0xf] %vm542, %v3966
      %v3971 = vld [vmem:[#allocation3] sm:$0xff]
      %v3972 = vld [vmem:[#allocation3 + $0x8] sm:$0xf]
      %v3973 = vld [vmem:[#allocation3 + $0xc] sm:$0xff]
      %v3974 = vld [vmem:[#allocation3 + $0x14] sm:$0xf]
      %v3975 = vld [vmem:[#allocation3 + $0x18] sm:$0xff]
      %v3976 = vld [vmem:[#allocation3 + $0x20] sm:$0xf]
      %v3977 = vld [vmem:[#allocation3 + $0x24] sm:$0xff]
      %v3978 = vld [vmem:[#allocation3 + $0x2c] sm:$0xf]
      %v3979 = vld [vmem:[#allocation3 + $0x30] sm:$0xff]
      %v3980 = vld [vmem:[#allocation3 + $0x38] sm:$0xf]
      %v3981 = vld [vmem:[#allocation3 + $0x3c] sm:$0xff]
      %v3982 = vld [vmem:[#allocation3 + $0x44] sm:$0xf]
      %v3983 = vld [vmem:[#allocation3 + $0x48] sm:$0xff]
      %v3984 = vld [vmem:[#allocation3 + $0x50] sm:$0xf]
      %v3985 = vld [vmem:[#allocation3 + $0x54] sm:$0xff]
      %v3986 = vld [vmem:[#allocation3 + $0x5c] sm:$0xf]
      %v3987 = vld [vmem:[#allocation3 + $0x60] sm:$0xff]
      %v3988 = vld [vmem:[#allocation3 + $0x68] sm:$0xf]
      %v3989 = vld [vmem:[#allocation3 + $0x6c] sm:$0xff]
      %v3990 = vld [vmem:[#allocation3 + $0x74] sm:$0xf]
      %v3991 = vld [vmem:[#allocation3 + $0x78] sm:$0xff]
      %v3992 = vld [vmem:[#allocation3 + $0x80] sm:$0xf]
      %v3993 = vld [vmem:[#allocation3 + $0x84] sm:$0xff]
      %v3994 = vld [vmem:[#allocation3 + $0x8c] sm:$0xf]
      %v3995 = vld [vmem:[#allocation3 + $0x90] sm:$0xff]
      %v3996 = vld [vmem:[#allocation3 + $0x98] sm:$0xf]
      %v3997 = vld [vmem:[#allocation3 + $0x9c] sm:$0xff]
      %v3998 = vld [vmem:[#allocation3 + $0xa4] sm:$0xf]
      %v3999 = vld [vmem:[#allocation3 + $0xa8] sm:$0xff]
      %v4000 = vld [vmem:[#allocation3 + $0xb0] sm:$0xf]
      %v4001 = vld [vmem:[#allocation3 + $0xb4] sm:$0xff]
      %v4002 = vld [vmem:[#allocation3 + $0xbc] sm:$0xf]
      %v4003 = vld [vmem:[#allocation3 + $0xc0] sm:$0xff]
      %v4004 = vld [vmem:[#allocation3 + $0xc8] sm:$0xf]
      %v4005 = vld [vmem:[#allocation3 + $0xcc] sm:$0xff]
      %v4006 = vld [vmem:[#allocation3 + $0xd4] sm:$0xf]
      %v4007 = vld [vmem:[#allocation3 + $0xd8] sm:$0xff]
      %v4008 = vld [vmem:[#allocation3 + $0xe0] sm:$0xf]
      %v4009 = vld [vmem:[#allocation3 + $0xe4] sm:$0xff]
      %v4010 = vld [vmem:[#allocation3 + $0xec] sm:$0xf]
      %v4011 = vld [vmem:[#allocation3 + $0xf0] sm:$0xff]
      %v4012 = vld [vmem:[#allocation3 + $0xf8] sm:$0xf]
      %v4013 = vld [vmem:[#allocation3 + $0xfc] sm:$0xff]
      %v4014 = vld [vmem:[#allocation3 + $0x104] sm:$0xf]
      %v4015 = vld [vmem:[#allocation3 + $0x108] sm:$0xff]
      %v4016 = vld [vmem:[#allocation3 + $0x110] sm:$0xf]
      %v4017 = vld [vmem:[#allocation3 + $0x114] sm:$0xff]
      %v4018 = vld [vmem:[#allocation3 + $0x11c] sm:$0xf]
      %v4019 = vld [vmem:[#allocation3 + $0x120] sm:$0xff]
      %v4020 = vld [vmem:[#allocation3 + $0x128] sm:$0xf]
      %v4021 = vld [vmem:[#allocation3 + $0x12c] sm:$0xff]
      %v4022 = vld [vmem:[#allocation3 + $0x134] sm:$0xf]
      %v4023 = vld [vmem:[#allocation3 + $0x138] sm:$0xff]
      %v4024 = vld [vmem:[#allocation3 + $0x140] sm:$0xf]
      %v4025 = vld [vmem:[#allocation3 + $0x144] sm:$0xff]
      %v4026 = vld [vmem:[#allocation3 + $0x14c] sm:$0xf]
      %v4027 = vld [vmem:[#allocation3 + $0x150] sm:$0xff]
      %v4028 = vld [vmem:[#allocation3 + $0x158] sm:$0xf]
      %v4029 = vld [vmem:[#allocation3 + $0x15c] sm:$0xff]
      %v4030 = vld [vmem:[#allocation3 + $0x164] sm:$0xf]
      %v4031 = vld [vmem:[#allocation3 + $0x168] sm:$0xff]
      %v4032 = vld [vmem:[#allocation3 + $0x170] sm:$0xf]
      %v4033 = vld [vmem:[#allocation3 + $0x174] sm:$0xff]
      %v4034 = vld [vmem:[#allocation3 + $0x17c] sm:$0xf]
      %v4035 = vld [vmem:[%s3] sm:$0xf]
      %v4036 = vld [vmem:[%s3 + $0x4] sm:$0xf]
      %v4037 = vld [vmem:[%s3 + $0x8] sm:$0xf]
      %v4038 = vld [vmem:[%s3 + $0xc] sm:$0xf]
      %v4039 = vld [vmem:[%s3 + $0x10] sm:$0xf]
      %v4040 = vld [vmem:[%s3 + $0x14] sm:$0xf]
      %v4041 = vld [vmem:[%s3 + $0x18] sm:$0xf]
      %v4042 = vld [vmem:[%s3 + $0x1c] sm:$0xf]
      %v4043 = vld [vmem:[%s3 + $0x20] sm:$0xf]
      %v4044 = vld [vmem:[%s3 + $0x24] sm:$0xf]
      %v4045 = vld [vmem:[%s3 + $0x28] sm:$0xf]
      %v4046 = vld [vmem:[%s3 + $0x2c] sm:$0xf]
      %v4047 = vld [vmem:[%s3 + $0x30] sm:$0xf]
      %v4048 = vld [vmem:[%s3 + $0x34] sm:$0xf]
      %v4049 = vld [vmem:[%s3 + $0x38] sm:$0xf]
      %v4050 = vld [vmem:[%s3 + $0x3c] sm:$0xf]
      %v4051 = vld [vmem:[%s3 + $0x40] sm:$0xf]
      %v4052 = vld [vmem:[%s3 + $0x44] sm:$0xf]
      %v4053 = vld [vmem:[%s3 + $0x48] sm:$0xf]
      %v4054 = vld [vmem:[%s3 + $0x4c] sm:$0xf]
      %v4055 = vld [vmem:[%s3 + $0x50] sm:$0xf]
      %v4056 = vld [vmem:[%s3 + $0x54] sm:$0xf]
      %v4057 = vld [vmem:[%s3 + $0x58] sm:$0xf]
      %v4058 = vld [vmem:[%s3 + $0x5c] sm:$0xf]
      %v4059 = vld [vmem:[%s3 + $0x60] sm:$0xf]
      %v4060 = vld [vmem:[%s3 + $0x64] sm:$0xf]
      %v4061 = vld [vmem:[%s3 + $0x68] sm:$0xf]
      %v4062 = vld [vmem:[%s3 + $0x6c] sm:$0xf]
      %v4063 = vld [vmem:[%s3 + $0x70] sm:$0xf]
      %v4064 = vld [vmem:[%s3 + $0x74] sm:$0xf]
      %v4065 = vld [vmem:[%s3 + $0x78] sm:$0xf]
      %v4066 = vld [vmem:[%s3 + $0x7c] sm:$0xf]
      %v4067 = vld [vmem:[%s3 + $0x80] sm:$0xf]
      %v4068 = vld [vmem:[%s3 + $0x84] sm:$0xf]
      %v4069 = vld [vmem:[%s3 + $0x88] sm:$0xf]
      %v4070 = vld [vmem:[%s3 + $0x8c] sm:$0xf]
      %v4135 = vunpack.c.l.b16 %v3971
      %v4136 = vunpack.c.h.b16 %v3971
      %v4137 = vunpack.c.l.b16 %v3972
      %v4138 = vunpack.c.l.b16 %v3973
      %v4139 = vunpack.c.h.b16 %v3973
      %v4140 = vunpack.c.l.b16 %v3974
      %v4141 = vunpack.c.l.b16 %v3975
      %v4142 = vunpack.c.h.b16 %v3975
      %v4143 = vunpack.c.l.b16 %v3976
      %v4144 = vunpack.c.l.b16 %v3977
      %v4145 = vunpack.c.h.b16 %v3977
      %v4146 = vunpack.c.l.b16 %v3978
      %v4147 = vunpack.c.l.b16 %v3979
      %v4148 = vunpack.c.h.b16 %v3979
      %v4149 = vunpack.c.l.b16 %v3980
      %v4150 = vunpack.c.l.b16 %v3981
      %v4151 = vunpack.c.h.b16 %v3981
      %v4152 = vunpack.c.l.b16 %v3982
      %v4153 = vunpack.c.l.b16 %v3983
      %v4154 = vunpack.c.h.b16 %v3983
      %v4155 = vunpack.c.l.b16 %v3984
      %v4156 = vunpack.c.l.b16 %v3985
      %v4157 = vunpack.c.h.b16 %v3985
      %v4158 = vunpack.c.l.b16 %v3986
      %v4159 = vunpack.c.l.b16 %v3987
      %v4160 = vunpack.c.h.b16 %v3987
      %v4161 = vunpack.c.l.b16 %v3988
      %v4162 = vunpack.c.l.b16 %v3989
      %v4163 = vunpack.c.h.b16 %v3989
      %v4164 = vunpack.c.l.b16 %v3990
      %v4165 = vunpack.c.l.b16 %v3991
      %v4166 = vunpack.c.h.b16 %v3991
      %v4167 = vunpack.c.l.b16 %v3992
      %v4168 = vunpack.c.l.b16 %v3993
      %v4169 = vunpack.c.h.b16 %v3993
      %v4170 = vunpack.c.l.b16 %v3994
      %v4171 = vunpack.c.l.b16 %v3995
      %v4172 = vunpack.c.h.b16 %v3995
      %v4173 = vunpack.c.l.b16 %v3996
      %v4174 = vunpack.c.l.b16 %v3997
      %v4175 = vunpack.c.h.b16 %v3997
      %v4176 = vunpack.c.l.b16 %v3998
      %v4177 = vunpack.c.l.b16 %v3999
      %v4178 = vunpack.c.h.b16 %v3999
      %v4179 = vunpack.c.l.b16 %v4000
      %v4180 = vunpack.c.l.b16 %v4001
      %v4181 = vunpack.c.h.b16 %v4001
      %v4182 = vunpack.c.l.b16 %v4002
      %v4183 = vunpack.c.l.b16 %v4003
      %v4184 = vunpack.c.h.b16 %v4003
      %v4185 = vunpack.c.l.b16 %v4004
      %v4186 = vunpack.c.l.b16 %v4005
      %v4187 = vunpack.c.h.b16 %v4005
      %v4188 = vunpack.c.l.b16 %v4006
      %v4189 = vunpack.c.l.b16 %v4007
      %v4190 = vunpack.c.h.b16 %v4007
      %v4191 = vunpack.c.l.b16 %v4008
      %v4192 = vunpack.c.l.b16 %v4009
      %v4193 = vunpack.c.h.b16 %v4009
      %v4194 = vunpack.c.l.b16 %v4010
      %v4195 = vunpack.c.l.b16 %v4011
      %v4196 = vunpack.c.h.b16 %v4011
      %v4197 = vunpack.c.l.b16 %v4012
      %v4198 = vunpack.c.l.b16 %v4013
      %v4199 = vunpack.c.h.b16 %v4013
      %v4200 = vunpack.c.l.b16 %v4014
      %v4201 = vunpack.c.l.b16 %v4015
      %v4202 = vunpack.c.h.b16 %v4015
      %v4203 = vunpack.c.l.b16 %v4016
      %v4204 = vunpack.c.l.b16 %v4017
      %v4205 = vunpack.c.h.b16 %v4017
      %v4206 = vunpack.c.l.b16 %v4018
      %v4207 = vunpack.c.l.b16 %v4019
      %v4208 = vunpack.c.h.b16 %v4019
      %v4209 = vunpack.c.l.b16 %v4020
      %v4210 = vunpack.c.l.b16 %v4021
      %v4211 = vunpack.c.h.b16 %v4021
      %v4212 = vunpack.c.l.b16 %v4022
      %v4213 = vunpack.c.l.b16 %v4023
      %v4214 = vunpack.c.h.b16 %v4023
      %v4215 = vunpack.c.l.b16 %v4024
      %v4216 = vunpack.c.l.b16 %v4025
      %v4217 = vunpack.c.h.b16 %v4025
      %v4218 = vunpack.c.l.b16 %v4026
      %v4219 = vunpack.c.l.b16 %v4027
      %v4220 = vunpack.c.h.b16 %v4027
      %v4221 = vunpack.c.l.b16 %v4028
      %v4222 = vunpack.c.l.b16 %v4029
      %v4223 = vunpack.c.h.b16 %v4029
      %v4224 = vunpack.c.l.b16 %v4030
      %v4225 = vunpack.c.l.b16 %v4031
      %v4226 = vunpack.c.h.b16 %v4031
      %v4227 = vunpack.c.l.b16 %v4032
      %v4228 = vunpack.c.l.b16 %v4033
      %v4229 = vunpack.c.h.b16 %v4033
      %v4230 = vunpack.c.l.b16 %v4034
      %v4231 = vpack.c.b16 %v4138, %v4135
      %v4232 = vpack.c.b16 %v4139, %v4136
      %v4233 = vpack.c.b16 %v4140, %v4137
      %v4234 = vpack.c.b16 %v4144, %v4141
      %v4235 = vpack.c.b16 %v4145, %v4142
      %v4236 = vpack.c.b16 %v4146, %v4143
      %v4237 = vpack.c.b16 %v4150, %v4147
      %v4238 = vpack.c.b16 %v4151, %v4148
      %v4239 = vpack.c.b16 %v4152, %v4149
      %v4240 = vpack.c.b16 %v4156, %v4153
      %v4241 = vpack.c.b16 %v4157, %v4154
      %v4242 = vpack.c.b16 %v4158, %v4155
      %v4243 = vpack.c.b16 %v4162, %v4159
      %v4244 = vpack.c.b16 %v4163, %v4160
      %v4245 = vpack.c.b16 %v4164, %v4161
      %v4246 = vpack.c.b16 %v4168, %v4165
      %v4247 = vpack.c.b16 %v4169, %v4166
      %v4248 = vpack.c.b16 %v4170, %v4167
      %v4249 = vpack.c.b16 %v4174, %v4171
      %v4250 = vpack.c.b16 %v4175, %v4172
      %v4251 = vpack.c.b16 %v4176, %v4173
      %v4252 = vpack.c.b16 %v4180, %v4177
      %v4253 = vpack.c.b16 %v4181, %v4178
      %v4254 = vpack.c.b16 %v4182, %v4179
      %v4255 = vpack.c.b16 %v4186, %v4183
      %v4256 = vpack.c.b16 %v4187, %v4184
      %v4257 = vpack.c.b16 %v4188, %v4185
      %v4258 = vpack.c.b16 %v4192, %v4189
      %v4259 = vpack.c.b16 %v4193, %v4190
      %v4260 = vpack.c.b16 %v4194, %v4191
      %v4261 = vpack.c.b16 %v4198, %v4195
      %v4262 = vpack.c.b16 %v4199, %v4196
      %v4263 = vpack.c.b16 %v4200, %v4197
      %v4264 = vpack.c.b16 %v4204, %v4201
      %v4265 = vpack.c.b16 %v4205, %v4202
      %v4266 = vpack.c.b16 %v4206, %v4203
      %v4267 = vpack.c.b16 %v4210, %v4207
      %v4268 = vpack.c.b16 %v4211, %v4208
      %v4269 = vpack.c.b16 %v4212, %v4209
      %v4270 = vpack.c.b16 %v4216, %v4213
      %v4271 = vpack.c.b16 %v4217, %v4214
      %v4272 = vpack.c.b16 %v4218, %v4215
      %v4273 = vpack.c.b16 %v4222, %v4219
      %v4274 = vpack.c.b16 %v4223, %v4220
      %v4275 = vpack.c.b16 %v4224, %v4221
      %v4276 = vpack.c.b16 %v4228, %v4225
      %v4277 = vpack.c.b16 %v4229, %v4226
      %v4278 = vpack.c.b16 %v4230, %v4227
      %v4347 = vunpack.c.l.b16 %v4035
      %v4348 = vunpack.c.l.b16 %v4036
      %v4349 = vunpack.c.l.b16 %v4037
      %v4350 = vunpack.c.l.b16 %v4038
      %v4351 = vunpack.c.l.b16 %v4039
      %v4352 = vunpack.c.l.b16 %v4040
      %v4353 = vunpack.c.l.b16 %v4041
      %v4354 = vunpack.c.l.b16 %v4042
      %v4355 = vunpack.c.l.b16 %v4043
      %v4356 = vunpack.c.l.b16 %v4044
      %v4357 = vunpack.c.l.b16 %v4045
      %v4358 = vunpack.c.l.b16 %v4046
      %v4359 = vunpack.c.l.b16 %v4047
      %v4360 = vunpack.c.l.b16 %v4048
      %v4361 = vunpack.c.l.b16 %v4049
      %v4362 = vunpack.c.l.b16 %v4050
      %v4363 = vunpack.c.l.b16 %v4051
      %v4364 = vunpack.c.l.b16 %v4052
      %v4365 = vunpack.c.l.b16 %v4053
      %v4366 = vunpack.c.l.b16 %v4054
      %v4367 = vunpack.c.l.b16 %v4055
      %v4368 = vunpack.c.l.b16 %v4056
      %v4369 = vunpack.c.l.b16 %v4057
      %v4370 = vunpack.c.l.b16 %v4058
      %v4371 = vunpack.c.l.b16 %v4059
      %v4372 = vunpack.c.l.b16 %v4060
      %v4373 = vunpack.c.l.b16 %v4061
      %v4374 = vunpack.c.l.b16 %v4062
      %v4375 = vunpack.c.l.b16 %v4063
      %v4376 = vunpack.c.l.b16 %v4064
      %v4377 = vunpack.c.l.b16 %v4065
      %v4378 = vunpack.c.l.b16 %v4066
      %v4379 = vunpack.c.l.b16 %v4067
      %v4380 = vunpack.c.l.b16 %v4068
      %v4381 = vunpack.c.l.b16 %v4069
      %v4382 = vunpack.c.l.b16 %v4070
      %v4383 = vpack.c.b16 %v4348, %v4347
      %v4384 = vpack.c.b16 %v4350, %v4349
      %v4385 = vpack.c.b16 %v4352, %v4351
      %v4386 = vpack.c.b16 %v4354, %v4353
      %v4387 = vpack.c.b16 %v4356, %v4355
      %v4388 = vpack.c.b16 %v4358, %v4357
      %v4389 = vpack.c.b16 %v4360, %v4359
      %v4390 = vpack.c.b16 %v4362, %v4361
      %v4391 = vpack.c.b16 %v4364, %v4363
      %v4392 = vpack.c.b16 %v4366, %v4365
      %v4393 = vpack.c.b16 %v4368, %v4367
      %v4394 = vpack.c.b16 %v4370, %v4369
      %v4395 = vpack.c.b16 %v4372, %v4371
      %v4396 = vpack.c.b16 %v4374, %v4373
      %v4397 = vpack.c.b16 %v4376, %v4375
      %v4398 = vpack.c.b16 %v4378, %v4377
      %v4399 = vpack.c.b16 %v4380, %v4379
      %v4400 = vpack.c.b16 %v4382, %v4381
      %vm4419 = vcmask 261120
      %v4421 = vsel %vm4419, %v4233, 0
      %v4424 = vsel %vm4419, %v4236, 0
      %v4427 = vsel %vm4419, %v4239, 0
      %v4430 = vsel %vm4419, %v4242, 0
      %v4433 = vsel %vm4419, %v4245, 0
      %v4436 = vsel %vm4419, %v4248, 0
      %v4439 = vsel %vm4419, %v4251, 0
      %v4442 = vsel %vm4419, %v4254, 0
      %v4445 = vsel %vm4419, %v4257, 0
      %v4448 = vsel %vm4419, %v4260, 0
      %v4451 = vsel %vm4419, %v4263, 0
      %v4454 = vsel %vm4419, %v4266, 0
      %v4457 = vsel %vm4419, %v4269, 0
      %v4460 = vsel %vm4419, %v4272, 0
      %v4463 = vsel %vm4419, %v4275, 0
      %v4466 = vsel %vm4419, %v4278, 0
      %4468 = vmatpush.bf16.msra.mxu0 %v4390
      %4469 = vmatpush.bf16.msra.mxu0 %v4389
      %4470 = vmatpush.bf16.msra.mxu0 %v4388
      %4471 = vmatpush.bf16.msra.mxu0 %v4387
      %4472 = vmatpush.bf16.msra.mxu0 %v4386
      %4473 = vmatpush.bf16.msra.mxu0 %v4385
      %4474 = vmatpush.bf16.msra.mxu0 %v4384
      %4475 = vmatpush.bf16.msra.mxu0 %v4383
      %4476 = vmatmul.bf16.gmra.mxu0 %v4231
      %v4477 = vpop.f32.mrf.mxu0
      %v4478 = vadd.f32 0.0, %v4477
      %v4479 = vpop.f32.mrf.mxu0
      %v4480 = vadd.f32 0.0, %v4479
      %4481 = vmatmul.bf16.gmra.mxu0 %v4234
      %v4482 = vpop.f32.mrf.mxu0
      %v4483 = vadd.f32 0.0, %v4482
      %v4484 = vpop.f32.mrf.mxu0
      %v4485 = vadd.f32 0.0, %v4484
      %4486 = vmatmul.bf16.gmra.mxu0 %v4237
      %v4487 = vpop.f32.mrf.mxu0
      %v4488 = vadd.f32 0.0, %v4487
      %v4489 = vpop.f32.mrf.mxu0
      %v4490 = vadd.f32 0.0, %v4489
      %4491 = vmatmul.bf16.gmra.mxu0 %v4240
      %v4492 = vpop.f32.mrf.mxu0
      %v4493 = vadd.f32 0.0, %v4492
      %v4494 = vpop.f32.mrf.mxu0
      %v4495 = vadd.f32 0.0, %v4494
      %4496 = vmatmul.bf16.gmra.mxu0 %v4243
      %v4497 = vpop.f32.mrf.mxu0
      %v4498 = vadd.f32 0.0, %v4497
      %v4499 = vpop.f32.mrf.mxu0
      %v4500 = vadd.f32 0.0, %v4499
      %4501 = vmatmul.bf16.gmra.mxu0 %v4246
      %v4502 = vpop.f32.mrf.mxu0
      %v4503 = vadd.f32 0.0, %v4502
      %v4504 = vpop.f32.mrf.mxu0
      %v4505 = vadd.f32 0.0, %v4504
      %4506 = vmatmul.bf16.gmra.mxu0 %v4249
      %v4507 = vpop.f32.mrf.mxu0
      %v4508 = vadd.f32 0.0, %v4507
      %v4509 = vpop.f32.mrf.mxu0
      %v4510 = vadd.f32 0.0, %v4509
      %4511 = vmatmul.bf16.gmra.mxu0 %v4252
      %v4512 = vpop.f32.mrf.mxu0
      %v4513 = vadd.f32 0.0, %v4512
      %v4514 = vpop.f32.mrf.mxu0
      %v4515 = vadd.f32 0.0, %v4514
      %4516 = vmatmul.bf16.gmra.mxu0 %v4255
      %v4517 = vpop.f32.mrf.mxu0
      %v4518 = vadd.f32 0.0, %v4517
      %v4519 = vpop.f32.mrf.mxu0
      %v4520 = vadd.f32 0.0, %v4519
      %4521 = vmatmul.bf16.gmra.mxu0 %v4258
      %v4522 = vpop.f32.mrf.mxu0
      %v4523 = vadd.f32 0.0, %v4522
      %v4524 = vpop.f32.mrf.mxu0
      %v4525 = vadd.f32 0.0, %v4524
      %4526 = vmatmul.bf16.gmra.mxu0 %v4261
      %v4527 = vpop.f32.mrf.mxu0
      %v4528 = vadd.f32 0.0, %v4527
      %v4529 = vpop.f32.mrf.mxu0
      %v4530 = vadd.f32 0.0, %v4529
      %4531 = vmatmul.bf16.gmra.mxu0 %v4264
      %v4532 = vpop.f32.mrf.mxu0
      %v4533 = vadd.f32 0.0, %v4532
      %v4534 = vpop.f32.mrf.mxu0
      %v4535 = vadd.f32 0.0, %v4534
      %4536 = vmatmul.bf16.gmra.mxu0 %v4267
      %v4537 = vpop.f32.mrf.mxu0
      %v4538 = vadd.f32 0.0, %v4537
      %v4539 = vpop.f32.mrf.mxu0
      %v4540 = vadd.f32 0.0, %v4539
      %4541 = vmatmul.bf16.gmra.mxu0 %v4270
      %v4542 = vpop.f32.mrf.mxu0
      %v4543 = vadd.f32 0.0, %v4542
      %v4544 = vpop.f32.mrf.mxu0
      %v4545 = vadd.f32 0.0, %v4544
      %4546 = vmatmul.bf16.gmra.mxu0 %v4273
      %v4547 = vpop.f32.mrf.mxu0
      %v4548 = vadd.f32 0.0, %v4547
      %v4549 = vpop.f32.mrf.mxu0
      %v4550 = vadd.f32 0.0, %v4549
      %4551 = vmatmul.bf16.gmra.mxu0 %v4276
      %v4552 = vpop.f32.mrf.mxu0
      %v4553 = vadd.f32 0.0, %v4552
      %v4554 = vpop.f32.mrf.mxu0
      %v4555 = vadd.f32 0.0, %v4554
      %4556 = vdwg.mxu0
      %4557 = vmatpush.bf16.msra.mxu0 %v4398
      %4558 = vmatpush.bf16.msra.mxu0 %v4397
      %4559 = vmatpush.bf16.msra.mxu0 %v4396
      %4560 = vmatpush.bf16.msra.mxu0 %v4395
      %4561 = vmatpush.bf16.msra.mxu0 %v4394
      %4562 = vmatpush.bf16.msra.mxu0 %v4393
      %4563 = vmatpush.bf16.msra.mxu0 %v4392
      %4564 = vmatpush.bf16.msra.mxu0 %v4391
      %4565 = vmatmul.bf16.gmra.mxu0 %v4232
      %v4566 = vpop.f32.mrf.mxu0
      %v4567 = vadd.f32 %v4478, %v4566
      %v4568 = vpop.f32.mrf.mxu0
      %v4569 = vadd.f32 %v4480, %v4568
      %4570 = vmatmul.bf16.gmra.mxu0 %v4235
      %v4571 = vpop.f32.mrf.mxu0
      %v4572 = vadd.f32 %v4483, %v4571
      %v4573 = vpop.f32.mrf.mxu0
      %v4574 = vadd.f32 %v4485, %v4573
      %4575 = vmatmul.bf16.gmra.mxu0 %v4238
      %v4576 = vpop.f32.mrf.mxu0
      %v4577 = vadd.f32 %v4488, %v4576
      %v4578 = vpop.f32.mrf.mxu0
      %v4579 = vadd.f32 %v4490, %v4578
      %4580 = vmatmul.bf16.gmra.mxu0 %v4241
      %v4581 = vpop.f32.mrf.mxu0
      %v4582 = vadd.f32 %v4493, %v4581
      %v4583 = vpop.f32.mrf.mxu0
      %v4584 = vadd.f32 %v4495, %v4583
      %4585 = vmatmul.bf16.gmra.mxu0 %v4244
      %v4586 = vpop.f32.mrf.mxu0
      %v4587 = vadd.f32 %v4498, %v4586
      %v4588 = vpop.f32.mrf.mxu0
      %v4589 = vadd.f32 %v4500, %v4588
      %4590 = vmatmul.bf16.gmra.mxu0 %v4247
      %v4591 = vpop.f32.mrf.mxu0
      %v4592 = vadd.f32 %v4503, %v4591
      %v4593 = vpop.f32.mrf.mxu0
      %v4594 = vadd.f32 %v4505, %v4593
      %4595 = vmatmul.bf16.gmra.mxu0 %v4250
      %v4596 = vpop.f32.mrf.mxu0
      %v4597 = vadd.f32 %v4508, %v4596
      %v4598 = vpop.f32.mrf.mxu0
      %v4599 = vadd.f32 %v4510, %v4598
      %4600 = vmatmul.bf16.gmra.mxu0 %v4253
      %v4601 = vpop.f32.mrf.mxu0
      %v4602 = vadd.f32 %v4513, %v4601
      %v4603 = vpop.f32.mrf.mxu0
      %v4604 = vadd.f32 %v4515, %v4603
      %4605 = vmatmul.bf16.gmra.mxu0 %v4256
      %v4606 = vpop.f32.mrf.mxu0
      %v4607 = vadd.f32 %v4518, %v4606
      %v4608 = vpop.f32.mrf.mxu0
      %v4609 = vadd.f32 %v4520, %v4608
      %4610 = vmatmul.bf16.gmra.mxu0 %v4259
      %v4611 = vpop.f32.mrf.mxu0
      %v4612 = vadd.f32 %v4523, %v4611
      %v4613 = vpop.f32.mrf.mxu0
      %v4614 = vadd.f32 %v4525, %v4613
      %4615 = vmatmul.bf16.gmra.mxu0 %v4262
      %v4616 = vpop.f32.mrf.mxu0
      %v4617 = vadd.f32 %v4528, %v4616
      %v4618 = vpop.f32.mrf.mxu0
      %v4619 = vadd.f32 %v4530, %v4618
      %4620 = vmatmul.bf16.gmra.mxu0 %v4265
      %v4621 = vpop.f32.mrf.mxu0
      %v4622 = vadd.f32 %v4533, %v4621
      %v4623 = vpop.f32.mrf.mxu0
      %v4624 = vadd.f32 %v4535, %v4623
      %4625 = vmatmul.bf16.gmra.mxu0 %v4268
      %v4626 = vpop.f32.mrf.mxu0
      %v4627 = vadd.f32 %v4538, %v4626
      %v4628 = vpop.f32.mrf.mxu0
      %v4629 = vadd.f32 %v4540, %v4628
      %4630 = vmatmul.bf16.gmra.mxu0 %v4271
      %v4631 = vpop.f32.mrf.mxu0
      %v4632 = vadd.f32 %v4543, %v4631
      %v4633 = vpop.f32.mrf.mxu0
      %v4634 = vadd.f32 %v4545, %v4633
      %4635 = vmatmul.bf16.gmra.mxu0 %v4274
      %v4636 = vpop.f32.mrf.mxu0
      %v4637 = vadd.f32 %v4548, %v4636
      %v4638 = vpop.f32.mrf.mxu0
      %v4639 = vadd.f32 %v4550, %v4638
      %4640 = vmatmul.bf16.gmra.mxu0 %v4277
      %v4641 = vpop.f32.mrf.mxu0
      %v4642 = vadd.f32 %v4553, %v4641
      %v4643 = vpop.f32.mrf.mxu0
      %v4644 = vadd.f32 %v4555, %v4643
      %4645 = vdwg.mxu0
      %4646 = vmatpush.bf16.msra.mxu0 0
      %4647 = vmatpush.bf16.msra.mxu0 0
      %4648 = vmatpush.bf16.msra.mxu0 0
      %4649 = vmatpush.bf16.msra.mxu0 0
      %4650 = vmatpush.bf16.msra.mxu0 0
      %4651 = vmatpush.bf16.msra.mxu0 0
      %4652 = vmatpush.bf16.msra.mxu0 %v4400
      %4653 = vmatpush.bf16.msra.mxu0 %v4399
      %4654 = vmatmul.bf16.gmra.mxu0 %v4421
      %v4655 = vpop.f32.mrf.mxu0
      %v4656 = vadd.f32 %v4567, %v4655
      %v4657 = vpop.f32.mrf.mxu0
      %v4658 = vadd.f32 %v4569, %v4657
      %4659 = vmatmul.bf16.gmra.mxu0 %v4424
      %v4660 = vpop.f32.mrf.mxu0
      %v4661 = vadd.f32 %v4572, %v4660
      %v4662 = vpop.f32.mrf.mxu0
      %v4663 = vadd.f32 %v4574, %v4662
      %4664 = vmatmul.bf16.gmra.mxu0 %v4427
      %v4665 = vpop.f32.mrf.mxu0
      %v4666 = vadd.f32 %v4577, %v4665
      %v4667 = vpop.f32.mrf.mxu0
      %v4668 = vadd.f32 %v4579, %v4667
      %4669 = vmatmul.bf16.gmra.mxu0 %v4430
      %v4670 = vpop.f32.mrf.mxu0
      %v4671 = vadd.f32 %v4582, %v4670
      %v4672 = vpop.f32.mrf.mxu0
      %v4673 = vadd.f32 %v4584, %v4672
      %4674 = vmatmul.bf16.gmra.mxu0 %v4433
      %v4675 = vpop.f32.mrf.mxu0
      %v4676 = vadd.f32 %v4587, %v4675
      %v4677 = vpop.f32.mrf.mxu0
      %v4678 = vadd.f32 %v4589, %v4677
      %4679 = vmatmul.bf16.gmra.mxu0 %v4436
      %v4680 = vpop.f32.mrf.mxu0
      %v4681 = vadd.f32 %v4592, %v4680
      %v4682 = vpop.f32.mrf.mxu0
      %v4683 = vadd.f32 %v4594, %v4682
      %4684 = vmatmul.bf16.gmra.mxu0 %v4439
      %v4685 = vpop.f32.mrf.mxu0
      %v4686 = vadd.f32 %v4597, %v4685
      %v4687 = vpop.f32.mrf.mxu0
      %v4688 = vadd.f32 %v4599, %v4687
      %4689 = vmatmul.bf16.gmra.mxu0 %v4442
      %v4690 = vpop.f32.mrf.mxu0
      %v4691 = vadd.f32 %v4602, %v4690
      %v4692 = vpop.f32.mrf.mxu0
      %v4693 = vadd.f32 %v4604, %v4692
      %4694 = vmatmul.bf16.gmra.mxu0 %v4445
      %v4695 = vpop.f32.mrf.mxu0
      %v4696 = vadd.f32 %v4607, %v4695
      %v4697 = vpop.f32.mrf.mxu0
      %v4698 = vadd.f32 %v4609, %v4697
      %4699 = vmatmul.bf16.gmra.mxu0 %v4448
      %v4700 = vpop.f32.mrf.mxu0
      %v4701 = vadd.f32 %v4612, %v4700
      %v4702 = vpop.f32.mrf.mxu0
      %v4703 = vadd.f32 %v4614, %v4702
      %4704 = vmatmul.bf16.gmra.mxu0 %v4451
      %v4705 = vpop.f32.mrf.mxu0
      %v4706 = vadd.f32 %v4617, %v4705
      %v4707 = vpop.f32.mrf.mxu0
      %v4708 = vadd.f32 %v4619, %v4707
      %4709 = vmatmul.bf16.gmra.mxu0 %v4454
      %v4710 = vpop.f32.mrf.mxu0
      %v4711 = vadd.f32 %v4622, %v4710
      %v4712 = vpop.f32.mrf.mxu0
      %v4713 = vadd.f32 %v4624, %v4712
      %4714 = vmatmul.bf16.gmra.mxu0 %v4457
      %v4715 = vpop.f32.mrf.mxu0
      %v4716 = vadd.f32 %v4627, %v4715
      %v4717 = vpop.f32.mrf.mxu0
      %v4718 = vadd.f32 %v4629, %v4717
      %4719 = vmatmul.bf16.gmra.mxu0 %v4460
      %v4720 = vpop.f32.mrf.mxu0
      %v4721 = vadd.f32 %v4632, %v4720
      %v4722 = vpop.f32.mrf.mxu0
      %v4723 = vadd.f32 %v4634, %v4722
      %4724 = vmatmul.bf16.gmra.mxu0 %v4463
      %v4725 = vpop.f32.mrf.mxu0
      %v4726 = vadd.f32 %v4637, %v4725
      %v4727 = vpop.f32.mrf.mxu0
      %v4728 = vadd.f32 %v4639, %v4727
      %4729 = vmatmul.bf16.gmra.mxu0 %v4466
      %v4730 = vpop.f32.mrf.mxu0
      %v4731 = vadd.f32 %v4642, %v4730
      %v4732 = vpop.f32.mrf.mxu0
      %v4733 = vadd.f32 %v4644, %v4732
      %4734 = vdwg.mxu0
      %v4735 = vld [vmem:[%s5] sm:$0x1]
      %v4736 = vsel %vm4419, %v4656, 0.0
      %v4737 = vsel %vm4419, %v4658, 0.0
      %v4738 = vadd.f32 %v4736, %v4737
      %v4739 = vsel %vm4419, %v4661, 0.0
      %v4740 = vadd.f32 %v4738, %v4739
      %v4741 = vsel %vm4419, %v4663, 0.0
      %v4742 = vadd.f32 %v4740, %v4741
      %v4743 = vsel %vm4419, %v4666, 0.0
      %v4744 = vadd.f32 %v4742, %v4743
      %v4745 = vsel %vm4419, %v4668, 0.0
      %v4746 = vadd.f32 %v4744, %v4745
      %v4747 = vsel %vm4419, %v4671, 0.0
      %v4748 = vadd.f32 %v4746, %v4747
      %v4749 = vsel %vm4419, %v4673, 0.0
      %v4750 = vadd.f32 %v4748, %v4749
      %v4751 = vsel %vm4419, %v4676, 0.0
      %v4752 = vadd.f32 %v4750, %v4751
      %v4753 = vsel %vm4419, %v4678, 0.0
      %v4754 = vadd.f32 %v4752, %v4753
      %v4755 = vsel %vm4419, %v4681, 0.0
      %v4756 = vadd.f32 %v4754, %v4755
      %v4757 = vsel %vm4419, %v4683, 0.0
      %v4758 = vadd.f32 %v4756, %v4757
      %v4759 = vsel %vm4419, %v4686, 0.0
      %v4760 = vadd.f32 %v4758, %v4759
      %v4761 = vsel %vm4419, %v4688, 0.0
      %v4762 = vadd.f32 %v4760, %v4761
      %v4763 = vsel %vm4419, %v4691, 0.0
      %v4764 = vadd.f32 %v4762, %v4763
      %v4765 = vsel %vm4419, %v4693, 0.0
      %v4766 = vadd.f32 %v4764, %v4765
      %v4767 = vsel %vm4419, %v4696, 0.0
      %v4768 = vadd.f32 %v4766, %v4767
      %v4769 = vsel %vm4419, %v4698, 0.0
      %v4770 = vadd.f32 %v4768, %v4769
      %v4771 = vsel %vm4419, %v4701, 0.0
      %v4772 = vadd.f32 %v4770, %v4771
      %v4773 = vsel %vm4419, %v4703, 0.0
      %v4774 = vadd.f32 %v4772, %v4773
      %v4775 = vsel %vm4419, %v4706, 0.0
      %v4776 = vadd.f32 %v4774, %v4775
      %v4777 = vsel %vm4419, %v4708, 0.0
      %v4778 = vadd.f32 %v4776, %v4777
      %v4779 = vsel %vm4419, %v4711, 0.0
      %v4780 = vadd.f32 %v4778, %v4779
      %v4781 = vsel %vm4419, %v4713, 0.0
      %v4782 = vadd.f32 %v4780, %v4781
      %v4783 = vsel %vm4419, %v4716, 0.0
      %v4784 = vadd.f32 %v4782, %v4783
      %v4785 = vsel %vm4419, %v4718, 0.0
      %v4786 = vadd.f32 %v4784, %v4785
      %v4787 = vsel %vm4419, %v4721, 0.0
      %v4788 = vadd.f32 %v4786, %v4787
      %v4789 = vsel %vm4419, %v4723, 0.0
      %v4790 = vadd.f32 %v4788, %v4789
      %v4791 = vsel %vm4419, %v4726, 0.0
      %v4792 = vadd.f32 %v4790, %v4791
      %v4793 = vsel %vm4419, %v4728, 0.0
      %v4794 = vadd.f32 %v4792, %v4793
      %v4795 = vsel %vm4419, %v4731, 0.0
      %v4796 = vadd.f32 %v4794, %v4795
      %v4797 = vsel %vm4419, %v4733, 0.0
      %v4798 = vadd.f32 %v4796, %v4797
      %v4799 = vrot.slane %v4798, 4
      %v4800 = vadd.f32 %v4798, %v4799
      %v4801 = vrot.slane %v4800, 2
      %v4802 = vadd.f32 %v4800, %v4801
      %v4803 = vrot.slane %v4802, 1
      %v4804 = vadd.f32 %v4802, %v4803
      %v4805 = vadd.f32 %v4735, %v4804
      %vm4806 = vcmask 253952
      %4807 = vst.msk [vmem:[%s5] sm:$0x1] %vm4806, %v4805
      %v4808 = vld [vmem:[%s6] sm:$0x1]
      %v4809 = vmul.f32 %v4656, %v4656
      %v4810 = vmul.f32 %v4658, %v4658
      %v4811 = vmul.f32 %v4661, %v4661
      %v4812 = vmul.f32 %v4663, %v4663
      %v4813 = vmul.f32 %v4666, %v4666
      %v4814 = vmul.f32 %v4668, %v4668
      %v4815 = vmul.f32 %v4671, %v4671
      %v4816 = vmul.f32 %v4673, %v4673
      %v4817 = vmul.f32 %v4676, %v4676
      %v4818 = vmul.f32 %v4678, %v4678
      %v4819 = vmul.f32 %v4681, %v4681
      %v4820 = vmul.f32 %v4683, %v4683
      %v4821 = vmul.f32 %v4686, %v4686
      %v4822 = vmul.f32 %v4688, %v4688
      %v4823 = vmul.f32 %v4691, %v4691
      %v4824 = vmul.f32 %v4693, %v4693
      %v4825 = vmul.f32 %v4696, %v4696
      %v4826 = vmul.f32 %v4698, %v4698
      %v4827 = vmul.f32 %v4701, %v4701
      %v4828 = vmul.f32 %v4703, %v4703
      %v4829 = vmul.f32 %v4706, %v4706
      %v4830 = vmul.f32 %v4708, %v4708
      %v4831 = vmul.f32 %v4711, %v4711
      %v4832 = vmul.f32 %v4713, %v4713
      %v4833 = vmul.f32 %v4716, %v4716
      %v4834 = vmul.f32 %v4718, %v4718
      %v4835 = vmul.f32 %v4721, %v4721
      %v4836 = vmul.f32 %v4723, %v4723
      %v4837 = vmul.f32 %v4726, %v4726
      %v4838 = vmul.f32 %v4728, %v4728
      %v4839 = vmul.f32 %v4731, %v4731
      %v4840 = vmul.f32 %v4733, %v4733
      %v4841 = vsel %vm4419, %v4809, 0.0
      %v4842 = vsel %vm4419, %v4810, 0.0
      %v4843 = vadd.f32 %v4841, %v4842
      %v4844 = vsel %vm4419, %v4811, 0.0
      %v4845 = vadd.f32 %v4843, %v4844
      %v4846 = vsel %vm4419, %v4812, 0.0
      %v4847 = vadd.f32 %v4845, %v4846
      %v4848 = vsel %vm4419, %v4813, 0.0
      %v4849 = vadd.f32 %v4847, %v4848
      %v4850 = vsel %vm4419, %v4814, 0.0
      %v4851 = vadd.f32 %v4849, %v4850
      %v4852 = vsel %vm4419, %v4815, 0.0
      %v4853 = vadd.f32 %v4851, %v4852
      %v4854 = vsel %vm4419, %v4816, 0.0
      %v4855 = vadd.f32 %v4853, %v4854
      %v4856 = vsel %vm4419, %v4817, 0.0
      %v4857 = vadd.f32 %v4855, %v4856
      %v4858 = vsel %vm4419, %v4818, 0.0
      %v4859 = vadd.f32 %v4857, %v4858
      %v4860 = vsel %vm4419, %v4819, 0.0
      %v4861 = vadd.f32 %v4859, %v4860
      %v4862 = vsel %vm4419, %v4820, 0.0
      %v4863 = vadd.f32 %v4861, %v4862
      %v4864 = vsel %vm4419, %v4821, 0.0
      %v4865 = vadd.f32 %v4863, %v4864
      %v4866 = vsel %vm4419, %v4822, 0.0
      %v4867 = vadd.f32 %v4865, %v4866
      %v4868 = vsel %vm4419, %v4823, 0.0
      %v4869 = vadd.f32 %v4867, %v4868
      %v4870 = vsel %vm4419, %v4824, 0.0
      %v4871 = vadd.f32 %v4869, %v4870
      %v4872 = vsel %vm4419, %v4825, 0.0
      %v4873 = vadd.f32 %v4871, %v4872
      %v4874 = vsel %vm4419, %v4826, 0.0
      %v4875 = vadd.f32 %v4873, %v4874
      %v4876 = vsel %vm4419, %v4827, 0.0
      %v4877 = vadd.f32 %v4875, %v4876
      %v4878 = vsel %vm4419, %v4828, 0.0
      %v4879 = vadd.f32 %v4877, %v4878
      %v4880 = vsel %vm4419, %v4829, 0.0
      %v4881 = vadd.f32 %v4879, %v4880
      %v4882 = vsel %vm4419, %v4830, 0.0
      %v4883 = vadd.f32 %v4881, %v4882
      %v4884 = vsel %vm4419, %v4831, 0.0
      %v4885 = vadd.f32 %v4883, %v4884
      %v4886 = vsel %vm4419, %v4832, 0.0
      %v4887 = vadd.f32 %v4885, %v4886
      %v4888 = vsel %vm4419, %v4833, 0.0
      %v4889 = vadd.f32 %v4887, %v4888
      %v4890 = vsel %vm4419, %v4834, 0.0
      %v4891 = vadd.f32 %v4889, %v4890
      %v4892 = vsel %vm4419, %v4835, 0.0
      %v4893 = vadd.f32 %v4891, %v4892
      %v4894 = vsel %vm4419, %v4836, 0.0
      %v4895 = vadd.f32 %v4893, %v4894
      %v4896 = vsel %vm4419, %v4837, 0.0
      %v4897 = vadd.f32 %v4895, %v4896
      %v4898 = vsel %vm4419, %v4838, 0.0
      %v4899 = vadd.f32 %v4897, %v4898
      %v4900 = vsel %vm4419, %v4839, 0.0
      %v4901 = vadd.f32 %v4899, %v4900
      %v4902 = vsel %vm4419, %v4840, 0.0
      %v4903 = vadd.f32 %v4901, %v4902
      %v4904 = vrot.slane %v4903, 4
      %v4905 = vadd.f32 %v4903, %v4904
      %v4906 = vrot.slane %v4905, 2
      %v4907 = vadd.f32 %v4905, %v4906
      %v4908 = vrot.slane %v4907, 1
      %v4909 = vadd.f32 %v4907, %v4908
      %v4910 = vadd.f32 %v4808, %v4909
      %4911 = vst.msk [vmem:[%s6] sm:$0x1] %vm4806, %v4910
      %v4912 = vpack.c.bf16 %v4656, %v4656
      %v4913 = vpack.c.bf16 %v4658, %v4658
      %v4914 = vpack.c.bf16 %v4661, %v4661
      %v4915 = vpack.c.bf16 %v4663, %v4663
      %v4916 = vpack.c.bf16 %v4666, %v4666
      %v4917 = vpack.c.bf16 %v4668, %v4668
      %v4918 = vpack.c.bf16 %v4671, %v4671
      %v4919 = vpack.c.bf16 %v4673, %v4673
      %v4920 = vpack.c.bf16 %v4676, %v4676
      %v4921 = vpack.c.bf16 %v4678, %v4678
      %v4922 = vpack.c.bf16 %v4681, %v4681
      %v4923 = vpack.c.bf16 %v4683, %v4683
      %v4924 = vpack.c.bf16 %v4686, %v4686
      %v4925 = vpack.c.bf16 %v4688, %v4688
      %v4926 = vpack.c.bf16 %v4691, %v4691
      %v4927 = vpack.c.bf16 %v4693, %v4693
      %v4928 = vpack.c.bf16 %v4696, %v4696
      %v4929 = vpack.c.bf16 %v4698, %v4698
      %v4930 = vpack.c.bf16 %v4701, %v4701
      %v4931 = vpack.c.bf16 %v4703, %v4703
      %v4932 = vpack.c.bf16 %v4706, %v4706
      %v4933 = vpack.c.bf16 %v4708, %v4708
      %v4934 = vpack.c.bf16 %v4711, %v4711
      %v4935 = vpack.c.bf16 %v4713, %v4713
      %v4936 = vpack.c.bf16 %v4716, %v4716
      %v4937 = vpack.c.bf16 %v4718, %v4718
      %v4938 = vpack.c.bf16 %v4721, %v4721
      %v4939 = vpack.c.bf16 %v4723, %v4723
      %v4940 = vpack.c.bf16 %v4726, %v4726
      %v4941 = vpack.c.bf16 %v4728, %v4728
      %v4942 = vpack.c.bf16 %v4731, %v4731
      %v4943 = vpack.c.bf16 %v4733, %v4733
      %4944 = vst.msk [vmem:[%s248] sm:$0xf] %vm542, %v4912
      %4945 = vst.msk [vmem:[%s248 + $0x4] sm:$0xf] %vm542, %v4913
      %4946 = vst.msk [vmem:[%s248 + $0x8] sm:$0xf] %vm542, %v4914
      %4947 = vst.msk [vmem:[%s248 + $0xc] sm:$0xf] %vm542, %v4915
      %4948 = vst.msk [vmem:[%s248 + $0x10] sm:$0xf] %vm542, %v4916
      %4949 = vst.msk [vmem:[%s248 + $0x14] sm:$0xf] %vm542, %v4917
      %4950 = vst.msk [vmem:[%s248 + $0x18] sm:$0xf] %vm542, %v4918
      %4951 = vst.msk [vmem:[%s248 + $0x1c] sm:$0xf] %vm542, %v4919
      %4952 = vst.msk [vmem:[%s248 + $0x20] sm:$0xf] %vm542, %v4920
      %4953 = vst.msk [vmem:[%s248 + $0x24] sm:$0xf] %vm542, %v4921
      %4954 = vst.msk [vmem:[%s248 + $0x28] sm:$0xf] %vm542, %v4922
      %4955 = vst.msk [vmem:[%s248 + $0x2c] sm:$0xf] %vm542, %v4923
      %4956 = vst.msk [vmem:[%s248 + $0x30] sm:$0xf] %vm542, %v4924
      %4957 = vst.msk [vmem:[%s248 + $0x34] sm:$0xf] %vm542, %v4925
      %4958 = vst.msk [vmem:[%s248 + $0x38] sm:$0xf] %vm542, %v4926
      %4959 = vst.msk [vmem:[%s248 + $0x3c] sm:$0xf] %vm542, %v4927
      %4960 = vst.msk [vmem:[%s248 + $0x40] sm:$0xf] %vm542, %v4928
      %4961 = vst.msk [vmem:[%s248 + $0x44] sm:$0xf] %vm542, %v4929
      %4962 = vst.msk [vmem:[%s248 + $0x48] sm:$0xf] %vm542, %v4930
      %4963 = vst.msk [vmem:[%s248 + $0x4c] sm:$0xf] %vm542, %v4931
      %4964 = vst.msk [vmem:[%s248 + $0x50] sm:$0xf] %vm542, %v4932
      %4965 = vst.msk [vmem:[%s248 + $0x54] sm:$0xf] %vm542, %v4933
      %4966 = vst.msk [vmem:[%s248 + $0x58] sm:$0xf] %vm542, %v4934
      %4967 = vst.msk [vmem:[%s248 + $0x5c] sm:$0xf] %vm542, %v4935
      %4968 = vst.msk [vmem:[%s248 + $0x60] sm:$0xf] %vm542, %v4936
      %4969 = vst.msk [vmem:[%s248 + $0x64] sm:$0xf] %vm542, %v4937
      %4970 = vst.msk [vmem:[%s248 + $0x68] sm:$0xf] %vm542, %v4938
      %4971 = vst.msk [vmem:[%s248 + $0x6c] sm:$0xf] %vm542, %v4939
      %4972 = vst.msk [vmem:[%s248 + $0x70] sm:$0xf] %vm542, %v4940
      %4973 = vst.msk [vmem:[%s248 + $0x74] sm:$0xf] %vm542, %v4941
      %4974 = vst.msk [vmem:[%s248 + $0x78] sm:$0xf] %vm542, %v4942
      %4975 = vst.msk [vmem:[%s248 + $0x7c] sm:$0xf] %vm542, %v4943
      %s4976 = smul.u32 32, %s18
      %p4977 = scmp.lt.s32.totalorder %s4976, 63
      %s4978 = scalar_select %p4977, %s4976, 63
      %s4979 = smul.addr %s4978, 4
      %s4980 = scalar_lea.vmem %s4, %s4979
      // Predicated region
      $region41: #{resnext_bottleneck_forward.5} parent=35 // pred_check
        %p4981 = pneg %p125
      $region42: #{resnext_bottleneck_forward.5} parent=35 // pred_check_branch
        %4983 = sbr.rel (%p4981) target = $region44
      $region43: #{resnext_bottleneck_forward.5} parent=35 // pred_region
        %s4984 = smul.u32 32, %s18
      $region44: #{resnext_bottleneck_forward.5} parent=35 // pred_fallthru
        _
      // Predicated region
      $region45: #{resnext_bottleneck_forward.5} parent=35 // pred_check
        %p4985 = pneg %p146
      $region46: #{resnext_bottleneck_forward.5} parent=35 // pred_check_branch
        %4987 = sbr.rel (%p4985) target = $region48
      $region47: #{resnext_bottleneck_forward.5} parent=35 // pred_region
        _
      $region48: #{resnext_bottleneck_forward.5} parent=35 // pred_fallthru
        _
      // Predicated region
      $region49: #{resnext_bottleneck_forward.5} parent=35 // pred_check
        %p4988 = pneg %p167
      $region50: #{resnext_bottleneck_forward.5} parent=35 // pred_check_branch
        %4990 = sbr.rel (%p4988) target = $region52
      $region51: #{resnext_bottleneck_forward.5} parent=35 // pred_region
        _
      $region52: #{resnext_bottleneck_forward.5} parent=35 // pred_fallthru
        _
      // Predicated region
      $region53: #{resnext_bottleneck_forward.5} parent=35 // pred_check
        %p4991 = pneg %p146
      $region54: #{resnext_bottleneck_forward.5} parent=35 // pred_check_branch
        %4993 = sbr.rel (%p4991) target = $region56
      $region55: #{resnext_bottleneck_forward.5} parent=35 // pred_region
        _
      $region56: #{resnext_bottleneck_forward.5} parent=35 // pred_fallthru
        _
      // Predicated region
      $region57: #{resnext_bottleneck_forward.5} parent=35 // pred_check
        %p4994 = pneg %p167
      $region58: #{resnext_bottleneck_forward.5} parent=35 // pred_check_branch
        %4996 = sbr.rel (%p4994) target = $region60
      $region59: #{resnext_bottleneck_forward.5} parent=35 // pred_region
        _
      $region60: #{resnext_bottleneck_forward.5} parent=35 // pred_fallthru
        _
    $region36: #{resnext_bottleneck_forward.5} parent=5 // pred_fallthru
      _
    %p4997 = scmp.le.s32.totalorder 2, %s13
    // Predicated region
    $region61: #{resnext_bottleneck_forward.5} parent=5 // pred_check
      %p4998 = pneg %p4997
    $region62: #{resnext_bottleneck_forward.5} parent=5 // pred_check_branch
      %5000 = sbr.rel (%p4998) target = $region64
    $region63: #{resnext_bottleneck_forward.5} parent=5 // pred_region
      %s5001 = ssub.s32 %s13, 2
      // Predicated region
      $region65: #{resnext_bottleneck_forward.5} parent=63 // pred_check
        %p5002 = pneg %p131
      $region66: #{resnext_bottleneck_forward.5} parent=63 // pred_check_branch
        %5004 = sbr.rel (%p5002) target = $region68
      $region67: #{resnext_bottleneck_forward.5} parent=63 // pred_region
        %s5005 = smul.u32 32, %s19
        %p5006 = scmp.lt.s32.totalorder %s5005, 63
        %s5007 = scalar_select %p5006, %s5005, 63
        %s5008 = smul.addr %s5007, 4
        %s5009 = scalar_lea.vmem %s4, %s5008
      $region68: #{resnext_bottleneck_forward.5} parent=63 // pred_fallthru
        _
    $region64: #{resnext_bottleneck_forward.5} parent=5 // pred_fallthru
      _
  $region6: #{resnext_bottleneck_forward.5} parent=0 // loop_footer
    %s17 = sadd.s32 1, %s13
  $region7: #{resnext_bottleneck_forward.5} parent=0 // loop_footer_branch
    %12 = sbr.rel target = $region3
  $region8: #{resnext_bottleneck_forward.5} parent=0 // loop_exit
    _

</llo_original>
